<compile_context>
chip_gen: v6e
topology: v6e:2x2x1
jax: 0.10.0
libtpu: 0.0.40
codegen_flags: <defaults>
</compile_context>

<pallas_src>
import functools

import jax
import jax.numpy as jnp
from jax.experimental import pallas as pl
from jax.experimental.pallas import tpu as pltpu

VERY_SMALL = 1e-12


# ----------------------------------------------------------------------------
# Fused kernel: graph learner + adj normalization + DCGRU stack + last_relevant
#               + IB head, grid = (B,)
# ----------------------------------------------------------------------------
def dcrnn_fused_kernel(idx_ref, x_ref, u_ref, eps_ref,
                       glw1_ref, glb1_ref, glw2_ref, glb2_ref,
                       *rest,
                       num_layers, num_heads, hid, diff_steps, temperature,
                       seq_len, input_dim):
    nl, K, H, T, Din = num_layers, num_heads, hid, seq_len, input_dim
    N = x_ref.shape[1]
    f32 = jnp.float32

    layer_refs = rest[:5 * nl]
    (muw_ref, mub_ref, sgw_ref, sgb_ref, clw_ref, clb_ref) = rest[5 * nl:5 * nl + 6]
    logits_ref, z_ref, mu_ref, sigma_ref = rest[5 * nl + 6:5 * nl + 10]
    xp_ref = rest[5 * nl + 10]                      # VMEM scratch (T, N, 3H)

    b = pl.program_id(0)
    x2 = x_ref[0]                                   # (N, T*Din); column block t == x[b, t]

    # ---------------- ConcreteGraphLearner + preprocess_adj (per batch element) ------
    # x.mean(dim=1) folded in; computed via static lane slices (no relayout reshape).
    x_agg = x2[:, 0:Din]
    for t in range(1, T):
        x_agg = x_agg + x2[:, t * Din:(t + 1) * Din]
    x_agg = x_agg * (1.0 / T)

    # Per-head 2-layer MLPs fused: W1 stacked along output, W2 stored block-diagonal.
    h1 = jnp.maximum(
        jnp.dot(x_agg, glw1_ref[...], preferred_element_type=f32) + glb1_ref[...], 0.0)
    e = jnp.dot(h1, glw2_ref[...], preferred_element_type=f32) + glb2_ref[...]

    inv_temp = 1.0 / temperature
    sups = []
    for head in range(K):
        eh = e[:, head * H:(head + 1) * H]                               # (N, H)
        # logit(sigmoid(sim)) == sim (up to the 1e-12 guard) -> skip the round trip.
        sim = jax.lax.dot_general(eh, eh, (((1,), (1,)), ((), ())),
                                  preferred_element_type=f32)            # (N, N)
        u = jnp.clip(u_ref[0, head], VERY_SMALL, 1.0 - VERY_SMALL)
        noise = jnp.log(u + VERY_SMALL) - jnp.log(1.0 - u + VERY_SMALL)
        A = jax.nn.sigmoid((sim + noise) * inv_temp)
        # preprocess_adj: A * d^-1/2 * (d^-1/2)^T with d = row sums (matches torch code
        # exactly, including using row sums on both sides of the asymmetric A).
        dinv = jax.lax.rsqrt(jnp.sum(A, axis=-1, keepdims=True) + 1e-10)  # (N, 1)
        sups.append(A * dinv * jnp.transpose(dinv))                       # VPU broadcasts

    # ---------------- weights as VMEM-resident values --------------------------------
    layer_ws = []
    for l in range(nl):
        wr = layer_refs[5 * l:5 * l + 5]
        layer_ws.append(tuple(r[...] for r in wr))   # (wx, wh_ru, wh_c, b_ru, b_c)

    # ------- hoisted layer-0 input-side diffusion + projection (h-independent) -------
    wx0 = layer_ws[0][0]                             # (M*Din, 3H)
    chains = [x2]
    for k in range(K):
        d = x2
        for _ in range(diff_steps):
            d = jnp.dot(sups[k], d, preferred_element_type=f32)           # (N, T*Din)
            chains.append(d)
    for t in range(T):
        acc = None
        for m, ch in enumerate(chains):
            c = jnp.dot(ch[:, t * Din:(t + 1) * Din],
                        wx0[m * Din:(m + 1) * Din],
                        preferred_element_type=f32)                       # (N, 3H)
            acc = c if acc is None else acc + c
        xp_ref[t] = acc

    # ---------------- recurrent sweep (all layers fused, dynamic trip count) ---------
    def gconv(v, w):
        # v: (N, F); w: (M*F, Fout). Per-order partial matmuls against sublane row
        # blocks of w (no lane-axis concatenation of sub-128 diffusion terms).
        f = v.shape[-1]
        out = jnp.dot(v, w[0:f], preferred_element_type=f32)
        m = 1
        for k in range(K):
            d = v
            for _ in range(diff_steps):
                d = jnp.dot(sups[k], d, preferred_element_type=f32)
                out = out + jnp.dot(d, w[m * f:(m + 1) * f], preferred_element_type=f32)
                m += 1
        return out

    def gru(xc, h, wh_ru, wh_c, b_ru, b_c):
        # xc: precomputed x-side contribution (N, 3H): [:, :2H] -> r/u, [:, 2H:] -> c.
        ru = jax.nn.sigmoid(xc[:, :2 * H] + gconv(h, wh_ru) + b_ru)
        r = ru[:, :H]
        u_g = ru[:, H:]
        c = jnp.tanh(xc[:, 2 * H:] + gconv(r * h, wh_c) + b_c)
        return u_g * h + (1.0 - u_g) * c

    def step(t, hs):
        new_hs = []
        xc = xp_ref[t]                               # hoisted layer-0 input projection
        for l in range(nl):
            wx_l, whru_l, whc_l, bru_l, bc_l = layer_ws[l]
            if l > 0:
                xc = gconv(new_hs[l - 1], wx_l)      # layer input = previous layer's h_t
            new_hs.append(gru(xc, hs[l], whru_l, whc_l, bru_l, bc_l))
        return tuple(new_hs)

    # Run exactly seq_length steps: skips padded timesteps and leaves h at t = len-1,
    # which is precisely utils.last_relevant_pytorch of the last layer's sequence.
    n_steps = idx_ref[b] + 1
    h0 = tuple(jnp.zeros((N, H), f32) for _ in range(nl))
    hs = jax.lax.fori_loop(0, n_steps, step, h0)
    h_last = hs[nl - 1]                              # (N, H)

    # ---------------- IB head: node max-pool, mu/sigma, reparam, classifier ----------
    pooled = jnp.max(h_last, axis=0, keepdims=True)                       # (1, H)
    mu = jnp.dot(pooled, muw_ref[...], preferred_element_type=f32) + mub_ref[...]
    s = jnp.dot(pooled, sgw_ref[...], preferred_element_type=f32) + sgb_ref[...]
    sigma = jnp.maximum(s, 0.0) + jnp.log(1.0 + jnp.exp(-jnp.abs(s)))     # softplus
    z = mu + sigma * eps_ref[0]
    zr = jnp.maximum(z, 0.0)          # relu(dropout(Z)); dropout == identity (eval)
    logits_ref[0] = jnp.dot(zr, clw_ref[...], preferred_element_type=f32) + clb_ref[...]
    z_ref[0] = z
    mu_ref[0] = mu
    sigma_ref[0] = sigma


# ----------------------------------------------------------------------------
# Wrapper (glue in plain JAX: RNG draws, layout plumbing, BlockSpecs)
# ----------------------------------------------------------------------------
def dcrnn_forward(params, x, seq_lengths, supports, key, *,
                  max_diffusion_step, temperature):
    B, T, N, Din = x.shape
    H = params['cells'][0]['b_c'].shape[-1]
    K = params['gl_b1'].shape[-1] // H
    nl = len(params['cells'])
    IB = params['mu_W'].shape[-1]
    C = params['cls_W'].shape[-1]
    # torch only uses supports for its time dim (== T); the repeated copies are identical.
    del supports

    key_u, key_n = jax.random.split(key)
    u_noise = jax.random.uniform(key_u, (B, K, N, N), dtype=jnp.float32)
    eps = jax.random.normal(key_n, (B, 1, IB), dtype=jnp.float32)

    # Layout plumbing: (B, T, N, Din) -> (B, N, T*Din) so column block t == x[b, t].
    x_perm = jnp.transpose(x, (0, 2, 1, 3)).reshape(B, N, T * Din)
    last_idx = jnp.clip(seq_lengths.astype(jnp.int32) - 1, 0, T - 1)

    kern = functools.partial(
        dcrnn_fused_kernel, num_layers=nl, num_heads=K, hid=H,
        diff_steps=max_diffusion_step, temperature=temperature,
        seq_len=T, input_dim=Din)

    def per_b3(b, idx): return (b, 0, 0)
    def per_b4(b, idx): return (b, 0, 0, 0)
    def const(b, idx): return (0, 0)

    in_specs = [
        pl.BlockSpec((1, N, T * Din), per_b3),
        pl.BlockSpec((1, K, N, N), per_b4),
        pl.BlockSpec((1, 1, IB), per_b3),
        pl.BlockSpec(params['gl_W1'].shape, const),
        pl.BlockSpec(params['gl_b1'].shape, const),
        pl.BlockSpec(params['gl_W2_bd'].shape, const),
        pl.BlockSpec(params['gl_b2'].shape, const),
    ]
    args = [x_perm, u_noise, eps,
            params['gl_W1'], params['gl_b1'], params['gl_W2_bd'], params['gl_b2']]
    for lw in params['cells']:
        for name in ('wx', 'wh_ru', 'wh_c', 'b_ru', 'b_c'):
            in_specs.append(pl.BlockSpec(lw[name].shape, const))
            args.append(lw[name])
    for name in ('mu_W', 'mu_b', 'sig_W', 'sig_b', 'cls_W', 'cls_b'):
        in_specs.append(pl.BlockSpec(params[name].shape, const))
        args.append(params[name])

    out_shape = (jax.ShapeDtypeStruct((B, 1, C), jnp.float32),
                 jax.ShapeDtypeStruct((B, 1, IB), jnp.float32),
                 jax.ShapeDtypeStruct((B, 1, IB), jnp.float32),
                 jax.ShapeDtypeStruct((B, 1, IB), jnp.float32))
    out_specs = (pl.BlockSpec((1, 1, C), per_b3),
                 pl.BlockSpec((1, 1, IB), per_b3),
                 pl.BlockSpec((1, 1, IB), per_b3),
                 pl.BlockSpec((1, 1, IB), per_b3))

    logits, z, mu, sigma = pl.pallas_call(
        kern,
        out_shape=out_shape,
        grid_spec=pltpu.PrefetchScalarGridSpec(
            num_scalar_prefetch=1,
            grid=(B,),
            in_specs=in_specs,
            out_specs=out_specs,
            scratch_shapes=[pltpu.VMEM((T, N, 3 * H), jnp.float32)]),
        compiler_params=pltpu.CompilerParams(dimension_semantics=("parallel",)),
    )(last_idx, *args)

    return logits[:, 0, :], z[:, 0, :], mu[:, 0, :], sigma[:, 0, :]


# ----------------------------------------------------------------------------
# Deterministic synthetic parameter initialization (fused/stacked layouts)
# ----------------------------------------------------------------------------
def init_model_params(key, *, input_dim, hid, num_heads, max_diffusion_step,
                      num_layers, IB, num_classes):
    keys = jax.random.split(key, 8 + 4 * num_layers)

    def nrm(k, shape, scale=0.1):
        return scale * jax.random.normal(k, shape, dtype=jnp.float32)

    HH = num_heads * hid
    M = num_heads * max_diffusion_step + 1

    p = {
        'gl_W1': nrm(keys[0], (input_dim, HH)),
        'gl_b1': jnp.zeros((1, HH), jnp.float32),
        'gl_b2': jnp.zeros((1, HH), jnp.float32),
    }
    w2 = jnp.zeros((HH, HH), jnp.float32)
    for h in range(num_heads):
        blk = nrm(jax.random.fold_in(keys[1], h), (hid, hid))
        w2 = w2.at[h * hid:(h + 1) * hid, h * hid:(h + 1) * hid].set(blk)
    p['gl_W2_bd'] = w2

    cells = []
    ki = 2
    for layer in range(num_layers):
        fin = input_dim if layer == 0 else hid
        cells.append({
            'wx': nrm(keys[ki + 0], (M * fin, 3 * hid)),     # cols [:2H]=r/u, [2H:]=cand
            'wh_ru': nrm(keys[ki + 1], (M * hid, 2 * hid)),
            'wh_c': nrm(keys[ki + 2], (M * hid, hid)),
            'b_ru': jnp.ones((1, 2 * hid), jnp.float32),     # gate bias_start = 1.0
            'b_c': jnp.zeros((1, hid), jnp.float32),
        })
        ki += 3
    p['cells'] = cells

    p['mu_W'] = nrm(keys[ki + 0], (hid, IB))
    p['mu_b'] = jnp.zeros((1, IB), jnp.float32)
    p['sig_W'] = nrm(keys[ki + 1], (hid, IB))
    p['sig_b'] = jnp.zeros((1, IB), jnp.float32)
    p['cls_W'] = nrm(keys[ki + 2], (IB, num_classes))
    p['cls_b'] = jnp.zeros((1, num_classes), jnp.float32)
    return p


if __name__ == "__main__":
    # small args consistent with the module
    B, T, N, DIN, HID = 2, 6, 8, 8, 32          # batch, seq, num_nodes, input_dim, rnn_units
    MAX_DIFF, LAYERS, NUM_SUP = 2, 2, 2         # max_diffusion_step, num_rnn_layers, heads
    IB, NUM_CLASSES = 16, 5
    TEMPERATURE = 0.1

    key = jax.random.PRNGKey(0)
    k_param, k_x, k_fwd = jax.random.split(key, 3)

    params = init_model_params(k_param, input_dim=DIN, hid=HID, num_heads=NUM_SUP,
                               max_diffusion_step=MAX_DIFF, num_layers=LAYERS,
                               IB=IB, num_classes=NUM_CLASSES)

    x = jax.random.normal(k_x, (B, T, N, DIN), dtype=jnp.float32)
    seq_lengths = jnp.array([T, T - 2], dtype=jnp.int32)
    # `supports` is only used for its time dimension in the torch forward
    supports = jnp.zeros((B, T, N, N), dtype=jnp.float32)

    fwd = jax.jit(functools.partial(dcrnn_forward, max_diffusion_step=MAX_DIFF,
                                    temperature=TEMPERATURE))
    logits, Z, mu, sigma = fwd(params, x, seq_lengths, supports, k_fwd)
    jax.block_until_ready((logits, Z, mu, sigma))

    assert logits.shape == (B, NUM_CLASSES)
    assert Z.shape == (B, IB) and mu.shape == (B, IB) and sigma.shape == (B, IB)
    assert bool(jnp.all(jnp.isfinite(logits)))
    print("KERNEL_OK")
</pallas_src>

<mosaic_0001>
module attributes {stable_mosaic.version = 11 : i64} {
  func.func @dcrnn_fused_kernel(%arg0: i32, %arg1: memref<2xi32, #tpu.memory_space<smem>>, %arg2: memref<1x8x48xf32, #tpu.memory_space<vmem>>, %arg3: memref<1x2x8x8xf32, #tpu.memory_space<vmem>>, %arg4: memref<1x1x16xf32, #tpu.memory_space<vmem>>, %arg5: memref<8x64xf32, #tpu.memory_space<vmem>>, %arg6: memref<1x64xf32, #tpu.memory_space<vmem>>, %arg7: memref<64x64xf32, #tpu.memory_space<vmem>>, %arg8: memref<1x64xf32, #tpu.memory_space<vmem>>, %arg9: memref<40x96xf32, #tpu.memory_space<vmem>>, %arg10: memref<160x64xf32, #tpu.memory_space<vmem>>, %arg11: memref<160x32xf32, #tpu.memory_space<vmem>>, %arg12: memref<1x64xf32, #tpu.memory_space<vmem>>, %arg13: memref<1x32xf32, #tpu.memory_space<vmem>>, %arg14: memref<160x96xf32, #tpu.memory_space<vmem>>, %arg15: memref<160x64xf32, #tpu.memory_space<vmem>>, %arg16: memref<160x32xf32, #tpu.memory_space<vmem>>, %arg17: memref<1x64xf32, #tpu.memory_space<vmem>>, %arg18: memref<1x32xf32, #tpu.memory_space<vmem>>, %arg19: memref<32x16xf32, #tpu.memory_space<vmem>>, %arg20: memref<1x16xf32, #tpu.memory_space<vmem>>, %arg21: memref<32x16xf32, #tpu.memory_space<vmem>>, %arg22: memref<1x16xf32, #tpu.memory_space<vmem>>, %arg23: memref<16x5xf32, #tpu.memory_space<vmem>>, %arg24: memref<1x5xf32, #tpu.memory_space<vmem>>, %arg25: memref<1x1x5xf32, #tpu.memory_space<vmem>>, %arg26: memref<1x1x16xf32, #tpu.memory_space<vmem>>, %arg27: memref<1x1x16xf32, #tpu.memory_space<vmem>>, %arg28: memref<1x1x16xf32, #tpu.memory_space<vmem>>, %arg29: memref<6x8x96xf32, #tpu.memory_space<vmem>>) attributes {dimension_semantics = [#tpu.dimension_semantics<parallel>], iteration_bounds = array<i64: 2>, scalar_prefetch = 1 : i64, scratch_operands = 1 : i64, tpu.core_type = #tpu.core_type<tc>, window_params = [{transform_indices = @transform_0, window_bounds = array<i64: 1, 8, 48>}, {transform_indices = @transform_1, window_bounds = array<i64: 1, 2, 8, 8>}, {transform_indices = @transform_2, window_bounds = array<i64: 1, 1, 16>}, {pipeline_mode = #tpu.pipeline_mode<synchronous>, transform_indices = @transform_3, window_bounds = array<i64: 8, 64>}, {pipeline_mode = #tpu.pipeline_mode<synchronous>, transform_indices = @transform_4, window_bounds = array<i64: 1, 64>}, {pipeline_mode = #tpu.pipeline_mode<synchronous>, transform_indices = @transform_5, window_bounds = array<i64: 64, 64>}, {pipeline_mode = #tpu.pipeline_mode<synchronous>, transform_indices = @transform_6, window_bounds = array<i64: 1, 64>}, {pipeline_mode = #tpu.pipeline_mode<synchronous>, transform_indices = @transform_7, window_bounds = array<i64: 40, 96>}, {pipeline_mode = #tpu.pipeline_mode<synchronous>, transform_indices = @transform_8, window_bounds = array<i64: 160, 64>}, {pipeline_mode = #tpu.pipeline_mode<synchronous>, transform_indices = @transform_9, window_bounds = array<i64: 160, 32>}, {pipeline_mode = #tpu.pipeline_mode<synchronous>, transform_indices = @transform_10, window_bounds = array<i64: 1, 64>}, {pipeline_mode = #tpu.pipeline_mode<synchronous>, transform_indices = @transform_11, window_bounds = array<i64: 1, 32>}, {pipeline_mode = #tpu.pipeline_mode<synchronous>, transform_indices = @transform_12, window_bounds = array<i64: 160, 96>}, {pipeline_mode = #tpu.pipeline_mode<synchronous>, transform_indices = @transform_13, window_bounds = array<i64: 160, 64>}, {pipeline_mode = #tpu.pipeline_mode<synchronous>, transform_indices = @transform_14, window_bounds = array<i64: 160, 32>}, {pipeline_mode = #tpu.pipeline_mode<synchronous>, transform_indices = @transform_15, window_bounds = array<i64: 1, 64>}, {pipeline_mode = #tpu.pipeline_mode<synchronous>, transform_indices = @transform_16, window_bounds = array<i64: 1, 32>}, {pipeline_mode = #tpu.pipeline_mode<synchronous>, transform_indices = @transform_17, window_bounds = array<i64: 32, 16>}, {pipeline_mode = #tpu.pipeline_mode<synchronous>, transform_indices = @transform_18, window_bounds = array<i64: 1, 16>}, {pipeline_mode = #tpu.pipeline_mode<synchronous>, transform_indices = @transform_19, window_bounds = array<i64: 32, 16>}, {pipeline_mode = #tpu.pipeline_mode<synchronous>, transform_indices = @transform_20, window_bounds = array<i64: 1, 16>}, {pipeline_mode = #tpu.pipeline_mode<synchronous>, transform_indices = @transform_21, window_bounds = array<i64: 16, 5>}, {pipeline_mode = #tpu.pipeline_mode<synchronous>, transform_indices = @transform_22, window_bounds = array<i64: 1, 5>}, {transform_indices = @transform_23, window_bounds = array<i64: 1, 1, 5>}, {transform_indices = @transform_24, window_bounds = array<i64: 1, 1, 16>}, {transform_indices = @transform_25, window_bounds = array<i64: 1, 1, 16>}, {transform_indices = @transform_26, window_bounds = array<i64: 1, 1, 16>}]} {
    %c0 = arith.constant 0 : index
    %c0_0 = arith.constant 0 : index
    %c0_1 = arith.constant 0 : index
    %0 = vector.load %arg2[%c0, %c0_0, %c0_1] : memref<1x8x48xf32, #tpu.memory_space<vmem>>, vector<1x8x48xf32>
    %1 = vector.shape_cast %0 : vector<1x8x48xf32> to vector<8x48xf32>
    %2 = vector.extract_strided_slice %1 {offsets = [0, 0], sizes = [8, 8], strides = [1, 1]} : vector<8x48xf32> to vector<8x8xf32>
    %3 = vector.extract_strided_slice %1 {offsets = [0, 8], sizes = [8, 8], strides = [1, 1]} : vector<8x48xf32> to vector<8x8xf32>
    %4 = arith.addf %2, %3 : vector<8x8xf32>
    %5 = vector.extract_strided_slice %1 {offsets = [0, 16], sizes = [8, 8], strides = [1, 1]} : vector<8x48xf32> to vector<8x8xf32>
    %6 = arith.addf %4, %5 : vector<8x8xf32>
    %7 = vector.extract_strided_slice %1 {offsets = [0, 24], sizes = [8, 8], strides = [1, 1]} : vector<8x48xf32> to vector<8x8xf32>
    %8 = arith.addf %6, %7 : vector<8x8xf32>
    %9 = vector.extract_strided_slice %1 {offsets = [0, 32], sizes = [8, 8], strides = [1, 1]} : vector<8x48xf32> to vector<8x8xf32>
    %10 = arith.addf %8, %9 : vector<8x8xf32>
    %11 = vector.extract_strided_slice %1 {offsets = [0, 40], sizes = [8, 8], strides = [1, 1]} : vector<8x48xf32> to vector<8x8xf32>
    %12 = arith.addf %10, %11 : vector<8x8xf32>
    %cst = arith.constant 0.166666672 : f32
    %13 = vector.broadcast %cst : f32 to vector<8x8xf32>
    %14 = arith.mulf %12, %13 : vector<8x8xf32>
    %c0_2 = arith.constant 0 : index
    %c0_3 = arith.constant 0 : index
    %15 = vector.load %arg5[%c0_2, %c0_3] : memref<8x64xf32, #tpu.memory_space<vmem>>, vector<8x64xf32>
    %cst_4 = arith.constant dense<0.000000e+00> : vector<8x64xf32>
    %16 = tpu.matmul %14, %15, %cst_4 {dimension_numbers = #tpu.dot_dimension_numbers<[1], [0], [0], [1], [0, 0, 1, 1], [], []>} : vector<8x8xf32>, vector<8x64xf32>, vector<8x64xf32> -> vector<8x64xf32>
    %c0_5 = arith.constant 0 : index
    %c0_6 = arith.constant 0 : index
    %17 = vector.load %arg6[%c0_5, %c0_6] : memref<1x64xf32, #tpu.memory_space<vmem>>, vector<1x64xf32>
    %18 = vector.broadcast %17 : vector<1x64xf32> to vector<8x64xf32>
    %19 = arith.addf %16, %18 : vector<8x64xf32>
    %cst_7 = arith.constant 0.000000e+00 : f32
    %20 = vector.broadcast %cst_7 : f32 to vector<8x64xf32>
    %21 = arith.maximumf %19, %20 : vector<8x64xf32>
    %c0_8 = arith.constant 0 : index
    %c0_9 = arith.constant 0 : index
    %22 = vector.load %arg7[%c0_8, %c0_9] : memref<64x64xf32, #tpu.memory_space<vmem>>, vector<64x64xf32>
    %cst_10 = arith.constant dense<0.000000e+00> : vector<8x64xf32>
    %23 = tpu.matmul %21, %22, %cst_10 {dimension_numbers = #tpu.dot_dimension_numbers<[1], [0], [0], [1], [0, 0, 1, 1], [], []>} : vector<8x64xf32>, vector<64x64xf32>, vector<8x64xf32> -> vector<8x64xf32>
    %c0_11 = arith.constant 0 : index
    %c0_12 = arith.constant 0 : index
    %24 = vector.load %arg8[%c0_11, %c0_12] : memref<1x64xf32, #tpu.memory_space<vmem>>, vector<1x64xf32>
    %25 = vector.broadcast %24 : vector<1x64xf32> to vector<8x64xf32>
    %26 = arith.addf %23, %25 : vector<8x64xf32>
    %27 = vector.extract_strided_slice %26 {offsets = [0, 0], sizes = [8, 32], strides = [1, 1]} : vector<8x64xf32> to vector<8x32xf32>
    %cst_13 = arith.constant dense<0.000000e+00> : vector<8x8xf32>
    %28 = tpu.matmul %27, %27, %cst_13 {dimension_numbers = #tpu.dot_dimension_numbers<[1], [1], [0], [0], [0, 0, 1, 0], [], []>} : vector<8x32xf32>, vector<8x32xf32>, vector<8x8xf32> -> vector<8x8xf32>
    %c0_14 = arith.constant 0 : index
    %c0_15 = arith.constant 0 : index
    %c0_16 = arith.constant 0 : index
    %c0_17 = arith.constant 0 : index
    %29 = vector.load %arg3[%c0_14, %c0_15, %c0_16, %c0_17] : memref<1x2x8x8xf32, #tpu.memory_space<vmem>>, vector<1x1x8x8xf32>
    %30 = vector.shape_cast %29 : vector<1x1x8x8xf32> to vector<8x8xf32>
    %cst_18 = arith.constant 9.99999996E-13 : f32
    %cst_19 = arith.constant 1.000000e+00 : f32
    %31 = vector.broadcast %cst_18 : f32 to vector<8x8xf32>
    %32 = arith.maximumf %31, %30 : vector<8x8xf32>
    %33 = vector.broadcast %cst_19 : f32 to vector<8x8xf32>
    %34 = arith.minimumf %33, %32 : vector<8x8xf32>
    %cst_20 = arith.constant 9.99999996E-13 : f32
    %35 = vector.broadcast %cst_20 : f32 to vector<8x8xf32>
    %36 = arith.addf %34, %35 : vector<8x8xf32>
    %37 = math.log %36 : vector<8x8xf32>
    %cst_21 = arith.constant 1.000000e+00 : f32
    %38 = vector.broadcast %cst_21 : f32 to vector<8x8xf32>
    %39 = arith.subf %38, %34 : vector<8x8xf32>
    %cst_22 = arith.constant 9.99999996E-13 : f32
    %40 = vector.broadcast %cst_22 : f32 to vector<8x8xf32>
    %41 = arith.addf %39, %40 : vector<8x8xf32>
    %42 = math.log %41 : vector<8x8xf32>
    %43 = arith.subf %37, %42 : vector<8x8xf32>
    %44 = arith.addf %28, %43 : vector<8x8xf32>
    %cst_23 = arith.constant 1.000000e+01 : f32
    %45 = vector.broadcast %cst_23 : f32 to vector<8x8xf32>
    %46 = arith.mulf %44, %45 : vector<8x8xf32>
    %47 = arith.negf %46 : vector<8x8xf32>
    %48 = math.exp %47 : vector<8x8xf32>
    %cst_24 = arith.constant 1.000000e+00 : f32
    %49 = vector.broadcast %cst_24 : f32 to vector<8x8xf32>
    %50 = arith.addf %49, %48 : vector<8x8xf32>
    %51 = arith.divf %49, %50 : vector<8x8xf32>
    %cst_25 = arith.constant dense<0.000000e+00> : vector<8xf32>
    %52 = vector.multi_reduction <add>, %51, %cst_25 [1] : vector<8x8xf32> to vector<8xf32>
    %53 = vector.shape_cast %52 : vector<8xf32> to vector<8x1xf32>
    %cst_26 = arith.constant 1.000000e-10 : f32
    %54 = vector.broadcast %cst_26 : f32 to vector<8x1xf32>
    %55 = arith.addf %53, %54 : vector<8x1xf32>
    %56 = math.rsqrt %55 : vector<8x1xf32>
    %57 = vector.broadcast %56 : vector<8x1xf32> to vector<8x8xf32>
    %58 = arith.mulf %51, %57 : vector<8x8xf32>
    %59 = tpu.transpose %56, [1, 0] : vector<8x1xf32> -> vector<1x8xf32>
    %60 = vector.broadcast %59 : vector<1x8xf32> to vector<8x8xf32>
    %61 = arith.mulf %58, %60 : vector<8x8xf32>
    %62 = vector.extract_strided_slice %26 {offsets = [0, 32], sizes = [8, 32], strides = [1, 1]} : vector<8x64xf32> to vector<8x32xf32>
    %cst_27 = arith.constant dense<0.000000e+00> : vector<8x8xf32>
    %63 = tpu.matmul %62, %62, %cst_27 {dimension_numbers = #tpu.dot_dimension_numbers<[1], [1], [0], [0], [0, 0, 1, 0], [], []>} : vector<8x32xf32>, vector<8x32xf32>, vector<8x8xf32> -> vector<8x8xf32>
    %c0_28 = arith.constant 0 : index
    %c1 = arith.constant 1 : index
    %c0_29 = arith.constant 0 : index
    %c0_30 = arith.constant 0 : index
    %64 = vector.load %arg3[%c0_28, %c1, %c0_29, %c0_30] : memref<1x2x8x8xf32, #tpu.memory_space<vmem>>, vector<1x1x8x8xf32>
    %65 = vector.shape_cast %64 : vector<1x1x8x8xf32> to vector<8x8xf32>
    %cst_31 = arith.constant 9.99999996E-13 : f32
    %cst_32 = arith.constant 1.000000e+00 : f32
    %66 = vector.broadcast %cst_31 : f32 to vector<8x8xf32>
    %67 = arith.maximumf %66, %65 : vector<8x8xf32>
    %68 = vector.broadcast %cst_32 : f32 to vector<8x8xf32>
    %69 = arith.minimumf %68, %67 : vector<8x8xf32>
    %cst_33 = arith.constant 9.99999996E-13 : f32
    %70 = vector.broadcast %cst_33 : f32 to vector<8x8xf32>
    %71 = arith.addf %69, %70 : vector<8x8xf32>
    %72 = math.log %71 : vector<8x8xf32>
    %cst_34 = arith.constant 1.000000e+00 : f32
    %73 = vector.broadcast %cst_34 : f32 to vector<8x8xf32>
    %74 = arith.subf %73, %69 : vector<8x8xf32>
    %cst_35 = arith.constant 9.99999996E-13 : f32
    %75 = vector.broadcast %cst_35 : f32 to vector<8x8xf32>
    %76 = arith.addf %74, %75 : vector<8x8xf32>
    %77 = math.log %76 : vector<8x8xf32>
    %78 = arith.subf %72, %77 : vector<8x8xf32>
    %79 = arith.addf %63, %78 : vector<8x8xf32>
    %cst_36 = arith.constant 1.000000e+01 : f32
    %80 = vector.broadcast %cst_36 : f32 to vector<8x8xf32>
    %81 = arith.mulf %79, %80 : vector<8x8xf32>
    %82 = arith.negf %81 : vector<8x8xf32>
    %83 = math.exp %82 : vector<8x8xf32>
    %cst_37 = arith.constant 1.000000e+00 : f32
    %84 = vector.broadcast %cst_37 : f32 to vector<8x8xf32>
    %85 = arith.addf %84, %83 : vector<8x8xf32>
    %86 = arith.divf %84, %85 : vector<8x8xf32>
    %cst_38 = arith.constant dense<0.000000e+00> : vector<8xf32>
    %87 = vector.multi_reduction <add>, %86, %cst_38 [1] : vector<8x8xf32> to vector<8xf32>
    %88 = vector.shape_cast %87 : vector<8xf32> to vector<8x1xf32>
    %cst_39 = arith.constant 1.000000e-10 : f32
    %89 = vector.broadcast %cst_39 : f32 to vector<8x1xf32>
    %90 = arith.addf %88, %89 : vector<8x1xf32>
    %91 = math.rsqrt %90 : vector<8x1xf32>
    %92 = vector.broadcast %91 : vector<8x1xf32> to vector<8x8xf32>
    %93 = arith.mulf %86, %92 : vector<8x8xf32>
    %94 = tpu.transpose %91, [1, 0] : vector<8x1xf32> -> vector<1x8xf32>
    %95 = vector.broadcast %94 : vector<1x8xf32> to vector<8x8xf32>
    %96 = arith.mulf %93, %95 : vector<8x8xf32>
    %c0_40 = arith.constant 0 : index
    %c0_41 = arith.constant 0 : index
    %97 = vector.load %arg9[%c0_40, %c0_41] : memref<40x96xf32, #tpu.memory_space<vmem>>, vector<40x96xf32>
    %c0_42 = arith.constant 0 : index
    %c0_43 = arith.constant 0 : index
    %98 = vector.load %arg10[%c0_42, %c0_43] : memref<160x64xf32, #tpu.memory_space<vmem>>, vector<160x64xf32>
    %c0_44 = arith.constant 0 : index
    %c0_45 = arith.constant 0 : index
    %99 = vector.load %arg11[%c0_44, %c0_45] : memref<160x32xf32, #tpu.memory_space<vmem>>, vector<160x32xf32>
    %c0_46 = arith.constant 0 : index
    %c0_47 = arith.constant 0 : index
    %100 = vector.load %arg12[%c0_46, %c0_47] : memref<1x64xf32, #tpu.memory_space<vmem>>, vector<1x64xf32>
    %c0_48 = arith.constant 0 : index
    %c0_49 = arith.constant 0 : index
    %101 = vector.load %arg13[%c0_48, %c0_49] : memref<1x32xf32, #tpu.memory_space<vmem>>, vector<1x32xf32>
    %c0_50 = arith.constant 0 : index
    %c0_51 = arith.constant 0 : index
    %102 = vector.load %arg14[%c0_50, %c0_51] : memref<160x96xf32, #tpu.memory_space<vmem>>, vector<160x96xf32>
    %c0_52 = arith.constant 0 : index
    %c0_53 = arith.constant 0 : index
    %103 = vector.load %arg15[%c0_52, %c0_53] : memref<160x64xf32, #tpu.memory_space<vmem>>, vector<160x64xf32>
    %c0_54 = arith.constant 0 : index
    %c0_55 = arith.constant 0 : index
    %104 = vector.load %arg16[%c0_54, %c0_55] : memref<160x32xf32, #tpu.memory_space<vmem>>, vector<160x32xf32>
    %c0_56 = arith.constant 0 : index
    %c0_57 = arith.constant 0 : index
    %105 = vector.load %arg17[%c0_56, %c0_57] : memref<1x64xf32, #tpu.memory_space<vmem>>, vector<1x64xf32>
    %c0_58 = arith.constant 0 : index
    %c0_59 = arith.constant 0 : index
    %106 = vector.load %arg18[%c0_58, %c0_59] : memref<1x32xf32, #tpu.memory_space<vmem>>, vector<1x32xf32>
    %cst_60 = arith.constant dense<0.000000e+00> : vector<8x48xf32>
    %107 = tpu.matmul %61, %1, %cst_60 {dimension_numbers = #tpu.dot_dimension_numbers<[1], [0], [0], [1], [0, 0, 1, 1], [], []>} : vector<8x8xf32>, vector<8x48xf32>, vector<8x48xf32> -> vector<8x48xf32>
    %cst_61 = arith.constant dense<0.000000e+00> : vector<8x48xf32>
    %108 = tpu.matmul %61, %107, %cst_61 {dimension_numbers = #tpu.dot_dimension_numbers<[1], [0], [0], [1], [0, 0, 1, 1], [], []>} : vector<8x8xf32>, vector<8x48xf32>, vector<8x48xf32> -> vector<8x48xf32>
    %cst_62 = arith.constant dense<0.000000e+00> : vector<8x48xf32>
    %109 = tpu.matmul %96, %1, %cst_62 {dimension_numbers = #tpu.dot_dimension_numbers<[1], [0], [0], [1], [0, 0, 1, 1], [], []>} : vector<8x8xf32>, vector<8x48xf32>, vector<8x48xf32> -> vector<8x48xf32>
    %cst_63 = arith.constant dense<0.000000e+00> : vector<8x48xf32>
    %110 = tpu.matmul %96, %109, %cst_63 {dimension_numbers = #tpu.dot_dimension_numbers<[1], [0], [0], [1], [0, 0, 1, 1], [], []>} : vector<8x8xf32>, vector<8x48xf32>, vector<8x48xf32> -> vector<8x48xf32>
    %111 = vector.extract_strided_slice %1 {offsets = [0, 0], sizes = [8, 8], strides = [1, 1]} : vector<8x48xf32> to vector<8x8xf32>
    %112 = vector.extract_strided_slice %97 {offsets = [0, 0], sizes = [8, 96], strides = [1, 1]} : vector<40x96xf32> to vector<8x96xf32>
    %cst_64 = arith.constant dense<0.000000e+00> : vector<8x96xf32>
    %113 = tpu.matmul %111, %112, %cst_64 {dimension_numbers = #tpu.dot_dimension_numbers<[1], [0], [0], [1], [0, 0, 1, 1], [], []>} : vector<8x8xf32>, vector<8x96xf32>, vector<8x96xf32> -> vector<8x96xf32>
    %114 = vector.extract_strided_slice %107 {offsets = [0, 0], sizes = [8, 8], strides = [1, 1]} : vector<8x48xf32> to vector<8x8xf32>
    %115 = vector.extract_strided_slice %97 {offsets = [8, 0], sizes = [8, 96], strides = [1, 1]} : vector<40x96xf32> to vector<8x96xf32>
    %cst_65 = arith.constant dense<0.000000e+00> : vector<8x96xf32>
    %116 = tpu.matmul %114, %115, %cst_65 {dimension_numbers = #tpu.dot_dimension_numbers<[1], [0], [0], [1], [0, 0, 1, 1], [], []>} : vector<8x8xf32>, vector<8x96xf32>, vector<8x96xf32> -> vector<8x96xf32>
    %117 = arith.addf %113, %116 : vector<8x96xf32>
    %118 = vector.extract_strided_slice %108 {offsets = [0, 0], sizes = [8, 8], strides = [1, 1]} : vector<8x48xf32> to vector<8x8xf32>
    %119 = vector.extract_strided_slice %97 {offsets = [16, 0], sizes = [8, 96], strides = [1, 1]} : vector<40x96xf32> to vector<8x96xf32>
    %cst_66 = arith.constant dense<0.000000e+00> : vector<8x96xf32>
    %120 = tpu.matmul %118, %119, %cst_66 {dimension_numbers = #tpu.dot_dimension_numbers<[1], [0], [0], [1], [0, 0, 1, 1], [], []>} : vector<8x8xf32>, vector<8x96xf32>, vector<8x96xf32> -> vector<8x96xf32>
    %121 = arith.addf %117, %120 : vector<8x96xf32>
    %122 = vector.extract_strided_slice %109 {offsets = [0, 0], sizes = [8, 8], strides = [1, 1]} : vector<8x48xf32> to vector<8x8xf32>
    %123 = vector.extract_strided_slice %97 {offsets = [24, 0], sizes = [8, 96], strides = [1, 1]} : vector<40x96xf32> to vector<8x96xf32>
    %cst_67 = arith.constant dense<0.000000e+00> : vector<8x96xf32>
    %124 = tpu.matmul %122, %123, %cst_67 {dimension_numbers = #tpu.dot_dimension_numbers<[1], [0], [0], [1], [0, 0, 1, 1], [], []>} : vector<8x8xf32>, vector<8x96xf32>, vector<8x96xf32> -> vector<8x96xf32>
    %125 = arith.addf %121, %124 : vector<8x96xf32>
    %126 = vector.extract_strided_slice %110 {offsets = [0, 0], sizes = [8, 8], strides = [1, 1]} : vector<8x48xf32> to vector<8x8xf32>
    %127 = vector.extract_strided_slice %97 {offsets = [32, 0], sizes = [8, 96], strides = [1, 1]} : vector<40x96xf32> to vector<8x96xf32>
    %cst_68 = arith.constant dense<0.000000e+00> : vector<8x96xf32>
    %128 = tpu.matmul %126, %127, %cst_68 {dimension_numbers = #tpu.dot_dimension_numbers<[1], [0], [0], [1], [0, 0, 1, 1], [], []>} : vector<8x8xf32>, vector<8x96xf32>, vector<8x96xf32> -> vector<8x96xf32>
    %129 = arith.addf %125, %128 : vector<8x96xf32>
    %c0_69 = arith.constant 0 : index
    %c0_70 = arith.constant 0 : index
    %c0_71 = arith.constant 0 : index
    %130 = vector.load %arg29[%c0_69, %c0_70, %c0_71] : memref<6x8x96xf32, #tpu.memory_space<vmem>>, vector<1x8x96xf32>
    %131 = vector.shape_cast %130 : vector<1x8x96xf32> to vector<8x96xf32>
    %132 = vector.shape_cast %129 : vector<8x96xf32> to vector<1x8x96xf32>
    tpu.vector_store %arg29[%c0_69, %c0_70, %c0_71], %132 {strides = array<i32>} : memref<6x8x96xf32, #tpu.memory_space<vmem>>, vector<1x8x96xf32>,
    %133 = vector.extract_strided_slice %1 {offsets = [0, 8], sizes = [8, 8], strides = [1, 1]} : vector<8x48xf32> to vector<8x8xf32>
    %134 = vector.extract_strided_slice %97 {offsets = [0, 0], sizes = [8, 96], strides = [1, 1]} : vector<40x96xf32> to vector<8x96xf32>
    %cst_72 = arith.constant dense<0.000000e+00> : vector<8x96xf32>
    %135 = tpu.matmul %133, %134, %cst_72 {dimension_numbers = #tpu.dot_dimension_numbers<[1], [0], [0], [1], [0, 0, 1, 1], [], []>} : vector<8x8xf32>, vector<8x96xf32>, vector<8x96xf32> -> vector<8x96xf32>
    %136 = vector.extract_strided_slice %107 {offsets = [0, 8], sizes = [8, 8], strides = [1, 1]} : vector<8x48xf32> to vector<8x8xf32>
    %137 = vector.extract_strided_slice %97 {offsets = [8, 0], sizes = [8, 96], strides = [1, 1]} : vector<40x96xf32> to vector<8x96xf32>
    %cst_73 = arith.constant dense<0.000000e+00> : vector<8x96xf32>
    %138 = tpu.matmul %136, %137, %cst_73 {dimension_numbers = #tpu.dot_dimension_numbers<[1], [0], [0], [1], [0, 0, 1, 1], [], []>} : vector<8x8xf32>, vector<8x96xf32>, vector<8x96xf32> -> vector<8x96xf32>
    %139 = arith.addf %135, %138 : vector<8x96xf32>
    %140 = vector.extract_strided_slice %108 {offsets = [0, 8], sizes = [8, 8], strides = [1, 1]} : vector<8x48xf32> to vector<8x8xf32>
    %141 = vector.extract_strided_slice %97 {offsets = [16, 0], sizes = [8, 96], strides = [1, 1]} : vector<40x96xf32> to vector<8x96xf32>
    %cst_74 = arith.constant dense<0.000000e+00> : vector<8x96xf32>
    %142 = tpu.matmul %140, %141, %cst_74 {dimension_numbers = #tpu.dot_dimension_numbers<[1], [0], [0], [1], [0, 0, 1, 1], [], []>} : vector<8x8xf32>, vector<8x96xf32>, vector<8x96xf32> -> vector<8x96xf32>
    %143 = arith.addf %139, %142 : vector<8x96xf32>
    %144 = vector.extract_strided_slice %109 {offsets = [0, 8], sizes = [8, 8], strides = [1, 1]} : vector<8x48xf32> to vector<8x8xf32>
    %145 = vector.extract_strided_slice %97 {offsets = [24, 0], sizes = [8, 96], strides = [1, 1]} : vector<40x96xf32> to vector<8x96xf32>
    %cst_75 = arith.constant dense<0.000000e+00> : vector<8x96xf32>
    %146 = tpu.matmul %144, %145, %cst_75 {dimension_numbers = #tpu.dot_dimension_numbers<[1], [0], [0], [1], [0, 0, 1, 1], [], []>} : vector<8x8xf32>, vector<8x96xf32>, vector<8x96xf32> -> vector<8x96xf32>
    %147 = arith.addf %143, %146 : vector<8x96xf32>
    %148 = vector.extract_strided_slice %110 {offsets = [0, 8], sizes = [8, 8], strides = [1, 1]} : vector<8x48xf32> to vector<8x8xf32>
    %149 = vector.extract_strided_slice %97 {offsets = [32, 0], sizes = [8, 96], strides = [1, 1]} : vector<40x96xf32> to vector<8x96xf32>
    %cst_76 = arith.constant dense<0.000000e+00> : vector<8x96xf32>
    %150 = tpu.matmul %148, %149, %cst_76 {dimension_numbers = #tpu.dot_dimension_numbers<[1], [0], [0], [1], [0, 0, 1, 1], [], []>} : vector<8x8xf32>, vector<8x96xf32>, vector<8x96xf32> -> vector<8x96xf32>
    %151 = arith.addf %147, %150 : vector<8x96xf32>
    %c1_77 = arith.constant 1 : index
    %c0_78 = arith.constant 0 : index
    %c0_79 = arith.constant 0 : index
    %152 = vector.load %arg29[%c1_77, %c0_78, %c0_79] : memref<6x8x96xf32, #tpu.memory_space<vmem>>, vector<1x8x96xf32>
    %153 = vector.shape_cast %152 : vector<1x8x96xf32> to vector<8x96xf32>
    %154 = vector.shape_cast %151 : vector<8x96xf32> to vector<1x8x96xf32>
    tpu.vector_store %arg29[%c1_77, %c0_78, %c0_79], %154 {strides = array<i32>} : memref<6x8x96xf32, #tpu.memory_space<vmem>>, vector<1x8x96xf32>,
    %155 = vector.extract_strided_slice %1 {offsets = [0, 16], sizes = [8, 8], strides = [1, 1]} : vector<8x48xf32> to vector<8x8xf32>
    %156 = vector.extract_strided_slice %97 {offsets = [0, 0], sizes = [8, 96], strides = [1, 1]} : vector<40x96xf32> to vector<8x96xf32>
    %cst_80 = arith.constant dense<0.000000e+00> : vector<8x96xf32>
    %157 = tpu.matmul %155, %156, %cst_80 {dimension_numbers = #tpu.dot_dimension_numbers<[1], [0], [0], [1], [0, 0, 1, 1], [], []>} : vector<8x8xf32>, vector<8x96xf32>, vector<8x96xf32> -> vector<8x96xf32>
    %158 = vector.extract_strided_slice %107 {offsets = [0, 16], sizes = [8, 8], strides = [1, 1]} : vector<8x48xf32> to vector<8x8xf32>
    %159 = vector.extract_strided_slice %97 {offsets = [8, 0], sizes = [8, 96], strides = [1, 1]} : vector<40x96xf32> to vector<8x96xf32>
    %cst_81 = arith.constant dense<0.000000e+00> : vector<8x96xf32>
    %160 = tpu.matmul %158, %159, %cst_81 {dimension_numbers = #tpu.dot_dimension_numbers<[1], [0], [0], [1], [0, 0, 1, 1], [], []>} : vector<8x8xf32>, vector<8x96xf32>, vector<8x96xf32> -> vector<8x96xf32>
    %161 = arith.addf %157, %160 : vector<8x96xf32>
    %162 = vector.extract_strided_slice %108 {offsets = [0, 16], sizes = [8, 8], strides = [1, 1]} : vector<8x48xf32> to vector<8x8xf32>
    %163 = vector.extract_strided_slice %97 {offsets = [16, 0], sizes = [8, 96], strides = [1, 1]} : vector<40x96xf32> to vector<8x96xf32>
    %cst_82 = arith.constant dense<0.000000e+00> : vector<8x96xf32>
    %164 = tpu.matmul %162, %163, %cst_82 {dimension_numbers = #tpu.dot_dimension_numbers<[1], [0], [0], [1], [0, 0, 1, 1], [], []>} : vector<8x8xf32>, vector<8x96xf32>, vector<8x96xf32> -> vector<8x96xf32>
    %165 = arith.addf %161, %164 : vector<8x96xf32>
    %166 = vector.extract_strided_slice %109 {offsets = [0, 16], sizes = [8, 8], strides = [1, 1]} : vector<8x48xf32> to vector<8x8xf32>
    %167 = vector.extract_strided_slice %97 {offsets = [24, 0], sizes = [8, 96], strides = [1, 1]} : vector<40x96xf32> to vector<8x96xf32>
    %cst_83 = arith.constant dense<0.000000e+00> : vector<8x96xf32>
    %168 = tpu.matmul %166, %167, %cst_83 {dimension_numbers = #tpu.dot_dimension_numbers<[1], [0], [0], [1], [0, 0, 1, 1], [], []>} : vector<8x8xf32>, vector<8x96xf32>, vector<8x96xf32> -> vector<8x96xf32>
    %169 = arith.addf %165, %168 : vector<8x96xf32>
    %170 = vector.extract_strided_slice %110 {offsets = [0, 16], sizes = [8, 8], strides = [1, 1]} : vector<8x48xf32> to vector<8x8xf32>
    %171 = vector.extract_strided_slice %97 {offsets = [32, 0], sizes = [8, 96], strides = [1, 1]} : vector<40x96xf32> to vector<8x96xf32>
    %cst_84 = arith.constant dense<0.000000e+00> : vector<8x96xf32>
    %172 = tpu.matmul %170, %171, %cst_84 {dimension_numbers = #tpu.dot_dimension_numbers<[1], [0], [0], [1], [0, 0, 1, 1], [], []>} : vector<8x8xf32>, vector<8x96xf32>, vector<8x96xf32> -> vector<8x96xf32>
    %173 = arith.addf %169, %172 : vector<8x96xf32>
    %c2 = arith.constant 2 : index
    %c0_85 = arith.constant 0 : index
    %c0_86 = arith.constant 0 : index
    %174 = vector.load %arg29[%c2, %c0_85, %c0_86] : memref<6x8x96xf32, #tpu.memory_space<vmem>>, vector<1x8x96xf32>
    %175 = vector.shape_cast %174 : vector<1x8x96xf32> to vector<8x96xf32>
    %176 = vector.shape_cast %173 : vector<8x96xf32> to vector<1x8x96xf32>
    tpu.vector_store %arg29[%c2, %c0_85, %c0_86], %176 {strides = array<i32>} : memref<6x8x96xf32, #tpu.memory_space<vmem>>, vector<1x8x96xf32>,
    %177 = vector.extract_strided_slice %1 {offsets = [0, 24], sizes = [8, 8], strides = [1, 1]} : vector<8x48xf32> to vector<8x8xf32>
    %178 = vector.extract_strided_slice %97 {offsets = [0, 0], sizes = [8, 96], strides = [1, 1]} : vector<40x96xf32> to vector<8x96xf32>
    %cst_87 = arith.constant dense<0.000000e+00> : vector<8x96xf32>
    %179 = tpu.matmul %177, %178, %cst_87 {dimension_numbers = #tpu.dot_dimension_numbers<[1], [0], [0], [1], [0, 0, 1, 1], [], []>} : vector<8x8xf32>, vector<8x96xf32>, vector<8x96xf32> -> vector<8x96xf32>
    %180 = vector.extract_strided_slice %107 {offsets = [0, 24], sizes = [8, 8], strides = [1, 1]} : vector<8x48xf32> to vector<8x8xf32>
    %181 = vector.extract_strided_slice %97 {offsets = [8, 0], sizes = [8, 96], strides = [1, 1]} : vector<40x96xf32> to vector<8x96xf32>
    %cst_88 = arith.constant dense<0.000000e+00> : vector<8x96xf32>
    %182 = tpu.matmul %180, %181, %cst_88 {dimension_numbers = #tpu.dot_dimension_numbers<[1], [0], [0], [1], [0, 0, 1, 1], [], []>} : vector<8x8xf32>, vector<8x96xf32>, vector<8x96xf32> -> vector<8x96xf32>
    %183 = arith.addf %179, %182 : vector<8x96xf32>
    %184 = vector.extract_strided_slice %108 {offsets = [0, 24], sizes = [8, 8], strides = [1, 1]} : vector<8x48xf32> to vector<8x8xf32>
    %185 = vector.extract_strided_slice %97 {offsets = [16, 0], sizes = [8, 96], strides = [1, 1]} : vector<40x96xf32> to vector<8x96xf32>
    %cst_89 = arith.constant dense<0.000000e+00> : vector<8x96xf32>
    %186 = tpu.matmul %184, %185, %cst_89 {dimension_numbers = #tpu.dot_dimension_numbers<[1], [0], [0], [1], [0, 0, 1, 1], [], []>} : vector<8x8xf32>, vector<8x96xf32>, vector<8x96xf32> -> vector<8x96xf32>
    %187 = arith.addf %183, %186 : vector<8x96xf32>
    %188 = vector.extract_strided_slice %109 {offsets = [0, 24], sizes = [8, 8], strides = [1, 1]} : vector<8x48xf32> to vector<8x8xf32>
    %189 = vector.extract_strided_slice %97 {offsets = [24, 0], sizes = [8, 96], strides = [1, 1]} : vector<40x96xf32> to vector<8x96xf32>
    %cst_90 = arith.constant dense<0.000000e+00> : vector<8x96xf32>
    %190 = tpu.matmul %188, %189, %cst_90 {dimension_numbers = #tpu.dot_dimension_numbers<[1], [0], [0], [1], [0, 0, 1, 1], [], []>} : vector<8x8xf32>, vector<8x96xf32>, vector<8x96xf32> -> vector<8x96xf32>
    %191 = arith.addf %187, %190 : vector<8x96xf32>
    %192 = vector.extract_strided_slice %110 {offsets = [0, 24], sizes = [8, 8], strides = [1, 1]} : vector<8x48xf32> to vector<8x8xf32>
    %193 = vector.extract_strided_slice %97 {offsets = [32, 0], sizes = [8, 96], strides = [1, 1]} : vector<40x96xf32> to vector<8x96xf32>
    %cst_91 = arith.constant dense<0.000000e+00> : vector<8x96xf32>
    %194 = tpu.matmul %192, %193, %cst_91 {dimension_numbers = #tpu.dot_dimension_numbers<[1], [0], [0], [1], [0, 0, 1, 1], [], []>} : vector<8x8xf32>, vector<8x96xf32>, vector<8x96xf32> -> vector<8x96xf32>
    %195 = arith.addf %191, %194 : vector<8x96xf32>
    %c3 = arith.constant 3 : index
    %c0_92 = arith.constant 0 : index
    %c0_93 = arith.constant 0 : index
    %196 = vector.load %arg29[%c3, %c0_92, %c0_93] : memref<6x8x96xf32, #tpu.memory_space<vmem>>, vector<1x8x96xf32>
    %197 = vector.shape_cast %196 : vector<1x8x96xf32> to vector<8x96xf32>
    %198 = vector.shape_cast %195 : vector<8x96xf32> to vector<1x8x96xf32>
    tpu.vector_store %arg29[%c3, %c0_92, %c0_93], %198 {strides = array<i32>} : memref<6x8x96xf32, #tpu.memory_space<vmem>>, vector<1x8x96xf32>,
    %199 = vector.extract_strided_slice %1 {offsets = [0, 32], sizes = [8, 8], strides = [1, 1]} : vector<8x48xf32> to vector<8x8xf32>
    %200 = vector.extract_strided_slice %97 {offsets = [0, 0], sizes = [8, 96], strides = [1, 1]} : vector<40x96xf32> to vector<8x96xf32>
    %cst_94 = arith.constant dense<0.000000e+00> : vector<8x96xf32>
    %201 = tpu.matmul %199, %200, %cst_94 {dimension_numbers = #tpu.dot_dimension_numbers<[1], [0], [0], [1], [0, 0, 1, 1], [], []>} : vector<8x8xf32>, vector<8x96xf32>, vector<8x96xf32> -> vector<8x96xf32>
    %202 = vector.extract_strided_slice %107 {offsets = [0, 32], sizes = [8, 8], strides = [1, 1]} : vector<8x48xf32> to vector<8x8xf32>
    %203 = vector.extract_strided_slice %97 {offsets = [8, 0], sizes = [8, 96], strides = [1, 1]} : vector<40x96xf32> to vector<8x96xf32>
    %cst_95 = arith.constant dense<0.000000e+00> : vector<8x96xf32>
    %204 = tpu.matmul %202, %203, %cst_95 {dimension_numbers = #tpu.dot_dimension_numbers<[1], [0], [0], [1], [0, 0, 1, 1], [], []>} : vector<8x8xf32>, vector<8x96xf32>, vector<8x96xf32> -> vector<8x96xf32>
    %205 = arith.addf %201, %204 : vector<8x96xf32>
    %206 = vector.extract_strided_slice %108 {offsets = [0, 32], sizes = [8, 8], strides = [1, 1]} : vector<8x48xf32> to vector<8x8xf32>
    %207 = vector.extract_strided_slice %97 {offsets = [16, 0], sizes = [8, 96], strides = [1, 1]} : vector<40x96xf32> to vector<8x96xf32>
    %cst_96 = arith.constant dense<0.000000e+00> : vector<8x96xf32>
    %208 = tpu.matmul %206, %207, %cst_96 {dimension_numbers = #tpu.dot_dimension_numbers<[1], [0], [0], [1], [0, 0, 1, 1], [], []>} : vector<8x8xf32>, vector<8x96xf32>, vector<8x96xf32> -> vector<8x96xf32>
    %209 = arith.addf %205, %208 : vector<8x96xf32>
    %210 = vector.extract_strided_slice %109 {offsets = [0, 32], sizes = [8, 8], strides = [1, 1]} : vector<8x48xf32> to vector<8x8xf32>
    %211 = vector.extract_strided_slice %97 {offsets = [24, 0], sizes = [8, 96], strides = [1, 1]} : vector<40x96xf32> to vector<8x96xf32>
    %cst_97 = arith.constant dense<0.000000e+00> : vector<8x96xf32>
    %212 = tpu.matmul %210, %211, %cst_97 {dimension_numbers = #tpu.dot_dimension_numbers<[1], [0], [0], [1], [0, 0, 1, 1], [], []>} : vector<8x8xf32>, vector<8x96xf32>, vector<8x96xf32> -> vector<8x96xf32>
    %213 = arith.addf %209, %212 : vector<8x96xf32>
    %214 = vector.extract_strided_slice %110 {offsets = [0, 32], sizes = [8, 8], strides = [1, 1]} : vector<8x48xf32> to vector<8x8xf32>
    %215 = vector.extract_strided_slice %97 {offsets = [32, 0], sizes = [8, 96], strides = [1, 1]} : vector<40x96xf32> to vector<8x96xf32>
    %cst_98 = arith.constant dense<0.000000e+00> : vector<8x96xf32>
    %216 = tpu.matmul %214, %215, %cst_98 {dimension_numbers = #tpu.dot_dimension_numbers<[1], [0], [0], [1], [0, 0, 1, 1], [], []>} : vector<8x8xf32>, vector<8x96xf32>, vector<8x96xf32> -> vector<8x96xf32>
    %217 = arith.addf %213, %216 : vector<8x96xf32>
    %c4 = arith.constant 4 : index
    %c0_99 = arith.constant 0 : index
    %c0_100 = arith.constant 0 : index
    %218 = vector.load %arg29[%c4, %c0_99, %c0_100] : memref<6x8x96xf32, #tpu.memory_space<vmem>>, vector<1x8x96xf32>
    %219 = vector.shape_cast %218 : vector<1x8x96xf32> to vector<8x96xf32>
    %220 = vector.shape_cast %217 : vector<8x96xf32> to vector<1x8x96xf32>
    tpu.vector_store %arg29[%c4, %c0_99, %c0_100], %220 {strides = array<i32>} : memref<6x8x96xf32, #tpu.memory_space<vmem>>, vector<1x8x96xf32>,
    %221 = vector.extract_strided_slice %1 {offsets = [0, 40], sizes = [8, 8], strides = [1, 1]} : vector<8x48xf32> to vector<8x8xf32>
    %222 = vector.extract_strided_slice %97 {offsets = [0, 0], sizes = [8, 96], strides = [1, 1]} : vector<40x96xf32> to vector<8x96xf32>
    %cst_101 = arith.constant dense<0.000000e+00> : vector<8x96xf32>
    %223 = tpu.matmul %221, %222, %cst_101 {dimension_numbers = #tpu.dot_dimension_numbers<[1], [0], [0], [1], [0, 0, 1, 1], [], []>} : vector<8x8xf32>, vector<8x96xf32>, vector<8x96xf32> -> vector<8x96xf32>
    %224 = vector.extract_strided_slice %107 {offsets = [0, 40], sizes = [8, 8], strides = [1, 1]} : vector<8x48xf32> to vector<8x8xf32>
    %225 = vector.extract_strided_slice %97 {offsets = [8, 0], sizes = [8, 96], strides = [1, 1]} : vector<40x96xf32> to vector<8x96xf32>
    %cst_102 = arith.constant dense<0.000000e+00> : vector<8x96xf32>
    %226 = tpu.matmul %224, %225, %cst_102 {dimension_numbers = #tpu.dot_dimension_numbers<[1], [0], [0], [1], [0, 0, 1, 1], [], []>} : vector<8x8xf32>, vector<8x96xf32>, vector<8x96xf32> -> vector<8x96xf32>
    %227 = arith.addf %223, %226 : vector<8x96xf32>
    %228 = vector.extract_strided_slice %108 {offsets = [0, 40], sizes = [8, 8], strides = [1, 1]} : vector<8x48xf32> to vector<8x8xf32>
    %229 = vector.extract_strided_slice %97 {offsets = [16, 0], sizes = [8, 96], strides = [1, 1]} : vector<40x96xf32> to vector<8x96xf32>
    %cst_103 = arith.constant dense<0.000000e+00> : vector<8x96xf32>
    %230 = tpu.matmul %228, %229, %cst_103 {dimension_numbers = #tpu.dot_dimension_numbers<[1], [0], [0], [1], [0, 0, 1, 1], [], []>} : vector<8x8xf32>, vector<8x96xf32>, vector<8x96xf32> -> vector<8x96xf32>
    %231 = arith.addf %227, %230 : vector<8x96xf32>
    %232 = vector.extract_strided_slice %109 {offsets = [0, 40], sizes = [8, 8], strides = [1, 1]} : vector<8x48xf32> to vector<8x8xf32>
    %233 = vector.extract_strided_slice %97 {offsets = [24, 0], sizes = [8, 96], strides = [1, 1]} : vector<40x96xf32> to vector<8x96xf32>
    %cst_104 = arith.constant dense<0.000000e+00> : vector<8x96xf32>
    %234 = tpu.matmul %232, %233, %cst_104 {dimension_numbers = #tpu.dot_dimension_numbers<[1], [0], [0], [1], [0, 0, 1, 1], [], []>} : vector<8x8xf32>, vector<8x96xf32>, vector<8x96xf32> -> vector<8x96xf32>
    %235 = arith.addf %231, %234 : vector<8x96xf32>
    %236 = vector.extract_strided_slice %110 {offsets = [0, 40], sizes = [8, 8], strides = [1, 1]} : vector<8x48xf32> to vector<8x8xf32>
    %237 = vector.extract_strided_slice %97 {offsets = [32, 0], sizes = [8, 96], strides = [1, 1]} : vector<40x96xf32> to vector<8x96xf32>
    %cst_105 = arith.constant dense<0.000000e+00> : vector<8x96xf32>
    %238 = tpu.matmul %236, %237, %cst_105 {dimension_numbers = #tpu.dot_dimension_numbers<[1], [0], [0], [1], [0, 0, 1, 1], [], []>} : vector<8x8xf32>, vector<8x96xf32>, vector<8x96xf32> -> vector<8x96xf32>
    %239 = arith.addf %235, %238 : vector<8x96xf32>
    %c5 = arith.constant 5 : index
    %c0_106 = arith.constant 0 : index
    %c0_107 = arith.constant 0 : index
    %240 = vector.load %arg29[%c5, %c0_106, %c0_107] : memref<6x8x96xf32, #tpu.memory_space<vmem>>, vector<1x8x96xf32>
    %241 = vector.shape_cast %240 : vector<1x8x96xf32> to vector<8x96xf32>
    %242 = vector.shape_cast %239 : vector<8x96xf32> to vector<1x8x96xf32>
    tpu.vector_store %arg29[%c5, %c0_106, %c0_107], %242 {strides = array<i32>} : memref<6x8x96xf32, #tpu.memory_space<vmem>>, vector<1x8x96xf32>,
    %243 = arith.index_cast %arg0 : i32 to index
    %244 = memref.load %arg1[%243] : memref<2xi32, #tpu.memory_space<smem>>
    %c1_i32 = arith.constant 1 : i32
    %245 = arith.addi %244, %c1_i32 : i32
    %cst_108 = arith.constant 0.000000e+00 : f32
    %246 = vector.broadcast %cst_108 : f32 to vector<8x32xf32>
    %cst_109 = arith.constant 0.000000e+00 : f32
    %247 = vector.broadcast %cst_109 : f32 to vector<8x32xf32>
    %c0_i32 = arith.constant 0 : i32
    %248 = arith.subi %245, %c0_i32 : i32
    %249 = arith.addi %c0_i32, %248 : i32
    %c1_i32_110 = arith.constant 1 : i32
    %250:2 = scf.for %arg30 = %c0_i32 to %249 step %c1_i32_110 iter_args(%arg31 = %246, %arg32 = %247) -> (vector<8x32xf32>, vector<8x32xf32>)  : i32 {
      %293 = arith.index_cast %arg30 : i32 to index
      %c0_146 = arith.constant 0 : index
      %c0_147 = arith.constant 0 : index
      %294 = vector.load %arg29[%293, %c0_146, %c0_147] : memref<6x8x96xf32, #tpu.memory_space<vmem>>, vector<1x8x96xf32>
      %295 = vector.shape_cast %294 : vector<1x8x96xf32> to vector<8x96xf32>
      %296 = vector.extract_strided_slice %295 {offsets = [0, 0], sizes = [8, 64], strides = [1, 1]} : vector<8x96xf32> to vector<8x64xf32>
      %297 = vector.extract_strided_slice %98 {offsets = [0, 0], sizes = [32, 64], strides = [1, 1]} : vector<160x64xf32> to vector<32x64xf32>
      %cst_148 = arith.constant dense<0.000000e+00> : vector<8x64xf32>
      %298 = tpu.matmul %arg31, %297, %cst_148 {dimension_numbers = #tpu.dot_dimension_numbers<[1], [0], [0], [1], [0, 0, 1, 1], [], []>} : vector<8x32xf32>, vector<32x64xf32>, vector<8x64xf32> -> vector<8x64xf32>
      %cst_149 = arith.constant dense<0.000000e+00> : vector<8x32xf32>
      %299 = tpu.matmul %61, %arg31, %cst_149 {dimension_numbers = #tpu.dot_dimension_numbers<[1], [0], [0], [1], [0, 0, 1, 1], [], []>} : vector<8x8xf32>, vector<8x32xf32>, vector<8x32xf32> -> vector<8x32xf32>
      %300 = vector.extract_strided_slice %98 {offsets = [32, 0], sizes = [32, 64], strides = [1, 1]} : vector<160x64xf32> to vector<32x64xf32>
      %cst_150 = arith.constant dense<0.000000e+00> : vector<8x64xf32>
      %301 = tpu.matmul %299, %300, %cst_150 {dimension_numbers = #tpu.dot_dimension_numbers<[1], [0], [0], [1], [0, 0, 1, 1], [], []>} : vector<8x32xf32>, vector<32x64xf32>, vector<8x64xf32> -> vector<8x64xf32>
      %302 = arith.addf %298, %301 : vector<8x64xf32>
      %cst_151 = arith.constant dense<0.000000e+00> : vector<8x32xf32>
      %303 = tpu.matmul %61, %299, %cst_151 {dimension_numbers = #tpu.dot_dimension_numbers<[1], [0], [0], [1], [0, 0, 1, 1], [], []>} : vector<8x8xf32>, vector<8x32xf32>, vector<8x32xf32> -> vector<8x32xf32>
      %304 = vector.extract_strided_slice %98 {offsets = [64, 0], sizes = [32, 64], strides = [1, 1]} : vector<160x64xf32> to vector<32x64xf32>
      %cst_152 = arith.constant dense<0.000000e+00> : vector<8x64xf32>
      %305 = tpu.matmul %303, %304, %cst_152 {dimension_numbers = #tpu.dot_dimension_numbers<[1], [0], [0], [1], [0, 0, 1, 1], [], []>} : vector<8x32xf32>, vector<32x64xf32>, vector<8x64xf32> -> vector<8x64xf32>
      %306 = arith.addf %302, %305 : vector<8x64xf32>
      %cst_153 = arith.constant dense<0.000000e+00> : vector<8x32xf32>
      %307 = tpu.matmul %96, %arg31, %cst_153 {dimension_numbers = #tpu.dot_dimension_numbers<[1], [0], [0], [1], [0, 0, 1, 1], [], []>} : vector<8x8xf32>, vector<8x32xf32>, vector<8x32xf32> -> vector<8x32xf32>
      %308 = vector.extract_strided_slice %98 {offsets = [96, 0], sizes = [32, 64], strides = [1, 1]} : vector<160x64xf32> to vector<32x64xf32>
      %cst_154 = arith.constant dense<0.000000e+00> : vector<8x64xf32>
      %309 = tpu.matmul %307, %308, %cst_154 {dimension_numbers = #tpu.dot_dimension_numbers<[1], [0], [0], [1], [0, 0, 1, 1], [], []>} : vector<8x32xf32>, vector<32x64xf32>, vector<8x64xf32> -> vector<8x64xf32>
      %310 = arith.addf %306, %309 : vector<8x64xf32>
      %cst_155 = arith.constant dense<0.000000e+00> : vector<8x32xf32>
      %311 = tpu.matmul %96, %307, %cst_155 {dimension_numbers = #tpu.dot_dimension_numbers<[1], [0], [0], [1], [0, 0, 1, 1], [], []>} : vector<8x8xf32>, vector<8x32xf32>, vector<8x32xf32> -> vector<8x32xf32>
      %312 = vector.extract_strided_slice %98 {offsets = [128, 0], sizes = [32, 64], strides = [1, 1]} : vector<160x64xf32> to vector<32x64xf32>
      %cst_156 = arith.constant dense<0.000000e+00> : vector<8x64xf32>
      %313 = tpu.matmul %311, %312, %cst_156 {dimension_numbers = #tpu.dot_dimension_numbers<[1], [0], [0], [1], [0, 0, 1, 1], [], []>} : vector<8x32xf32>, vector<32x64xf32>, vector<8x64xf32> -> vector<8x64xf32>
      %314 = arith.addf %310, %313 : vector<8x64xf32>
      %315 = arith.addf %296, %314 : vector<8x64xf32>
      %316 = vector.broadcast %100 : vector<1x64xf32> to vector<8x64xf32>
      %317 = arith.addf %315, %316 : vector<8x64xf32>
      %318 = arith.negf %317 : vector<8x64xf32>
      %319 = math.exp %318 : vector<8x64xf32>
      %cst_157 = arith.constant 1.000000e+00 : f32
      %320 = vector.broadcast %cst_157 : f32 to vector<8x64xf32>
      %321 = arith.addf %320, %319 : vector<8x64xf32>
      %322 = arith.divf %320, %321 : vector<8x64xf32>
      %323 = vector.extract_strided_slice %322 {offsets = [0, 0], sizes = [8, 32], strides = [1, 1]} : vector<8x64xf32> to vector<8x32xf32>
      %324 = vector.extract_strided_slice %322 {offsets = [0, 32], sizes = [8, 32], strides = [1, 1]} : vector<8x64xf32> to vector<8x32xf32>
      %325 = vector.extract_strided_slice %295 {offsets = [0, 64], sizes = [8, 32], strides = [1, 1]} : vector<8x96xf32> to vector<8x32xf32>
      %326 = arith.mulf %323, %arg31 : vector<8x32xf32>
      %327 = vector.extract_strided_slice %99 {offsets = [0, 0], sizes = [32, 32], strides = [1, 1]} : vector<160x32xf32> to vector<32x32xf32>
      %cst_158 = arith.constant dense<0.000000e+00> : vector<8x32xf32>
      %328 = tpu.matmul %326, %327, %cst_158 {dimension_numbers = #tpu.dot_dimension_numbers<[1], [0], [0], [1], [0, 0, 1, 1], [], []>} : vector<8x32xf32>, vector<32x32xf32>, vector<8x32xf32> -> vector<8x32xf32>
      %cst_159 = arith.constant dense<0.000000e+00> : vector<8x32xf32>
      %329 = tpu.matmul %61, %326, %cst_159 {dimension_numbers = #tpu.dot_dimension_numbers<[1], [0], [0], [1], [0, 0, 1, 1], [], []>} : vector<8x8xf32>, vector<8x32xf32>, vector<8x32xf32> -> vector<8x32xf32>
      %330 = vector.extract_strided_slice %99 {offsets = [32, 0], sizes = [32, 32], strides = [1, 1]} : vector<160x32xf32> to vector<32x32xf32>
      %cst_160 = arith.constant dense<0.000000e+00> : vector<8x32xf32>
      %331 = tpu.matmul %329, %330, %cst_160 {dimension_numbers = #tpu.dot_dimension_numbers<[1], [0], [0], [1], [0, 0, 1, 1], [], []>} : vector<8x32xf32>, vector<32x32xf32>, vector<8x32xf32> -> vector<8x32xf32>
      %332 = arith.addf %328, %331 : vector<8x32xf32>
      %cst_161 = arith.constant dense<0.000000e+00> : vector<8x32xf32>
      %333 = tpu.matmul %61, %329, %cst_161 {dimension_numbers = #tpu.dot_dimension_numbers<[1], [0], [0], [1], [0, 0, 1, 1], [], []>} : vector<8x8xf32>, vector<8x32xf32>, vector<8x32xf32> -> vector<8x32xf32>
      %334 = vector.extract_strided_slice %99 {offsets = [64, 0], sizes = [32, 32], strides = [1, 1]} : vector<160x32xf32> to vector<32x32xf32>
      %cst_162 = arith.constant dense<0.000000e+00> : vector<8x32xf32>
      %335 = tpu.matmul %333, %334, %cst_162 {dimension_numbers = #tpu.dot_dimension_numbers<[1], [0], [0], [1], [0, 0, 1, 1], [], []>} : vector<8x32xf32>, vector<32x32xf32>, vector<8x32xf32> -> vector<8x32xf32>
      %336 = arith.addf %332, %335 : vector<8x32xf32>
      %cst_163 = arith.constant dense<0.000000e+00> : vector<8x32xf32>
      %337 = tpu.matmul %96, %326, %cst_163 {dimension_numbers = #tpu.dot_dimension_numbers<[1], [0], [0], [1], [0, 0, 1, 1], [], []>} : vector<8x8xf32>, vector<8x32xf32>, vector<8x32xf32> -> vector<8x32xf32>
      %338 = vector.extract_strided_slice %99 {offsets = [96, 0], sizes = [32, 32], strides = [1, 1]} : vector<160x32xf32> to vector<32x32xf32>
      %cst_164 = arith.constant dense<0.000000e+00> : vector<8x32xf32>
      %339 = tpu.matmul %337, %338, %cst_164 {dimension_numbers = #tpu.dot_dimension_numbers<[1], [0], [0], [1], [0, 0, 1, 1], [], []>} : vector<8x32xf32>, vector<32x32xf32>, vector<8x32xf32> -> vector<8x32xf32>
      %340 = arith.addf %336, %339 : vector<8x32xf32>
      %cst_165 = arith.constant dense<0.000000e+00> : vector<8x32xf32>
      %341 = tpu.matmul %96, %337, %cst_165 {dimension_numbers = #tpu.dot_dimension_numbers<[1], [0], [0], [1], [0, 0, 1, 1], [], []>} : vector<8x8xf32>, vector<8x32xf32>, vector<8x32xf32> -> vector<8x32xf32>
      %342 = vector.extract_strided_slice %99 {offsets = [128, 0], sizes = [32, 32], strides = [1, 1]} : vector<160x32xf32> to vector<32x32xf32>
      %cst_166 = arith.constant dense<0.000000e+00> : vector<8x32xf32>
      %343 = tpu.matmul %341, %342, %cst_166 {dimension_numbers = #tpu.dot_dimension_numbers<[1], [0], [0], [1], [0, 0, 1, 1], [], []>} : vector<8x32xf32>, vector<32x32xf32>, vector<8x32xf32> -> vector<8x32xf32>
      %344 = arith.addf %340, %343 : vector<8x32xf32>
      %345 = arith.addf %325, %344 : vector<8x32xf32>
      %346 = vector.broadcast %101 : vector<1x32xf32> to vector<8x32xf32>
      %347 = arith.addf %345, %346 : vector<8x32xf32>
      %348 = math.tanh %347 : vector<8x32xf32>
      %349 = arith.mulf %324, %arg31 : vector<8x32xf32>
      %cst_167 = arith.constant 1.000000e+00 : f32
      %350 = vector.broadcast %cst_167 : f32 to vector<8x32xf32>
      %351 = arith.subf %350, %324 : vector<8x32xf32>
      %352 = arith.mulf %351, %348 : vector<8x32xf32>
      %353 = arith.addf %349, %352 : vector<8x32xf32>
      %354 = vector.extract_strided_slice %102 {offsets = [0, 0], sizes = [32, 96], strides = [1, 1]} : vector<160x96xf32> to vector<32x96xf32>
      %cst_168 = arith.constant dense<0.000000e+00> : vector<8x96xf32>
      %355 = tpu.matmul %353, %354, %cst_168 {dimension_numbers = #tpu.dot_dimension_numbers<[1], [0], [0], [1], [0, 0, 1, 1], [], []>} : vector<8x32xf32>, vector<32x96xf32>, vector<8x96xf32> -> vector<8x96xf32>
      %cst_169 = arith.constant dense<0.000000e+00> : vector<8x32xf32>
      %356 = tpu.matmul %61, %353, %cst_169 {dimension_numbers = #tpu.dot_dimension_numbers<[1], [0], [0], [1], [0, 0, 1, 1], [], []>} : vector<8x8xf32>, vector<8x32xf32>, vector<8x32xf32> -> vector<8x32xf32>
      %357 = vector.extract_strided_slice %102 {offsets = [32, 0], sizes = [32, 96], strides = [1, 1]} : vector<160x96xf32> to vector<32x96xf32>
      %cst_170 = arith.constant dense<0.000000e+00> : vector<8x96xf32>
      %358 = tpu.matmul %356, %357, %cst_170 {dimension_numbers = #tpu.dot_dimension_numbers<[1], [0], [0], [1], [0, 0, 1, 1], [], []>} : vector<8x32xf32>, vector<32x96xf32>, vector<8x96xf32> -> vector<8x96xf32>
      %359 = arith.addf %355, %358 : vector<8x96xf32>
      %cst_171 = arith.constant dense<0.000000e+00> : vector<8x32xf32>
      %360 = tpu.matmul %61, %356, %cst_171 {dimension_numbers = #tpu.dot_dimension_numbers<[1], [0], [0], [1], [0, 0, 1, 1], [], []>} : vector<8x8xf32>, vector<8x32xf32>, vector<8x32xf32> -> vector<8x32xf32>
      %361 = vector.extract_strided_slice %102 {offsets = [64, 0], sizes = [32, 96], strides = [1, 1]} : vector<160x96xf32> to vector<32x96xf32>
      %cst_172 = arith.constant dense<0.000000e+00> : vector<8x96xf32>
      %362 = tpu.matmul %360, %361, %cst_172 {dimension_numbers = #tpu.dot_dimension_numbers<[1], [0], [0], [1], [0, 0, 1, 1], [], []>} : vector<8x32xf32>, vector<32x96xf32>, vector<8x96xf32> -> vector<8x96xf32>
      %363 = arith.addf %359, %362 : vector<8x96xf32>
      %cst_173 = arith.constant dense<0.000000e+00> : vector<8x32xf32>
      %364 = tpu.matmul %96, %353, %cst_173 {dimension_numbers = #tpu.dot_dimension_numbers<[1], [0], [0], [1], [0, 0, 1, 1], [], []>} : vector<8x8xf32>, vector<8x32xf32>, vector<8x32xf32> -> vector<8x32xf32>
      %365 = vector.extract_strided_slice %102 {offsets = [96, 0], sizes = [32, 96], strides = [1, 1]} : vector<160x96xf32> to vector<32x96xf32>
      %cst_174 = arith.constant dense<0.000000e+00> : vector<8x96xf32>
      %366 = tpu.matmul %364, %365, %cst_174 {dimension_numbers = #tpu.dot_dimension_numbers<[1], [0], [0], [1], [0, 0, 1, 1], [], []>} : vector<8x32xf32>, vector<32x96xf32>, vector<8x96xf32> -> vector<8x96xf32>
      %367 = arith.addf %363, %366 : vector<8x96xf32>
      %cst_175 = arith.constant dense<0.000000e+00> : vector<8x32xf32>
      %368 = tpu.matmul %96, %364, %cst_175 {dimension_numbers = #tpu.dot_dimension_numbers<[1], [0], [0], [1], [0, 0, 1, 1], [], []>} : vector<8x8xf32>, vector<8x32xf32>, vector<8x32xf32> -> vector<8x32xf32>
      %369 = vector.extract_strided_slice %102 {offsets = [128, 0], sizes = [32, 96], strides = [1, 1]} : vector<160x96xf32> to vector<32x96xf32>
      %cst_176 = arith.constant dense<0.000000e+00> : vector<8x96xf32>
      %370 = tpu.matmul %368, %369, %cst_176 {dimension_numbers = #tpu.dot_dimension_numbers<[1], [0], [0], [1], [0, 0, 1, 1], [], []>} : vector<8x32xf32>, vector<32x96xf32>, vector<8x96xf32> -> vector<8x96xf32>
      %371 = arith.addf %367, %370 : vector<8x96xf32>
      %372 = vector.extract_strided_slice %371 {offsets = [0, 0], sizes = [8, 64], strides = [1, 1]} : vector<8x96xf32> to vector<8x64xf32>
      %373 = vector.extract_strided_slice %103 {offsets = [0, 0], sizes = [32, 64], strides = [1, 1]} : vector<160x64xf32> to vector<32x64xf32>
      %cst_177 = arith.constant dense<0.000000e+00> : vector<8x64xf32>
      %374 = tpu.matmul %arg32, %373, %cst_177 {dimension_numbers = #tpu.dot_dimension_numbers<[1], [0], [0], [1], [0, 0, 1, 1], [], []>} : vector<8x32xf32>, vector<32x64xf32>, vector<8x64xf32> -> vector<8x64xf32>
      %cst_178 = arith.constant dense<0.000000e+00> : vector<8x32xf32>
      %375 = tpu.matmul %61, %arg32, %cst_178 {dimension_numbers = #tpu.dot_dimension_numbers<[1], [0], [0], [1], [0, 0, 1, 1], [], []>} : vector<8x8xf32>, vector<8x32xf32>, vector<8x32xf32> -> vector<8x32xf32>
      %376 = vector.extract_strided_slice %103 {offsets = [32, 0], sizes = [32, 64], strides = [1, 1]} : vector<160x64xf32> to vector<32x64xf32>
      %cst_179 = arith.constant dense<0.000000e+00> : vector<8x64xf32>
      %377 = tpu.matmul %375, %376, %cst_179 {dimension_numbers = #tpu.dot_dimension_numbers<[1], [0], [0], [1], [0, 0, 1, 1], [], []>} : vector<8x32xf32>, vector<32x64xf32>, vector<8x64xf32> -> vector<8x64xf32>
      %378 = arith.addf %374, %377 : vector<8x64xf32>
      %cst_180 = arith.constant dense<0.000000e+00> : vector<8x32xf32>
      %379 = tpu.matmul %61, %375, %cst_180 {dimension_numbers = #tpu.dot_dimension_numbers<[1], [0], [0], [1], [0, 0, 1, 1], [], []>} : vector<8x8xf32>, vector<8x32xf32>, vector<8x32xf32> -> vector<8x32xf32>
      %380 = vector.extract_strided_slice %103 {offsets = [64, 0], sizes = [32, 64], strides = [1, 1]} : vector<160x64xf32> to vector<32x64xf32>
      %cst_181 = arith.constant dense<0.000000e+00> : vector<8x64xf32>
      %381 = tpu.matmul %379, %380, %cst_181 {dimension_numbers = #tpu.dot_dimension_numbers<[1], [0], [0], [1], [0, 0, 1, 1], [], []>} : vector<8x32xf32>, vector<32x64xf32>, vector<8x64xf32> -> vector<8x64xf32>
      %382 = arith.addf %378, %381 : vector<8x64xf32>
      %cst_182 = arith.constant dense<0.000000e+00> : vector<8x32xf32>
      %383 = tpu.matmul %96, %arg32, %cst_182 {dimension_numbers = #tpu.dot_dimension_numbers<[1], [0], [0], [1], [0, 0, 1, 1], [], []>} : vector<8x8xf32>, vector<8x32xf32>, vector<8x32xf32> -> vector<8x32xf32>
      %384 = vector.extract_strided_slice %103 {offsets = [96, 0], sizes = [32, 64], strides = [1, 1]} : vector<160x64xf32> to vector<32x64xf32>
      %cst_183 = arith.constant dense<0.000000e+00> : vector<8x64xf32>
      %385 = tpu.matmul %383, %384, %cst_183 {dimension_numbers = #tpu.dot_dimension_numbers<[1], [0], [0], [1], [0, 0, 1, 1], [], []>} : vector<8x32xf32>, vector<32x64xf32>, vector<8x64xf32> -> vector<8x64xf32>
      %386 = arith.addf %382, %385 : vector<8x64xf32>
      %cst_184 = arith.constant dense<0.000000e+00> : vector<8x32xf32>
      %387 = tpu.matmul %96, %383, %cst_184 {dimension_numbers = #tpu.dot_dimension_numbers<[1], [0], [0], [1], [0, 0, 1, 1], [], []>} : vector<8x8xf32>, vector<8x32xf32>, vector<8x32xf32> -> vector<8x32xf32>
      %388 = vector.extract_strided_slice %103 {offsets = [128, 0], sizes = [32, 64], strides = [1, 1]} : vector<160x64xf32> to vector<32x64xf32>
      %cst_185 = arith.constant dense<0.000000e+00> : vector<8x64xf32>
      %389 = tpu.matmul %387, %388, %cst_185 {dimension_numbers = #tpu.dot_dimension_numbers<[1], [0], [0], [1], [0, 0, 1, 1], [], []>} : vector<8x32xf32>, vector<32x64xf32>, vector<8x64xf32> -> vector<8x64xf32>
      %390 = arith.addf %386, %389 : vector<8x64xf32>
      %391 = arith.addf %372, %390 : vector<8x64xf32>
      %392 = vector.broadcast %105 : vector<1x64xf32> to vector<8x64xf32>
      %393 = arith.addf %391, %392 : vector<8x64xf32>
      %394 = arith.negf %393 : vector<8x64xf32>
      %395 = math.exp %394 : vector<8x64xf32>
      %cst_186 = arith.constant 1.000000e+00 : f32
      %396 = vector.broadcast %cst_186 : f32 to vector<8x64xf32>
      %397 = arith.addf %396, %395 : vector<8x64xf32>
      %398 = arith.divf %396, %397 : vector<8x64xf32>
      %399 = vector.extract_strided_slice %398 {offsets = [0, 0], sizes = [8, 32], strides = [1, 1]} : vector<8x64xf32> to vector<8x32xf32>
      %400 = vector.extract_strided_slice %398 {offsets = [0, 32], sizes = [8, 32], strides = [1, 1]} : vector<8x64xf32> to vector<8x32xf32>
      %401 = vector.extract_strided_slice %371 {offsets = [0, 64], sizes = [8, 32], strides = [1, 1]} : vector<8x96xf32> to vector<8x32xf32>
      %402 = arith.mulf %399, %arg32 : vector<8x32xf32>
      %403 = vector.extract_strided_slice %104 {offsets = [0, 0], sizes = [32, 32], strides = [1, 1]} : vector<160x32xf32> to vector<32x32xf32>
      %cst_187 = arith.constant dense<0.000000e+00> : vector<8x32xf32>
      %404 = tpu.matmul %402, %403, %cst_187 {dimension_numbers = #tpu.dot_dimension_numbers<[1], [0], [0], [1], [0, 0, 1, 1], [], []>} : vector<8x32xf32>, vector<32x32xf32>, vector<8x32xf32> -> vector<8x32xf32>
      %cst_188 = arith.constant dense<0.000000e+00> : vector<8x32xf32>
      %405 = tpu.matmul %61, %402, %cst_188 {dimension_numbers = #tpu.dot_dimension_numbers<[1], [0], [0], [1], [0, 0, 1, 1], [], []>} : vector<8x8xf32>, vector<8x32xf32>, vector<8x32xf32> -> vector<8x32xf32>
      %406 = vector.extract_strided_slice %104 {offsets = [32, 0], sizes = [32, 32], strides = [1, 1]} : vector<160x32xf32> to vector<32x32xf32>
      %cst_189 = arith.constant dense<0.000000e+00> : vector<8x32xf32>
      %407 = tpu.matmul %405, %406, %cst_189 {dimension_numbers = #tpu.dot_dimension_numbers<[1], [0], [0], [1], [0, 0, 1, 1], [], []>} : vector<8x32xf32>, vector<32x32xf32>, vector<8x32xf32> -> vector<8x32xf32>
      %408 = arith.addf %404, %407 : vector<8x32xf32>
      %cst_190 = arith.constant dense<0.000000e+00> : vector<8x32xf32>
      %409 = tpu.matmul %61, %405, %cst_190 {dimension_numbers = #tpu.dot_dimension_numbers<[1], [0], [0], [1], [0, 0, 1, 1], [], []>} : vector<8x8xf32>, vector<8x32xf32>, vector<8x32xf32> -> vector<8x32xf32>
      %410 = vector.extract_strided_slice %104 {offsets = [64, 0], sizes = [32, 32], strides = [1, 1]} : vector<160x32xf32> to vector<32x32xf32>
      %cst_191 = arith.constant dense<0.000000e+00> : vector<8x32xf32>
      %411 = tpu.matmul %409, %410, %cst_191 {dimension_numbers = #tpu.dot_dimension_numbers<[1], [0], [0], [1], [0, 0, 1, 1], [], []>} : vector<8x32xf32>, vector<32x32xf32>, vector<8x32xf32> -> vector<8x32xf32>
      %412 = arith.addf %408, %411 : vector<8x32xf32>
      %cst_192 = arith.constant dense<0.000000e+00> : vector<8x32xf32>
      %413 = tpu.matmul %96, %402, %cst_192 {dimension_numbers = #tpu.dot_dimension_numbers<[1], [0], [0], [1], [0, 0, 1, 1], [], []>} : vector<8x8xf32>, vector<8x32xf32>, vector<8x32xf32> -> vector<8x32xf32>
      %414 = vector.extract_strided_slice %104 {offsets = [96, 0], sizes = [32, 32], strides = [1, 1]} : vector<160x32xf32> to vector<32x32xf32>
      %cst_193 = arith.constant dense<0.000000e+00> : vector<8x32xf32>
      %415 = tpu.matmul %413, %414, %cst_193 {dimension_numbers = #tpu.dot_dimension_numbers<[1], [0], [0], [1], [0, 0, 1, 1], [], []>} : vector<8x32xf32>, vector<32x32xf32>, vector<8x32xf32> -> vector<8x32xf32>
      %416 = arith.addf %412, %415 : vector<8x32xf32>
      %cst_194 = arith.constant dense<0.000000e+00> : vector<8x32xf32>
      %417 = tpu.matmul %96, %413, %cst_194 {dimension_numbers = #tpu.dot_dimension_numbers<[1], [0], [0], [1], [0, 0, 1, 1], [], []>} : vector<8x8xf32>, vector<8x32xf32>, vector<8x32xf32> -> vector<8x32xf32>
      %418 = vector.extract_strided_slice %104 {offsets = [128, 0], sizes = [32, 32], strides = [1, 1]} : vector<160x32xf32> to vector<32x32xf32>
      %cst_195 = arith.constant dense<0.000000e+00> : vector<8x32xf32>
      %419 = tpu.matmul %417, %418, %cst_195 {dimension_numbers = #tpu.dot_dimension_numbers<[1], [0], [0], [1], [0, 0, 1, 1], [], []>} : vector<8x32xf32>, vector<32x32xf32>, vector<8x32xf32> -> vector<8x32xf32>
      %420 = arith.addf %416, %419 : vector<8x32xf32>
      %421 = arith.addf %401, %420 : vector<8x32xf32>
      %422 = vector.broadcast %106 : vector<1x32xf32> to vector<8x32xf32>
      %423 = arith.addf %421, %422 : vector<8x32xf32>
      %424 = math.tanh %423 : vector<8x32xf32>
      %425 = arith.mulf %400, %arg32 : vector<8x32xf32>
      %cst_196 = arith.constant 1.000000e+00 : f32
      %426 = vector.broadcast %cst_196 : f32 to vector<8x32xf32>
      %427 = arith.subf %426, %400 : vector<8x32xf32>
      %428 = arith.mulf %427, %424 : vector<8x32xf32>
      %429 = arith.addf %425, %428 : vector<8x32xf32>
      scf.yield %353, %429 : vector<8x32xf32>, vector<8x32xf32>
    }
    %cst_111 = arith.constant dense<0xFF800000> : vector<32xf32>
    %251 = vector.multi_reduction <maximumf>, %250#1, %cst_111 [0] : vector<8x32xf32> to vector<32xf32>
    %252 = vector.shape_cast %251 : vector<32xf32> to vector<1x32xf32>
    %c0_112 = arith.constant 0 : index
    %c0_113 = arith.constant 0 : index
    %253 = vector.load %arg19[%c0_112, %c0_113] : memref<32x16xf32, #tpu.memory_space<vmem>>, vector<32x16xf32>
    %cst_114 = arith.constant dense<0.000000e+00> : vector<1x16xf32>
    %254 = tpu.matmul %252, %253, %cst_114 {dimension_numbers = #tpu.dot_dimension_numbers<[1], [0], [0], [1], [0, 0, 1, 1], [], []>} : vector<1x32xf32>, vector<32x16xf32>, vector<1x16xf32> -> vector<1x16xf32>
    %c0_115 = arith.constant 0 : index
    %c0_116 = arith.constant 0 : index
    %255 = vector.load %arg20[%c0_115, %c0_116] : memref<1x16xf32, #tpu.memory_space<vmem>>, vector<1x16xf32>
    %256 = arith.addf %254, %255 : vector<1x16xf32>
    %c0_117 = arith.constant 0 : index
    %c0_118 = arith.constant 0 : index
    %257 = vector.load %arg21[%c0_117, %c0_118] : memref<32x16xf32, #tpu.memory_space<vmem>>, vector<32x16xf32>
    %cst_119 = arith.constant dense<0.000000e+00> : vector<1x16xf32>
    %258 = tpu.matmul %252, %257, %cst_119 {dimension_numbers = #tpu.dot_dimension_numbers<[1], [0], [0], [1], [0, 0, 1, 1], [], []>} : vector<1x32xf32>, vector<32x16xf32>, vector<1x16xf32> -> vector<1x16xf32>
    %c0_120 = arith.constant 0 : index
    %c0_121 = arith.constant 0 : index
    %259 = vector.load %arg22[%c0_120, %c0_121] : memref<1x16xf32, #tpu.memory_space<vmem>>, vector<1x16xf32>
    %260 = arith.addf %258, %259 : vector<1x16xf32>
    %cst_122 = arith.constant 0.000000e+00 : f32
    %261 = vector.broadcast %cst_122 : f32 to vector<1x16xf32>
    %262 = arith.maximumf %260, %261 : vector<1x16xf32>
    %263 = math.absf %260 : vector<1x16xf32>
    %cst_123 = arith.constant 0.000000e+00 : f32
    %264 = vector.broadcast %cst_123 : f32 to vector<1x16xf32>
    %265 = arith.subf %264, %263 : vector<1x16xf32>
    %266 = math.exp %265 : vector<1x16xf32>
    %cst_124 = arith.constant 1.000000e+00 : f32
    %267 = vector.broadcast %cst_124 : f32 to vector<1x16xf32>
    %268 = arith.addf %267, %266 : vector<1x16xf32>
    %269 = math.log %268 : vector<1x16xf32>
    %270 = arith.addf %262, %269 : vector<1x16xf32>
    %c0_125 = arith.constant 0 : index
    %c0_126 = arith.constant 0 : index
    %c0_127 = arith.constant 0 : index
    %271 = vector.load %arg4[%c0_125, %c0_126, %c0_127] : memref<1x1x16xf32, #tpu.memory_space<vmem>>, vector<1x1x16xf32>
    %272 = vector.shape_cast %271 : vector<1x1x16xf32> to vector<1x16xf32>
    %273 = arith.mulf %270, %272 : vector<1x16xf32>
    %274 = arith.addf %256, %273 : vector<1x16xf32>
    %cst_128 = arith.constant 0.000000e+00 : f32
    %275 = vector.broadcast %cst_128 : f32 to vector<1x16xf32>
    %276 = arith.maximumf %274, %275 : vector<1x16xf32>
    %c0_129 = arith.constant 0 : index
    %c0_130 = arith.constant 0 : index
    %277 = vector.load %arg23[%c0_129, %c0_130] : memref<16x5xf32, #tpu.memory_space<vmem>>, vector<16x5xf32>
    %cst_131 = arith.constant dense<0.000000e+00> : vector<1x5xf32>
    %278 = tpu.matmul %276, %277, %cst_131 {dimension_numbers = #tpu.dot_dimension_numbers<[1], [0], [0], [1], [0, 0, 1, 1], [], []>} : vector<1x16xf32>, vector<16x5xf32>, vector<1x5xf32> -> vector<1x5xf32>
    %c0_132 = arith.constant 0 : index
    %c0_133 = arith.constant 0 : index
    %279 = vector.load %arg24[%c0_132, %c0_133] : memref<1x5xf32, #tpu.memory_space<vmem>>, vector<1x5xf32>
    %280 = arith.addf %278, %279 : vector<1x5xf32>
    %c0_134 = arith.constant 0 : index
    %c0_135 = arith.constant 0 : index
    %c0_136 = arith.constant 0 : index
    %281 = vector.load %arg25[%c0_134, %c0_135, %c0_136] : memref<1x1x5xf32, #tpu.memory_space<vmem>>, vector<1x1x5xf32>
    %282 = vector.shape_cast %281 : vector<1x1x5xf32> to vector<1x5xf32>
    %283 = vector.shape_cast %280 : vector<1x5xf32> to vector<1x1x5xf32>
    tpu.vector_store %arg25[%c0_134, %c0_135, %c0_136], %283 {strides = array<i32>} : memref<1x1x5xf32, #tpu.memory_space<vmem>>, vector<1x1x5xf32>,
    %c0_137 = arith.constant 0 : index
    %c0_138 = arith.constant 0 : index
    %c0_139 = arith.constant 0 : index
    %284 = vector.load %arg26[%c0_137, %c0_138, %c0_139] : memref<1x1x16xf32, #tpu.memory_space<vmem>>, vector<1x1x16xf32>
    %285 = vector.shape_cast %284 : vector<1x1x16xf32> to vector<1x16xf32>
    %286 = vector.shape_cast %274 : vector<1x16xf32> to vector<1x1x16xf32>
    tpu.vector_store %arg26[%c0_137, %c0_138, %c0_139], %286 {strides = array<i32>} : memref<1x1x16xf32, #tpu.memory_space<vmem>>, vector<1x1x16xf32>,
    %c0_140 = arith.constant 0 : index
    %c0_141 = arith.constant 0 : index
    %c0_142 = arith.constant 0 : index
    %287 = vector.load %arg27[%c0_140, %c0_141, %c0_142] : memref<1x1x16xf32, #tpu.memory_space<vmem>>, vector<1x1x16xf32>
    %288 = vector.shape_cast %287 : vector<1x1x16xf32> to vector<1x16xf32>
    %289 = vector.shape_cast %256 : vector<1x16xf32> to vector<1x1x16xf32>
    tpu.vector_store %arg27[%c0_140, %c0_141, %c0_142], %289 {strides = array<i32>} : memref<1x1x16xf32, #tpu.memory_space<vmem>>, vector<1x1x16xf32>,
    %c0_143 = arith.constant 0 : index
    %c0_144 = arith.constant 0 : index
    %c0_145 = arith.constant 0 : index
    %290 = vector.load %arg28[%c0_143, %c0_144, %c0_145] : memref<1x1x16xf32, #tpu.memory_space<vmem>>, vector<1x1x16xf32>
    %291 = vector.shape_cast %290 : vector<1x1x16xf32> to vector<1x16xf32>
    %292 = vector.shape_cast %270 : vector<1x16xf32> to vector<1x1x16xf32>
    tpu.vector_store %arg28[%c0_143, %c0_144, %c0_145], %292 {strides = array<i32>} : memref<1x1x16xf32, #tpu.memory_space<vmem>>, vector<1x1x16xf32>,
    return
  }
  func.func @transform_0(%arg0: i32, %arg1: memref<2xi32, #tpu.memory_space<smem>>) -> (i32, i32, i32) {
    %c0_i32 = arith.constant 0 : i32
    %c0_i32_0 = arith.constant 0 : i32
    %c0_i32_1 = arith.constant 0 : i32
    return %arg0, %c0_i32, %c0_i32_0 : i32, i32, i32
  }
  func.func @transform_1(%arg0: i32, %arg1: memref<2xi32, #tpu.memory_space<smem>>) -> (i32, i32, i32, i32) {
    %c0_i32 = arith.constant 0 : i32
    %c0_i32_0 = arith.constant 0 : i32
    %c0_i32_1 = arith.constant 0 : i32
    %c0_i32_2 = arith.constant 0 : i32
    return %arg0, %c0_i32, %c0_i32_0, %c0_i32_1 : i32, i32, i32, i32
  }
  func.func @transform_2(%arg0: i32, %arg1: memref<2xi32, #tpu.memory_space<smem>>) -> (i32, i32, i32) {
    %c0_i32 = arith.constant 0 : i32
    %c0_i32_0 = arith.constant 0 : i32
    %c0_i32_1 = arith.constant 0 : i32
    return %arg0, %c0_i32, %c0_i32_0 : i32, i32, i32
  }
  func.func @transform_3(%arg0: i32, %arg1: memref<2xi32, #tpu.memory_space<smem>>) -> (i32, i32) {
    %c0_i32 = arith.constant 0 : i32
    %c0_i32_0 = arith.constant 0 : i32
    %c0_i32_1 = arith.constant 0 : i32
    return %c0_i32, %c0_i32_0 : i32, i32
  }
  func.func @transform_4(%arg0: i32, %arg1: memref<2xi32, #tpu.memory_space<smem>>) -> (i32, i32) {
    %c0_i32 = arith.constant 0 : i32
    %c0_i32_0 = arith.constant 0 : i32
    %c0_i32_1 = arith.constant 0 : i32
    return %c0_i32, %c0_i32_0 : i32, i32
  }
  func.func @transform_5(%arg0: i32, %arg1: memref<2xi32, #tpu.memory_space<smem>>) -> (i32, i32) {
    %c0_i32 = arith.constant 0 : i32
    %c0_i32_0 = arith.constant 0 : i32
    %c0_i32_1 = arith.constant 0 : i32
    return %c0_i32, %c0_i32_0 : i32, i32
  }
  func.func @transform_6(%arg0: i32, %arg1: memref<2xi32, #tpu.memory_space<smem>>) -> (i32, i32) {
    %c0_i32 = arith.constant 0 : i32
    %c0_i32_0 = arith.constant 0 : i32
    %c0_i32_1 = arith.constant 0 : i32
    return %c0_i32, %c0_i32_0 : i32, i32
  }
  func.func @transform_7(%arg0: i32, %arg1: memref<2xi32, #tpu.memory_space<smem>>) -> (i32, i32) {
    %c0_i32 = arith.constant 0 : i32
    %c0_i32_0 = arith.constant 0 : i32
    %c0_i32_1 = arith.constant 0 : i32
    return %c0_i32, %c0_i32_0 : i32, i32
  }
  func.func @transform_8(%arg0: i32, %arg1: memref<2xi32, #tpu.memory_space<smem>>) -> (i32, i32) {
    %c0_i32 = arith.constant 0 : i32
    %c0_i32_0 = arith.constant 0 : i32
    %c0_i32_1 = arith.constant 0 : i32
    return %c0_i32, %c0_i32_0 : i32, i32
  }
  func.func @transform_9(%arg0: i32, %arg1: memref<2xi32, #tpu.memory_space<smem>>) -> (i32, i32) {
    %c0_i32 = arith.constant 0 : i32
    %c0_i32_0 = arith.constant 0 : i32
    %c0_i32_1 = arith.constant 0 : i32
    return %c0_i32, %c0_i32_0 : i32, i32
  }
  func.func @transform_10(%arg0: i32, %arg1: memref<2xi32, #tpu.memory_space<smem>>) -> (i32, i32) {
    %c0_i32 = arith.constant 0 : i32
    %c0_i32_0 = arith.constant 0 : i32
    %c0_i32_1 = arith.constant 0 : i32
    return %c0_i32, %c0_i32_0 : i32, i32
  }
  func.func @transform_11(%arg0: i32, %arg1: memref<2xi32, #tpu.memory_space<smem>>) -> (i32, i32) {
    %c0_i32 = arith.constant 0 : i32
    %c0_i32_0 = arith.constant 0 : i32
    %c0_i32_1 = arith.constant 0 : i32
    return %c0_i32, %c0_i32_0 : i32, i32
  }
  func.func @transform_12(%arg0: i32, %arg1: memref<2xi32, #tpu.memory_space<smem>>) -> (i32, i32) {
    %c0_i32 = arith.constant 0 : i32
    %c0_i32_0 = arith.constant 0 : i32
    %c0_i32_1 = arith.constant 0 : i32
    return %c0_i32, %c0_i32_0 : i32, i32
  }
  func.func @transform_13(%arg0: i32, %arg1: memref<2xi32, #tpu.memory_space<smem>>) -> (i32, i32) {
    %c0_i32 = arith.constant 0 : i32
    %c0_i32_0 = arith.constant 0 : i32
    %c0_i32_1 = arith.constant 0 : i32
    return %c0_i32, %c0_i32_0 : i32, i32
  }
  func.func @transform_14(%arg0: i32, %arg1: memref<2xi32, #tpu.memory_space<smem>>) -> (i32, i32) {
    %c0_i32 = arith.constant 0 : i32
    %c0_i32_0 = arith.constant 0 : i32
    %c0_i32_1 = arith.constant 0 : i32
    return %c0_i32, %c0_i32_0 : i32, i32
  }
  func.func @transform_15(%arg0: i32, %arg1: memref<2xi32, #tpu.memory_space<smem>>) -> (i32, i32) {
    %c0_i32 = arith.constant 0 : i32
    %c0_i32_0 = arith.constant 0 : i32
    %c0_i32_1 = arith.constant 0 : i32
    return %c0_i32, %c0_i32_0 : i32, i32
  }
  func.func @transform_16(%arg0: i32, %arg1: memref<2xi32, #tpu.memory_space<smem>>) -> (i32, i32) {
    %c0_i32 = arith.constant 0 : i32
    %c0_i32_0 = arith.constant 0 : i32
    %c0_i32_1 = arith.constant 0 : i32
    return %c0_i32, %c0_i32_0 : i32, i32
  }
  func.func @transform_17(%arg0: i32, %arg1: memref<2xi32, #tpu.memory_space<smem>>) -> (i32, i32) {
    %c0_i32 = arith.constant 0 : i32
    %c0_i32_0 = arith.constant 0 : i32
    %c0_i32_1 = arith.constant 0 : i32
    return %c0_i32, %c0_i32_0 : i32, i32
  }
  func.func @transform_18(%arg0: i32, %arg1: memref<2xi32, #tpu.memory_space<smem>>) -> (i32, i32) {
    %c0_i32 = arith.constant 0 : i32
    %c0_i32_0 = arith.constant 0 : i32
    %c0_i32_1 = arith.constant 0 : i32
    return %c0_i32, %c0_i32_0 : i32, i32
  }
  func.func @transform_19(%arg0: i32, %arg1: memref<2xi32, #tpu.memory_space<smem>>) -> (i32, i32) {
    %c0_i32 = arith.constant 0 : i32
    %c0_i32_0 = arith.constant 0 : i32
    %c0_i32_1 = arith.constant 0 : i32
    return %c0_i32, %c0_i32_0 : i32, i32
  }
  func.func @transform_20(%arg0: i32, %arg1: memref<2xi32, #tpu.memory_space<smem>>) -> (i32, i32) {
    %c0_i32 = arith.constant 0 : i32
    %c0_i32_0 = arith.constant 0 : i32
    %c0_i32_1 = arith.constant 0 : i32
    return %c0_i32, %c0_i32_0 : i32, i32
  }
  func.func @transform_21(%arg0: i32, %arg1: memref<2xi32, #tpu.memory_space<smem>>) -> (i32, i32) {
    %c0_i32 = arith.constant 0 : i32
    %c0_i32_0 = arith.constant 0 : i32
    %c0_i32_1 = arith.constant 0 : i32
    return %c0_i32, %c0_i32_0 : i32, i32
  }
  func.func @transform_22(%arg0: i32, %arg1: memref<2xi32, #tpu.memory_space<smem>>) -> (i32, i32) {
    %c0_i32 = arith.constant 0 : i32
    %c0_i32_0 = arith.constant 0 : i32
    %c0_i32_1 = arith.constant 0 : i32
    return %c0_i32, %c0_i32_0 : i32, i32
  }
  func.func @transform_23(%arg0: i32, %arg1: memref<2xi32, #tpu.memory_space<smem>>) -> (i32, i32, i32) {
    %c0_i32 = arith.constant 0 : i32
    %c0_i32_0 = arith.constant 0 : i32
    %c0_i32_1 = arith.constant 0 : i32
    return %arg0, %c0_i32, %c0_i32_0 : i32, i32, i32
  }
  func.func @transform_24(%arg0: i32, %arg1: memref<2xi32, #tpu.memory_space<smem>>) -> (i32, i32, i32) {
    %c0_i32 = arith.constant 0 : i32
    %c0_i32_0 = arith.constant 0 : i32
    %c0_i32_1 = arith.constant 0 : i32
    return %arg0, %c0_i32, %c0_i32_0 : i32, i32, i32
  }
  func.func @transform_25(%arg0: i32, %arg1: memref<2xi32, #tpu.memory_space<smem>>) -> (i32, i32, i32) {
    %c0_i32 = arith.constant 0 : i32
    %c0_i32_0 = arith.constant 0 : i32
    %c0_i32_1 = arith.constant 0 : i32
    return %arg0, %c0_i32, %c0_i32_0 : i32, i32, i32
  }
  func.func @transform_26(%arg0: i32, %arg1: memref<2xi32, #tpu.memory_space<smem>>) -> (i32, i32, i32) {
    %c0_i32 = arith.constant 0 : i32
    %c0_i32_0 = arith.constant 0 : i32
    %c0_i32_1 = arith.constant 0 : i32
    return %arg0, %c0_i32, %c0_i32_0 : i32, i32, i32
  }
}

</mosaic_0001>

<llo_original>
// kernel: dcrnn_forward.3
$region0: #{dcrnn_forward.3}
  #allocation0 [shape = 'u32[]', space=smem, size = 0x4, offset = 0x4, fixed_abs, tag = 'smem constant byte address 0x4 - core index']
  #allocation1 [shape = 'u32[144,128]{1,0:T(1,128)}', space=vmem, size = 0x12000, scoped, tag = 'internal scratch']
  #allocation2 [shape = 'f32[6,8,96]{2,1,0:T(8,128)}', space=vmem, size = 0x6000, scoped, tag = 'scratch operand']
  #allocation3 [shape = 's32[1]{0}', space=sflag, size = 0x4, scoped, tag = 'scoped memory for dcrnn_forward.3']
  #allocation4 [shape = 'u8[512]{0}', space=smem, size = 0x200, scoped, tag = 'prefetched SMEM operand 0']
  %s0 = inlined_call_operand.vmem [shape: s32[2], index: 0, kind: input, shape index: {}]
  %s1 = inlined_call_operand.vmem [shape: f32[2,8,48], index: 1, kind: input, shape index: {}]
  %s2 = inlined_call_operand.vmem [shape: f32[2,2,8,8], index: 2, kind: input, shape index: {}]
  %s3 = inlined_call_operand.vmem [shape: f32[2,1,16], index: 3, kind: input, shape index: {}]
  %s4 = inlined_call_operand.vmem [shape: f32[8,64], index: 4, kind: input, shape index: {}]
  %s5 = inlined_call_operand.vmem [shape: f32[1,64], index: 5, kind: input, shape index: {}]
  %s6 = inlined_call_operand.vmem [shape: f32[64,64], index: 6, kind: input, shape index: {}]
  %s7 = inlined_call_operand.vmem [shape: f32[1,64], index: 7, kind: input, shape index: {}]
  %s8 = inlined_call_operand.vmem [shape: f32[40,96], index: 8, kind: input, shape index: {}]
  %s9 = inlined_call_operand.vmem [shape: f32[160,64], index: 9, kind: input, shape index: {}]
  %s10 = inlined_call_operand.vmem [shape: f32[160,32], index: 10, kind: input, shape index: {}]
  %s11 = inlined_call_operand.vmem [shape: f32[1,64], index: 11, kind: input, shape index: {}]
  %s12 = inlined_call_operand.vmem [shape: f32[1,32], index: 12, kind: input, shape index: {}]
  %s13 = inlined_call_operand.vmem [shape: f32[160,96], index: 13, kind: input, shape index: {}]
  %s14 = inlined_call_operand.vmem [shape: f32[160,64], index: 14, kind: input, shape index: {}]
  %s15 = inlined_call_operand.vmem [shape: f32[160,32], index: 15, kind: input, shape index: {}]
  %s16 = inlined_call_operand.vmem [shape: f32[1,64], index: 16, kind: input, shape index: {}]
  %s17 = inlined_call_operand.vmem [shape: f32[1,32], index: 17, kind: input, shape index: {}]
  %s18 = inlined_call_operand.vmem [shape: f32[32,16], index: 18, kind: input, shape index: {}]
  %s19 = inlined_call_operand.vmem [shape: f32[1,16], index: 19, kind: input, shape index: {}]
  %s20 = inlined_call_operand.vmem [shape: f32[32,16], index: 20, kind: input, shape index: {}]
  %s21 = inlined_call_operand.vmem [shape: f32[1,16], index: 21, kind: input, shape index: {}]
  %s22 = inlined_call_operand.vmem [shape: f32[16,5], index: 22, kind: input, shape index: {}]
  %s23 = inlined_call_operand.vmem [shape: f32[1,5], index: 23, kind: input, shape index: {}]
  %s24 = inlined_call_operand.hbm [shape: f32[2,1,5], index: 24, kind: output, shape index: {0}]
  %s25 = inlined_call_operand.hbm [shape: f32[2,1,16], index: 25, kind: output, shape index: {1}]
  %s26 = inlined_call_operand.hbm [shape: f32[2,1,16], index: 26, kind: output, shape index: {2}]
  %s27 = inlined_call_operand.hbm [shape: f32[2,1,16], index: 27, kind: output, shape index: {3}]
  %28 = xla_tuple %s24, %s25, %s26, %s27
  %s29 = sld [smem:[#allocation0]]
  $region156: #{dcrnn_forward.3} parent=0
    _
  %s31 = ssub.s32 1, %s29
  %s32 = scalar_select 0, %s31, %s29
  %s33 = sshll.u32 %s0, 4
  %s34 = int_to_ptr.vmem [resolvable:$true] %s33
  %36 = dma.vmem_to_smem %s34, 16, [#allocation4], [#allocation3]
  %37 = dma.done [#allocation3], 16
  %38 = sfence
  $region1: #{dcrnn_forward.3} parent=0
    #allocation5 [shape = 'u8[1024]{0}', space=vmem, size = 0x400, scoped, tag = 'output window, operand 0']
    #allocation6 [shape = 's32[2]{0}', space=sflag, size = 0x8, scoped, tag = 'scoped memory for dcrnn_forward.3']
    #allocation7 [shape = 'u8[1024]{0}', space=vmem, size = 0x400, scoped, tag = 'output window, operand 1']
    #allocation8 [shape = 's32[2]{0}', space=sflag, size = 0x8, scoped, tag = 'scoped memory for dcrnn_forward.3']
    #allocation9 [shape = 'u8[1024]{0}', space=vmem, size = 0x400, scoped, tag = 'output window, operand 2']
    #allocation10 [shape = 'u8[1024]{0}', space=vmem, size = 0x400, scoped, tag = 'output window, operand 3']
    #allocation11 [shape = 's32[2]{0}', space=sflag, size = 0x8, scoped, tag = 'scoped memory for dcrnn_forward.3']
    %39 = vsyncpa [#allocation6], 0
    %s40 = scalar_lea.sflag [#allocation6], 1
    %41 = vsyncpa %s40, 0
    %42 = vsyncpa [#allocation8], 0
    %s43 = scalar_lea.sflag [#allocation8], 1
    %44 = vsyncpa %s43, 0
    %45 = vsyncpa [#allocation11], 0
    %s46 = scalar_lea.sflag [#allocation11], 1
    %47 = vsyncpa %s46, 0
    loop: start=0, step=1, limit=4
    $region2: #{dcrnn_forward.3} parent=1 // loop_pre_header
      _
    $region3: #{dcrnn_forward.3} parent=1 // loop_header
      %s49 = sphi 0, %s53
      %p50 = scmp.ge.s32.totalorder %s49, 4
      %s59 = sphi 0, %s61
      %s62 = sphi 0, %s59
      %s63 = sphi 0, %s62
      %s79 = sphi 0, %s63
      %s85 = sphi 0, %s87
      %s88 = sphi 0, %s85
      %s89 = sphi 0, %s88
      %s105 = sphi 0, %s89
      %s111 = sphi 0, %s113
      %s114 = sphi 0, %s111
      %s115 = sphi 0, %s114
      %s131 = sphi 0, %s115
      %s135 = sphi 0, %s135
      %s137 = sphi 0, %s135
      %s138 = sphi 0, %s137
      %s152 = sphi 0, %s138
      %s156 = sphi 0, %s156
      %s158 = sphi 0, %s156
      %s159 = sphi 0, %s158
      %s173 = sphi 0, %s159
      %s177 = sphi 0, %s177
      %s179 = sphi 0, %s177
      %s180 = sphi 0, %s179
      %s194 = sphi 0, %s180
      %s198 = sphi 0, %s198
      %s200 = sphi 0, %s198
      %s201 = sphi 0, %s200
      %s215 = sphi 0, %s201
      %s219 = sphi 0, %s219
      %s221 = sphi 0, %s219
      %s222 = sphi 0, %s221
      %s236 = sphi 0, %s222
      %s240 = sphi 0, %s240
      %s242 = sphi 0, %s240
      %s243 = sphi 0, %s242
      %s257 = sphi 0, %s243
      %s261 = sphi 0, %s261
      %s263 = sphi 0, %s261
      %s264 = sphi 0, %s263
      %s278 = sphi 0, %s264
      %s282 = sphi 0, %s282
      %s284 = sphi 0, %s282
      %s285 = sphi 0, %s284
      %s299 = sphi 0, %s285
      %s303 = sphi 0, %s303
      %s305 = sphi 0, %s303
      %s306 = sphi 0, %s305
      %s320 = sphi 0, %s306
      %s324 = sphi 0, %s324
      %s326 = sphi 0, %s324
      %s327 = sphi 0, %s326
      %s341 = sphi 0, %s327
      %s345 = sphi 0, %s345
      %s347 = sphi 0, %s345
      %s348 = sphi 0, %s347
      %s362 = sphi 0, %s348
      %s366 = sphi 0, %s366
      %s368 = sphi 0, %s366
      %s369 = sphi 0, %s368
      %s383 = sphi 0, %s369
      %s387 = sphi 0, %s387
      %s389 = sphi 0, %s387
      %s390 = sphi 0, %s389
      %s404 = sphi 0, %s390
      %s408 = sphi 0, %s408
      %s410 = sphi 0, %s408
      %s411 = sphi 0, %s410
      %s425 = sphi 0, %s411
      %s429 = sphi 0, %s429
      %s431 = sphi 0, %s429
      %s432 = sphi 0, %s431
      %s446 = sphi 0, %s432
      %s450 = sphi 0, %s450
      %s452 = sphi 0, %s450
      %s453 = sphi 0, %s452
      %s467 = sphi 0, %s453
      %s471 = sphi 0, %s471
      %s473 = sphi 0, %s471
      %s474 = sphi 0, %s473
      %s488 = sphi 0, %s474
      %s492 = sphi 0, %s492
      %s494 = sphi 0, %s492
      %s495 = sphi 0, %s494
      %s509 = sphi 0, %s495
      %s513 = sphi 0, %s513
      %s515 = sphi 0, %s513
      %s516 = sphi 0, %s515
      %s530 = sphi 0, %s516
      %s534 = sphi 0, %s534
      %s536 = sphi 0, %s534
      %s537 = sphi 0, %s536
      %s551 = sphi 0, %s537
      %s557 = sphi 0, %s559
      %s560 = sphi 0, %s557
      %s561 = sphi 0, %s560
      %s577 = sphi 0, %s561
      %s583 = sphi 0, %s585
      %s586 = sphi 0, %s583
      %s587 = sphi 0, %s586
      %s603 = sphi 0, %s587
      %s609 = sphi 0, %s611
      %s612 = sphi 0, %s609
      %s613 = sphi 0, %s612
      %s629 = sphi 0, %s613
      %s635 = sphi 0, %s637
      %s638 = sphi 0, %s635
      %s639 = sphi 0, %s638
      %s655 = sphi 0, %s639
    $region4: #{dcrnn_forward.3} parent=1 // loop_header_branch
      %52 = sbr.rel (%p50) target = $region8
    $region5: #{dcrnn_forward.3} parent=1 // loop_body
      %s54 = ssub.s32 %s49, 1
      %s55 = ssub.s32 %s49, 2
      %s56 = sadd.s32 %s49, 1
      %s57 = ssub.s32 %s49, %s56
      %p58 = scmp.eq.s32.totalorder %s57, 0
      %s60 = sadd.s32 %s59, 1
      %s61 = scalar_select %p58, %s59, %s60
      %p64 = pneg %p58
      %p65 = scmp.eq.s32.totalorder %s49, 1
      %p66 = por %p64, %p65
      %p67 = scmp.ne.s32.totalorder %s59, %s62
      %p68 = scmp.eq.s32.totalorder %s49, 0
      %p69 = por %p67, %p68
      %p70 = scmp.ne.s32.totalorder %s59, %s62
      %p71 = scmp.eq.s32.totalorder %s54, 1
      %p72 = por %p70, %p71
      %p73 = scmp.ne.s32.totalorder %s62, %s63
      %p74 = scmp.eq.s32.totalorder %s54, 0
      %p75 = por %p73, %p74
      %p76 = scmp.ne.s32.totalorder %s62, %s63
      %p77 = scmp.eq.s32.totalorder %s55, 1
      %p78 = por %p76, %p77
      %p80 = scmp.ne.s32.totalorder %s63, %s79
      %p81 = scmp.eq.s32.totalorder %s55, 0
      %p82 = por %p80, %p81
      %s83 = ssub.s32 %s49, %s56
      %p84 = scmp.eq.s32.totalorder %s83, 0
      %s86 = sadd.s32 %s85, 1
      %s87 = scalar_select %p84, %s85, %s86
      %p90 = pneg %p84
      %p91 = scmp.eq.s32.totalorder %s49, 1
      %p92 = por %p90, %p91
      %p93 = scmp.ne.s32.totalorder %s85, %s88
      %p94 = scmp.eq.s32.totalorder %s49, 0
      %p95 = por %p93, %p94
      %p96 = scmp.ne.s32.totalorder %s85, %s88
      %p97 = scmp.eq.s32.totalorder %s54, 1
      %p98 = por %p96, %p97
      %p99 = scmp.ne.s32.totalorder %s88, %s89
      %p100 = scmp.eq.s32.totalorder %s54, 0
      %p101 = por %p99, %p100
      %p102 = scmp.ne.s32.totalorder %s88, %s89
      %p103 = scmp.eq.s32.totalorder %s55, 1
      %p104 = por %p102, %p103
      %p106 = scmp.ne.s32.totalorder %s89, %s105
      %p107 = scmp.eq.s32.totalorder %s55, 0
      %p108 = por %p106, %p107
      %s109 = ssub.s32 %s49, %s56
      %p110 = scmp.eq.s32.totalorder %s109, 0
      %s112 = sadd.s32 %s111, 1
      %s113 = scalar_select %p110, %s111, %s112
      %p116 = pneg %p110
      %p117 = scmp.eq.s32.totalorder %s49, 1
      %p118 = por %p116, %p117
      %p119 = scmp.ne.s32.totalorder %s111, %s114
      %p120 = scmp.eq.s32.totalorder %s49, 0
      %p121 = por %p119, %p120
      %p122 = scmp.ne.s32.totalorder %s111, %s114
      %p123 = scmp.eq.s32.totalorder %s54, 1
      %p124 = por %p122, %p123
      %p125 = scmp.ne.s32.totalorder %s114, %s115
      %p126 = scmp.eq.s32.totalorder %s54, 0
      %p127 = por %p125, %p126
      %p128 = scmp.ne.s32.totalorder %s114, %s115
      %p129 = scmp.eq.s32.totalorder %s55, 1
      %p130 = por %p128, %p129
      %p132 = scmp.ne.s32.totalorder %s115, %s131
      %p133 = scmp.eq.s32.totalorder %s55, 0
      %p134 = por %p132, %p133
      %s136 = sadd.s32 %s135, 1
      %p139 = scmp.eq.s32.totalorder %s49, 1
      %p140 = scmp.ne.s32.totalorder %s135, %s137
      %p141 = scmp.eq.s32.totalorder %s49, 0
      %p142 = por %p140, %p141
      %p143 = scmp.ne.s32.totalorder %s135, %s137
      %p144 = scmp.eq.s32.totalorder %s54, 1
      %p145 = por %p143, %p144
      %p146 = scmp.ne.s32.totalorder %s137, %s138
      %p147 = scmp.eq.s32.totalorder %s54, 0
      %p148 = por %p146, %p147
      %p149 = scmp.ne.s32.totalorder %s137, %s138
      %p150 = scmp.eq.s32.totalorder %s55, 1
      %p151 = por %p149, %p150
      %p153 = scmp.ne.s32.totalorder %s138, %s152
      %p154 = scmp.eq.s32.totalorder %s55, 0
      %p155 = por %p153, %p154
      %s157 = sadd.s32 %s156, 1
      %p160 = scmp.eq.s32.totalorder %s49, 1
      %p161 = scmp.ne.s32.totalorder %s156, %s158
      %p162 = scmp.eq.s32.totalorder %s49, 0
      %p163 = por %p161, %p162
      %p164 = scmp.ne.s32.totalorder %s156, %s158
      %p165 = scmp.eq.s32.totalorder %s54, 1
      %p166 = por %p164, %p165
      %p167 = scmp.ne.s32.totalorder %s158, %s159
      %p168 = scmp.eq.s32.totalorder %s54, 0
      %p169 = por %p167, %p168
      %p170 = scmp.ne.s32.totalorder %s158, %s159
      %p171 = scmp.eq.s32.totalorder %s55, 1
      %p172 = por %p170, %p171
      %p174 = scmp.ne.s32.totalorder %s159, %s173
      %p175 = scmp.eq.s32.totalorder %s55, 0
      %p176 = por %p174, %p175
      %s178 = sadd.s32 %s177, 1
      %p181 = scmp.eq.s32.totalorder %s49, 1
      %p182 = scmp.ne.s32.totalorder %s177, %s179
      %p183 = scmp.eq.s32.totalorder %s49, 0
      %p184 = por %p182, %p183
      %p185 = scmp.ne.s32.totalorder %s177, %s179
      %p186 = scmp.eq.s32.totalorder %s54, 1
      %p187 = por %p185, %p186
      %p188 = scmp.ne.s32.totalorder %s179, %s180
      %p189 = scmp.eq.s32.totalorder %s54, 0
      %p190 = por %p188, %p189
      %p191 = scmp.ne.s32.totalorder %s179, %s180
      %p192 = scmp.eq.s32.totalorder %s55, 1
      %p193 = por %p191, %p192
      %p195 = scmp.ne.s32.totalorder %s180, %s194
      %p196 = scmp.eq.s32.totalorder %s55, 0
      %p197 = por %p195, %p196
      %s199 = sadd.s32 %s198, 1
      %p202 = scmp.eq.s32.totalorder %s49, 1
      %p203 = scmp.ne.s32.totalorder %s198, %s200
      %p204 = scmp.eq.s32.totalorder %s49, 0
      %p205 = por %p203, %p204
      %p206 = scmp.ne.s32.totalorder %s198, %s200
      %p207 = scmp.eq.s32.totalorder %s54, 1
      %p208 = por %p206, %p207
      %p209 = scmp.ne.s32.totalorder %s200, %s201
      %p210 = scmp.eq.s32.totalorder %s54, 0
      %p211 = por %p209, %p210
      %p212 = scmp.ne.s32.totalorder %s200, %s201
      %p213 = scmp.eq.s32.totalorder %s55, 1
      %p214 = por %p212, %p213
      %p216 = scmp.ne.s32.totalorder %s201, %s215
      %p217 = scmp.eq.s32.totalorder %s55, 0
      %p218 = por %p216, %p217
      %s220 = sadd.s32 %s219, 1
      %p223 = scmp.eq.s32.totalorder %s49, 1
      %p224 = scmp.ne.s32.totalorder %s219, %s221
      %p225 = scmp.eq.s32.totalorder %s49, 0
      %p226 = por %p224, %p225
      %p227 = scmp.ne.s32.totalorder %s219, %s221
      %p228 = scmp.eq.s32.totalorder %s54, 1
      %p229 = por %p227, %p228
      %p230 = scmp.ne.s32.totalorder %s221, %s222
      %p231 = scmp.eq.s32.totalorder %s54, 0
      %p232 = por %p230, %p231
      %p233 = scmp.ne.s32.totalorder %s221, %s222
      %p234 = scmp.eq.s32.totalorder %s55, 1
      %p235 = por %p233, %p234
      %p237 = scmp.ne.s32.totalorder %s222, %s236
      %p238 = scmp.eq.s32.totalorder %s55, 0
      %p239 = por %p237, %p238
      %s241 = sadd.s32 %s240, 1
      %p244 = scmp.eq.s32.totalorder %s49, 1
      %p245 = scmp.ne.s32.totalorder %s240, %s242
      %p246 = scmp.eq.s32.totalorder %s49, 0
      %p247 = por %p245, %p246
      %p248 = scmp.ne.s32.totalorder %s240, %s242
      %p249 = scmp.eq.s32.totalorder %s54, 1
      %p250 = por %p248, %p249
      %p251 = scmp.ne.s32.totalorder %s242, %s243
      %p252 = scmp.eq.s32.totalorder %s54, 0
      %p253 = por %p251, %p252
      %p254 = scmp.ne.s32.totalorder %s242, %s243
      %p255 = scmp.eq.s32.totalorder %s55, 1
      %p256 = por %p254, %p255
      %p258 = scmp.ne.s32.totalorder %s243, %s257
      %p259 = scmp.eq.s32.totalorder %s55, 0
      %p260 = por %p258, %p259
      %s262 = sadd.s32 %s261, 1
      %p265 = scmp.eq.s32.totalorder %s49, 1
      %p266 = scmp.ne.s32.totalorder %s261, %s263
      %p267 = scmp.eq.s32.totalorder %s49, 0
      %p268 = por %p266, %p267
      %p269 = scmp.ne.s32.totalorder %s261, %s263
      %p270 = scmp.eq.s32.totalorder %s54, 1
      %p271 = por %p269, %p270
      %p272 = scmp.ne.s32.totalorder %s263, %s264
      %p273 = scmp.eq.s32.totalorder %s54, 0
      %p274 = por %p272, %p273
      %p275 = scmp.ne.s32.totalorder %s263, %s264
      %p276 = scmp.eq.s32.totalorder %s55, 1
      %p277 = por %p275, %p276
      %p279 = scmp.ne.s32.totalorder %s264, %s278
      %p280 = scmp.eq.s32.totalorder %s55, 0
      %p281 = por %p279, %p280
      %s283 = sadd.s32 %s282, 1
      %p286 = scmp.eq.s32.totalorder %s49, 1
      %p287 = scmp.ne.s32.totalorder %s282, %s284
      %p288 = scmp.eq.s32.totalorder %s49, 0
      %p289 = por %p287, %p288
      %p290 = scmp.ne.s32.totalorder %s282, %s284
      %p291 = scmp.eq.s32.totalorder %s54, 1
      %p292 = por %p290, %p291
      %p293 = scmp.ne.s32.totalorder %s284, %s285
      %p294 = scmp.eq.s32.totalorder %s54, 0
      %p295 = por %p293, %p294
      %p296 = scmp.ne.s32.totalorder %s284, %s285
      %p297 = scmp.eq.s32.totalorder %s55, 1
      %p298 = por %p296, %p297
      %p300 = scmp.ne.s32.totalorder %s285, %s299
      %p301 = scmp.eq.s32.totalorder %s55, 0
      %p302 = por %p300, %p301
      %s304 = sadd.s32 %s303, 1
      %p307 = scmp.eq.s32.totalorder %s49, 1
      %p308 = scmp.ne.s32.totalorder %s303, %s305
      %p309 = scmp.eq.s32.totalorder %s49, 0
      %p310 = por %p308, %p309
      %p311 = scmp.ne.s32.totalorder %s303, %s305
      %p312 = scmp.eq.s32.totalorder %s54, 1
      %p313 = por %p311, %p312
      %p314 = scmp.ne.s32.totalorder %s305, %s306
      %p315 = scmp.eq.s32.totalorder %s54, 0
      %p316 = por %p314, %p315
      %p317 = scmp.ne.s32.totalorder %s305, %s306
      %p318 = scmp.eq.s32.totalorder %s55, 1
      %p319 = por %p317, %p318
      %p321 = scmp.ne.s32.totalorder %s306, %s320
      %p322 = scmp.eq.s32.totalorder %s55, 0
      %p323 = por %p321, %p322
      %s325 = sadd.s32 %s324, 1
      %p328 = scmp.eq.s32.totalorder %s49, 1
      %p329 = scmp.ne.s32.totalorder %s324, %s326
      %p330 = scmp.eq.s32.totalorder %s49, 0
      %p331 = por %p329, %p330
      %p332 = scmp.ne.s32.totalorder %s324, %s326
      %p333 = scmp.eq.s32.totalorder %s54, 1
      %p334 = por %p332, %p333
      %p335 = scmp.ne.s32.totalorder %s326, %s327
      %p336 = scmp.eq.s32.totalorder %s54, 0
      %p337 = por %p335, %p336
      %p338 = scmp.ne.s32.totalorder %s326, %s327
      %p339 = scmp.eq.s32.totalorder %s55, 1
      %p340 = por %p338, %p339
      %p342 = scmp.ne.s32.totalorder %s327, %s341
      %p343 = scmp.eq.s32.totalorder %s55, 0
      %p344 = por %p342, %p343
      %s346 = sadd.s32 %s345, 1
      %p349 = scmp.eq.s32.totalorder %s49, 1
      %p350 = scmp.ne.s32.totalorder %s345, %s347
      %p351 = scmp.eq.s32.totalorder %s49, 0
      %p352 = por %p350, %p351
      %p353 = scmp.ne.s32.totalorder %s345, %s347
      %p354 = scmp.eq.s32.totalorder %s54, 1
      %p355 = por %p353, %p354
      %p356 = scmp.ne.s32.totalorder %s347, %s348
      %p357 = scmp.eq.s32.totalorder %s54, 0
      %p358 = por %p356, %p357
      %p359 = scmp.ne.s32.totalorder %s347, %s348
      %p360 = scmp.eq.s32.totalorder %s55, 1
      %p361 = por %p359, %p360
      %p363 = scmp.ne.s32.totalorder %s348, %s362
      %p364 = scmp.eq.s32.totalorder %s55, 0
      %p365 = por %p363, %p364
      %s367 = sadd.s32 %s366, 1
      %p370 = scmp.eq.s32.totalorder %s49, 1
      %p371 = scmp.ne.s32.totalorder %s366, %s368
      %p372 = scmp.eq.s32.totalorder %s49, 0
      %p373 = por %p371, %p372
      %p374 = scmp.ne.s32.totalorder %s366, %s368
      %p375 = scmp.eq.s32.totalorder %s54, 1
      %p376 = por %p374, %p375
      %p377 = scmp.ne.s32.totalorder %s368, %s369
      %p378 = scmp.eq.s32.totalorder %s54, 0
      %p379 = por %p377, %p378
      %p380 = scmp.ne.s32.totalorder %s368, %s369
      %p381 = scmp.eq.s32.totalorder %s55, 1
      %p382 = por %p380, %p381
      %p384 = scmp.ne.s32.totalorder %s369, %s383
      %p385 = scmp.eq.s32.totalorder %s55, 0
      %p386 = por %p384, %p385
      %s388 = sadd.s32 %s387, 1
      %p391 = scmp.eq.s32.totalorder %s49, 1
      %p392 = scmp.ne.s32.totalorder %s387, %s389
      %p393 = scmp.eq.s32.totalorder %s49, 0
      %p394 = por %p392, %p393
      %p395 = scmp.ne.s32.totalorder %s387, %s389
      %p396 = scmp.eq.s32.totalorder %s54, 1
      %p397 = por %p395, %p396
      %p398 = scmp.ne.s32.totalorder %s389, %s390
      %p399 = scmp.eq.s32.totalorder %s54, 0
      %p400 = por %p398, %p399
      %p401 = scmp.ne.s32.totalorder %s389, %s390
      %p402 = scmp.eq.s32.totalorder %s55, 1
      %p403 = por %p401, %p402
      %p405 = scmp.ne.s32.totalorder %s390, %s404
      %p406 = scmp.eq.s32.totalorder %s55, 0
      %p407 = por %p405, %p406
      %s409 = sadd.s32 %s408, 1
      %p412 = scmp.eq.s32.totalorder %s49, 1
      %p413 = scmp.ne.s32.totalorder %s408, %s410
      %p414 = scmp.eq.s32.totalorder %s49, 0
      %p415 = por %p413, %p414
      %p416 = scmp.ne.s32.totalorder %s408, %s410
      %p417 = scmp.eq.s32.totalorder %s54, 1
      %p418 = por %p416, %p417
      %p419 = scmp.ne.s32.totalorder %s410, %s411
      %p420 = scmp.eq.s32.totalorder %s54, 0
      %p421 = por %p419, %p420
      %p422 = scmp.ne.s32.totalorder %s410, %s411
      %p423 = scmp.eq.s32.totalorder %s55, 1
      %p424 = por %p422, %p423
      %p426 = scmp.ne.s32.totalorder %s411, %s425
      %p427 = scmp.eq.s32.totalorder %s55, 0
      %p428 = por %p426, %p427
      %s430 = sadd.s32 %s429, 1
      %p433 = scmp.eq.s32.totalorder %s49, 1
      %p434 = scmp.ne.s32.totalorder %s429, %s431
      %p435 = scmp.eq.s32.totalorder %s49, 0
      %p436 = por %p434, %p435
      %p437 = scmp.ne.s32.totalorder %s429, %s431
      %p438 = scmp.eq.s32.totalorder %s54, 1
      %p439 = por %p437, %p438
      %p440 = scmp.ne.s32.totalorder %s431, %s432
      %p441 = scmp.eq.s32.totalorder %s54, 0
      %p442 = por %p440, %p441
      %p443 = scmp.ne.s32.totalorder %s431, %s432
      %p444 = scmp.eq.s32.totalorder %s55, 1
      %p445 = por %p443, %p444
      %p447 = scmp.ne.s32.totalorder %s432, %s446
      %p448 = scmp.eq.s32.totalorder %s55, 0
      %p449 = por %p447, %p448
      %s451 = sadd.s32 %s450, 1
      %p454 = scmp.eq.s32.totalorder %s49, 1
      %p455 = scmp.ne.s32.totalorder %s450, %s452
      %p456 = scmp.eq.s32.totalorder %s49, 0
      %p457 = por %p455, %p456
      %p458 = scmp.ne.s32.totalorder %s450, %s452
      %p459 = scmp.eq.s32.totalorder %s54, 1
      %p460 = por %p458, %p459
      %p461 = scmp.ne.s32.totalorder %s452, %s453
      %p462 = scmp.eq.s32.totalorder %s54, 0
      %p463 = por %p461, %p462
      %p464 = scmp.ne.s32.totalorder %s452, %s453
      %p465 = scmp.eq.s32.totalorder %s55, 1
      %p466 = por %p464, %p465
      %p468 = scmp.ne.s32.totalorder %s453, %s467
      %p469 = scmp.eq.s32.totalorder %s55, 0
      %p470 = por %p468, %p469
      %s472 = sadd.s32 %s471, 1
      %p475 = scmp.eq.s32.totalorder %s49, 1
      %p476 = scmp.ne.s32.totalorder %s471, %s473
      %p477 = scmp.eq.s32.totalorder %s49, 0
      %p478 = por %p476, %p477
      %p479 = scmp.ne.s32.totalorder %s471, %s473
      %p480 = scmp.eq.s32.totalorder %s54, 1
      %p481 = por %p479, %p480
      %p482 = scmp.ne.s32.totalorder %s473, %s474
      %p483 = scmp.eq.s32.totalorder %s54, 0
      %p484 = por %p482, %p483
      %p485 = scmp.ne.s32.totalorder %s473, %s474
      %p486 = scmp.eq.s32.totalorder %s55, 1
      %p487 = por %p485, %p486
      %p489 = scmp.ne.s32.totalorder %s474, %s488
      %p490 = scmp.eq.s32.totalorder %s55, 0
      %p491 = por %p489, %p490
      %s493 = sadd.s32 %s492, 1
      %p496 = scmp.eq.s32.totalorder %s49, 1
      %p497 = scmp.ne.s32.totalorder %s492, %s494
      %p498 = scmp.eq.s32.totalorder %s49, 0
      %p499 = por %p497, %p498
      %p500 = scmp.ne.s32.totalorder %s492, %s494
      %p501 = scmp.eq.s32.totalorder %s54, 1
      %p502 = por %p500, %p501
      %p503 = scmp.ne.s32.totalorder %s494, %s495
      %p504 = scmp.eq.s32.totalorder %s54, 0
      %p505 = por %p503, %p504
      %p506 = scmp.ne.s32.totalorder %s494, %s495
      %p507 = scmp.eq.s32.totalorder %s55, 1
      %p508 = por %p506, %p507
      %p510 = scmp.ne.s32.totalorder %s495, %s509
      %p511 = scmp.eq.s32.totalorder %s55, 0
      %p512 = por %p510, %p511
      %s514 = sadd.s32 %s513, 1
      %p517 = scmp.eq.s32.totalorder %s49, 1
      %p518 = scmp.ne.s32.totalorder %s513, %s515
      %p519 = scmp.eq.s32.totalorder %s49, 0
      %p520 = por %p518, %p519
      %p521 = scmp.ne.s32.totalorder %s513, %s515
      %p522 = scmp.eq.s32.totalorder %s54, 1
      %p523 = por %p521, %p522
      %p524 = scmp.ne.s32.totalorder %s515, %s516
      %p525 = scmp.eq.s32.totalorder %s54, 0
      %p526 = por %p524, %p525
      %p527 = scmp.ne.s32.totalorder %s515, %s516
      %p528 = scmp.eq.s32.totalorder %s55, 1
      %p529 = por %p527, %p528
      %p531 = scmp.ne.s32.totalorder %s516, %s530
      %p532 = scmp.eq.s32.totalorder %s55, 0
      %p533 = por %p531, %p532
      %s535 = sadd.s32 %s534, 1
      %p538 = scmp.eq.s32.totalorder %s49, 1
      %p539 = scmp.ne.s32.totalorder %s534, %s536
      %p540 = scmp.eq.s32.totalorder %s49, 0
      %p541 = por %p539, %p540
      %p542 = scmp.ne.s32.totalorder %s534, %s536
      %p543 = scmp.eq.s32.totalorder %s54, 1
      %p544 = por %p542, %p543
      %p545 = scmp.ne.s32.totalorder %s536, %s537
      %p546 = scmp.eq.s32.totalorder %s54, 0
      %p547 = por %p545, %p546
      %p548 = scmp.ne.s32.totalorder %s536, %s537
      %p549 = scmp.eq.s32.totalorder %s55, 1
      %p550 = por %p548, %p549
      %p552 = scmp.ne.s32.totalorder %s537, %s551
      %p553 = scmp.eq.s32.totalorder %s55, 0
      %p554 = por %p552, %p553
      %s555 = ssub.s32 %s49, %s56
      %p556 = scmp.eq.s32.totalorder %s555, 0
      %s558 = sadd.s32 %s557, 1
      %s559 = scalar_select %p556, %s557, %s558
      %p562 = pneg %p556
      %p563 = scmp.eq.s32.totalorder %s49, 1
      %p564 = por %p562, %p563
      %p565 = scmp.ne.s32.totalorder %s557, %s560
      %p566 = scmp.eq.s32.totalorder %s49, 0
      %p567 = por %p565, %p566
      %p568 = scmp.ne.s32.totalorder %s557, %s560
      %p569 = scmp.eq.s32.totalorder %s54, 1
      %p570 = por %p568, %p569
      %p571 = scmp.ne.s32.totalorder %s560, %s561
      %p572 = scmp.eq.s32.totalorder %s54, 0
      %p573 = por %p571, %p572
      %p574 = scmp.ne.s32.totalorder %s560, %s561
      %p575 = scmp.eq.s32.totalorder %s55, 1
      %p576 = por %p574, %p575
      %p578 = scmp.ne.s32.totalorder %s561, %s577
      %p579 = scmp.eq.s32.totalorder %s55, 0
      %p580 = por %p578, %p579
      %s581 = ssub.s32 %s49, %s56
      %p582 = scmp.eq.s32.totalorder %s581, 0
      %s584 = sadd.s32 %s583, 1
      %s585 = scalar_select %p582, %s583, %s584
      %p588 = pneg %p582
      %p589 = scmp.eq.s32.totalorder %s49, 1
      %p590 = por %p588, %p589
      %p591 = scmp.ne.s32.totalorder %s583, %s586
      %p592 = scmp.eq.s32.totalorder %s49, 0
      %p593 = por %p591, %p592
      %p594 = scmp.ne.s32.totalorder %s583, %s586
      %p595 = scmp.eq.s32.totalorder %s54, 1
      %p596 = por %p594, %p595
      %p597 = scmp.ne.s32.totalorder %s586, %s587
      %p598 = scmp.eq.s32.totalorder %s54, 0
      %p599 = por %p597, %p598
      %p600 = scmp.ne.s32.totalorder %s586, %s587
      %p601 = scmp.eq.s32.totalorder %s55, 1
      %p602 = por %p600, %p601
      %p604 = scmp.ne.s32.totalorder %s587, %s603
      %p605 = scmp.eq.s32.totalorder %s55, 0
      %p606 = por %p604, %p605
      %s607 = ssub.s32 %s49, %s56
      %p608 = scmp.eq.s32.totalorder %s607, 0
      %s610 = sadd.s32 %s609, 1
      %s611 = scalar_select %p608, %s609, %s610
      %p614 = pneg %p608
      %p615 = scmp.eq.s32.totalorder %s49, 1
      %p616 = por %p614, %p615
      %p617 = scmp.ne.s32.totalorder %s609, %s612
      %p618 = scmp.eq.s32.totalorder %s49, 0
      %p619 = por %p617, %p618
      %p620 = scmp.ne.s32.totalorder %s609, %s612
      %p621 = scmp.eq.s32.totalorder %s54, 1
      %p622 = por %p620, %p621
      %p623 = scmp.ne.s32.totalorder %s612, %s613
      %p624 = scmp.eq.s32.totalorder %s54, 0
      %p625 = por %p623, %p624
      %p626 = scmp.ne.s32.totalorder %s612, %s613
      %p627 = scmp.eq.s32.totalorder %s55, 1
      %p628 = por %p626, %p627
      %p630 = scmp.ne.s32.totalorder %s613, %s629
      %p631 = scmp.eq.s32.totalorder %s55, 0
      %p632 = por %p630, %p631
      %s633 = ssub.s32 %s49, %s56
      %p634 = scmp.eq.s32.totalorder %s633, 0
      %s636 = sadd.s32 %s635, 1
      %s637 = scalar_select %p634, %s635, %s636
      %p640 = pneg %p634
      %p641 = scmp.eq.s32.totalorder %s49, 1
      %p642 = por %p640, %p641
      %p643 = scmp.ne.s32.totalorder %s635, %s638
      %p644 = scmp.eq.s32.totalorder %s49, 0
      %p645 = por %p643, %p644
      %p646 = scmp.ne.s32.totalorder %s635, %s638
      %p647 = scmp.eq.s32.totalorder %s54, 1
      %p648 = por %p646, %p647
      %p649 = scmp.ne.s32.totalorder %s638, %s639
      %p650 = scmp.eq.s32.totalorder %s54, 0
      %p651 = por %p649, %p650
      %p652 = scmp.ne.s32.totalorder %s638, %s639
      %p653 = scmp.eq.s32.totalorder %s55, 1
      %p654 = por %p652, %p653
      %p656 = scmp.ne.s32.totalorder %s639, %s655
      %p657 = scmp.eq.s32.totalorder %s55, 0
      %p658 = por %p656, %p657
      %p659 = scmp.le.s32.totalorder 1, %s49
      %p660 = scmp.lt.s32.totalorder %s49, 3
      %p661 = pnand %p659, %p660
      %p662 = pneg %p661
      // Predicated region
      $region9: #{dcrnn_forward.3} parent=5 // pred_check
        _
      $region10: #{dcrnn_forward.3} parent=5 // pred_check_branch
        %664 = sbr.rel (%p661) target = $region12
      $region11: #{dcrnn_forward.3} parent=5 // pred_region
        %s665 = ssub.s32 %s49, 1
        // Predicated region
        $region13: #{dcrnn_forward.3} parent=11 // pred_check
          %p666 = pneg %p148
        $region14: #{dcrnn_forward.3} parent=11 // pred_check_branch
          %668 = sbr.rel (%p666) target = $region16
        $region15: #{dcrnn_forward.3} parent=11 // pred_region
          _
        $region16: #{dcrnn_forward.3} parent=11 // pred_fallthru
          _
        // Predicated region
        $region17: #{dcrnn_forward.3} parent=11 // pred_check
          %p669 = pneg %p169
        $region18: #{dcrnn_forward.3} parent=11 // pred_check_branch
          %671 = sbr.rel (%p669) target = $region20
        $region19: #{dcrnn_forward.3} parent=11 // pred_region
          _
        $region20: #{dcrnn_forward.3} parent=11 // pred_fallthru
          _
        // Predicated region
        $region21: #{dcrnn_forward.3} parent=11 // pred_check
          %p672 = pneg %p190
        $region22: #{dcrnn_forward.3} parent=11 // pred_check_branch
          %674 = sbr.rel (%p672) target = $region24
        $region23: #{dcrnn_forward.3} parent=11 // pred_region
          _
        $region24: #{dcrnn_forward.3} parent=11 // pred_fallthru
          _
        // Predicated region
        $region25: #{dcrnn_forward.3} parent=11 // pred_check
          %p675 = pneg %p211
        $region26: #{dcrnn_forward.3} parent=11 // pred_check_branch
          %677 = sbr.rel (%p675) target = $region28
        $region27: #{dcrnn_forward.3} parent=11 // pred_region
          _
        $region28: #{dcrnn_forward.3} parent=11 // pred_fallthru
          _
        // Predicated region
        $region29: #{dcrnn_forward.3} parent=11 // pred_check
          %p678 = pneg %p232
        $region30: #{dcrnn_forward.3} parent=11 // pred_check_branch
          %680 = sbr.rel (%p678) target = $region32
        $region31: #{dcrnn_forward.3} parent=11 // pred_region
          _
        $region32: #{dcrnn_forward.3} parent=11 // pred_fallthru
          _
        // Predicated region
        $region33: #{dcrnn_forward.3} parent=11 // pred_check
          %p681 = pneg %p253
        $region34: #{dcrnn_forward.3} parent=11 // pred_check_branch
          %683 = sbr.rel (%p681) target = $region36
        $region35: #{dcrnn_forward.3} parent=11 // pred_region
          _
        $region36: #{dcrnn_forward.3} parent=11 // pred_fallthru
          _
        // Predicated region
        $region37: #{dcrnn_forward.3} parent=11 // pred_check
          %p684 = pneg %p274
        $region38: #{dcrnn_forward.3} parent=11 // pred_check_branch
          %686 = sbr.rel (%p684) target = $region40
        $region39: #{dcrnn_forward.3} parent=11 // pred_region
          _
        $region40: #{dcrnn_forward.3} parent=11 // pred_fallthru
          _
        // Predicated region
        $region41: #{dcrnn_forward.3} parent=11 // pred_check
          %p687 = pneg %p295
        $region42: #{dcrnn_forward.3} parent=11 // pred_check_branch
          %689 = sbr.rel (%p687) target = $region44
        $region43: #{dcrnn_forward.3} parent=11 // pred_region
          _
        $region44: #{dcrnn_forward.3} parent=11 // pred_fallthru
          _
        // Predicated region
        $region45: #{dcrnn_forward.3} parent=11 // pred_check
          %p690 = pneg %p316
        $region46: #{dcrnn_forward.3} parent=11 // pred_check_branch
          %692 = sbr.rel (%p690) target = $region48
        $region47: #{dcrnn_forward.3} parent=11 // pred_region
          _
        $region48: #{dcrnn_forward.3} parent=11 // pred_fallthru
          _
        // Predicated region
        $region49: #{dcrnn_forward.3} parent=11 // pred_check
          %p693 = pneg %p337
        $region50: #{dcrnn_forward.3} parent=11 // pred_check_branch
          %695 = sbr.rel (%p693) target = $region52
        $region51: #{dcrnn_forward.3} parent=11 // pred_region
          _
        $region52: #{dcrnn_forward.3} parent=11 // pred_fallthru
          _
        // Predicated region
        $region53: #{dcrnn_forward.3} parent=11 // pred_check
          %p696 = pneg %p358
        $region54: #{dcrnn_forward.3} parent=11 // pred_check_branch
          %698 = sbr.rel (%p696) target = $region56
        $region55: #{dcrnn_forward.3} parent=11 // pred_region
          _
        $region56: #{dcrnn_forward.3} parent=11 // pred_fallthru
          _
        // Predicated region
        $region57: #{dcrnn_forward.3} parent=11 // pred_check
          %p699 = pneg %p379
        $region58: #{dcrnn_forward.3} parent=11 // pred_check_branch
          %701 = sbr.rel (%p699) target = $region60
        $region59: #{dcrnn_forward.3} parent=11 // pred_region
          _
        $region60: #{dcrnn_forward.3} parent=11 // pred_fallthru
          _
        // Predicated region
        $region61: #{dcrnn_forward.3} parent=11 // pred_check
          %p702 = pneg %p400
        $region62: #{dcrnn_forward.3} parent=11 // pred_check_branch
          %704 = sbr.rel (%p702) target = $region64
        $region63: #{dcrnn_forward.3} parent=11 // pred_region
          _
        $region64: #{dcrnn_forward.3} parent=11 // pred_fallthru
          _
        // Predicated region
        $region65: #{dcrnn_forward.3} parent=11 // pred_check
          %p705 = pneg %p421
        $region66: #{dcrnn_forward.3} parent=11 // pred_check_branch
          %707 = sbr.rel (%p705) target = $region68
        $region67: #{dcrnn_forward.3} parent=11 // pred_region
          _
        $region68: #{dcrnn_forward.3} parent=11 // pred_fallthru
          _
        // Predicated region
        $region69: #{dcrnn_forward.3} parent=11 // pred_check
          %p708 = pneg %p442
        $region70: #{dcrnn_forward.3} parent=11 // pred_check_branch
          %710 = sbr.rel (%p708) target = $region72
        $region71: #{dcrnn_forward.3} parent=11 // pred_region
          _
        $region72: #{dcrnn_forward.3} parent=11 // pred_fallthru
          _
        // Predicated region
        $region73: #{dcrnn_forward.3} parent=11 // pred_check
          %p711 = pneg %p463
        $region74: #{dcrnn_forward.3} parent=11 // pred_check_branch
          %713 = sbr.rel (%p711) target = $region76
        $region75: #{dcrnn_forward.3} parent=11 // pred_region
          _
        $region76: #{dcrnn_forward.3} parent=11 // pred_fallthru
          _
        // Predicated region
        $region77: #{dcrnn_forward.3} parent=11 // pred_check
          %p714 = pneg %p484
        $region78: #{dcrnn_forward.3} parent=11 // pred_check_branch
          %716 = sbr.rel (%p714) target = $region80
        $region79: #{dcrnn_forward.3} parent=11 // pred_region
          _
        $region80: #{dcrnn_forward.3} parent=11 // pred_fallthru
          _
        // Predicated region
        $region81: #{dcrnn_forward.3} parent=11 // pred_check
          %p717 = pneg %p505
        $region82: #{dcrnn_forward.3} parent=11 // pred_check_branch
          %719 = sbr.rel (%p717) target = $region84
        $region83: #{dcrnn_forward.3} parent=11 // pred_region
          _
        $region84: #{dcrnn_forward.3} parent=11 // pred_fallthru
          _
        // Predicated region
        $region85: #{dcrnn_forward.3} parent=11 // pred_check
          %p720 = pneg %p526
        $region86: #{dcrnn_forward.3} parent=11 // pred_check_branch
          %722 = sbr.rel (%p720) target = $region88
        $region87: #{dcrnn_forward.3} parent=11 // pred_region
          _
        $region88: #{dcrnn_forward.3} parent=11 // pred_fallthru
          _
        // Predicated region
        $region89: #{dcrnn_forward.3} parent=11 // pred_check
          %p723 = pneg %p547
        $region90: #{dcrnn_forward.3} parent=11 // pred_check_branch
          %725 = sbr.rel (%p723) target = $region92
        $region91: #{dcrnn_forward.3} parent=11 // pred_region
          _
        $region92: #{dcrnn_forward.3} parent=11 // pred_fallthru
          _
      $region12: #{dcrnn_forward.3} parent=5 // pred_fallthru
        _
      %p726 = scmp.lt.s32.totalorder %s49, 2
      // Predicated region
      $region93: #{dcrnn_forward.3} parent=5 // pred_check
        %p727 = pneg %p726
      $region94: #{dcrnn_forward.3} parent=5 // pred_check_branch
        %729 = sbr.rel (%p727) target = $region96
      $region95: #{dcrnn_forward.3} parent=5 // pred_region
        // Predicated region
        $region97: #{dcrnn_forward.3} parent=95 // pred_check
          %p730 = pneg %p69
        $region98: #{dcrnn_forward.3} parent=95 // pred_check_branch
          %732 = sbr.rel (%p730) target = $region100
        $region99: #{dcrnn_forward.3} parent=95 // pred_region
          %p733 = scmp.lt.s32.totalorder %s49, 1
          %s734 = scalar_select %p733, %s49, 1
          %s735 = smul.addr %s734, 8
          %s736 = scalar_lea.vmem %s1, %s735
        $region100: #{dcrnn_forward.3} parent=95 // pred_fallthru
          _
        // Predicated region
        $region101: #{dcrnn_forward.3} parent=95 // pred_check
          %p737 = pneg %p95
        $region102: #{dcrnn_forward.3} parent=95 // pred_check_branch
          %739 = sbr.rel (%p737) target = $region104
        $region103: #{dcrnn_forward.3} parent=95 // pred_region
          %p740 = scmp.lt.s32.totalorder %s49, 1
          %s741 = scalar_select %p740, %s49, 1
          %s742 = smul.addr %s741, 2
          %s743 = smul.addr %s742, 8
          %s744 = scalar_lea.vmem %s2, %s743
        $region104: #{dcrnn_forward.3} parent=95 // pred_fallthru
          _
        // Predicated region
        $region105: #{dcrnn_forward.3} parent=95 // pred_check
          %p745 = pneg %p121
        $region106: #{dcrnn_forward.3} parent=95 // pred_check_branch
          %747 = sbr.rel (%p745) target = $region108
        $region107: #{dcrnn_forward.3} parent=95 // pred_region
          %p748 = scmp.lt.s32.totalorder %s49, 1
          %s749 = scalar_select %p748, %s49, 1
          %s750 = scalar_lea.vmem %s3, %s749
        $region108: #{dcrnn_forward.3} parent=95 // pred_fallthru
          _
      $region96: #{dcrnn_forward.3} parent=5 // pred_fallthru
        _
      %p751 = scmp.le.s32.totalorder 1, %s49
      %p752 = scmp.lt.s32.totalorder %s49, 3
      %p753 = pnand %p751, %p752
      %p754 = pneg %p753
      // Predicated region
      $region109: #{dcrnn_forward.3} parent=5 // pred_check
        _
      $region110: #{dcrnn_forward.3} parent=5 // pred_check_branch
        %756 = sbr.rel (%p753) target = $region112
      $region111: #{dcrnn_forward.3} parent=5 // pred_region
        %s757 = ssub.s32 %s49, 1
        %p758 = scmp.lt.s32.totalorder %s54, 1
        %s759 = scalar_select %p758, %s54, 1
        %s760 = smul.addr %s759, 8
        %s761 = scalar_lea.vmem %s1, %s760
        %p762 = pneg %p75
        %p763 = pneg %p72
        %p764 = scmp.lt.s32.totalorder %s54, 1
        %s765 = scalar_select %p764, %s54, 1
        %s766 = smul.addr %s765, 2
        %s767 = smul.addr %s766, 8
        %s768 = scalar_lea.vmem %s2, %s767
        %p769 = pneg %p101
        %p770 = pneg %p98
        %p771 = scmp.lt.s32.totalorder %s54, 1
        %s772 = scalar_select %p771, %s54, 1
        %s773 = scalar_lea.vmem %s3, %s772
        %p774 = pneg %p127
        %p775 = pneg %p124
        %p776 = pneg %p148
        %p777 = pneg %p145
        %p778 = pneg %p169
        %p779 = pneg %p166
        %p780 = pneg %p190
        %p781 = pneg %p187
        %p782 = pneg %p211
        %p783 = pneg %p208
        %p784 = pneg %p232
        %p785 = pneg %p229
        %p786 = pneg %p253
        %p787 = pneg %p250
        %p788 = pneg %p274
        %p789 = pneg %p271
        %p790 = pneg %p295
        %p791 = pneg %p292
        %p792 = pneg %p316
        %p793 = pneg %p313
        %p794 = pneg %p337
        %p795 = pneg %p334
        %p796 = pneg %p358
        %p797 = pneg %p355
        %p798 = pneg %p379
        %p799 = pneg %p376
        %p800 = pneg %p400
        %p801 = pneg %p397
        %p802 = pneg %p421
        %p803 = pneg %p418
        %p804 = pneg %p442
        %p805 = pneg %p439
        %p806 = pneg %p463
        %p807 = pneg %p460
        %p808 = pneg %p484
        %p809 = pneg %p481
        %p810 = pneg %p505
        %p811 = pneg %p502
        %p812 = pneg %p526
        %p813 = pneg %p523
        %p814 = pneg %p547
        %p815 = pneg %p544
        %p816 = pneg %p573
        %p817 = pneg %p570
        %s818 = sand.u32 %s560, 1
        %s819 = scalar_lea.sflag [#allocation6], %s818
        %s820 = sand.u32 %s560, 1
        %s821 = scalar_lea.vmem [#allocation5], %s820
        %p822 = pneg %p599
        %p823 = pneg %p596
        %s824 = sand.u32 %s54, 1
        %s825 = scalar_lea.sflag [#allocation8], %s824
        %s826 = sand.u32 %s586, 1
        %s827 = scalar_lea.vmem [#allocation7], %s826
        %p828 = pneg %p625
        %p829 = pneg %p622
        %s830 = sand.u32 %s54, 1
        %s831 = scalar_lea.sflag [#allocation8], %s830
        %s832 = sand.u32 %s612, 1
        %s833 = scalar_lea.vmem [#allocation9], %s832
        %p834 = pneg %p651
        %p835 = pneg %p648
        %s836 = sand.u32 %s638, 1
        %s837 = scalar_lea.sflag [#allocation11], %s836
        %s838 = sand.u32 %s638, 1
        %s839 = scalar_lea.vmem [#allocation10], %s838
        %p840 = scmp.lt.s32.totalorder %s54, 1
        %s841 = scalar_select %p840, %s54, 1
        %s842 = smul.addr %s841, 8
        %s843 = scalar_lea.vmem %s1, %s842
        %p844 = scmp.lt.s32.totalorder %s54, 1
        %s845 = scalar_select %p844, %s54, 1
        %s846 = smul.addr %s845, 2
        %s847 = smul.addr %s846, 8
        %s848 = scalar_lea.vmem %s2, %s847
        %p849 = scmp.lt.s32.totalorder %s54, 1
        %s850 = scalar_select %p849, %s54, 1
        %s851 = scalar_lea.vmem %s3, %s850
        %v852 = vld [vmem:[%s843] sm:$0xff]
        %854 = vrot.lane.b32.xlu0 %v852, 120
        %v855 = vpop.permute.xlu0 %854
        %v857 = vadd.f32 %v852, %v855
        %858 = vrot.lane.b32.xlu0 %v852, 112
        %v859 = vpop.permute.xlu0 %858
        %v861 = vadd.f32 %v857, %v859
        %862 = vrot.lane.b32.xlu0 %v852, 104
        %v863 = vpop.permute.xlu0 %862
        %v865 = vadd.f32 %v861, %v863
        %866 = vrot.lane.b32.xlu0 %v852, 96
        %v867 = vpop.permute.xlu0 %866
        %v869 = vadd.f32 %v865, %v867
        %870 = vrot.lane.b32.xlu0 %v852, 88
        %v871 = vpop.permute.xlu0 %870
        %v873 = vadd.f32 %v869, %v871
        %v874 = vmul.f32 %v873, 0.16666667
        %v875 = vld [vmem:[%s4] sm:$0xff]
        %v876 = vld [vmem:[%s5] sm:$0x1]
        %v878 = vlaneseq
        %v879 = vshrl.u32 %v878, 7
        %v880 = vsub.s32 0, %v879
        %v881 = vrot.slane %v876, %v880
        %vm883 = vcmask 64512
        %v885 = vsel %vm883, %v874, 0
        %887 = vmatprep.subr.mxu0 0.0
        %888 = vmatpush1.msra.mxu0 0.0
        %889 = vmatprep.subr.mxu0 0.0
        %890 = vmatpush1.msra.mxu0 0.0
        %891 = vmatprep.subr.mxu0 0.0
        %892 = vmatpush1.msra.mxu0 0.0
        %893 = vmatprep.subr.mxu0 0.0
        %894 = vmatpush1.msra.mxu0 0.0
        %895 = vmatprep.subr.mxu0 0.0
        %896 = vmatpush1.msra.mxu0 0.0
        %897 = vmatprep.subr.mxu0 0.0
        %898 = vmatpush1.msra.mxu0 0.0
        %899 = vmatprep.subr.mxu0 0.0
        %900 = vmatpush1.msra.mxu0 0.0
        %901 = vmatprep.subr.mxu0 0.0
        %902 = vmatpush1.msra.mxu0 0.0
        %903 = vmatprep.subr.mxu0 0.0
        %904 = vmatpush1.msra.mxu0 0.0
        %905 = vmatprep.subr.mxu0 0.0
        %906 = vmatpush1.msra.mxu0 0.0
        %907 = vmatprep.subr.mxu0 0.0
        %908 = vmatpush1.msra.mxu0 0.0
        %909 = vmatprep.subr.mxu0 0.0
        %910 = vmatpush1.msra.mxu0 0.0
        %911 = vmatprep.subr.mxu0 0.0
        %912 = vmatpush1.msra.mxu0 0.0
        %913 = vmatprep.subr.mxu0 0.0
        %914 = vmatpush1.msra.mxu0 0.0
        %915 = vmatprep.subr.mxu0 0.0
        %916 = vmatpush1.msra.mxu0 0.0
        %917 = vmatprep.subr.mxu0 0.0
        %918 = vmatpush1.msra.mxu0 %v875
        %919 = vmatprep.subr.mxu0 0.0
        %920 = vmatpush2.msra.mxu0 0.0
        %921 = vmatprep.subr.mxu0 0.0
        %922 = vmatpush2.msra.mxu0 0.0
        %923 = vmatprep.subr.mxu0 0.0
        %924 = vmatpush2.msra.mxu0 0.0
        %925 = vmatprep.subr.mxu0 0.0
        %926 = vmatpush2.msra.mxu0 0.0
        %927 = vmatprep.subr.mxu0 0.0
        %928 = vmatpush2.msra.mxu0 0.0
        %929 = vmatprep.subr.mxu0 0.0
        %930 = vmatpush2.msra.mxu0 0.0
        %931 = vmatprep.subr.mxu0 0.0
        %932 = vmatpush2.msra.mxu0 0.0
        %933 = vmatprep.subr.mxu0 0.0
        %934 = vmatpush2.msra.mxu0 0.0
        %935 = vmatprep.subr.mxu0 0.0
        %936 = vmatpush2.msra.mxu0 0.0
        %937 = vmatprep.subr.mxu0 0.0
        %938 = vmatpush2.msra.mxu0 0.0
        %939 = vmatprep.subr.mxu0 0.0
        %940 = vmatpush2.msra.mxu0 0.0
        %941 = vmatprep.subr.mxu0 0.0
        %942 = vmatpush2.msra.mxu0 0.0
        %943 = vmatprep.subr.mxu0 0.0
        %944 = vmatpush2.msra.mxu0 0.0
        %945 = vmatprep.subr.mxu0 0.0
        %946 = vmatpush2.msra.mxu0 0.0
        %947 = vmatprep.subr.mxu0 0.0
        %948 = vmatpush2.msra.mxu0 0.0
        %949 = vmatprep.subr.mxu0 0.0
        %950 = vmatpush2.msra.mxu0 0.0
        %951 = vmatprep.mubr.f32.mxu0 0.0
        %952 = vmatmul.mubr.f32.gmra.mxu0 %v885
        %v953 = vpop.f32.mrf.mxu0
        %v954 = vadd.f32 %v881, %v953
        %v955 = vpop.f32.mrf.mxu0
        %956 = vdwg.mxu0
        %v957 = vmax.f32 %v954, 0.0
        %v958 = vld [vmem:[%s6] sm:$0xff]
        %v959 = vld [vmem:[%s6 + $0x8] sm:$0xff]
        %v960 = vld [vmem:[%s6 + $0x10] sm:$0xff]
        %v961 = vld [vmem:[%s6 + $0x18] sm:$0xff]
        %v962 = vld [vmem:[%s6 + $0x20] sm:$0xff]
        %v963 = vld [vmem:[%s6 + $0x28] sm:$0xff]
        %v964 = vld [vmem:[%s6 + $0x30] sm:$0xff]
        %v965 = vld [vmem:[%s6 + $0x38] sm:$0xff]
        %v966 = vld [vmem:[%s7] sm:$0x1]
        %v968 = vlaneseq
        %v969 = vshrl.u32 %v968, 7
        %v970 = vsub.s32 0, %v969
        %v971 = vrot.slane %v966, %v970
        %vm973 = vcmask 523264
        %v975 = vsel %vm973, %v957, 0
        %977 = vmatprep.subr.mxu0 0.0
        %978 = vmatpush1.msra.mxu0 0.0
        %979 = vmatprep.subr.mxu0 0.0
        %980 = vmatpush1.msra.mxu0 0.0
        %981 = vmatprep.subr.mxu0 0.0
        %982 = vmatpush1.msra.mxu0 0.0
        %983 = vmatprep.subr.mxu0 0.0
        %984 = vmatpush1.msra.mxu0 0.0
        %985 = vmatprep.subr.mxu0 0.0
        %986 = vmatpush1.msra.mxu0 0.0
        %987 = vmatprep.subr.mxu0 0.0
        %988 = vmatpush1.msra.mxu0 0.0
        %989 = vmatprep.subr.mxu0 0.0
        %990 = vmatpush1.msra.mxu0 0.0
        %991 = vmatprep.subr.mxu0 0.0
        %992 = vmatpush1.msra.mxu0 0.0
        %993 = vmatprep.subr.mxu0 0.0
        %994 = vmatpush1.msra.mxu0 %v965
        %995 = vmatprep.subr.mxu0 0.0
        %996 = vmatpush1.msra.mxu0 %v964
        %997 = vmatprep.subr.mxu0 0.0
        %998 = vmatpush1.msra.mxu0 %v963
        %999 = vmatprep.subr.mxu0 0.0
        %1000 = vmatpush1.msra.mxu0 %v962
        %1001 = vmatprep.subr.mxu0 0.0
        %1002 = vmatpush1.msra.mxu0 %v961
        %1003 = vmatprep.subr.mxu0 0.0
        %1004 = vmatpush1.msra.mxu0 %v960
        %1005 = vmatprep.subr.mxu0 0.0
        %1006 = vmatpush1.msra.mxu0 %v959
        %1007 = vmatprep.subr.mxu0 0.0
        %1008 = vmatpush1.msra.mxu0 %v958
        %1009 = vmatprep.subr.mxu0 0.0
        %1010 = vmatpush2.msra.mxu0 0.0
        %1011 = vmatprep.subr.mxu0 0.0
        %1012 = vmatpush2.msra.mxu0 0.0
        %1013 = vmatprep.subr.mxu0 0.0
        %1014 = vmatpush2.msra.mxu0 0.0
        %1015 = vmatprep.subr.mxu0 0.0
        %1016 = vmatpush2.msra.mxu0 0.0
        %1017 = vmatprep.subr.mxu0 0.0
        %1018 = vmatpush2.msra.mxu0 0.0
        %1019 = vmatprep.subr.mxu0 0.0
        %1020 = vmatpush2.msra.mxu0 0.0
        %1021 = vmatprep.subr.mxu0 0.0
        %1022 = vmatpush2.msra.mxu0 0.0
        %1023 = vmatprep.subr.mxu0 0.0
        %1024 = vmatpush2.msra.mxu0 0.0
        %1025 = vmatprep.subr.mxu0 0.0
        %1026 = vmatpush2.msra.mxu0 0.0
        %1027 = vmatprep.subr.mxu0 0.0
        %1028 = vmatpush2.msra.mxu0 0.0
        %1029 = vmatprep.subr.mxu0 0.0
        %1030 = vmatpush2.msra.mxu0 0.0
        %1031 = vmatprep.subr.mxu0 0.0
        %1032 = vmatpush2.msra.mxu0 0.0
        %1033 = vmatprep.subr.mxu0 0.0
        %1034 = vmatpush2.msra.mxu0 0.0
        %1035 = vmatprep.subr.mxu0 0.0
        %1036 = vmatpush2.msra.mxu0 0.0
        %1037 = vmatprep.subr.mxu0 0.0
        %1038 = vmatpush2.msra.mxu0 0.0
        %1039 = vmatprep.subr.mxu0 0.0
        %1040 = vmatpush2.msra.mxu0 0.0
        %1041 = vmatprep.mubr.f32.mxu0 0.0
        %1042 = vmatmul.mubr.f32.gmra.mxu0 %v975
        %v1043 = vpop.f32.mrf.mxu0
        %v1044 = vadd.f32 %v971, %v1043
        %v1045 = vpop.f32.mrf.mxu0
        %1046 = vdwg.mxu0
        %v1047 = vld [vmem:[%s848] sm:$0xff]
        %v1048 = vmax.f32 %v1047, 1e-12
        %v1049 = vmin.f32 %v1048, 1.0
        %v1050 = vadd.f32 %v1049, 1e-12
        %v1051 = vlog2.pop %v1050
        %v1052 = vmul.f32 %v1051, 0.6931472
        %v1053 = vsub.f32 1.0, %v1049
        %v1054 = vadd.f32 %v1053, 1e-12
        %v1055 = vlog2.pop %v1054
        %v1056 = vmul.f32 %v1055, 0.6931472
        %v1057 = vsub.f32 %v1052, %v1056
        %vm1058 = vcmask 261120
        %v1060 = vsel %vm1058, %v1044, 0
        %1062 = vmatprep.subr.mxu0 0.0
        %1063 = vmatpush1.xpose.msra.mxu0 0.0
        %1064 = vmatprep.subr.mxu0 0.0
        %1065 = vmatpush1.xpose.msra.mxu0 0.0
        %1066 = vmatprep.subr.mxu0 0.0
        %1067 = vmatpush1.xpose.msra.mxu0 0.0
        %1068 = vmatprep.subr.mxu0 0.0
        %1069 = vmatpush1.xpose.msra.mxu0 0.0
        %1070 = vmatprep.subr.mxu0 0.0
        %1071 = vmatpush1.xpose.msra.mxu0 0.0
        %1072 = vmatprep.subr.mxu0 0.0
        %1073 = vmatpush1.xpose.msra.mxu0 0.0
        %1074 = vmatprep.subr.mxu0 0.0
        %1075 = vmatpush1.xpose.msra.mxu0 0.0
        %1076 = vmatprep.subr.mxu0 0.0
        %1077 = vmatpush1.xpose.msra.mxu0 0.0
        %1078 = vmatprep.subr.mxu0 0.0
        %1079 = vmatpush1.xpose.msra.mxu0 0.0
        %1080 = vmatprep.subr.mxu0 0.0
        %1081 = vmatpush1.xpose.msra.mxu0 0.0
        %1082 = vmatprep.subr.mxu0 0.0
        %1083 = vmatpush1.xpose.msra.mxu0 0.0
        %1084 = vmatprep.subr.mxu0 0.0
        %1085 = vmatpush1.xpose.msra.mxu0 0.0
        %1086 = vmatprep.subr.mxu0 0.0
        %1087 = vmatpush1.xpose.msra.mxu0 0.0
        %1088 = vmatprep.subr.mxu0 0.0
        %1089 = vmatpush1.xpose.msra.mxu0 0.0
        %1090 = vmatprep.subr.mxu0 0.0
        %1091 = vmatpush1.xpose.msra.mxu0 0.0
        %1092 = vmatprep.subr.mxu0 0.0
        %1093 = vmatpush1.xpose.msra.mxu0 %v1060
        %1094 = vmatprep.subr.mxu0 0.0
        %1095 = vmatpush2.xpose.msra.mxu0 0.0
        %1096 = vmatprep.subr.mxu0 0.0
        %1097 = vmatpush2.xpose.msra.mxu0 0.0
        %1098 = vmatprep.subr.mxu0 0.0
        %1099 = vmatpush2.xpose.msra.mxu0 0.0
        %1100 = vmatprep.subr.mxu0 0.0
        %1101 = vmatpush2.xpose.msra.mxu0 0.0
        %1102 = vmatprep.subr.mxu0 0.0
        %1103 = vmatpush2.xpose.msra.mxu0 0.0
        %1104 = vmatprep.subr.mxu0 0.0
        %1105 = vmatpush2.xpose.msra.mxu0 0.0
        %1106 = vmatprep.subr.mxu0 0.0
        %1107 = vmatpush2.xpose.msra.mxu0 0.0
        %1108 = vmatprep.subr.mxu0 0.0
        %1109 = vmatpush2.xpose.msra.mxu0 0.0
        %1110 = vmatprep.subr.mxu0 0.0
        %1111 = vmatpush2.xpose.msra.mxu0 0.0
        %1112 = vmatprep.subr.mxu0 0.0
        %1113 = vmatpush2.xpose.msra.mxu0 0.0
        %1114 = vmatprep.subr.mxu0 0.0
        %1115 = vmatpush2.xpose.msra.mxu0 0.0
        %1116 = vmatprep.subr.mxu0 0.0
        %1117 = vmatpush2.xpose.msra.mxu0 0.0
        %1118 = vmatprep.subr.mxu0 0.0
        %1119 = vmatpush2.xpose.msra.mxu0 0.0
        %1120 = vmatprep.subr.mxu0 0.0
        %1121 = vmatpush2.xpose.msra.mxu0 0.0
        %1122 = vmatprep.subr.mxu0 0.0
        %1123 = vmatpush2.xpose.msra.mxu0 0.0
        %1124 = vmatprep.subr.mxu0 0.0
        %1125 = vmatpush2.xpose.msra.mxu0 0.0
        %1126 = vmatprep.mubr.f32.mxu0 0.0
        %1127 = vmatmul.mubr.f32.gmra.mxu0 %v1060
        %v1128 = vpop.f32.mrf.mxu0
        %v1129 = vadd.f32 %v1057, %v1128
        %v1130 = vpop.f32.mrf.mxu0
        %1131 = vdwg.mxu0
        %v1132 = vmul.f32 %v1129, 10.0
        %v1133 = vxor.u32 %v1132, 2147483648
        %v1134 = vmul.f32 %v1133, 1.442695
        %v1135 = vpow.pop %v1134
        %v1136 = vadd.f32 %v1135, 1.0
        %v1137 = vrcp.pop %v1136
        %v1138 = vmul.f32 1.0, %v1137
        %v1139 = vsel %vm883, %v1138, 0.0
        %1140 = vadd.xlane.f32.xlu0 %v1139
        %v1141 = vpop.xlane.xlu0 %1140
        %v1142 = vadd.f32 %v1141, 1e-10
        %v1143 = vrsqrt.pop %v1142
        %v1144 = vmul.f32 %v1138, %v1143
        %1145 = vxpose.xlu0.b32.start [1/16] %v1143, 128
        %1146 = vxpose.xlu0.b32.cont [2/16] 0.0, 128
        %1147 = vxpose.xlu0.b32.cont [3/16] 0.0, 128
        %1148 = vxpose.xlu0.b32.cont [4/16] 0.0, 128
        %1149 = vxpose.xlu0.b32.cont [5/16] 0.0, 128
        %1150 = vxpose.xlu0.b32.cont [6/16] 0.0, 128
        %1151 = vxpose.xlu0.b32.cont [7/16] 0.0, 128
        %1152 = vxpose.xlu0.b32.cont [8/16] 0.0, 128
        %1153 = vxpose.xlu0.b32.cont [9/16] 0.0, 128
        %1154 = vxpose.xlu0.b32.cont [10/16] 0.0, 128
        %1155 = vxpose.xlu0.b32.cont [11/16] 0.0, 128
        %1156 = vxpose.xlu0.b32.cont [12/16] 0.0, 128
        %1157 = vxpose.xlu0.b32.cont [13/16] 0.0, 128
        %1158 = vxpose.xlu0.b32.cont [14/16] 0.0, 128
        %1159 = vxpose.xlu0.b32.cont [15/16] 0.0, 128
        %1160 = vxpose.xlu0.b32.end [16/16] 0.0, 128
        %v1161 = vpop.trf.xlu0
        %v1162 = vpop.trf.xlu0
        %v1163 = vpop.trf.xlu0
        %v1164 = vpop.trf.xlu0
        %v1165 = vpop.trf.xlu0
        %v1166 = vpop.trf.xlu0
        %v1167 = vpop.trf.xlu0
        %v1168 = vpop.trf.xlu0
        %v1169 = vpop.trf.xlu0
        %v1170 = vpop.trf.xlu0
        %v1171 = vpop.trf.xlu0
        %v1172 = vpop.trf.xlu0
        %v1173 = vpop.trf.xlu0
        %v1174 = vpop.trf.xlu0
        %v1175 = vpop.trf.xlu0
        %v1176 = vpop.trf.xlu0
        %v1177 = vlaneseq
        %v1178 = vshrl.u32 %v1177, 7
        %v1179 = vsub.s32 0, %v1178
        %v1180 = vrot.slane %v1161, %v1179
        %v1181 = vmul.f32 %v1144, %v1180
        %s1182 = scalar_lea.vmem %s848, 8
        %v1183 = vld [vmem:[%s1182] sm:$0xff]
        %v1184 = vmax.f32 %v1183, 1e-12
        %v1185 = vmin.f32 %v1184, 1.0
        %v1186 = vadd.f32 %v1185, 1e-12
        %v1187 = vlog2.pop %v1186
        %v1188 = vmul.f32 %v1187, 0.6931472
        %v1189 = vsub.f32 1.0, %v1185
        %v1190 = vadd.f32 %v1189, 1e-12
        %v1191 = vlog2.pop %v1190
        %v1192 = vmul.f32 %v1191, 0.6931472
        %v1193 = vsub.f32 %v1188, %v1192
        %1194 = vrot.lane.b32.xlu0 %v1044, 96
        %v1195 = vpop.permute.xlu0 %1194
        %v1196 = vsel %vm1058, %v1195, 0
        %1198 = vmatprep.subr.mxu0 0.0
        %1199 = vmatpush1.xpose.msra.mxu0 0.0
        %1200 = vmatprep.subr.mxu0 0.0
        %1201 = vmatpush1.xpose.msra.mxu0 0.0
        %1202 = vmatprep.subr.mxu0 0.0
        %1203 = vmatpush1.xpose.msra.mxu0 0.0
        %1204 = vmatprep.subr.mxu0 0.0
        %1205 = vmatpush1.xpose.msra.mxu0 0.0
        %1206 = vmatprep.subr.mxu0 0.0
        %1207 = vmatpush1.xpose.msra.mxu0 0.0
        %1208 = vmatprep.subr.mxu0 0.0
        %1209 = vmatpush1.xpose.msra.mxu0 0.0
        %1210 = vmatprep.subr.mxu0 0.0
        %1211 = vmatpush1.xpose.msra.mxu0 0.0
        %1212 = vmatprep.subr.mxu0 0.0
        %1213 = vmatpush1.xpose.msra.mxu0 0.0
        %1214 = vmatprep.subr.mxu0 0.0
        %1215 = vmatpush1.xpose.msra.mxu0 0.0
        %1216 = vmatprep.subr.mxu0 0.0
        %1217 = vmatpush1.xpose.msra.mxu0 0.0
        %1218 = vmatprep.subr.mxu0 0.0
        %1219 = vmatpush1.xpose.msra.mxu0 0.0
        %1220 = vmatprep.subr.mxu0 0.0
        %1221 = vmatpush1.xpose.msra.mxu0 0.0
        %1222 = vmatprep.subr.mxu0 0.0
        %1223 = vmatpush1.xpose.msra.mxu0 0.0
        %1224 = vmatprep.subr.mxu0 0.0
        %1225 = vmatpush1.xpose.msra.mxu0 0.0
        %1226 = vmatprep.subr.mxu0 0.0
        %1227 = vmatpush1.xpose.msra.mxu0 0.0
        %1228 = vmatprep.subr.mxu0 0.0
        %1229 = vmatpush1.xpose.msra.mxu0 %v1196
        %1230 = vmatprep.subr.mxu0 0.0
        %1231 = vmatpush2.xpose.msra.mxu0 0.0
        %1232 = vmatprep.subr.mxu0 0.0
        %1233 = vmatpush2.xpose.msra.mxu0 0.0
        %1234 = vmatprep.subr.mxu0 0.0
        %1235 = vmatpush2.xpose.msra.mxu0 0.0
        %1236 = vmatprep.subr.mxu0 0.0
        %1237 = vmatpush2.xpose.msra.mxu0 0.0
        %1238 = vmatprep.subr.mxu0 0.0
        %1239 = vmatpush2.xpose.msra.mxu0 0.0
        %1240 = vmatprep.subr.mxu0 0.0
        %1241 = vmatpush2.xpose.msra.mxu0 0.0
        %1242 = vmatprep.subr.mxu0 0.0
        %1243 = vmatpush2.xpose.msra.mxu0 0.0
        %1244 = vmatprep.subr.mxu0 0.0
        %1245 = vmatpush2.xpose.msra.mxu0 0.0
        %1246 = vmatprep.subr.mxu0 0.0
        %1247 = vmatpush2.xpose.msra.mxu0 0.0
        %1248 = vmatprep.subr.mxu0 0.0
        %1249 = vmatpush2.xpose.msra.mxu0 0.0
        %1250 = vmatprep.subr.mxu0 0.0
        %1251 = vmatpush2.xpose.msra.mxu0 0.0
        %1252 = vmatprep.subr.mxu0 0.0
        %1253 = vmatpush2.xpose.msra.mxu0 0.0
        %1254 = vmatprep.subr.mxu0 0.0
        %1255 = vmatpush2.xpose.msra.mxu0 0.0
        %1256 = vmatprep.subr.mxu0 0.0
        %1257 = vmatpush2.xpose.msra.mxu0 0.0
        %1258 = vmatprep.subr.mxu0 0.0
        %1259 = vmatpush2.xpose.msra.mxu0 0.0
        %1260 = vmatprep.subr.mxu0 0.0
        %1261 = vmatpush2.xpose.msra.mxu0 0.0
        %1262 = vmatprep.mubr.f32.mxu0 0.0
        %1263 = vmatmul.mubr.f32.gmra.mxu0 %v1196
        %v1264 = vpop.f32.mrf.mxu0
        %v1265 = vadd.f32 %v1193, %v1264
        %v1266 = vpop.f32.mrf.mxu0
        %1267 = vdwg.mxu0
        %v1268 = vmul.f32 %v1265, 10.0
        %v1269 = vxor.u32 %v1268, 2147483648
        %v1270 = vmul.f32 %v1269, 1.442695
        %v1271 = vpow.pop %v1270
        %v1272 = vadd.f32 %v1271, 1.0
        %v1273 = vrcp.pop %v1272
        %v1274 = vmul.f32 1.0, %v1273
        %v1275 = vsel %vm883, %v1274, 0.0
        %1276 = vadd.xlane.f32.xlu0 %v1275
        %v1277 = vpop.xlane.xlu0 %1276
        %v1278 = vadd.f32 %v1277, 1e-10
        %v1279 = vrsqrt.pop %v1278
        %v1280 = vmul.f32 %v1274, %v1279
        %1281 = vxpose.xlu0.b32.start [1/16] %v1279, 128
        %1282 = vxpose.xlu0.b32.cont [2/16] 0.0, 128
        %1283 = vxpose.xlu0.b32.cont [3/16] 0.0, 128
        %1284 = vxpose.xlu0.b32.cont [4/16] 0.0, 128
        %1285 = vxpose.xlu0.b32.cont [5/16] 0.0, 128
        %1286 = vxpose.xlu0.b32.cont [6/16] 0.0, 128
        %1287 = vxpose.xlu0.b32.cont [7/16] 0.0, 128
        %1288 = vxpose.xlu0.b32.cont [8/16] 0.0, 128
        %1289 = vxpose.xlu0.b32.cont [9/16] 0.0, 128
        %1290 = vxpose.xlu0.b32.cont [10/16] 0.0, 128
        %1291 = vxpose.xlu0.b32.cont [11/16] 0.0, 128
        %1292 = vxpose.xlu0.b32.cont [12/16] 0.0, 128
        %1293 = vxpose.xlu0.b32.cont [13/16] 0.0, 128
        %1294 = vxpose.xlu0.b32.cont [14/16] 0.0, 128
        %1295 = vxpose.xlu0.b32.cont [15/16] 0.0, 128
        %1296 = vxpose.xlu0.b32.end [16/16] 0.0, 128
        %v1297 = vpop.trf.xlu0
        %v1298 = vpop.trf.xlu0
        %v1299 = vpop.trf.xlu0
        %v1300 = vpop.trf.xlu0
        %v1301 = vpop.trf.xlu0
        %v1302 = vpop.trf.xlu0
        %v1303 = vpop.trf.xlu0
        %v1304 = vpop.trf.xlu0
        %v1305 = vpop.trf.xlu0
        %v1306 = vpop.trf.xlu0
        %v1307 = vpop.trf.xlu0
        %v1308 = vpop.trf.xlu0
        %v1309 = vpop.trf.xlu0
        %v1310 = vpop.trf.xlu0
        %v1311 = vpop.trf.xlu0
        %v1312 = vpop.trf.xlu0
        %v1313 = vlaneseq
        %v1314 = vshrl.u32 %v1313, 7
        %v1315 = vsub.s32 0, %v1314
        %v1316 = vrot.slane %v1297, %v1315
        %v1317 = vmul.f32 %v1280, %v1316
        %v1318 = vld [vmem:[%s8] sm:$0xff]
        %v1319 = vld [vmem:[%s8 + $0x8] sm:$0xff]
        %v1320 = vld [vmem:[%s8 + $0x10] sm:$0xff]
        %v1321 = vld [vmem:[%s8 + $0x18] sm:$0xff]
        %v1322 = vld [vmem:[%s8 + $0x20] sm:$0xff]
        %v1323 = vld [vmem:[%s9] sm:$0xff]
        %v1324 = vld [vmem:[%s9 + $0x8] sm:$0xff]
        %v1325 = vld [vmem:[%s9 + $0x10] sm:$0xff]
        %v1326 = vld [vmem:[%s9 + $0x18] sm:$0xff]
        %v1327 = vld [vmem:[%s9 + $0x20] sm:$0xff]
        %v1328 = vld [vmem:[%s9 + $0x28] sm:$0xff]
        %v1329 = vld [vmem:[%s9 + $0x30] sm:$0xff]
        %v1330 = vld [vmem:[%s9 + $0x38] sm:$0xff]
        %v1331 = vld [vmem:[%s9 + $0x40] sm:$0xff]
        %v1332 = vld [vmem:[%s9 + $0x48] sm:$0xff]
        %v1333 = vld [vmem:[%s9 + $0x50] sm:$0xff]
        %v1334 = vld [vmem:[%s9 + $0x58] sm:$0xff]
        %v1335 = vld [vmem:[%s9 + $0x60] sm:$0xff]
        %v1336 = vld [vmem:[%s9 + $0x68] sm:$0xff]
        %v1337 = vld [vmem:[%s9 + $0x70] sm:$0xff]
        %v1338 = vld [vmem:[%s9 + $0x78] sm:$0xff]
        %v1339 = vld [vmem:[%s9 + $0x80] sm:$0xff]
        %v1340 = vld [vmem:[%s9 + $0x88] sm:$0xff]
        %v1341 = vld [vmem:[%s9 + $0x90] sm:$0xff]
        %v1342 = vld [vmem:[%s9 + $0x98] sm:$0xff]
        %v1343 = vld [vmem:[%s10] sm:$0xff]
        %v1344 = vld [vmem:[%s10 + $0x8] sm:$0xff]
        %v1345 = vld [vmem:[%s10 + $0x10] sm:$0xff]
        %v1346 = vld [vmem:[%s10 + $0x18] sm:$0xff]
        %v1347 = vld [vmem:[%s10 + $0x20] sm:$0xff]
        %v1348 = vld [vmem:[%s10 + $0x28] sm:$0xff]
        %v1349 = vld [vmem:[%s10 + $0x30] sm:$0xff]
        %v1350 = vld [vmem:[%s10 + $0x38] sm:$0xff]
        %v1351 = vld [vmem:[%s10 + $0x40] sm:$0xff]
        %v1352 = vld [vmem:[%s10 + $0x48] sm:$0xff]
        %v1353 = vld [vmem:[%s10 + $0x50] sm:$0xff]
        %v1354 = vld [vmem:[%s10 + $0x58] sm:$0xff]
        %v1355 = vld [vmem:[%s10 + $0x60] sm:$0xff]
        %v1356 = vld [vmem:[%s10 + $0x68] sm:$0xff]
        %v1357 = vld [vmem:[%s10 + $0x70] sm:$0xff]
        %v1358 = vld [vmem:[%s10 + $0x78] sm:$0xff]
        %v1359 = vld [vmem:[%s10 + $0x80] sm:$0xff]
        %v1360 = vld [vmem:[%s10 + $0x88] sm:$0xff]
        %v1361 = vld [vmem:[%s10 + $0x90] sm:$0xff]
        %v1362 = vld [vmem:[%s10 + $0x98] sm:$0xff]
        %v1363 = vld [vmem:[%s11] sm:$0x1]
        %v1364 = vld [vmem:[%s12] sm:$0x1]
        %v1365 = vld [vmem:[%s13] sm:$0xff]
        %v1366 = vld [vmem:[%s13 + $0x8] sm:$0xff]
        %v1367 = vld [vmem:[%s13 + $0x10] sm:$0xff]
        %v1368 = vld [vmem:[%s13 + $0x18] sm:$0xff]
        %v1369 = vld [vmem:[%s13 + $0x20] sm:$0xff]
        %v1370 = vld [vmem:[%s13 + $0x28] sm:$0xff]
        %v1371 = vld [vmem:[%s13 + $0x30] sm:$0xff]
        %v1372 = vld [vmem:[%s13 + $0x38] sm:$0xff]
        %v1373 = vld [vmem:[%s13 + $0x40] sm:$0xff]
        %v1374 = vld [vmem:[%s13 + $0x48] sm:$0xff]
        %v1375 = vld [vmem:[%s13 + $0x50] sm:$0xff]
        %v1376 = vld [vmem:[%s13 + $0x58] sm:$0xff]
        %v1377 = vld [vmem:[%s13 + $0x60] sm:$0xff]
        %v1378 = vld [vmem:[%s13 + $0x68] sm:$0xff]
        %v1379 = vld [vmem:[%s13 + $0x70] sm:$0xff]
        %v1380 = vld [vmem:[%s13 + $0x78] sm:$0xff]
        %v1381 = vld [vmem:[%s13 + $0x80] sm:$0xff]
        %v1382 = vld [vmem:[%s13 + $0x88] sm:$0xff]
        %v1383 = vld [vmem:[%s13 + $0x90] sm:$0xff]
        %v1384 = vld [vmem:[%s13 + $0x98] sm:$0xff]
        %v1385 = vld [vmem:[%s14] sm:$0xff]
        %v1386 = vld [vmem:[%s14 + $0x8] sm:$0xff]
        %v1387 = vld [vmem:[%s14 + $0x10] sm:$0xff]
        %v1388 = vld [vmem:[%s14 + $0x18] sm:$0xff]
        %v1389 = vld [vmem:[%s14 + $0x20] sm:$0xff]
        %v1390 = vld [vmem:[%s14 + $0x28] sm:$0xff]
        %v1391 = vld [vmem:[%s14 + $0x30] sm:$0xff]
        %v1392 = vld [vmem:[%s14 + $0x38] sm:$0xff]
        %v1393 = vld [vmem:[%s14 + $0x40] sm:$0xff]
        %v1394 = vld [vmem:[%s14 + $0x48] sm:$0xff]
        %v1395 = vld [vmem:[%s14 + $0x50] sm:$0xff]
        %v1396 = vld [vmem:[%s14 + $0x58] sm:$0xff]
        %v1397 = vld [vmem:[%s14 + $0x60] sm:$0xff]
        %v1398 = vld [vmem:[%s14 + $0x68] sm:$0xff]
        %v1399 = vld [vmem:[%s14 + $0x70] sm:$0xff]
        %v1400 = vld [vmem:[%s14 + $0x78] sm:$0xff]
        %v1401 = vld [vmem:[%s14 + $0x80] sm:$0xff]
        %v1402 = vld [vmem:[%s14 + $0x88] sm:$0xff]
        %v1403 = vld [vmem:[%s14 + $0x90] sm:$0xff]
        %v1404 = vld [vmem:[%s14 + $0x98] sm:$0xff]
        %v1405 = vld [vmem:[%s15] sm:$0xff]
        %v1406 = vld [vmem:[%s15 + $0x8] sm:$0xff]
        %v1407 = vld [vmem:[%s15 + $0x10] sm:$0xff]
        %v1408 = vld [vmem:[%s15 + $0x18] sm:$0xff]
        %v1409 = vld [vmem:[%s15 + $0x20] sm:$0xff]
        %v1410 = vld [vmem:[%s15 + $0x28] sm:$0xff]
        %v1411 = vld [vmem:[%s15 + $0x30] sm:$0xff]
        %v1412 = vld [vmem:[%s15 + $0x38] sm:$0xff]
        %v1413 = vld [vmem:[%s15 + $0x40] sm:$0xff]
        %v1414 = vld [vmem:[%s15 + $0x48] sm:$0xff]
        %v1415 = vld [vmem:[%s15 + $0x50] sm:$0xff]
        %v1416 = vld [vmem:[%s15 + $0x58] sm:$0xff]
        %v1417 = vld [vmem:[%s15 + $0x60] sm:$0xff]
        %v1418 = vld [vmem:[%s15 + $0x68] sm:$0xff]
        %v1419 = vld [vmem:[%s15 + $0x70] sm:$0xff]
        %v1420 = vld [vmem:[%s15 + $0x78] sm:$0xff]
        %v1421 = vld [vmem:[%s15 + $0x80] sm:$0xff]
        %v1422 = vld [vmem:[%s15 + $0x88] sm:$0xff]
        %v1423 = vld [vmem:[%s15 + $0x90] sm:$0xff]
        %v1424 = vld [vmem:[%s15 + $0x98] sm:$0xff]
        %v1425 = vld [vmem:[%s16] sm:$0x1]
        %v1426 = vld [vmem:[%s17] sm:$0x1]
        %v1428 = vsel %vm883, %v1181, 0
        %1430 = vmatprep.subr.mxu0 0.0
        %1431 = vmatpush1.msra.mxu0 0.0
        %1432 = vmatprep.subr.mxu0 0.0
        %1433 = vmatpush1.msra.mxu0 0.0
        %1434 = vmatprep.subr.mxu0 0.0
        %1435 = vmatpush1.msra.mxu0 0.0
        %1436 = vmatprep.subr.mxu0 0.0
        %1437 = vmatpush1.msra.mxu0 0.0
        %1438 = vmatprep.subr.mxu0 0.0
        %1439 = vmatpush1.msra.mxu0 0.0
        %1440 = vmatprep.subr.mxu0 0.0
        %1441 = vmatpush1.msra.mxu0 0.0
        %1442 = vmatprep.subr.mxu0 0.0
        %1443 = vmatpush1.msra.mxu0 0.0
        %1444 = vmatprep.subr.mxu0 0.0
        %1445 = vmatpush1.msra.mxu0 0.0
        %1446 = vmatprep.subr.mxu0 0.0
        %1447 = vmatpush1.msra.mxu0 0.0
        %1448 = vmatprep.subr.mxu0 0.0
        %1449 = vmatpush1.msra.mxu0 0.0
        %1450 = vmatprep.subr.mxu0 0.0
        %1451 = vmatpush1.msra.mxu0 0.0
        %1452 = vmatprep.subr.mxu0 0.0
        %1453 = vmatpush1.msra.mxu0 0.0
        %1454 = vmatprep.subr.mxu0 0.0
        %1455 = vmatpush1.msra.mxu0 0.0
        %1456 = vmatprep.subr.mxu0 0.0
        %1457 = vmatpush1.msra.mxu0 0.0
        %1458 = vmatprep.subr.mxu0 0.0
        %1459 = vmatpush1.msra.mxu0 0.0
        %1460 = vmatprep.subr.mxu0 0.0
        %1461 = vmatpush1.msra.mxu0 %v852
        %1462 = vmatprep.subr.mxu0 0.0
        %1463 = vmatpush2.msra.mxu0 0.0
        %1464 = vmatprep.subr.mxu0 0.0
        %1465 = vmatpush2.msra.mxu0 0.0
        %1466 = vmatprep.subr.mxu0 0.0
        %1467 = vmatpush2.msra.mxu0 0.0
        %1468 = vmatprep.subr.mxu0 0.0
        %1469 = vmatpush2.msra.mxu0 0.0
        %1470 = vmatprep.subr.mxu0 0.0
        %1471 = vmatpush2.msra.mxu0 0.0
        %1472 = vmatprep.subr.mxu0 0.0
        %1473 = vmatpush2.msra.mxu0 0.0
        %1474 = vmatprep.subr.mxu0 0.0
        %1475 = vmatpush2.msra.mxu0 0.0
        %1476 = vmatprep.subr.mxu0 0.0
        %1477 = vmatpush2.msra.mxu0 0.0
        %1478 = vmatprep.subr.mxu0 0.0
        %1479 = vmatpush2.msra.mxu0 0.0
        %1480 = vmatprep.subr.mxu0 0.0
        %1481 = vmatpush2.msra.mxu0 0.0
        %1482 = vmatprep.subr.mxu0 0.0
        %1483 = vmatpush2.msra.mxu0 0.0
        %1484 = vmatprep.subr.mxu0 0.0
        %1485 = vmatpush2.msra.mxu0 0.0
        %1486 = vmatprep.subr.mxu0 0.0
        %1487 = vmatpush2.msra.mxu0 0.0
        %1488 = vmatprep.subr.mxu0 0.0
        %1489 = vmatpush2.msra.mxu0 0.0
        %1490 = vmatprep.subr.mxu0 0.0
        %1491 = vmatpush2.msra.mxu0 0.0
        %1492 = vmatprep.subr.mxu0 0.0
        %1493 = vmatpush2.msra.mxu0 0.0
        %1494 = vmatprep.mubr.f32.mxu0 0.0
        %1495 = vmatmul.mubr.f32.gmra.mxu0 %v1428
        %v1496 = vpop.f32.mrf.mxu0
        %v1497 = vadd.f32 0.0, %v1496
        %v1498 = vpop.f32.mrf.mxu0
        %1499 = vdwg.mxu0
        %1500 = vmatprep.subr.mxu0 0.0
        %1501 = vmatpush1.msra.mxu0 0.0
        %1502 = vmatprep.subr.mxu0 0.0
        %1503 = vmatpush1.msra.mxu0 0.0
        %1504 = vmatprep.subr.mxu0 0.0
        %1505 = vmatpush1.msra.mxu0 0.0
        %1506 = vmatprep.subr.mxu0 0.0
        %1507 = vmatpush1.msra.mxu0 0.0
        %1508 = vmatprep.subr.mxu0 0.0
        %1509 = vmatpush1.msra.mxu0 0.0
        %1510 = vmatprep.subr.mxu0 0.0
        %1511 = vmatpush1.msra.mxu0 0.0
        %1512 = vmatprep.subr.mxu0 0.0
        %1513 = vmatpush1.msra.mxu0 0.0
        %1514 = vmatprep.subr.mxu0 0.0
        %1515 = vmatpush1.msra.mxu0 0.0
        %1516 = vmatprep.subr.mxu0 0.0
        %1517 = vmatpush1.msra.mxu0 0.0
        %1518 = vmatprep.subr.mxu0 0.0
        %1519 = vmatpush1.msra.mxu0 0.0
        %1520 = vmatprep.subr.mxu0 0.0
        %1521 = vmatpush1.msra.mxu0 0.0
        %1522 = vmatprep.subr.mxu0 0.0
        %1523 = vmatpush1.msra.mxu0 0.0
        %1524 = vmatprep.subr.mxu0 0.0
        %1525 = vmatpush1.msra.mxu0 0.0
        %1526 = vmatprep.subr.mxu0 0.0
        %1527 = vmatpush1.msra.mxu0 0.0
        %1528 = vmatprep.subr.mxu0 0.0
        %1529 = vmatpush1.msra.mxu0 0.0
        %1530 = vmatprep.subr.mxu0 0.0
        %1531 = vmatpush1.msra.mxu0 %v1497
        %1532 = vmatprep.subr.mxu0 0.0
        %1533 = vmatpush2.msra.mxu0 0.0
        %1534 = vmatprep.subr.mxu0 0.0
        %1535 = vmatpush2.msra.mxu0 0.0
        %1536 = vmatprep.subr.mxu0 0.0
        %1537 = vmatpush2.msra.mxu0 0.0
        %1538 = vmatprep.subr.mxu0 0.0
        %1539 = vmatpush2.msra.mxu0 0.0
        %1540 = vmatprep.subr.mxu0 0.0
        %1541 = vmatpush2.msra.mxu0 0.0
        %1542 = vmatprep.subr.mxu0 0.0
        %1543 = vmatpush2.msra.mxu0 0.0
        %1544 = vmatprep.subr.mxu0 0.0
        %1545 = vmatpush2.msra.mxu0 0.0
        %1546 = vmatprep.subr.mxu0 0.0
        %1547 = vmatpush2.msra.mxu0 0.0
        %1548 = vmatprep.subr.mxu0 0.0
        %1549 = vmatpush2.msra.mxu0 0.0
        %1550 = vmatprep.subr.mxu0 0.0
        %1551 = vmatpush2.msra.mxu0 0.0
        %1552 = vmatprep.subr.mxu0 0.0
        %1553 = vmatpush2.msra.mxu0 0.0
        %1554 = vmatprep.subr.mxu0 0.0
        %1555 = vmatpush2.msra.mxu0 0.0
        %1556 = vmatprep.subr.mxu0 0.0
        %1557 = vmatpush2.msra.mxu0 0.0
        %1558 = vmatprep.subr.mxu0 0.0
        %1559 = vmatpush2.msra.mxu0 0.0
        %1560 = vmatprep.subr.mxu0 0.0
        %1561 = vmatpush2.msra.mxu0 0.0
        %1562 = vmatprep.subr.mxu0 0.0
        %1563 = vmatpush2.msra.mxu0 0.0
        %1564 = vmatprep.mubr.f32.mxu0 0.0
        %1565 = vmatmul.mubr.f32.gmra.mxu0 %v1428
        %v1566 = vpop.f32.mrf.mxu0
        %v1567 = vadd.f32 0.0, %v1566
        %v1568 = vpop.f32.mrf.mxu0
        %1569 = vdwg.mxu0
        %v1571 = vsel %vm883, %v1317, 0
        %1573 = vmatprep.subr.mxu0 0.0
        %1574 = vmatpush1.msra.mxu0 0.0
        %1575 = vmatprep.subr.mxu0 0.0
        %1576 = vmatpush1.msra.mxu0 0.0
        %1577 = vmatprep.subr.mxu0 0.0
        %1578 = vmatpush1.msra.mxu0 0.0
        %1579 = vmatprep.subr.mxu0 0.0
        %1580 = vmatpush1.msra.mxu0 0.0
        %1581 = vmatprep.subr.mxu0 0.0
        %1582 = vmatpush1.msra.mxu0 0.0
        %1583 = vmatprep.subr.mxu0 0.0
        %1584 = vmatpush1.msra.mxu0 0.0
        %1585 = vmatprep.subr.mxu0 0.0
        %1586 = vmatpush1.msra.mxu0 0.0
        %1587 = vmatprep.subr.mxu0 0.0
        %1588 = vmatpush1.msra.mxu0 0.0
        %1589 = vmatprep.subr.mxu0 0.0
        %1590 = vmatpush1.msra.mxu0 0.0
        %1591 = vmatprep.subr.mxu0 0.0
        %1592 = vmatpush1.msra.mxu0 0.0
        %1593 = vmatprep.subr.mxu0 0.0
        %1594 = vmatpush1.msra.mxu0 0.0
        %1595 = vmatprep.subr.mxu0 0.0
        %1596 = vmatpush1.msra.mxu0 0.0
        %1597 = vmatprep.subr.mxu0 0.0
        %1598 = vmatpush1.msra.mxu0 0.0
        %1599 = vmatprep.subr.mxu0 0.0
        %1600 = vmatpush1.msra.mxu0 0.0
        %1601 = vmatprep.subr.mxu0 0.0
        %1602 = vmatpush1.msra.mxu0 0.0
        %1603 = vmatprep.subr.mxu0 0.0
        %1604 = vmatpush1.msra.mxu0 %v852
        %1605 = vmatprep.subr.mxu0 0.0
        %1606 = vmatpush2.msra.mxu0 0.0
        %1607 = vmatprep.subr.mxu0 0.0
        %1608 = vmatpush2.msra.mxu0 0.0
        %1609 = vmatprep.subr.mxu0 0.0
        %1610 = vmatpush2.msra.mxu0 0.0
        %1611 = vmatprep.subr.mxu0 0.0
        %1612 = vmatpush2.msra.mxu0 0.0
        %1613 = vmatprep.subr.mxu0 0.0
        %1614 = vmatpush2.msra.mxu0 0.0
        %1615 = vmatprep.subr.mxu0 0.0
        %1616 = vmatpush2.msra.mxu0 0.0
        %1617 = vmatprep.subr.mxu0 0.0
        %1618 = vmatpush2.msra.mxu0 0.0
        %1619 = vmatprep.subr.mxu0 0.0
        %1620 = vmatpush2.msra.mxu0 0.0
        %1621 = vmatprep.subr.mxu0 0.0
        %1622 = vmatpush2.msra.mxu0 0.0
        %1623 = vmatprep.subr.mxu0 0.0
        %1624 = vmatpush2.msra.mxu0 0.0
        %1625 = vmatprep.subr.mxu0 0.0
        %1626 = vmatpush2.msra.mxu0 0.0
        %1627 = vmatprep.subr.mxu0 0.0
        %1628 = vmatpush2.msra.mxu0 0.0
        %1629 = vmatprep.subr.mxu0 0.0
        %1630 = vmatpush2.msra.mxu0 0.0
        %1631 = vmatprep.subr.mxu0 0.0
        %1632 = vmatpush2.msra.mxu0 0.0
        %1633 = vmatprep.subr.mxu0 0.0
        %1634 = vmatpush2.msra.mxu0 0.0
        %1635 = vmatprep.subr.mxu0 0.0
        %1636 = vmatpush2.msra.mxu0 0.0
        %1637 = vmatprep.mubr.f32.mxu0 0.0
        %1638 = vmatmul.mubr.f32.gmra.mxu0 %v1571
        %v1639 = vpop.f32.mrf.mxu0
        %v1640 = vadd.f32 0.0, %v1639
        %v1641 = vpop.f32.mrf.mxu0
        %1642 = vdwg.mxu0
        %1643 = vmatprep.subr.mxu0 0.0
        %1644 = vmatpush1.msra.mxu0 0.0
        %1645 = vmatprep.subr.mxu0 0.0
        %1646 = vmatpush1.msra.mxu0 0.0
        %1647 = vmatprep.subr.mxu0 0.0
        %1648 = vmatpush1.msra.mxu0 0.0
        %1649 = vmatprep.subr.mxu0 0.0
        %1650 = vmatpush1.msra.mxu0 0.0
        %1651 = vmatprep.subr.mxu0 0.0
        %1652 = vmatpush1.msra.mxu0 0.0
        %1653 = vmatprep.subr.mxu0 0.0
        %1654 = vmatpush1.msra.mxu0 0.0
        %1655 = vmatprep.subr.mxu0 0.0
        %1656 = vmatpush1.msra.mxu0 0.0
        %1657 = vmatprep.subr.mxu0 0.0
        %1658 = vmatpush1.msra.mxu0 0.0
        %1659 = vmatprep.subr.mxu0 0.0
        %1660 = vmatpush1.msra.mxu0 0.0
        %1661 = vmatprep.subr.mxu0 0.0
        %1662 = vmatpush1.msra.mxu0 0.0
        %1663 = vmatprep.subr.mxu0 0.0
        %1664 = vmatpush1.msra.mxu0 0.0
        %1665 = vmatprep.subr.mxu0 0.0
        %1666 = vmatpush1.msra.mxu0 0.0
        %1667 = vmatprep.subr.mxu0 0.0
        %1668 = vmatpush1.msra.mxu0 0.0
        %1669 = vmatprep.subr.mxu0 0.0
        %1670 = vmatpush1.msra.mxu0 0.0
        %1671 = vmatprep.subr.mxu0 0.0
        %1672 = vmatpush1.msra.mxu0 0.0
        %1673 = vmatprep.subr.mxu0 0.0
        %1674 = vmatpush1.msra.mxu0 %v1640
        %1675 = vmatprep.subr.mxu0 0.0
        %1676 = vmatpush2.msra.mxu0 0.0
        %1677 = vmatprep.subr.mxu0 0.0
        %1678 = vmatpush2.msra.mxu0 0.0
        %1679 = vmatprep.subr.mxu0 0.0
        %1680 = vmatpush2.msra.mxu0 0.0
        %1681 = vmatprep.subr.mxu0 0.0
        %1682 = vmatpush2.msra.mxu0 0.0
        %1683 = vmatprep.subr.mxu0 0.0
        %1684 = vmatpush2.msra.mxu0 0.0
        %1685 = vmatprep.subr.mxu0 0.0
        %1686 = vmatpush2.msra.mxu0 0.0
        %1687 = vmatprep.subr.mxu0 0.0
        %1688 = vmatpush2.msra.mxu0 0.0
        %1689 = vmatprep.subr.mxu0 0.0
        %1690 = vmatpush2.msra.mxu0 0.0
        %1691 = vmatprep.subr.mxu0 0.0
        %1692 = vmatpush2.msra.mxu0 0.0
        %1693 = vmatprep.subr.mxu0 0.0
        %1694 = vmatpush2.msra.mxu0 0.0
        %1695 = vmatprep.subr.mxu0 0.0
        %1696 = vmatpush2.msra.mxu0 0.0
        %1697 = vmatprep.subr.mxu0 0.0
        %1698 = vmatpush2.msra.mxu0 0.0
        %1699 = vmatprep.subr.mxu0 0.0
        %1700 = vmatpush2.msra.mxu0 0.0
        %1701 = vmatprep.subr.mxu0 0.0
        %1702 = vmatpush2.msra.mxu0 0.0
        %1703 = vmatprep.subr.mxu0 0.0
        %1704 = vmatpush2.msra.mxu0 0.0
        %1705 = vmatprep.subr.mxu0 0.0
        %1706 = vmatpush2.msra.mxu0 0.0
        %1707 = vmatprep.mubr.f32.mxu0 0.0
        %1708 = vmatmul.mubr.f32.gmra.mxu0 %v1571
        %v1709 = vpop.f32.mrf.mxu0
        %v1710 = vadd.f32 0.0, %v1709
        %v1711 = vpop.f32.mrf.mxu0
        %1712 = vdwg.mxu0
        %v1714 = vsel %vm883, %v1497, 0
        %1716 = vmatprep.subr.mxu0 0.0
        %1717 = vmatpush1.msra.mxu0 0.0
        %1718 = vmatprep.subr.mxu0 0.0
        %1719 = vmatpush1.msra.mxu0 0.0
        %1720 = vmatprep.subr.mxu0 0.0
        %1721 = vmatpush1.msra.mxu0 0.0
        %1722 = vmatprep.subr.mxu0 0.0
        %1723 = vmatpush1.msra.mxu0 0.0
        %1724 = vmatprep.subr.mxu0 0.0
        %1725 = vmatpush1.msra.mxu0 0.0
        %1726 = vmatprep.subr.mxu0 0.0
        %1727 = vmatpush1.msra.mxu0 0.0
        %1728 = vmatprep.subr.mxu0 0.0
        %1729 = vmatpush1.msra.mxu0 0.0
        %1730 = vmatprep.subr.mxu0 0.0
        %1731 = vmatpush1.msra.mxu0 0.0
        %1732 = vmatprep.subr.mxu0 0.0
        %1733 = vmatpush1.msra.mxu0 0.0
        %1734 = vmatprep.subr.mxu0 0.0
        %1735 = vmatpush1.msra.mxu0 0.0
        %1736 = vmatprep.subr.mxu0 0.0
        %1737 = vmatpush1.msra.mxu0 0.0
        %1738 = vmatprep.subr.mxu0 0.0
        %1739 = vmatpush1.msra.mxu0 0.0
        %1740 = vmatprep.subr.mxu0 0.0
        %1741 = vmatpush1.msra.mxu0 0.0
        %1742 = vmatprep.subr.mxu0 0.0
        %1743 = vmatpush1.msra.mxu0 0.0
        %1744 = vmatprep.subr.mxu0 0.0
        %1745 = vmatpush1.msra.mxu0 0.0
        %1746 = vmatprep.subr.mxu0 0.0
        %1747 = vmatpush1.msra.mxu0 %v1319
        %1748 = vmatprep.subr.mxu0 0.0
        %1749 = vmatpush2.msra.mxu0 0.0
        %1750 = vmatprep.subr.mxu0 0.0
        %1751 = vmatpush2.msra.mxu0 0.0
        %1752 = vmatprep.subr.mxu0 0.0
        %1753 = vmatpush2.msra.mxu0 0.0
        %1754 = vmatprep.subr.mxu0 0.0
        %1755 = vmatpush2.msra.mxu0 0.0
        %1756 = vmatprep.subr.mxu0 0.0
        %1757 = vmatpush2.msra.mxu0 0.0
        %1758 = vmatprep.subr.mxu0 0.0
        %1759 = vmatpush2.msra.mxu0 0.0
        %1760 = vmatprep.subr.mxu0 0.0
        %1761 = vmatpush2.msra.mxu0 0.0
        %1762 = vmatprep.subr.mxu0 0.0
        %1763 = vmatpush2.msra.mxu0 0.0
        %1764 = vmatprep.subr.mxu0 0.0
        %1765 = vmatpush2.msra.mxu0 0.0
        %1766 = vmatprep.subr.mxu0 0.0
        %1767 = vmatpush2.msra.mxu0 0.0
        %1768 = vmatprep.subr.mxu0 0.0
        %1769 = vmatpush2.msra.mxu0 0.0
        %1770 = vmatprep.subr.mxu0 0.0
        %1771 = vmatpush2.msra.mxu0 0.0
        %1772 = vmatprep.subr.mxu0 0.0
        %1773 = vmatpush2.msra.mxu0 0.0
        %1774 = vmatprep.subr.mxu0 0.0
        %1775 = vmatpush2.msra.mxu0 0.0
        %1776 = vmatprep.subr.mxu0 0.0
        %1777 = vmatpush2.msra.mxu0 0.0
        %1778 = vmatprep.subr.mxu0 0.0
        %1779 = vmatpush2.msra.mxu0 0.0
        %1780 = vmatprep.mubr.f32.mxu0 0.0
        %1781 = vmatmul.mubr.f32.gmra.mxu0 %v1714
        %v1782 = vpop.f32.mrf.mxu0
        %v1783 = vadd.f32 0.0, %v1782
        %v1784 = vpop.f32.mrf.mxu0
        %1785 = vdwg.mxu0
        %v1786 = vsel %vm883, %v852, 0
        %1788 = vmatprep.subr.mxu0 0.0
        %1789 = vmatpush1.msra.mxu0 0.0
        %1790 = vmatprep.subr.mxu0 0.0
        %1791 = vmatpush1.msra.mxu0 0.0
        %1792 = vmatprep.subr.mxu0 0.0
        %1793 = vmatpush1.msra.mxu0 0.0
        %1794 = vmatprep.subr.mxu0 0.0
        %1795 = vmatpush1.msra.mxu0 0.0
        %1796 = vmatprep.subr.mxu0 0.0
        %1797 = vmatpush1.msra.mxu0 0.0
        %1798 = vmatprep.subr.mxu0 0.0
        %1799 = vmatpush1.msra.mxu0 0.0
        %1800 = vmatprep.subr.mxu0 0.0
        %1801 = vmatpush1.msra.mxu0 0.0
        %1802 = vmatprep.subr.mxu0 0.0
        %1803 = vmatpush1.msra.mxu0 0.0
        %1804 = vmatprep.subr.mxu0 0.0
        %1805 = vmatpush1.msra.mxu0 0.0
        %1806 = vmatprep.subr.mxu0 0.0
        %1807 = vmatpush1.msra.mxu0 0.0
        %1808 = vmatprep.subr.mxu0 0.0
        %1809 = vmatpush1.msra.mxu0 0.0
        %1810 = vmatprep.subr.mxu0 0.0
        %1811 = vmatpush1.msra.mxu0 0.0
        %1812 = vmatprep.subr.mxu0 0.0
        %1813 = vmatpush1.msra.mxu0 0.0
        %1814 = vmatprep.subr.mxu0 0.0
        %1815 = vmatpush1.msra.mxu0 0.0
        %1816 = vmatprep.subr.mxu0 0.0
        %1817 = vmatpush1.msra.mxu0 0.0
        %1818 = vmatprep.subr.mxu0 0.0
        %1819 = vmatpush1.msra.mxu0 %v1318
        %1820 = vmatprep.subr.mxu0 0.0
        %1821 = vmatpush2.msra.mxu0 0.0
        %1822 = vmatprep.subr.mxu0 0.0
        %1823 = vmatpush2.msra.mxu0 0.0
        %1824 = vmatprep.subr.mxu0 0.0
        %1825 = vmatpush2.msra.mxu0 0.0
        %1826 = vmatprep.subr.mxu0 0.0
        %1827 = vmatpush2.msra.mxu0 0.0
        %1828 = vmatprep.subr.mxu0 0.0
        %1829 = vmatpush2.msra.mxu0 0.0
        %1830 = vmatprep.subr.mxu0 0.0
        %1831 = vmatpush2.msra.mxu0 0.0
        %1832 = vmatprep.subr.mxu0 0.0
        %1833 = vmatpush2.msra.mxu0 0.0
        %1834 = vmatprep.subr.mxu0 0.0
        %1835 = vmatpush2.msra.mxu0 0.0
        %1836 = vmatprep.subr.mxu0 0.0
        %1837 = vmatpush2.msra.mxu0 0.0
        %1838 = vmatprep.subr.mxu0 0.0
        %1839 = vmatpush2.msra.mxu0 0.0
        %1840 = vmatprep.subr.mxu0 0.0
        %1841 = vmatpush2.msra.mxu0 0.0
        %1842 = vmatprep.subr.mxu0 0.0
        %1843 = vmatpush2.msra.mxu0 0.0
        %1844 = vmatprep.subr.mxu0 0.0
        %1845 = vmatpush2.msra.mxu0 0.0
        %1846 = vmatprep.subr.mxu0 0.0
        %1847 = vmatpush2.msra.mxu0 0.0
        %1848 = vmatprep.subr.mxu0 0.0
        %1849 = vmatpush2.msra.mxu0 0.0
        %1850 = vmatprep.subr.mxu0 0.0
        %1851 = vmatpush2.msra.mxu0 0.0
        %1852 = vmatprep.mubr.f32.mxu0 0.0
        %1853 = vmatmul.mubr.f32.gmra.mxu0 %v1786
        %v1854 = vpop.f32.mrf.mxu0
        %v1855 = vadd.f32 %v1783, %v1854
        %v1856 = vpop.f32.mrf.mxu0
        %1857 = vdwg.mxu0
        %v1859 = vsel %vm883, %v1567, 0
        %1861 = vmatprep.subr.mxu0 0.0
        %1862 = vmatpush1.msra.mxu0 0.0
        %1863 = vmatprep.subr.mxu0 0.0
        %1864 = vmatpush1.msra.mxu0 0.0
        %1865 = vmatprep.subr.mxu0 0.0
        %1866 = vmatpush1.msra.mxu0 0.0
        %1867 = vmatprep.subr.mxu0 0.0
        %1868 = vmatpush1.msra.mxu0 0.0
        %1869 = vmatprep.subr.mxu0 0.0
        %1870 = vmatpush1.msra.mxu0 0.0
        %1871 = vmatprep.subr.mxu0 0.0
        %1872 = vmatpush1.msra.mxu0 0.0
        %1873 = vmatprep.subr.mxu0 0.0
        %1874 = vmatpush1.msra.mxu0 0.0
        %1875 = vmatprep.subr.mxu0 0.0
        %1876 = vmatpush1.msra.mxu0 0.0
        %1877 = vmatprep.subr.mxu0 0.0
        %1878 = vmatpush1.msra.mxu0 0.0
        %1879 = vmatprep.subr.mxu0 0.0
        %1880 = vmatpush1.msra.mxu0 0.0
        %1881 = vmatprep.subr.mxu0 0.0
        %1882 = vmatpush1.msra.mxu0 0.0
        %1883 = vmatprep.subr.mxu0 0.0
        %1884 = vmatpush1.msra.mxu0 0.0
        %1885 = vmatprep.subr.mxu0 0.0
        %1886 = vmatpush1.msra.mxu0 0.0
        %1887 = vmatprep.subr.mxu0 0.0
        %1888 = vmatpush1.msra.mxu0 0.0
        %1889 = vmatprep.subr.mxu0 0.0
        %1890 = vmatpush1.msra.mxu0 0.0
        %1891 = vmatprep.subr.mxu0 0.0
        %1892 = vmatpush1.msra.mxu0 %v1320
        %1893 = vmatprep.subr.mxu0 0.0
        %1894 = vmatpush2.msra.mxu0 0.0
        %1895 = vmatprep.subr.mxu0 0.0
        %1896 = vmatpush2.msra.mxu0 0.0
        %1897 = vmatprep.subr.mxu0 0.0
        %1898 = vmatpush2.msra.mxu0 0.0
        %1899 = vmatprep.subr.mxu0 0.0
        %1900 = vmatpush2.msra.mxu0 0.0
        %1901 = vmatprep.subr.mxu0 0.0
        %1902 = vmatpush2.msra.mxu0 0.0
        %1903 = vmatprep.subr.mxu0 0.0
        %1904 = vmatpush2.msra.mxu0 0.0
        %1905 = vmatprep.subr.mxu0 0.0
        %1906 = vmatpush2.msra.mxu0 0.0
        %1907 = vmatprep.subr.mxu0 0.0
        %1908 = vmatpush2.msra.mxu0 0.0
        %1909 = vmatprep.subr.mxu0 0.0
        %1910 = vmatpush2.msra.mxu0 0.0
        %1911 = vmatprep.subr.mxu0 0.0
        %1912 = vmatpush2.msra.mxu0 0.0
        %1913 = vmatprep.subr.mxu0 0.0
        %1914 = vmatpush2.msra.mxu0 0.0
        %1915 = vmatprep.subr.mxu0 0.0
        %1916 = vmatpush2.msra.mxu0 0.0
        %1917 = vmatprep.subr.mxu0 0.0
        %1918 = vmatpush2.msra.mxu0 0.0
        %1919 = vmatprep.subr.mxu0 0.0
        %1920 = vmatpush2.msra.mxu0 0.0
        %1921 = vmatprep.subr.mxu0 0.0
        %1922 = vmatpush2.msra.mxu0 0.0
        %1923 = vmatprep.subr.mxu0 0.0
        %1924 = vmatpush2.msra.mxu0 0.0
        %1925 = vmatprep.mubr.f32.mxu0 0.0
        %1926 = vmatmul.mubr.f32.gmra.mxu0 %v1859
        %v1927 = vpop.f32.mrf.mxu0
        %v1928 = vadd.f32 0.0, %v1927
        %v1929 = vpop.f32.mrf.mxu0
        %1930 = vdwg.mxu0
        %v1931 = vadd.f32 %v1855, %v1928
        %v1933 = vsel %vm883, %v1640, 0
        %1935 = vmatprep.subr.mxu0 0.0
        %1936 = vmatpush1.msra.mxu0 0.0
        %1937 = vmatprep.subr.mxu0 0.0
        %1938 = vmatpush1.msra.mxu0 0.0
        %1939 = vmatprep.subr.mxu0 0.0
        %1940 = vmatpush1.msra.mxu0 0.0
        %1941 = vmatprep.subr.mxu0 0.0
        %1942 = vmatpush1.msra.mxu0 0.0
        %1943 = vmatprep.subr.mxu0 0.0
        %1944 = vmatpush1.msra.mxu0 0.0
        %1945 = vmatprep.subr.mxu0 0.0
        %1946 = vmatpush1.msra.mxu0 0.0
        %1947 = vmatprep.subr.mxu0 0.0
        %1948 = vmatpush1.msra.mxu0 0.0
        %1949 = vmatprep.subr.mxu0 0.0
        %1950 = vmatpush1.msra.mxu0 0.0
        %1951 = vmatprep.subr.mxu0 0.0
        %1952 = vmatpush1.msra.mxu0 0.0
        %1953 = vmatprep.subr.mxu0 0.0
        %1954 = vmatpush1.msra.mxu0 0.0
        %1955 = vmatprep.subr.mxu0 0.0
        %1956 = vmatpush1.msra.mxu0 0.0
        %1957 = vmatprep.subr.mxu0 0.0
        %1958 = vmatpush1.msra.mxu0 0.0
        %1959 = vmatprep.subr.mxu0 0.0
        %1960 = vmatpush1.msra.mxu0 0.0
        %1961 = vmatprep.subr.mxu0 0.0
        %1962 = vmatpush1.msra.mxu0 0.0
        %1963 = vmatprep.subr.mxu0 0.0
        %1964 = vmatpush1.msra.mxu0 0.0
        %1965 = vmatprep.subr.mxu0 0.0
        %1966 = vmatpush1.msra.mxu0 %v1321
        %1967 = vmatprep.subr.mxu0 0.0
        %1968 = vmatpush2.msra.mxu0 0.0
        %1969 = vmatprep.subr.mxu0 0.0
        %1970 = vmatpush2.msra.mxu0 0.0
        %1971 = vmatprep.subr.mxu0 0.0
        %1972 = vmatpush2.msra.mxu0 0.0
        %1973 = vmatprep.subr.mxu0 0.0
        %1974 = vmatpush2.msra.mxu0 0.0
        %1975 = vmatprep.subr.mxu0 0.0
        %1976 = vmatpush2.msra.mxu0 0.0
        %1977 = vmatprep.subr.mxu0 0.0
        %1978 = vmatpush2.msra.mxu0 0.0
        %1979 = vmatprep.subr.mxu0 0.0
        %1980 = vmatpush2.msra.mxu0 0.0
        %1981 = vmatprep.subr.mxu0 0.0
        %1982 = vmatpush2.msra.mxu0 0.0
        %1983 = vmatprep.subr.mxu0 0.0
        %1984 = vmatpush2.msra.mxu0 0.0
        %1985 = vmatprep.subr.mxu0 0.0
        %1986 = vmatpush2.msra.mxu0 0.0
        %1987 = vmatprep.subr.mxu0 0.0
        %1988 = vmatpush2.msra.mxu0 0.0
        %1989 = vmatprep.subr.mxu0 0.0
        %1990 = vmatpush2.msra.mxu0 0.0
        %1991 = vmatprep.subr.mxu0 0.0
        %1992 = vmatpush2.msra.mxu0 0.0
        %1993 = vmatprep.subr.mxu0 0.0
        %1994 = vmatpush2.msra.mxu0 0.0
        %1995 = vmatprep.subr.mxu0 0.0
        %1996 = vmatpush2.msra.mxu0 0.0
        %1997 = vmatprep.subr.mxu0 0.0
        %1998 = vmatpush2.msra.mxu0 0.0
        %1999 = vmatprep.mubr.f32.mxu0 0.0
        %2000 = vmatmul.mubr.f32.gmra.mxu0 %v1933
        %v2001 = vpop.f32.mrf.mxu0
        %v2002 = vadd.f32 0.0, %v2001
        %v2003 = vpop.f32.mrf.mxu0
        %2004 = vdwg.mxu0
        %v2005 = vadd.f32 %v1931, %v2002
        %v2007 = vsel %vm883, %v1710, 0
        %2009 = vmatprep.subr.mxu0 0.0
        %2010 = vmatpush1.msra.mxu0 0.0
        %2011 = vmatprep.subr.mxu0 0.0
        %2012 = vmatpush1.msra.mxu0 0.0
        %2013 = vmatprep.subr.mxu0 0.0
        %2014 = vmatpush1.msra.mxu0 0.0
        %2015 = vmatprep.subr.mxu0 0.0
        %2016 = vmatpush1.msra.mxu0 0.0
        %2017 = vmatprep.subr.mxu0 0.0
        %2018 = vmatpush1.msra.mxu0 0.0
        %2019 = vmatprep.subr.mxu0 0.0
        %2020 = vmatpush1.msra.mxu0 0.0
        %2021 = vmatprep.subr.mxu0 0.0
        %2022 = vmatpush1.msra.mxu0 0.0
        %2023 = vmatprep.subr.mxu0 0.0
        %2024 = vmatpush1.msra.mxu0 0.0
        %2025 = vmatprep.subr.mxu0 0.0
        %2026 = vmatpush1.msra.mxu0 0.0
        %2027 = vmatprep.subr.mxu0 0.0
        %2028 = vmatpush1.msra.mxu0 0.0
        %2029 = vmatprep.subr.mxu0 0.0
        %2030 = vmatpush1.msra.mxu0 0.0
        %2031 = vmatprep.subr.mxu0 0.0
        %2032 = vmatpush1.msra.mxu0 0.0
        %2033 = vmatprep.subr.mxu0 0.0
        %2034 = vmatpush1.msra.mxu0 0.0
        %2035 = vmatprep.subr.mxu0 0.0
        %2036 = vmatpush1.msra.mxu0 0.0
        %2037 = vmatprep.subr.mxu0 0.0
        %2038 = vmatpush1.msra.mxu0 0.0
        %2039 = vmatprep.subr.mxu0 0.0
        %2040 = vmatpush1.msra.mxu0 %v1322
        %2041 = vmatprep.subr.mxu0 0.0
        %2042 = vmatpush2.msra.mxu0 0.0
        %2043 = vmatprep.subr.mxu0 0.0
        %2044 = vmatpush2.msra.mxu0 0.0
        %2045 = vmatprep.subr.mxu0 0.0
        %2046 = vmatpush2.msra.mxu0 0.0
        %2047 = vmatprep.subr.mxu0 0.0
        %2048 = vmatpush2.msra.mxu0 0.0
        %2049 = vmatprep.subr.mxu0 0.0
        %2050 = vmatpush2.msra.mxu0 0.0
        %2051 = vmatprep.subr.mxu0 0.0
        %2052 = vmatpush2.msra.mxu0 0.0
        %2053 = vmatprep.subr.mxu0 0.0
        %2054 = vmatpush2.msra.mxu0 0.0
        %2055 = vmatprep.subr.mxu0 0.0
        %2056 = vmatpush2.msra.mxu0 0.0
        %2057 = vmatprep.subr.mxu0 0.0
        %2058 = vmatpush2.msra.mxu0 0.0
        %2059 = vmatprep.subr.mxu0 0.0
        %2060 = vmatpush2.msra.mxu0 0.0
        %2061 = vmatprep.subr.mxu0 0.0
        %2062 = vmatpush2.msra.mxu0 0.0
        %2063 = vmatprep.subr.mxu0 0.0
        %2064 = vmatpush2.msra.mxu0 0.0
        %2065 = vmatprep.subr.mxu0 0.0
        %2066 = vmatpush2.msra.mxu0 0.0
        %2067 = vmatprep.subr.mxu0 0.0
        %2068 = vmatpush2.msra.mxu0 0.0
        %2069 = vmatprep.subr.mxu0 0.0
        %2070 = vmatpush2.msra.mxu0 0.0
        %2071 = vmatprep.subr.mxu0 0.0
        %2072 = vmatpush2.msra.mxu0 0.0
        %2073 = vmatprep.mubr.f32.mxu0 0.0
        %2074 = vmatmul.mubr.f32.gmra.mxu0 %v2007
        %v2075 = vpop.f32.mrf.mxu0
        %v2076 = vadd.f32 0.0, %v2075
        %v2077 = vpop.f32.mrf.mxu0
        %2078 = vdwg.mxu0
        %v2079 = vadd.f32 %v2005, %v2076
        %vm2080 = vcmask 785408
        %2081 = vst.msk [vmem:[#allocation2] sm:$0xff] %vm2080, %v2079
        %2082 = vrot.lane.b32.xlu0 %v1497, 120
        %v2083 = vpop.permute.xlu0 %2082
        %v2084 = vsel %vm883, %v2083, 0
        %2086 = vmatprep.subr.mxu0 0.0
        %2087 = vmatpush1.msra.mxu0 0.0
        %2088 = vmatprep.subr.mxu0 0.0
        %2089 = vmatpush1.msra.mxu0 0.0
        %2090 = vmatprep.subr.mxu0 0.0
        %2091 = vmatpush1.msra.mxu0 0.0
        %2092 = vmatprep.subr.mxu0 0.0
        %2093 = vmatpush1.msra.mxu0 0.0
        %2094 = vmatprep.subr.mxu0 0.0
        %2095 = vmatpush1.msra.mxu0 0.0
        %2096 = vmatprep.subr.mxu0 0.0
        %2097 = vmatpush1.msra.mxu0 0.0
        %2098 = vmatprep.subr.mxu0 0.0
        %2099 = vmatpush1.msra.mxu0 0.0
        %2100 = vmatprep.subr.mxu0 0.0
        %2101 = vmatpush1.msra.mxu0 0.0
        %2102 = vmatprep.subr.mxu0 0.0
        %2103 = vmatpush1.msra.mxu0 0.0
        %2104 = vmatprep.subr.mxu0 0.0
        %2105 = vmatpush1.msra.mxu0 0.0
        %2106 = vmatprep.subr.mxu0 0.0
        %2107 = vmatpush1.msra.mxu0 0.0
        %2108 = vmatprep.subr.mxu0 0.0
        %2109 = vmatpush1.msra.mxu0 0.0
        %2110 = vmatprep.subr.mxu0 0.0
        %2111 = vmatpush1.msra.mxu0 0.0
        %2112 = vmatprep.subr.mxu0 0.0
        %2113 = vmatpush1.msra.mxu0 0.0
        %2114 = vmatprep.subr.mxu0 0.0
        %2115 = vmatpush1.msra.mxu0 0.0
        %2116 = vmatprep.subr.mxu0 0.0
        %2117 = vmatpush1.msra.mxu0 %v1319
        %2118 = vmatprep.subr.mxu0 0.0
        %2119 = vmatpush2.msra.mxu0 0.0
        %2120 = vmatprep.subr.mxu0 0.0
        %2121 = vmatpush2.msra.mxu0 0.0
        %2122 = vmatprep.subr.mxu0 0.0
        %2123 = vmatpush2.msra.mxu0 0.0
        %2124 = vmatprep.subr.mxu0 0.0
        %2125 = vmatpush2.msra.mxu0 0.0
        %2126 = vmatprep.subr.mxu0 0.0
        %2127 = vmatpush2.msra.mxu0 0.0
        %2128 = vmatprep.subr.mxu0 0.0
        %2129 = vmatpush2.msra.mxu0 0.0
        %2130 = vmatprep.subr.mxu0 0.0
        %2131 = vmatpush2.msra.mxu0 0.0
        %2132 = vmatprep.subr.mxu0 0.0
        %2133 = vmatpush2.msra.mxu0 0.0
        %2134 = vmatprep.subr.mxu0 0.0
        %2135 = vmatpush2.msra.mxu0 0.0
        %2136 = vmatprep.subr.mxu0 0.0
        %2137 = vmatpush2.msra.mxu0 0.0
        %2138 = vmatprep.subr.mxu0 0.0
        %2139 = vmatpush2.msra.mxu0 0.0
        %2140 = vmatprep.subr.mxu0 0.0
        %2141 = vmatpush2.msra.mxu0 0.0
        %2142 = vmatprep.subr.mxu0 0.0
        %2143 = vmatpush2.msra.mxu0 0.0
        %2144 = vmatprep.subr.mxu0 0.0
        %2145 = vmatpush2.msra.mxu0 0.0
        %2146 = vmatprep.subr.mxu0 0.0
        %2147 = vmatpush2.msra.mxu0 0.0
        %2148 = vmatprep.subr.mxu0 0.0
        %2149 = vmatpush2.msra.mxu0 0.0
        %2150 = vmatprep.mubr.f32.mxu0 0.0
        %2151 = vmatmul.mubr.f32.gmra.mxu0 %v2084
        %v2152 = vpop.f32.mrf.mxu0
        %v2153 = vadd.f32 0.0, %v2152
        %v2154 = vpop.f32.mrf.mxu0
        %2155 = vdwg.mxu0
        %v2156 = vsel %vm883, %v855, 0
        %2158 = vmatprep.subr.mxu0 0.0
        %2159 = vmatpush1.msra.mxu0 0.0
        %2160 = vmatprep.subr.mxu0 0.0
        %2161 = vmatpush1.msra.mxu0 0.0
        %2162 = vmatprep.subr.mxu0 0.0
        %2163 = vmatpush1.msra.mxu0 0.0
        %2164 = vmatprep.subr.mxu0 0.0
        %2165 = vmatpush1.msra.mxu0 0.0
        %2166 = vmatprep.subr.mxu0 0.0
        %2167 = vmatpush1.msra.mxu0 0.0
        %2168 = vmatprep.subr.mxu0 0.0
        %2169 = vmatpush1.msra.mxu0 0.0
        %2170 = vmatprep.subr.mxu0 0.0
        %2171 = vmatpush1.msra.mxu0 0.0
        %2172 = vmatprep.subr.mxu0 0.0
        %2173 = vmatpush1.msra.mxu0 0.0
        %2174 = vmatprep.subr.mxu0 0.0
        %2175 = vmatpush1.msra.mxu0 0.0
        %2176 = vmatprep.subr.mxu0 0.0
        %2177 = vmatpush1.msra.mxu0 0.0
        %2178 = vmatprep.subr.mxu0 0.0
        %2179 = vmatpush1.msra.mxu0 0.0
        %2180 = vmatprep.subr.mxu0 0.0
        %2181 = vmatpush1.msra.mxu0 0.0
        %2182 = vmatprep.subr.mxu0 0.0
        %2183 = vmatpush1.msra.mxu0 0.0
        %2184 = vmatprep.subr.mxu0 0.0
        %2185 = vmatpush1.msra.mxu0 0.0
        %2186 = vmatprep.subr.mxu0 0.0
        %2187 = vmatpush1.msra.mxu0 0.0
        %2188 = vmatprep.subr.mxu0 0.0
        %2189 = vmatpush1.msra.mxu0 %v1318
        %2190 = vmatprep.subr.mxu0 0.0
        %2191 = vmatpush2.msra.mxu0 0.0
        %2192 = vmatprep.subr.mxu0 0.0
        %2193 = vmatpush2.msra.mxu0 0.0
        %2194 = vmatprep.subr.mxu0 0.0
        %2195 = vmatpush2.msra.mxu0 0.0
        %2196 = vmatprep.subr.mxu0 0.0
        %2197 = vmatpush2.msra.mxu0 0.0
        %2198 = vmatprep.subr.mxu0 0.0
        %2199 = vmatpush2.msra.mxu0 0.0
        %2200 = vmatprep.subr.mxu0 0.0
        %2201 = vmatpush2.msra.mxu0 0.0
        %2202 = vmatprep.subr.mxu0 0.0
        %2203 = vmatpush2.msra.mxu0 0.0
        %2204 = vmatprep.subr.mxu0 0.0
        %2205 = vmatpush2.msra.mxu0 0.0
        %2206 = vmatprep.subr.mxu0 0.0
        %2207 = vmatpush2.msra.mxu0 0.0
        %2208 = vmatprep.subr.mxu0 0.0
        %2209 = vmatpush2.msra.mxu0 0.0
        %2210 = vmatprep.subr.mxu0 0.0
        %2211 = vmatpush2.msra.mxu0 0.0
        %2212 = vmatprep.subr.mxu0 0.0
        %2213 = vmatpush2.msra.mxu0 0.0
        %2214 = vmatprep.subr.mxu0 0.0
        %2215 = vmatpush2.msra.mxu0 0.0
        %2216 = vmatprep.subr.mxu0 0.0
        %2217 = vmatpush2.msra.mxu0 0.0
        %2218 = vmatprep.subr.mxu0 0.0
        %2219 = vmatpush2.msra.mxu0 0.0
        %2220 = vmatprep.subr.mxu0 0.0
        %2221 = vmatpush2.msra.mxu0 0.0
        %2222 = vmatprep.mubr.f32.mxu0 0.0
        %2223 = vmatmul.mubr.f32.gmra.mxu0 %v2156
        %v2224 = vpop.f32.mrf.mxu0
        %v2225 = vadd.f32 %v2153, %v2224
        %v2226 = vpop.f32.mrf.mxu0
        %2227 = vdwg.mxu0
        %2228 = vrot.lane.b32.xlu0 %v1567, 120
        %v2229 = vpop.permute.xlu0 %2228
        %v2230 = vsel %vm883, %v2229, 0
        %2232 = vmatprep.subr.mxu0 0.0
        %2233 = vmatpush1.msra.mxu0 0.0
        %2234 = vmatprep.subr.mxu0 0.0
        %2235 = vmatpush1.msra.mxu0 0.0
        %2236 = vmatprep.subr.mxu0 0.0
        %2237 = vmatpush1.msra.mxu0 0.0
        %2238 = vmatprep.subr.mxu0 0.0
        %2239 = vmatpush1.msra.mxu0 0.0
        %2240 = vmatprep.subr.mxu0 0.0
        %2241 = vmatpush1.msra.mxu0 0.0
        %2242 = vmatprep.subr.mxu0 0.0
        %2243 = vmatpush1.msra.mxu0 0.0
        %2244 = vmatprep.subr.mxu0 0.0
        %2245 = vmatpush1.msra.mxu0 0.0
        %2246 = vmatprep.subr.mxu0 0.0
        %2247 = vmatpush1.msra.mxu0 0.0
        %2248 = vmatprep.subr.mxu0 0.0
        %2249 = vmatpush1.msra.mxu0 0.0
        %2250 = vmatprep.subr.mxu0 0.0
        %2251 = vmatpush1.msra.mxu0 0.0
        %2252 = vmatprep.subr.mxu0 0.0
        %2253 = vmatpush1.msra.mxu0 0.0
        %2254 = vmatprep.subr.mxu0 0.0
        %2255 = vmatpush1.msra.mxu0 0.0
        %2256 = vmatprep.subr.mxu0 0.0
        %2257 = vmatpush1.msra.mxu0 0.0
        %2258 = vmatprep.subr.mxu0 0.0
        %2259 = vmatpush1.msra.mxu0 0.0
        %2260 = vmatprep.subr.mxu0 0.0
        %2261 = vmatpush1.msra.mxu0 0.0
        %2262 = vmatprep.subr.mxu0 0.0
        %2263 = vmatpush1.msra.mxu0 %v1320
        %2264 = vmatprep.subr.mxu0 0.0
        %2265 = vmatpush2.msra.mxu0 0.0
        %2266 = vmatprep.subr.mxu0 0.0
        %2267 = vmatpush2.msra.mxu0 0.0
        %2268 = vmatprep.subr.mxu0 0.0
        %2269 = vmatpush2.msra.mxu0 0.0
        %2270 = vmatprep.subr.mxu0 0.0
        %2271 = vmatpush2.msra.mxu0 0.0
        %2272 = vmatprep.subr.mxu0 0.0
        %2273 = vmatpush2.msra.mxu0 0.0
        %2274 = vmatprep.subr.mxu0 0.0
        %2275 = vmatpush2.msra.mxu0 0.0
        %2276 = vmatprep.subr.mxu0 0.0
        %2277 = vmatpush2.msra.mxu0 0.0
        %2278 = vmatprep.subr.mxu0 0.0
        %2279 = vmatpush2.msra.mxu0 0.0
        %2280 = vmatprep.subr.mxu0 0.0
        %2281 = vmatpush2.msra.mxu0 0.0
        %2282 = vmatprep.subr.mxu0 0.0
        %2283 = vmatpush2.msra.mxu0 0.0
        %2284 = vmatprep.subr.mxu0 0.0
        %2285 = vmatpush2.msra.mxu0 0.0
        %2286 = vmatprep.subr.mxu0 0.0
        %2287 = vmatpush2.msra.mxu0 0.0
        %2288 = vmatprep.subr.mxu0 0.0
        %2289 = vmatpush2.msra.mxu0 0.0
        %2290 = vmatprep.subr.mxu0 0.0
        %2291 = vmatpush2.msra.mxu0 0.0
        %2292 = vmatprep.subr.mxu0 0.0
        %2293 = vmatpush2.msra.mxu0 0.0
        %2294 = vmatprep.subr.mxu0 0.0
        %2295 = vmatpush2.msra.mxu0 0.0
        %2296 = vmatprep.mubr.f32.mxu0 0.0
        %2297 = vmatmul.mubr.f32.gmra.mxu0 %v2230
        %v2298 = vpop.f32.mrf.mxu0
        %v2299 = vadd.f32 0.0, %v2298
        %v2300 = vpop.f32.mrf.mxu0
        %2301 = vdwg.mxu0
        %v2302 = vadd.f32 %v2225, %v2299
        %2303 = vrot.lane.b32.xlu0 %v1640, 120
        %v2304 = vpop.permute.xlu0 %2303
        %v2305 = vsel %vm883, %v2304, 0
        %2307 = vmatprep.subr.mxu0 0.0
        %2308 = vmatpush1.msra.mxu0 0.0
        %2309 = vmatprep.subr.mxu0 0.0
        %2310 = vmatpush1.msra.mxu0 0.0
        %2311 = vmatprep.subr.mxu0 0.0
        %2312 = vmatpush1.msra.mxu0 0.0
        %2313 = vmatprep.subr.mxu0 0.0
        %2314 = vmatpush1.msra.mxu0 0.0
        %2315 = vmatprep.subr.mxu0 0.0
        %2316 = vmatpush1.msra.mxu0 0.0
        %2317 = vmatprep.subr.mxu0 0.0
        %2318 = vmatpush1.msra.mxu0 0.0
        %2319 = vmatprep.subr.mxu0 0.0
        %2320 = vmatpush1.msra.mxu0 0.0
        %2321 = vmatprep.subr.mxu0 0.0
        %2322 = vmatpush1.msra.mxu0 0.0
        %2323 = vmatprep.subr.mxu0 0.0
        %2324 = vmatpush1.msra.mxu0 0.0
        %2325 = vmatprep.subr.mxu0 0.0
        %2326 = vmatpush1.msra.mxu0 0.0
        %2327 = vmatprep.subr.mxu0 0.0
        %2328 = vmatpush1.msra.mxu0 0.0
        %2329 = vmatprep.subr.mxu0 0.0
        %2330 = vmatpush1.msra.mxu0 0.0
        %2331 = vmatprep.subr.mxu0 0.0
        %2332 = vmatpush1.msra.mxu0 0.0
        %2333 = vmatprep.subr.mxu0 0.0
        %2334 = vmatpush1.msra.mxu0 0.0
        %2335 = vmatprep.subr.mxu0 0.0
        %2336 = vmatpush1.msra.mxu0 0.0
        %2337 = vmatprep.subr.mxu0 0.0
        %2338 = vmatpush1.msra.mxu0 %v1321
        %2339 = vmatprep.subr.mxu0 0.0
        %2340 = vmatpush2.msra.mxu0 0.0
        %2341 = vmatprep.subr.mxu0 0.0
        %2342 = vmatpush2.msra.mxu0 0.0
        %2343 = vmatprep.subr.mxu0 0.0
        %2344 = vmatpush2.msra.mxu0 0.0
        %2345 = vmatprep.subr.mxu0 0.0
        %2346 = vmatpush2.msra.mxu0 0.0
        %2347 = vmatprep.subr.mxu0 0.0
        %2348 = vmatpush2.msra.mxu0 0.0
        %2349 = vmatprep.subr.mxu0 0.0
        %2350 = vmatpush2.msra.mxu0 0.0
        %2351 = vmatprep.subr.mxu0 0.0
        %2352 = vmatpush2.msra.mxu0 0.0
        %2353 = vmatprep.subr.mxu0 0.0
        %2354 = vmatpush2.msra.mxu0 0.0
        %2355 = vmatprep.subr.mxu0 0.0
        %2356 = vmatpush2.msra.mxu0 0.0
        %2357 = vmatprep.subr.mxu0 0.0
        %2358 = vmatpush2.msra.mxu0 0.0
        %2359 = vmatprep.subr.mxu0 0.0
        %2360 = vmatpush2.msra.mxu0 0.0
        %2361 = vmatprep.subr.mxu0 0.0
        %2362 = vmatpush2.msra.mxu0 0.0
        %2363 = vmatprep.subr.mxu0 0.0
        %2364 = vmatpush2.msra.mxu0 0.0
        %2365 = vmatprep.subr.mxu0 0.0
        %2366 = vmatpush2.msra.mxu0 0.0
        %2367 = vmatprep.subr.mxu0 0.0
        %2368 = vmatpush2.msra.mxu0 0.0
        %2369 = vmatprep.subr.mxu0 0.0
        %2370 = vmatpush2.msra.mxu0 0.0
        %2371 = vmatprep.mubr.f32.mxu0 0.0
        %2372 = vmatmul.mubr.f32.gmra.mxu0 %v2305
        %v2373 = vpop.f32.mrf.mxu0
        %v2374 = vadd.f32 0.0, %v2373
        %v2375 = vpop.f32.mrf.mxu0
        %2376 = vdwg.mxu0
        %v2377 = vadd.f32 %v2302, %v2374
        %2378 = vrot.lane.b32.xlu0 %v1710, 120
        %v2379 = vpop.permute.xlu0 %2378
        %v2380 = vsel %vm883, %v2379, 0
        %2382 = vmatprep.subr.mxu0 0.0
        %2383 = vmatpush1.msra.mxu0 0.0
        %2384 = vmatprep.subr.mxu0 0.0
        %2385 = vmatpush1.msra.mxu0 0.0
        %2386 = vmatprep.subr.mxu0 0.0
        %2387 = vmatpush1.msra.mxu0 0.0
        %2388 = vmatprep.subr.mxu0 0.0
        %2389 = vmatpush1.msra.mxu0 0.0
        %2390 = vmatprep.subr.mxu0 0.0
        %2391 = vmatpush1.msra.mxu0 0.0
        %2392 = vmatprep.subr.mxu0 0.0
        %2393 = vmatpush1.msra.mxu0 0.0
        %2394 = vmatprep.subr.mxu0 0.0
        %2395 = vmatpush1.msra.mxu0 0.0
        %2396 = vmatprep.subr.mxu0 0.0
        %2397 = vmatpush1.msra.mxu0 0.0
        %2398 = vmatprep.subr.mxu0 0.0
        %2399 = vmatpush1.msra.mxu0 0.0
        %2400 = vmatprep.subr.mxu0 0.0
        %2401 = vmatpush1.msra.mxu0 0.0
        %2402 = vmatprep.subr.mxu0 0.0
        %2403 = vmatpush1.msra.mxu0 0.0
        %2404 = vmatprep.subr.mxu0 0.0
        %2405 = vmatpush1.msra.mxu0 0.0
        %2406 = vmatprep.subr.mxu0 0.0
        %2407 = vmatpush1.msra.mxu0 0.0
        %2408 = vmatprep.subr.mxu0 0.0
        %2409 = vmatpush1.msra.mxu0 0.0
        %2410 = vmatprep.subr.mxu0 0.0
        %2411 = vmatpush1.msra.mxu0 0.0
        %2412 = vmatprep.subr.mxu0 0.0
        %2413 = vmatpush1.msra.mxu0 %v1322
        %2414 = vmatprep.subr.mxu0 0.0
        %2415 = vmatpush2.msra.mxu0 0.0
        %2416 = vmatprep.subr.mxu0 0.0
        %2417 = vmatpush2.msra.mxu0 0.0
        %2418 = vmatprep.subr.mxu0 0.0
        %2419 = vmatpush2.msra.mxu0 0.0
        %2420 = vmatprep.subr.mxu0 0.0
        %2421 = vmatpush2.msra.mxu0 0.0
        %2422 = vmatprep.subr.mxu0 0.0
        %2423 = vmatpush2.msra.mxu0 0.0
        %2424 = vmatprep.subr.mxu0 0.0
        %2425 = vmatpush2.msra.mxu0 0.0
        %2426 = vmatprep.subr.mxu0 0.0
        %2427 = vmatpush2.msra.mxu0 0.0
        %2428 = vmatprep.subr.mxu0 0.0
        %2429 = vmatpush2.msra.mxu0 0.0
        %2430 = vmatprep.subr.mxu0 0.0
        %2431 = vmatpush2.msra.mxu0 0.0
        %2432 = vmatprep.subr.mxu0 0.0
        %2433 = vmatpush2.msra.mxu0 0.0
        %2434 = vmatprep.subr.mxu0 0.0
        %2435 = vmatpush2.msra.mxu0 0.0
        %2436 = vmatprep.subr.mxu0 0.0
        %2437 = vmatpush2.msra.mxu0 0.0
        %2438 = vmatprep.subr.mxu0 0.0
        %2439 = vmatpush2.msra.mxu0 0.0
        %2440 = vmatprep.subr.mxu0 0.0
        %2441 = vmatpush2.msra.mxu0 0.0
        %2442 = vmatprep.subr.mxu0 0.0
        %2443 = vmatpush2.msra.mxu0 0.0
        %2444 = vmatprep.subr.mxu0 0.0
        %2445 = vmatpush2.msra.mxu0 0.0
        %2446 = vmatprep.mubr.f32.mxu0 0.0
        %2447 = vmatmul.mubr.f32.gmra.mxu0 %v2380
        %v2448 = vpop.f32.mrf.mxu0
        %v2449 = vadd.f32 0.0, %v2448
        %v2450 = vpop.f32.mrf.mxu0
        %2451 = vdwg.mxu0
        %v2452 = vadd.f32 %v2377, %v2449
        %s2453 = scalar_lea.vmem [#allocation2], 8
        %2454 = vst.msk [vmem:[%s2453] sm:$0xff] %vm2080, %v2452
        %2455 = vrot.lane.b32.xlu0 %v1497, 112
        %v2456 = vpop.permute.xlu0 %2455
        %v2457 = vsel %vm883, %v2456, 0
        %2459 = vmatprep.subr.mxu0 0.0
        %2460 = vmatpush1.msra.mxu0 0.0
        %2461 = vmatprep.subr.mxu0 0.0
        %2462 = vmatpush1.msra.mxu0 0.0
        %2463 = vmatprep.subr.mxu0 0.0
        %2464 = vmatpush1.msra.mxu0 0.0
        %2465 = vmatprep.subr.mxu0 0.0
        %2466 = vmatpush1.msra.mxu0 0.0
        %2467 = vmatprep.subr.mxu0 0.0
        %2468 = vmatpush1.msra.mxu0 0.0
        %2469 = vmatprep.subr.mxu0 0.0
        %2470 = vmatpush1.msra.mxu0 0.0
        %2471 = vmatprep.subr.mxu0 0.0
        %2472 = vmatpush1.msra.mxu0 0.0
        %2473 = vmatprep.subr.mxu0 0.0
        %2474 = vmatpush1.msra.mxu0 0.0
        %2475 = vmatprep.subr.mxu0 0.0
        %2476 = vmatpush1.msra.mxu0 0.0
        %2477 = vmatprep.subr.mxu0 0.0
        %2478 = vmatpush1.msra.mxu0 0.0
        %2479 = vmatprep.subr.mxu0 0.0
        %2480 = vmatpush1.msra.mxu0 0.0
        %2481 = vmatprep.subr.mxu0 0.0
        %2482 = vmatpush1.msra.mxu0 0.0
        %2483 = vmatprep.subr.mxu0 0.0
        %2484 = vmatpush1.msra.mxu0 0.0
        %2485 = vmatprep.subr.mxu0 0.0
        %2486 = vmatpush1.msra.mxu0 0.0
        %2487 = vmatprep.subr.mxu0 0.0
        %2488 = vmatpush1.msra.mxu0 0.0
        %2489 = vmatprep.subr.mxu0 0.0
        %2490 = vmatpush1.msra.mxu0 %v1319
        %2491 = vmatprep.subr.mxu0 0.0
        %2492 = vmatpush2.msra.mxu0 0.0
        %2493 = vmatprep.subr.mxu0 0.0
        %2494 = vmatpush2.msra.mxu0 0.0
        %2495 = vmatprep.subr.mxu0 0.0
        %2496 = vmatpush2.msra.mxu0 0.0
        %2497 = vmatprep.subr.mxu0 0.0
        %2498 = vmatpush2.msra.mxu0 0.0
        %2499 = vmatprep.subr.mxu0 0.0
        %2500 = vmatpush2.msra.mxu0 0.0
        %2501 = vmatprep.subr.mxu0 0.0
        %2502 = vmatpush2.msra.mxu0 0.0
        %2503 = vmatprep.subr.mxu0 0.0
        %2504 = vmatpush2.msra.mxu0 0.0
        %2505 = vmatprep.subr.mxu0 0.0
        %2506 = vmatpush2.msra.mxu0 0.0
        %2507 = vmatprep.subr.mxu0 0.0
        %2508 = vmatpush2.msra.mxu0 0.0
        %2509 = vmatprep.subr.mxu0 0.0
        %2510 = vmatpush2.msra.mxu0 0.0
        %2511 = vmatprep.subr.mxu0 0.0
        %2512 = vmatpush2.msra.mxu0 0.0
        %2513 = vmatprep.subr.mxu0 0.0
        %2514 = vmatpush2.msra.mxu0 0.0
        %2515 = vmatprep.subr.mxu0 0.0
        %2516 = vmatpush2.msra.mxu0 0.0
        %2517 = vmatprep.subr.mxu0 0.0
        %2518 = vmatpush2.msra.mxu0 0.0
        %2519 = vmatprep.subr.mxu0 0.0
        %2520 = vmatpush2.msra.mxu0 0.0
        %2521 = vmatprep.subr.mxu0 0.0
        %2522 = vmatpush2.msra.mxu0 0.0
        %2523 = vmatprep.mubr.f32.mxu0 0.0
        %2524 = vmatmul.mubr.f32.gmra.mxu0 %v2457
        %v2525 = vpop.f32.mrf.mxu0
        %v2526 = vadd.f32 0.0, %v2525
        %v2527 = vpop.f32.mrf.mxu0
        %2528 = vdwg.mxu0
        %v2529 = vsel %vm883, %v859, 0
        %2531 = vmatprep.subr.mxu0 0.0
        %2532 = vmatpush1.msra.mxu0 0.0
        %2533 = vmatprep.subr.mxu0 0.0
        %2534 = vmatpush1.msra.mxu0 0.0
        %2535 = vmatprep.subr.mxu0 0.0
        %2536 = vmatpush1.msra.mxu0 0.0
        %2537 = vmatprep.subr.mxu0 0.0
        %2538 = vmatpush1.msra.mxu0 0.0
        %2539 = vmatprep.subr.mxu0 0.0
        %2540 = vmatpush1.msra.mxu0 0.0
        %2541 = vmatprep.subr.mxu0 0.0
        %2542 = vmatpush1.msra.mxu0 0.0
        %2543 = vmatprep.subr.mxu0 0.0
        %2544 = vmatpush1.msra.mxu0 0.0
        %2545 = vmatprep.subr.mxu0 0.0
        %2546 = vmatpush1.msra.mxu0 0.0
        %2547 = vmatprep.subr.mxu0 0.0
        %2548 = vmatpush1.msra.mxu0 0.0
        %2549 = vmatprep.subr.mxu0 0.0
        %2550 = vmatpush1.msra.mxu0 0.0
        %2551 = vmatprep.subr.mxu0 0.0
        %2552 = vmatpush1.msra.mxu0 0.0
        %2553 = vmatprep.subr.mxu0 0.0
        %2554 = vmatpush1.msra.mxu0 0.0
        %2555 = vmatprep.subr.mxu0 0.0
        %2556 = vmatpush1.msra.mxu0 0.0
        %2557 = vmatprep.subr.mxu0 0.0
        %2558 = vmatpush1.msra.mxu0 0.0
        %2559 = vmatprep.subr.mxu0 0.0
        %2560 = vmatpush1.msra.mxu0 0.0
        %2561 = vmatprep.subr.mxu0 0.0
        %2562 = vmatpush1.msra.mxu0 %v1318
        %2563 = vmatprep.subr.mxu0 0.0
        %2564 = vmatpush2.msra.mxu0 0.0
        %2565 = vmatprep.subr.mxu0 0.0
        %2566 = vmatpush2.msra.mxu0 0.0
        %2567 = vmatprep.subr.mxu0 0.0
        %2568 = vmatpush2.msra.mxu0 0.0
        %2569 = vmatprep.subr.mxu0 0.0
        %2570 = vmatpush2.msra.mxu0 0.0
        %2571 = vmatprep.subr.mxu0 0.0
        %2572 = vmatpush2.msra.mxu0 0.0
        %2573 = vmatprep.subr.mxu0 0.0
        %2574 = vmatpush2.msra.mxu0 0.0
        %2575 = vmatprep.subr.mxu0 0.0
        %2576 = vmatpush2.msra.mxu0 0.0
        %2577 = vmatprep.subr.mxu0 0.0
        %2578 = vmatpush2.msra.mxu0 0.0
        %2579 = vmatprep.subr.mxu0 0.0
        %2580 = vmatpush2.msra.mxu0 0.0
        %2581 = vmatprep.subr.mxu0 0.0
        %2582 = vmatpush2.msra.mxu0 0.0
        %2583 = vmatprep.subr.mxu0 0.0
        %2584 = vmatpush2.msra.mxu0 0.0
        %2585 = vmatprep.subr.mxu0 0.0
        %2586 = vmatpush2.msra.mxu0 0.0
        %2587 = vmatprep.subr.mxu0 0.0
        %2588 = vmatpush2.msra.mxu0 0.0
        %2589 = vmatprep.subr.mxu0 0.0
        %2590 = vmatpush2.msra.mxu0 0.0
        %2591 = vmatprep.subr.mxu0 0.0
        %2592 = vmatpush2.msra.mxu0 0.0
        %2593 = vmatprep.subr.mxu0 0.0
        %2594 = vmatpush2.msra.mxu0 0.0
        %2595 = vmatprep.mubr.f32.mxu0 0.0
        %2596 = vmatmul.mubr.f32.gmra.mxu0 %v2529
        %v2597 = vpop.f32.mrf.mxu0
        %v2598 = vadd.f32 %v2526, %v2597
        %v2599 = vpop.f32.mrf.mxu0
        %2600 = vdwg.mxu0
        %2601 = vrot.lane.b32.xlu0 %v1567, 112
        %v2602 = vpop.permute.xlu0 %2601
        %v2603 = vsel %vm883, %v2602, 0
        %2605 = vmatprep.subr.mxu0 0.0
        %2606 = vmatpush1.msra.mxu0 0.0
        %2607 = vmatprep.subr.mxu0 0.0
        %2608 = vmatpush1.msra.mxu0 0.0
        %2609 = vmatprep.subr.mxu0 0.0
        %2610 = vmatpush1.msra.mxu0 0.0
        %2611 = vmatprep.subr.mxu0 0.0
        %2612 = vmatpush1.msra.mxu0 0.0
        %2613 = vmatprep.subr.mxu0 0.0
        %2614 = vmatpush1.msra.mxu0 0.0
        %2615 = vmatprep.subr.mxu0 0.0
        %2616 = vmatpush1.msra.mxu0 0.0
        %2617 = vmatprep.subr.mxu0 0.0
        %2618 = vmatpush1.msra.mxu0 0.0
        %2619 = vmatprep.subr.mxu0 0.0
        %2620 = vmatpush1.msra.mxu0 0.0
        %2621 = vmatprep.subr.mxu0 0.0
        %2622 = vmatpush1.msra.mxu0 0.0
        %2623 = vmatprep.subr.mxu0 0.0
        %2624 = vmatpush1.msra.mxu0 0.0
        %2625 = vmatprep.subr.mxu0 0.0
        %2626 = vmatpush1.msra.mxu0 0.0
        %2627 = vmatprep.subr.mxu0 0.0
        %2628 = vmatpush1.msra.mxu0 0.0
        %2629 = vmatprep.subr.mxu0 0.0
        %2630 = vmatpush1.msra.mxu0 0.0
        %2631 = vmatprep.subr.mxu0 0.0
        %2632 = vmatpush1.msra.mxu0 0.0
        %2633 = vmatprep.subr.mxu0 0.0
        %2634 = vmatpush1.msra.mxu0 0.0
        %2635 = vmatprep.subr.mxu0 0.0
        %2636 = vmatpush1.msra.mxu0 %v1320
        %2637 = vmatprep.subr.mxu0 0.0
        %2638 = vmatpush2.msra.mxu0 0.0
        %2639 = vmatprep.subr.mxu0 0.0
        %2640 = vmatpush2.msra.mxu0 0.0
        %2641 = vmatprep.subr.mxu0 0.0
        %2642 = vmatpush2.msra.mxu0 0.0
        %2643 = vmatprep.subr.mxu0 0.0
        %2644 = vmatpush2.msra.mxu0 0.0
        %2645 = vmatprep.subr.mxu0 0.0
        %2646 = vmatpush2.msra.mxu0 0.0
        %2647 = vmatprep.subr.mxu0 0.0
        %2648 = vmatpush2.msra.mxu0 0.0
        %2649 = vmatprep.subr.mxu0 0.0
        %2650 = vmatpush2.msra.mxu0 0.0
        %2651 = vmatprep.subr.mxu0 0.0
        %2652 = vmatpush2.msra.mxu0 0.0
        %2653 = vmatprep.subr.mxu0 0.0
        %2654 = vmatpush2.msra.mxu0 0.0
        %2655 = vmatprep.subr.mxu0 0.0
        %2656 = vmatpush2.msra.mxu0 0.0
        %2657 = vmatprep.subr.mxu0 0.0
        %2658 = vmatpush2.msra.mxu0 0.0
        %2659 = vmatprep.subr.mxu0 0.0
        %2660 = vmatpush2.msra.mxu0 0.0
        %2661 = vmatprep.subr.mxu0 0.0
        %2662 = vmatpush2.msra.mxu0 0.0
        %2663 = vmatprep.subr.mxu0 0.0
        %2664 = vmatpush2.msra.mxu0 0.0
        %2665 = vmatprep.subr.mxu0 0.0
        %2666 = vmatpush2.msra.mxu0 0.0
        %2667 = vmatprep.subr.mxu0 0.0
        %2668 = vmatpush2.msra.mxu0 0.0
        %2669 = vmatprep.mubr.f32.mxu0 0.0
        %2670 = vmatmul.mubr.f32.gmra.mxu0 %v2603
        %v2671 = vpop.f32.mrf.mxu0
        %v2672 = vadd.f32 0.0, %v2671
        %v2673 = vpop.f32.mrf.mxu0
        %2674 = vdwg.mxu0
        %v2675 = vadd.f32 %v2598, %v2672
        %2676 = vrot.lane.b32.xlu0 %v1640, 112
        %v2677 = vpop.permute.xlu0 %2676
        %v2678 = vsel %vm883, %v2677, 0
        %2680 = vmatprep.subr.mxu0 0.0
        %2681 = vmatpush1.msra.mxu0 0.0
        %2682 = vmatprep.subr.mxu0 0.0
        %2683 = vmatpush1.msra.mxu0 0.0
        %2684 = vmatprep.subr.mxu0 0.0
        %2685 = vmatpush1.msra.mxu0 0.0
        %2686 = vmatprep.subr.mxu0 0.0
        %2687 = vmatpush1.msra.mxu0 0.0
        %2688 = vmatprep.subr.mxu0 0.0
        %2689 = vmatpush1.msra.mxu0 0.0
        %2690 = vmatprep.subr.mxu0 0.0
        %2691 = vmatpush1.msra.mxu0 0.0
        %2692 = vmatprep.subr.mxu0 0.0
        %2693 = vmatpush1.msra.mxu0 0.0
        %2694 = vmatprep.subr.mxu0 0.0
        %2695 = vmatpush1.msra.mxu0 0.0
        %2696 = vmatprep.subr.mxu0 0.0
        %2697 = vmatpush1.msra.mxu0 0.0
        %2698 = vmatprep.subr.mxu0 0.0
        %2699 = vmatpush1.msra.mxu0 0.0
        %2700 = vmatprep.subr.mxu0 0.0
        %2701 = vmatpush1.msra.mxu0 0.0
        %2702 = vmatprep.subr.mxu0 0.0
        %2703 = vmatpush1.msra.mxu0 0.0
        %2704 = vmatprep.subr.mxu0 0.0
        %2705 = vmatpush1.msra.mxu0 0.0
        %2706 = vmatprep.subr.mxu0 0.0
        %2707 = vmatpush1.msra.mxu0 0.0
        %2708 = vmatprep.subr.mxu0 0.0
        %2709 = vmatpush1.msra.mxu0 0.0
        %2710 = vmatprep.subr.mxu0 0.0
        %2711 = vmatpush1.msra.mxu0 %v1321
        %2712 = vmatprep.subr.mxu0 0.0
        %2713 = vmatpush2.msra.mxu0 0.0
        %2714 = vmatprep.subr.mxu0 0.0
        %2715 = vmatpush2.msra.mxu0 0.0
        %2716 = vmatprep.subr.mxu0 0.0
        %2717 = vmatpush2.msra.mxu0 0.0
        %2718 = vmatprep.subr.mxu0 0.0
        %2719 = vmatpush2.msra.mxu0 0.0
        %2720 = vmatprep.subr.mxu0 0.0
        %2721 = vmatpush2.msra.mxu0 0.0
        %2722 = vmatprep.subr.mxu0 0.0
        %2723 = vmatpush2.msra.mxu0 0.0
        %2724 = vmatprep.subr.mxu0 0.0
        %2725 = vmatpush2.msra.mxu0 0.0
        %2726 = vmatprep.subr.mxu0 0.0
        %2727 = vmatpush2.msra.mxu0 0.0
        %2728 = vmatprep.subr.mxu0 0.0
        %2729 = vmatpush2.msra.mxu0 0.0
        %2730 = vmatprep.subr.mxu0 0.0
        %2731 = vmatpush2.msra.mxu0 0.0
        %2732 = vmatprep.subr.mxu0 0.0
        %2733 = vmatpush2.msra.mxu0 0.0
        %2734 = vmatprep.subr.mxu0 0.0
        %2735 = vmatpush2.msra.mxu0 0.0
        %2736 = vmatprep.subr.mxu0 0.0
        %2737 = vmatpush2.msra.mxu0 0.0
        %2738 = vmatprep.subr.mxu0 0.0
        %2739 = vmatpush2.msra.mxu0 0.0
        %2740 = vmatprep.subr.mxu0 0.0
        %2741 = vmatpush2.msra.mxu0 0.0
        %2742 = vmatprep.subr.mxu0 0.0
        %2743 = vmatpush2.msra.mxu0 0.0
        %2744 = vmatprep.mubr.f32.mxu0 0.0
        %2745 = vmatmul.mubr.f32.gmra.mxu0 %v2678
        %v2746 = vpop.f32.mrf.mxu0
        %v2747 = vadd.f32 0.0, %v2746
        %v2748 = vpop.f32.mrf.mxu0
        %2749 = vdwg.mxu0
        %v2750 = vadd.f32 %v2675, %v2747
        %2751 = vrot.lane.b32.xlu0 %v1710, 112
        %v2752 = vpop.permute.xlu0 %2751
        %v2753 = vsel %vm883, %v2752, 0
        %2755 = vmatprep.subr.mxu0 0.0
        %2756 = vmatpush1.msra.mxu0 0.0
        %2757 = vmatprep.subr.mxu0 0.0
        %2758 = vmatpush1.msra.mxu0 0.0
        %2759 = vmatprep.subr.mxu0 0.0
        %2760 = vmatpush1.msra.mxu0 0.0
        %2761 = vmatprep.subr.mxu0 0.0
        %2762 = vmatpush1.msra.mxu0 0.0
        %2763 = vmatprep.subr.mxu0 0.0
        %2764 = vmatpush1.msra.mxu0 0.0
        %2765 = vmatprep.subr.mxu0 0.0
        %2766 = vmatpush1.msra.mxu0 0.0
        %2767 = vmatprep.subr.mxu0 0.0
        %2768 = vmatpush1.msra.mxu0 0.0
        %2769 = vmatprep.subr.mxu0 0.0
        %2770 = vmatpush1.msra.mxu0 0.0
        %2771 = vmatprep.subr.mxu0 0.0
        %2772 = vmatpush1.msra.mxu0 0.0
        %2773 = vmatprep.subr.mxu0 0.0
        %2774 = vmatpush1.msra.mxu0 0.0
        %2775 = vmatprep.subr.mxu0 0.0
        %2776 = vmatpush1.msra.mxu0 0.0
        %2777 = vmatprep.subr.mxu0 0.0
        %2778 = vmatpush1.msra.mxu0 0.0
        %2779 = vmatprep.subr.mxu0 0.0
        %2780 = vmatpush1.msra.mxu0 0.0
        %2781 = vmatprep.subr.mxu0 0.0
        %2782 = vmatpush1.msra.mxu0 0.0
        %2783 = vmatprep.subr.mxu0 0.0
        %2784 = vmatpush1.msra.mxu0 0.0
        %2785 = vmatprep.subr.mxu0 0.0
        %2786 = vmatpush1.msra.mxu0 %v1322
        %2787 = vmatprep.subr.mxu0 0.0
        %2788 = vmatpush2.msra.mxu0 0.0
        %2789 = vmatprep.subr.mxu0 0.0
        %2790 = vmatpush2.msra.mxu0 0.0
        %2791 = vmatprep.subr.mxu0 0.0
        %2792 = vmatpush2.msra.mxu0 0.0
        %2793 = vmatprep.subr.mxu0 0.0
        %2794 = vmatpush2.msra.mxu0 0.0
        %2795 = vmatprep.subr.mxu0 0.0
        %2796 = vmatpush2.msra.mxu0 0.0
        %2797 = vmatprep.subr.mxu0 0.0
        %2798 = vmatpush2.msra.mxu0 0.0
        %2799 = vmatprep.subr.mxu0 0.0
        %2800 = vmatpush2.msra.mxu0 0.0
        %2801 = vmatprep.subr.mxu0 0.0
        %2802 = vmatpush2.msra.mxu0 0.0
        %2803 = vmatprep.subr.mxu0 0.0
        %2804 = vmatpush2.msra.mxu0 0.0
        %2805 = vmatprep.subr.mxu0 0.0
        %2806 = vmatpush2.msra.mxu0 0.0
        %2807 = vmatprep.subr.mxu0 0.0
        %2808 = vmatpush2.msra.mxu0 0.0
        %2809 = vmatprep.subr.mxu0 0.0
        %2810 = vmatpush2.msra.mxu0 0.0
        %2811 = vmatprep.subr.mxu0 0.0
        %2812 = vmatpush2.msra.mxu0 0.0
        %2813 = vmatprep.subr.mxu0 0.0
        %2814 = vmatpush2.msra.mxu0 0.0
        %2815 = vmatprep.subr.mxu0 0.0
        %2816 = vmatpush2.msra.mxu0 0.0
        %2817 = vmatprep.subr.mxu0 0.0
        %2818 = vmatpush2.msra.mxu0 0.0
        %2819 = vmatprep.mubr.f32.mxu0 0.0
        %2820 = vmatmul.mubr.f32.gmra.mxu0 %v2753
        %v2821 = vpop.f32.mrf.mxu0
        %v2822 = vadd.f32 0.0, %v2821
        %v2823 = vpop.f32.mrf.mxu0
        %2824 = vdwg.mxu0
        %v2825 = vadd.f32 %v2750, %v2822
        %s2826 = scalar_lea.vmem [#allocation2], 16
        %2827 = vst.msk [vmem:[%s2826] sm:$0xff] %vm2080, %v2825
        %2828 = vrot.lane.b32.xlu0 %v1497, 104
        %v2829 = vpop.permute.xlu0 %2828
        %v2830 = vsel %vm883, %v2829, 0
        %2832 = vmatprep.subr.mxu0 0.0
        %2833 = vmatpush1.msra.mxu0 0.0
        %2834 = vmatprep.subr.mxu0 0.0
        %2835 = vmatpush1.msra.mxu0 0.0
        %2836 = vmatprep.subr.mxu0 0.0
        %2837 = vmatpush1.msra.mxu0 0.0
        %2838 = vmatprep.subr.mxu0 0.0
        %2839 = vmatpush1.msra.mxu0 0.0
        %2840 = vmatprep.subr.mxu0 0.0
        %2841 = vmatpush1.msra.mxu0 0.0
        %2842 = vmatprep.subr.mxu0 0.0
        %2843 = vmatpush1.msra.mxu0 0.0
        %2844 = vmatprep.subr.mxu0 0.0
        %2845 = vmatpush1.msra.mxu0 0.0
        %2846 = vmatprep.subr.mxu0 0.0
        %2847 = vmatpush1.msra.mxu0 0.0
        %2848 = vmatprep.subr.mxu0 0.0
        %2849 = vmatpush1.msra.mxu0 0.0
        %2850 = vmatprep.subr.mxu0 0.0
        %2851 = vmatpush1.msra.mxu0 0.0
        %2852 = vmatprep.subr.mxu0 0.0
        %2853 = vmatpush1.msra.mxu0 0.0
        %2854 = vmatprep.subr.mxu0 0.0
        %2855 = vmatpush1.msra.mxu0 0.0
        %2856 = vmatprep.subr.mxu0 0.0
        %2857 = vmatpush1.msra.mxu0 0.0
        %2858 = vmatprep.subr.mxu0 0.0
        %2859 = vmatpush1.msra.mxu0 0.0
        %2860 = vmatprep.subr.mxu0 0.0
        %2861 = vmatpush1.msra.mxu0 0.0
        %2862 = vmatprep.subr.mxu0 0.0
        %2863 = vmatpush1.msra.mxu0 %v1319
        %2864 = vmatprep.subr.mxu0 0.0
        %2865 = vmatpush2.msra.mxu0 0.0
        %2866 = vmatprep.subr.mxu0 0.0
        %2867 = vmatpush2.msra.mxu0 0.0
        %2868 = vmatprep.subr.mxu0 0.0
        %2869 = vmatpush2.msra.mxu0 0.0
        %2870 = vmatprep.subr.mxu0 0.0
        %2871 = vmatpush2.msra.mxu0 0.0
        %2872 = vmatprep.subr.mxu0 0.0
        %2873 = vmatpush2.msra.mxu0 0.0
        %2874 = vmatprep.subr.mxu0 0.0
        %2875 = vmatpush2.msra.mxu0 0.0
        %2876 = vmatprep.subr.mxu0 0.0
        %2877 = vmatpush2.msra.mxu0 0.0
        %2878 = vmatprep.subr.mxu0 0.0
        %2879 = vmatpush2.msra.mxu0 0.0
        %2880 = vmatprep.subr.mxu0 0.0
        %2881 = vmatpush2.msra.mxu0 0.0
        %2882 = vmatprep.subr.mxu0 0.0
        %2883 = vmatpush2.msra.mxu0 0.0
        %2884 = vmatprep.subr.mxu0 0.0
        %2885 = vmatpush2.msra.mxu0 0.0
        %2886 = vmatprep.subr.mxu0 0.0
        %2887 = vmatpush2.msra.mxu0 0.0
        %2888 = vmatprep.subr.mxu0 0.0
        %2889 = vmatpush2.msra.mxu0 0.0
        %2890 = vmatprep.subr.mxu0 0.0
        %2891 = vmatpush2.msra.mxu0 0.0
        %2892 = vmatprep.subr.mxu0 0.0
        %2893 = vmatpush2.msra.mxu0 0.0
        %2894 = vmatprep.subr.mxu0 0.0
        %2895 = vmatpush2.msra.mxu0 0.0
        %2896 = vmatprep.mubr.f32.mxu0 0.0
        %2897 = vmatmul.mubr.f32.gmra.mxu0 %v2830
        %v2898 = vpop.f32.mrf.mxu0
        %v2899 = vadd.f32 0.0, %v2898
        %v2900 = vpop.f32.mrf.mxu0
        %2901 = vdwg.mxu0
        %v2902 = vsel %vm883, %v863, 0
        %2904 = vmatprep.subr.mxu0 0.0
        %2905 = vmatpush1.msra.mxu0 0.0
        %2906 = vmatprep.subr.mxu0 0.0
        %2907 = vmatpush1.msra.mxu0 0.0
        %2908 = vmatprep.subr.mxu0 0.0
        %2909 = vmatpush1.msra.mxu0 0.0
        %2910 = vmatprep.subr.mxu0 0.0
        %2911 = vmatpush1.msra.mxu0 0.0
        %2912 = vmatprep.subr.mxu0 0.0
        %2913 = vmatpush1.msra.mxu0 0.0
        %2914 = vmatprep.subr.mxu0 0.0
        %2915 = vmatpush1.msra.mxu0 0.0
        %2916 = vmatprep.subr.mxu0 0.0
        %2917 = vmatpush1.msra.mxu0 0.0
        %2918 = vmatprep.subr.mxu0 0.0
        %2919 = vmatpush1.msra.mxu0 0.0
        %2920 = vmatprep.subr.mxu0 0.0
        %2921 = vmatpush1.msra.mxu0 0.0
        %2922 = vmatprep.subr.mxu0 0.0
        %2923 = vmatpush1.msra.mxu0 0.0
        %2924 = vmatprep.subr.mxu0 0.0
        %2925 = vmatpush1.msra.mxu0 0.0
        %2926 = vmatprep.subr.mxu0 0.0
        %2927 = vmatpush1.msra.mxu0 0.0
        %2928 = vmatprep.subr.mxu0 0.0
        %2929 = vmatpush1.msra.mxu0 0.0
        %2930 = vmatprep.subr.mxu0 0.0
        %2931 = vmatpush1.msra.mxu0 0.0
        %2932 = vmatprep.subr.mxu0 0.0
        %2933 = vmatpush1.msra.mxu0 0.0
        %2934 = vmatprep.subr.mxu0 0.0
        %2935 = vmatpush1.msra.mxu0 %v1318
        %2936 = vmatprep.subr.mxu0 0.0
        %2937 = vmatpush2.msra.mxu0 0.0
        %2938 = vmatprep.subr.mxu0 0.0
        %2939 = vmatpush2.msra.mxu0 0.0
        %2940 = vmatprep.subr.mxu0 0.0
        %2941 = vmatpush2.msra.mxu0 0.0
        %2942 = vmatprep.subr.mxu0 0.0
        %2943 = vmatpush2.msra.mxu0 0.0
        %2944 = vmatprep.subr.mxu0 0.0
        %2945 = vmatpush2.msra.mxu0 0.0
        %2946 = vmatprep.subr.mxu0 0.0
        %2947 = vmatpush2.msra.mxu0 0.0
        %2948 = vmatprep.subr.mxu0 0.0
        %2949 = vmatpush2.msra.mxu0 0.0
        %2950 = vmatprep.subr.mxu0 0.0
        %2951 = vmatpush2.msra.mxu0 0.0
        %2952 = vmatprep.subr.mxu0 0.0
        %2953 = vmatpush2.msra.mxu0 0.0
        %2954 = vmatprep.subr.mxu0 0.0
        %2955 = vmatpush2.msra.mxu0 0.0
        %2956 = vmatprep.subr.mxu0 0.0
        %2957 = vmatpush2.msra.mxu0 0.0
        %2958 = vmatprep.subr.mxu0 0.0
        %2959 = vmatpush2.msra.mxu0 0.0
        %2960 = vmatprep.subr.mxu0 0.0
        %2961 = vmatpush2.msra.mxu0 0.0
        %2962 = vmatprep.subr.mxu0 0.0
        %2963 = vmatpush2.msra.mxu0 0.0
        %2964 = vmatprep.subr.mxu0 0.0
        %2965 = vmatpush2.msra.mxu0 0.0
        %2966 = vmatprep.subr.mxu0 0.0
        %2967 = vmatpush2.msra.mxu0 0.0
        %2968 = vmatprep.mubr.f32.mxu0 0.0
        %2969 = vmatmul.mubr.f32.gmra.mxu0 %v2902
        %v2970 = vpop.f32.mrf.mxu0
        %v2971 = vadd.f32 %v2899, %v2970
        %v2972 = vpop.f32.mrf.mxu0
        %2973 = vdwg.mxu0
        %2974 = vrot.lane.b32.xlu0 %v1567, 104
        %v2975 = vpop.permute.xlu0 %2974
        %v2976 = vsel %vm883, %v2975, 0
        %2978 = vmatprep.subr.mxu0 0.0
        %2979 = vmatpush1.msra.mxu0 0.0
        %2980 = vmatprep.subr.mxu0 0.0
        %2981 = vmatpush1.msra.mxu0 0.0
        %2982 = vmatprep.subr.mxu0 0.0
        %2983 = vmatpush1.msra.mxu0 0.0
        %2984 = vmatprep.subr.mxu0 0.0
        %2985 = vmatpush1.msra.mxu0 0.0
        %2986 = vmatprep.subr.mxu0 0.0
        %2987 = vmatpush1.msra.mxu0 0.0
        %2988 = vmatprep.subr.mxu0 0.0
        %2989 = vmatpush1.msra.mxu0 0.0
        %2990 = vmatprep.subr.mxu0 0.0
        %2991 = vmatpush1.msra.mxu0 0.0
        %2992 = vmatprep.subr.mxu0 0.0
        %2993 = vmatpush1.msra.mxu0 0.0
        %2994 = vmatprep.subr.mxu0 0.0
        %2995 = vmatpush1.msra.mxu0 0.0
        %2996 = vmatprep.subr.mxu0 0.0
        %2997 = vmatpush1.msra.mxu0 0.0
        %2998 = vmatprep.subr.mxu0 0.0
        %2999 = vmatpush1.msra.mxu0 0.0
        %3000 = vmatprep.subr.mxu0 0.0
        %3001 = vmatpush1.msra.mxu0 0.0
        %3002 = vmatprep.subr.mxu0 0.0
        %3003 = vmatpush1.msra.mxu0 0.0
        %3004 = vmatprep.subr.mxu0 0.0
        %3005 = vmatpush1.msra.mxu0 0.0
        %3006 = vmatprep.subr.mxu0 0.0
        %3007 = vmatpush1.msra.mxu0 0.0
        %3008 = vmatprep.subr.mxu0 0.0
        %3009 = vmatpush1.msra.mxu0 %v1320
        %3010 = vmatprep.subr.mxu0 0.0
        %3011 = vmatpush2.msra.mxu0 0.0
        %3012 = vmatprep.subr.mxu0 0.0
        %3013 = vmatpush2.msra.mxu0 0.0
        %3014 = vmatprep.subr.mxu0 0.0
        %3015 = vmatpush2.msra.mxu0 0.0
        %3016 = vmatprep.subr.mxu0 0.0
        %3017 = vmatpush2.msra.mxu0 0.0
        %3018 = vmatprep.subr.mxu0 0.0
        %3019 = vmatpush2.msra.mxu0 0.0
        %3020 = vmatprep.subr.mxu0 0.0
        %3021 = vmatpush2.msra.mxu0 0.0
        %3022 = vmatprep.subr.mxu0 0.0
        %3023 = vmatpush2.msra.mxu0 0.0
        %3024 = vmatprep.subr.mxu0 0.0
        %3025 = vmatpush2.msra.mxu0 0.0
        %3026 = vmatprep.subr.mxu0 0.0
        %3027 = vmatpush2.msra.mxu0 0.0
        %3028 = vmatprep.subr.mxu0 0.0
        %3029 = vmatpush2.msra.mxu0 0.0
        %3030 = vmatprep.subr.mxu0 0.0
        %3031 = vmatpush2.msra.mxu0 0.0
        %3032 = vmatprep.subr.mxu0 0.0
        %3033 = vmatpush2.msra.mxu0 0.0
        %3034 = vmatprep.subr.mxu0 0.0
        %3035 = vmatpush2.msra.mxu0 0.0
        %3036 = vmatprep.subr.mxu0 0.0
        %3037 = vmatpush2.msra.mxu0 0.0
        %3038 = vmatprep.subr.mxu0 0.0
        %3039 = vmatpush2.msra.mxu0 0.0
        %3040 = vmatprep.subr.mxu0 0.0
        %3041 = vmatpush2.msra.mxu0 0.0
        %3042 = vmatprep.mubr.f32.mxu0 0.0
        %3043 = vmatmul.mubr.f32.gmra.mxu0 %v2976
        %v3044 = vpop.f32.mrf.mxu0
        %v3045 = vadd.f32 0.0, %v3044
        %v3046 = vpop.f32.mrf.mxu0
        %3047 = vdwg.mxu0
        %v3048 = vadd.f32 %v2971, %v3045
        %3049 = vrot.lane.b32.xlu0 %v1640, 104
        %v3050 = vpop.permute.xlu0 %3049
        %v3051 = vsel %vm883, %v3050, 0
        %3053 = vmatprep.subr.mxu0 0.0
        %3054 = vmatpush1.msra.mxu0 0.0
        %3055 = vmatprep.subr.mxu0 0.0
        %3056 = vmatpush1.msra.mxu0 0.0
        %3057 = vmatprep.subr.mxu0 0.0
        %3058 = vmatpush1.msra.mxu0 0.0
        %3059 = vmatprep.subr.mxu0 0.0
        %3060 = vmatpush1.msra.mxu0 0.0
        %3061 = vmatprep.subr.mxu0 0.0
        %3062 = vmatpush1.msra.mxu0 0.0
        %3063 = vmatprep.subr.mxu0 0.0
        %3064 = vmatpush1.msra.mxu0 0.0
        %3065 = vmatprep.subr.mxu0 0.0
        %3066 = vmatpush1.msra.mxu0 0.0
        %3067 = vmatprep.subr.mxu0 0.0
        %3068 = vmatpush1.msra.mxu0 0.0
        %3069 = vmatprep.subr.mxu0 0.0
        %3070 = vmatpush1.msra.mxu0 0.0
        %3071 = vmatprep.subr.mxu0 0.0
        %3072 = vmatpush1.msra.mxu0 0.0
        %3073 = vmatprep.subr.mxu0 0.0
        %3074 = vmatpush1.msra.mxu0 0.0
        %3075 = vmatprep.subr.mxu0 0.0
        %3076 = vmatpush1.msra.mxu0 0.0
        %3077 = vmatprep.subr.mxu0 0.0
        %3078 = vmatpush1.msra.mxu0 0.0
        %3079 = vmatprep.subr.mxu0 0.0
        %3080 = vmatpush1.msra.mxu0 0.0
        %3081 = vmatprep.subr.mxu0 0.0
        %3082 = vmatpush1.msra.mxu0 0.0
        %3083 = vmatprep.subr.mxu0 0.0
        %3084 = vmatpush1.msra.mxu0 %v1321
        %3085 = vmatprep.subr.mxu0 0.0
        %3086 = vmatpush2.msra.mxu0 0.0
        %3087 = vmatprep.subr.mxu0 0.0
        %3088 = vmatpush2.msra.mxu0 0.0
        %3089 = vmatprep.subr.mxu0 0.0
        %3090 = vmatpush2.msra.mxu0 0.0
        %3091 = vmatprep.subr.mxu0 0.0
        %3092 = vmatpush2.msra.mxu0 0.0
        %3093 = vmatprep.subr.mxu0 0.0
        %3094 = vmatpush2.msra.mxu0 0.0
        %3095 = vmatprep.subr.mxu0 0.0
        %3096 = vmatpush2.msra.mxu0 0.0
        %3097 = vmatprep.subr.mxu0 0.0
        %3098 = vmatpush2.msra.mxu0 0.0
        %3099 = vmatprep.subr.mxu0 0.0
        %3100 = vmatpush2.msra.mxu0 0.0
        %3101 = vmatprep.subr.mxu0 0.0
        %3102 = vmatpush2.msra.mxu0 0.0
        %3103 = vmatprep.subr.mxu0 0.0
        %3104 = vmatpush2.msra.mxu0 0.0
        %3105 = vmatprep.subr.mxu0 0.0
        %3106 = vmatpush2.msra.mxu0 0.0
        %3107 = vmatprep.subr.mxu0 0.0
        %3108 = vmatpush2.msra.mxu0 0.0
        %3109 = vmatprep.subr.mxu0 0.0
        %3110 = vmatpush2.msra.mxu0 0.0
        %3111 = vmatprep.subr.mxu0 0.0
        %3112 = vmatpush2.msra.mxu0 0.0
        %3113 = vmatprep.subr.mxu0 0.0
        %3114 = vmatpush2.msra.mxu0 0.0
        %3115 = vmatprep.subr.mxu0 0.0
        %3116 = vmatpush2.msra.mxu0 0.0
        %3117 = vmatprep.mubr.f32.mxu0 0.0
        %3118 = vmatmul.mubr.f32.gmra.mxu0 %v3051
        %v3119 = vpop.f32.mrf.mxu0
        %v3120 = vadd.f32 0.0, %v3119
        %v3121 = vpop.f32.mrf.mxu0
        %3122 = vdwg.mxu0
        %v3123 = vadd.f32 %v3048, %v3120
        %3124 = vrot.lane.b32.xlu0 %v1710, 104
        %v3125 = vpop.permute.xlu0 %3124
        %v3126 = vsel %vm883, %v3125, 0
        %3128 = vmatprep.subr.mxu0 0.0
        %3129 = vmatpush1.msra.mxu0 0.0
        %3130 = vmatprep.subr.mxu0 0.0
        %3131 = vmatpush1.msra.mxu0 0.0
        %3132 = vmatprep.subr.mxu0 0.0
        %3133 = vmatpush1.msra.mxu0 0.0
        %3134 = vmatprep.subr.mxu0 0.0
        %3135 = vmatpush1.msra.mxu0 0.0
        %3136 = vmatprep.subr.mxu0 0.0
        %3137 = vmatpush1.msra.mxu0 0.0
        %3138 = vmatprep.subr.mxu0 0.0
        %3139 = vmatpush1.msra.mxu0 0.0
        %3140 = vmatprep.subr.mxu0 0.0
        %3141 = vmatpush1.msra.mxu0 0.0
        %3142 = vmatprep.subr.mxu0 0.0
        %3143 = vmatpush1.msra.mxu0 0.0
        %3144 = vmatprep.subr.mxu0 0.0
        %3145 = vmatpush1.msra.mxu0 0.0
        %3146 = vmatprep.subr.mxu0 0.0
        %3147 = vmatpush1.msra.mxu0 0.0
        %3148 = vmatprep.subr.mxu0 0.0
        %3149 = vmatpush1.msra.mxu0 0.0
        %3150 = vmatprep.subr.mxu0 0.0
        %3151 = vmatpush1.msra.mxu0 0.0
        %3152 = vmatprep.subr.mxu0 0.0
        %3153 = vmatpush1.msra.mxu0 0.0
        %3154 = vmatprep.subr.mxu0 0.0
        %3155 = vmatpush1.msra.mxu0 0.0
        %3156 = vmatprep.subr.mxu0 0.0
        %3157 = vmatpush1.msra.mxu0 0.0
        %3158 = vmatprep.subr.mxu0 0.0
        %3159 = vmatpush1.msra.mxu0 %v1322
        %3160 = vmatprep.subr.mxu0 0.0
        %3161 = vmatpush2.msra.mxu0 0.0
        %3162 = vmatprep.subr.mxu0 0.0
        %3163 = vmatpush2.msra.mxu0 0.0
        %3164 = vmatprep.subr.mxu0 0.0
        %3165 = vmatpush2.msra.mxu0 0.0
        %3166 = vmatprep.subr.mxu0 0.0
        %3167 = vmatpush2.msra.mxu0 0.0
        %3168 = vmatprep.subr.mxu0 0.0
        %3169 = vmatpush2.msra.mxu0 0.0
        %3170 = vmatprep.subr.mxu0 0.0
        %3171 = vmatpush2.msra.mxu0 0.0
        %3172 = vmatprep.subr.mxu0 0.0
        %3173 = vmatpush2.msra.mxu0 0.0
        %3174 = vmatprep.subr.mxu0 0.0
        %3175 = vmatpush2.msra.mxu0 0.0
        %3176 = vmatprep.subr.mxu0 0.0
        %3177 = vmatpush2.msra.mxu0 0.0
        %3178 = vmatprep.subr.mxu0 0.0
        %3179 = vmatpush2.msra.mxu0 0.0
        %3180 = vmatprep.subr.mxu0 0.0
        %3181 = vmatpush2.msra.mxu0 0.0
        %3182 = vmatprep.subr.mxu0 0.0
        %3183 = vmatpush2.msra.mxu0 0.0
        %3184 = vmatprep.subr.mxu0 0.0
        %3185 = vmatpush2.msra.mxu0 0.0
        %3186 = vmatprep.subr.mxu0 0.0
        %3187 = vmatpush2.msra.mxu0 0.0
        %3188 = vmatprep.subr.mxu0 0.0
        %3189 = vmatpush2.msra.mxu0 0.0
        %3190 = vmatprep.subr.mxu0 0.0
        %3191 = vmatpush2.msra.mxu0 0.0
        %3192 = vmatprep.mubr.f32.mxu0 0.0
        %3193 = vmatmul.mubr.f32.gmra.mxu0 %v3126
        %v3194 = vpop.f32.mrf.mxu0
        %v3195 = vadd.f32 0.0, %v3194
        %v3196 = vpop.f32.mrf.mxu0
        %3197 = vdwg.mxu0
        %v3198 = vadd.f32 %v3123, %v3195
        %s3199 = scalar_lea.vmem [#allocation2], 24
        %3200 = vst.msk [vmem:[%s3199] sm:$0xff] %vm2080, %v3198
        %3201 = vrot.lane.b32.xlu0 %v1497, 96
        %v3202 = vpop.permute.xlu0 %3201
        %v3203 = vsel %vm883, %v3202, 0
        %3205 = vmatprep.subr.mxu0 0.0
        %3206 = vmatpush1.msra.mxu0 0.0
        %3207 = vmatprep.subr.mxu0 0.0
        %3208 = vmatpush1.msra.mxu0 0.0
        %3209 = vmatprep.subr.mxu0 0.0
        %3210 = vmatpush1.msra.mxu0 0.0
        %3211 = vmatprep.subr.mxu0 0.0
        %3212 = vmatpush1.msra.mxu0 0.0
        %3213 = vmatprep.subr.mxu0 0.0
        %3214 = vmatpush1.msra.mxu0 0.0
        %3215 = vmatprep.subr.mxu0 0.0
        %3216 = vmatpush1.msra.mxu0 0.0
        %3217 = vmatprep.subr.mxu0 0.0
        %3218 = vmatpush1.msra.mxu0 0.0
        %3219 = vmatprep.subr.mxu0 0.0
        %3220 = vmatpush1.msra.mxu0 0.0
        %3221 = vmatprep.subr.mxu0 0.0
        %3222 = vmatpush1.msra.mxu0 0.0
        %3223 = vmatprep.subr.mxu0 0.0
        %3224 = vmatpush1.msra.mxu0 0.0
        %3225 = vmatprep.subr.mxu0 0.0
        %3226 = vmatpush1.msra.mxu0 0.0
        %3227 = vmatprep.subr.mxu0 0.0
        %3228 = vmatpush1.msra.mxu0 0.0
        %3229 = vmatprep.subr.mxu0 0.0
        %3230 = vmatpush1.msra.mxu0 0.0
        %3231 = vmatprep.subr.mxu0 0.0
        %3232 = vmatpush1.msra.mxu0 0.0
        %3233 = vmatprep.subr.mxu0 0.0
        %3234 = vmatpush1.msra.mxu0 0.0
        %3235 = vmatprep.subr.mxu0 0.0
        %3236 = vmatpush1.msra.mxu0 %v1319
        %3237 = vmatprep.subr.mxu0 0.0
        %3238 = vmatpush2.msra.mxu0 0.0
        %3239 = vmatprep.subr.mxu0 0.0
        %3240 = vmatpush2.msra.mxu0 0.0
        %3241 = vmatprep.subr.mxu0 0.0
        %3242 = vmatpush2.msra.mxu0 0.0
        %3243 = vmatprep.subr.mxu0 0.0
        %3244 = vmatpush2.msra.mxu0 0.0
        %3245 = vmatprep.subr.mxu0 0.0
        %3246 = vmatpush2.msra.mxu0 0.0
        %3247 = vmatprep.subr.mxu0 0.0
        %3248 = vmatpush2.msra.mxu0 0.0
        %3249 = vmatprep.subr.mxu0 0.0
        %3250 = vmatpush2.msra.mxu0 0.0
        %3251 = vmatprep.subr.mxu0 0.0
        %3252 = vmatpush2.msra.mxu0 0.0
        %3253 = vmatprep.subr.mxu0 0.0
        %3254 = vmatpush2.msra.mxu0 0.0
        %3255 = vmatprep.subr.mxu0 0.0
        %3256 = vmatpush2.msra.mxu0 0.0
        %3257 = vmatprep.subr.mxu0 0.0
        %3258 = vmatpush2.msra.mxu0 0.0
        %3259 = vmatprep.subr.mxu0 0.0
        %3260 = vmatpush2.msra.mxu0 0.0
        %3261 = vmatprep.subr.mxu0 0.0
        %3262 = vmatpush2.msra.mxu0 0.0
        %3263 = vmatprep.subr.mxu0 0.0
        %3264 = vmatpush2.msra.mxu0 0.0
        %3265 = vmatprep.subr.mxu0 0.0
        %3266 = vmatpush2.msra.mxu0 0.0
        %3267 = vmatprep.subr.mxu0 0.0
        %3268 = vmatpush2.msra.mxu0 0.0
        %3269 = vmatprep.mubr.f32.mxu0 0.0
        %3270 = vmatmul.mubr.f32.gmra.mxu0 %v3203
        %v3271 = vpop.f32.mrf.mxu0
        %v3272 = vadd.f32 0.0, %v3271
        %v3273 = vpop.f32.mrf.mxu0
        %3274 = vdwg.mxu0
        %v3275 = vsel %vm883, %v867, 0
        %3277 = vmatprep.subr.mxu0 0.0
        %3278 = vmatpush1.msra.mxu0 0.0
        %3279 = vmatprep.subr.mxu0 0.0
        %3280 = vmatpush1.msra.mxu0 0.0
        %3281 = vmatprep.subr.mxu0 0.0
        %3282 = vmatpush1.msra.mxu0 0.0
        %3283 = vmatprep.subr.mxu0 0.0
        %3284 = vmatpush1.msra.mxu0 0.0
        %3285 = vmatprep.subr.mxu0 0.0
        %3286 = vmatpush1.msra.mxu0 0.0
        %3287 = vmatprep.subr.mxu0 0.0
        %3288 = vmatpush1.msra.mxu0 0.0
        %3289 = vmatprep.subr.mxu0 0.0
        %3290 = vmatpush1.msra.mxu0 0.0
        %3291 = vmatprep.subr.mxu0 0.0
        %3292 = vmatpush1.msra.mxu0 0.0
        %3293 = vmatprep.subr.mxu0 0.0
        %3294 = vmatpush1.msra.mxu0 0.0
        %3295 = vmatprep.subr.mxu0 0.0
        %3296 = vmatpush1.msra.mxu0 0.0
        %3297 = vmatprep.subr.mxu0 0.0
        %3298 = vmatpush1.msra.mxu0 0.0
        %3299 = vmatprep.subr.mxu0 0.0
        %3300 = vmatpush1.msra.mxu0 0.0
        %3301 = vmatprep.subr.mxu0 0.0
        %3302 = vmatpush1.msra.mxu0 0.0
        %3303 = vmatprep.subr.mxu0 0.0
        %3304 = vmatpush1.msra.mxu0 0.0
        %3305 = vmatprep.subr.mxu0 0.0
        %3306 = vmatpush1.msra.mxu0 0.0
        %3307 = vmatprep.subr.mxu0 0.0
        %3308 = vmatpush1.msra.mxu0 %v1318
        %3309 = vmatprep.subr.mxu0 0.0
        %3310 = vmatpush2.msra.mxu0 0.0
        %3311 = vmatprep.subr.mxu0 0.0
        %3312 = vmatpush2.msra.mxu0 0.0
        %3313 = vmatprep.subr.mxu0 0.0
        %3314 = vmatpush2.msra.mxu0 0.0
        %3315 = vmatprep.subr.mxu0 0.0
        %3316 = vmatpush2.msra.mxu0 0.0
        %3317 = vmatprep.subr.mxu0 0.0
        %3318 = vmatpush2.msra.mxu0 0.0
        %3319 = vmatprep.subr.mxu0 0.0
        %3320 = vmatpush2.msra.mxu0 0.0
        %3321 = vmatprep.subr.mxu0 0.0
        %3322 = vmatpush2.msra.mxu0 0.0
        %3323 = vmatprep.subr.mxu0 0.0
        %3324 = vmatpush2.msra.mxu0 0.0
        %3325 = vmatprep.subr.mxu0 0.0
        %3326 = vmatpush2.msra.mxu0 0.0
        %3327 = vmatprep.subr.mxu0 0.0
        %3328 = vmatpush2.msra.mxu0 0.0
        %3329 = vmatprep.subr.mxu0 0.0
        %3330 = vmatpush2.msra.mxu0 0.0
        %3331 = vmatprep.subr.mxu0 0.0
        %3332 = vmatpush2.msra.mxu0 0.0
        %3333 = vmatprep.subr.mxu0 0.0
        %3334 = vmatpush2.msra.mxu0 0.0
        %3335 = vmatprep.subr.mxu0 0.0
        %3336 = vmatpush2.msra.mxu0 0.0
        %3337 = vmatprep.subr.mxu0 0.0
        %3338 = vmatpush2.msra.mxu0 0.0
        %3339 = vmatprep.subr.mxu0 0.0
        %3340 = vmatpush2.msra.mxu0 0.0
        %3341 = vmatprep.mubr.f32.mxu0 0.0
        %3342 = vmatmul.mubr.f32.gmra.mxu0 %v3275
        %v3343 = vpop.f32.mrf.mxu0
        %v3344 = vadd.f32 %v3272, %v3343
        %v3345 = vpop.f32.mrf.mxu0
        %3346 = vdwg.mxu0
        %3347 = vrot.lane.b32.xlu0 %v1567, 96
        %v3348 = vpop.permute.xlu0 %3347
        %v3349 = vsel %vm883, %v3348, 0
        %3351 = vmatprep.subr.mxu0 0.0
        %3352 = vmatpush1.msra.mxu0 0.0
        %3353 = vmatprep.subr.mxu0 0.0
        %3354 = vmatpush1.msra.mxu0 0.0
        %3355 = vmatprep.subr.mxu0 0.0
        %3356 = vmatpush1.msra.mxu0 0.0
        %3357 = vmatprep.subr.mxu0 0.0
        %3358 = vmatpush1.msra.mxu0 0.0
        %3359 = vmatprep.subr.mxu0 0.0
        %3360 = vmatpush1.msra.mxu0 0.0
        %3361 = vmatprep.subr.mxu0 0.0
        %3362 = vmatpush1.msra.mxu0 0.0
        %3363 = vmatprep.subr.mxu0 0.0
        %3364 = vmatpush1.msra.mxu0 0.0
        %3365 = vmatprep.subr.mxu0 0.0
        %3366 = vmatpush1.msra.mxu0 0.0
        %3367 = vmatprep.subr.mxu0 0.0
        %3368 = vmatpush1.msra.mxu0 0.0
        %3369 = vmatprep.subr.mxu0 0.0
        %3370 = vmatpush1.msra.mxu0 0.0
        %3371 = vmatprep.subr.mxu0 0.0
        %3372 = vmatpush1.msra.mxu0 0.0
        %3373 = vmatprep.subr.mxu0 0.0
        %3374 = vmatpush1.msra.mxu0 0.0
        %3375 = vmatprep.subr.mxu0 0.0
        %3376 = vmatpush1.msra.mxu0 0.0
        %3377 = vmatprep.subr.mxu0 0.0
        %3378 = vmatpush1.msra.mxu0 0.0
        %3379 = vmatprep.subr.mxu0 0.0
        %3380 = vmatpush1.msra.mxu0 0.0
        %3381 = vmatprep.subr.mxu0 0.0
        %3382 = vmatpush1.msra.mxu0 %v1320
        %3383 = vmatprep.subr.mxu0 0.0
        %3384 = vmatpush2.msra.mxu0 0.0
        %3385 = vmatprep.subr.mxu0 0.0
        %3386 = vmatpush2.msra.mxu0 0.0
        %3387 = vmatprep.subr.mxu0 0.0
        %3388 = vmatpush2.msra.mxu0 0.0
        %3389 = vmatprep.subr.mxu0 0.0
        %3390 = vmatpush2.msra.mxu0 0.0
        %3391 = vmatprep.subr.mxu0 0.0
        %3392 = vmatpush2.msra.mxu0 0.0
        %3393 = vmatprep.subr.mxu0 0.0
        %3394 = vmatpush2.msra.mxu0 0.0
        %3395 = vmatprep.subr.mxu0 0.0
        %3396 = vmatpush2.msra.mxu0 0.0
        %3397 = vmatprep.subr.mxu0 0.0
        %3398 = vmatpush2.msra.mxu0 0.0
        %3399 = vmatprep.subr.mxu0 0.0
        %3400 = vmatpush2.msra.mxu0 0.0
        %3401 = vmatprep.subr.mxu0 0.0
        %3402 = vmatpush2.msra.mxu0 0.0
        %3403 = vmatprep.subr.mxu0 0.0
        %3404 = vmatpush2.msra.mxu0 0.0
        %3405 = vmatprep.subr.mxu0 0.0
        %3406 = vmatpush2.msra.mxu0 0.0
        %3407 = vmatprep.subr.mxu0 0.0
        %3408 = vmatpush2.msra.mxu0 0.0
        %3409 = vmatprep.subr.mxu0 0.0
        %3410 = vmatpush2.msra.mxu0 0.0
        %3411 = vmatprep.subr.mxu0 0.0
        %3412 = vmatpush2.msra.mxu0 0.0
        %3413 = vmatprep.subr.mxu0 0.0
        %3414 = vmatpush2.msra.mxu0 0.0
        %3415 = vmatprep.mubr.f32.mxu0 0.0
        %3416 = vmatmul.mubr.f32.gmra.mxu0 %v3349
        %v3417 = vpop.f32.mrf.mxu0
        %v3418 = vadd.f32 0.0, %v3417
        %v3419 = vpop.f32.mrf.mxu0
        %3420 = vdwg.mxu0
        %v3421 = vadd.f32 %v3344, %v3418
        %3422 = vrot.lane.b32.xlu0 %v1640, 96
        %v3423 = vpop.permute.xlu0 %3422
        %v3424 = vsel %vm883, %v3423, 0
        %3426 = vmatprep.subr.mxu0 0.0
        %3427 = vmatpush1.msra.mxu0 0.0
        %3428 = vmatprep.subr.mxu0 0.0
        %3429 = vmatpush1.msra.mxu0 0.0
        %3430 = vmatprep.subr.mxu0 0.0
        %3431 = vmatpush1.msra.mxu0 0.0
        %3432 = vmatprep.subr.mxu0 0.0
        %3433 = vmatpush1.msra.mxu0 0.0
        %3434 = vmatprep.subr.mxu0 0.0
        %3435 = vmatpush1.msra.mxu0 0.0
        %3436 = vmatprep.subr.mxu0 0.0
        %3437 = vmatpush1.msra.mxu0 0.0
        %3438 = vmatprep.subr.mxu0 0.0
        %3439 = vmatpush1.msra.mxu0 0.0
        %3440 = vmatprep.subr.mxu0 0.0
        %3441 = vmatpush1.msra.mxu0 0.0
        %3442 = vmatprep.subr.mxu0 0.0
        %3443 = vmatpush1.msra.mxu0 0.0
        %3444 = vmatprep.subr.mxu0 0.0
        %3445 = vmatpush1.msra.mxu0 0.0
        %3446 = vmatprep.subr.mxu0 0.0
        %3447 = vmatpush1.msra.mxu0 0.0
        %3448 = vmatprep.subr.mxu0 0.0
        %3449 = vmatpush1.msra.mxu0 0.0
        %3450 = vmatprep.subr.mxu0 0.0
        %3451 = vmatpush1.msra.mxu0 0.0
        %3452 = vmatprep.subr.mxu0 0.0
        %3453 = vmatpush1.msra.mxu0 0.0
        %3454 = vmatprep.subr.mxu0 0.0
        %3455 = vmatpush1.msra.mxu0 0.0
        %3456 = vmatprep.subr.mxu0 0.0
        %3457 = vmatpush1.msra.mxu0 %v1321
        %3458 = vmatprep.subr.mxu0 0.0
        %3459 = vmatpush2.msra.mxu0 0.0
        %3460 = vmatprep.subr.mxu0 0.0
        %3461 = vmatpush2.msra.mxu0 0.0
        %3462 = vmatprep.subr.mxu0 0.0
        %3463 = vmatpush2.msra.mxu0 0.0
        %3464 = vmatprep.subr.mxu0 0.0
        %3465 = vmatpush2.msra.mxu0 0.0
        %3466 = vmatprep.subr.mxu0 0.0
        %3467 = vmatpush2.msra.mxu0 0.0
        %3468 = vmatprep.subr.mxu0 0.0
        %3469 = vmatpush2.msra.mxu0 0.0
        %3470 = vmatprep.subr.mxu0 0.0
        %3471 = vmatpush2.msra.mxu0 0.0
        %3472 = vmatprep.subr.mxu0 0.0
        %3473 = vmatpush2.msra.mxu0 0.0
        %3474 = vmatprep.subr.mxu0 0.0
        %3475 = vmatpush2.msra.mxu0 0.0
        %3476 = vmatprep.subr.mxu0 0.0
        %3477 = vmatpush2.msra.mxu0 0.0
        %3478 = vmatprep.subr.mxu0 0.0
        %3479 = vmatpush2.msra.mxu0 0.0
        %3480 = vmatprep.subr.mxu0 0.0
        %3481 = vmatpush2.msra.mxu0 0.0
        %3482 = vmatprep.subr.mxu0 0.0
        %3483 = vmatpush2.msra.mxu0 0.0
        %3484 = vmatprep.subr.mxu0 0.0
        %3485 = vmatpush2.msra.mxu0 0.0
        %3486 = vmatprep.subr.mxu0 0.0
        %3487 = vmatpush2.msra.mxu0 0.0
        %3488 = vmatprep.subr.mxu0 0.0
        %3489 = vmatpush2.msra.mxu0 0.0
        %3490 = vmatprep.mubr.f32.mxu0 0.0
        %3491 = vmatmul.mubr.f32.gmra.mxu0 %v3424
        %v3492 = vpop.f32.mrf.mxu0
        %v3493 = vadd.f32 0.0, %v3492
        %v3494 = vpop.f32.mrf.mxu0
        %3495 = vdwg.mxu0
        %v3496 = vadd.f32 %v3421, %v3493
        %3497 = vrot.lane.b32.xlu0 %v1710, 96
        %v3498 = vpop.permute.xlu0 %3497
        %v3499 = vsel %vm883, %v3498, 0
        %3501 = vmatprep.subr.mxu0 0.0
        %3502 = vmatpush1.msra.mxu0 0.0
        %3503 = vmatprep.subr.mxu0 0.0
        %3504 = vmatpush1.msra.mxu0 0.0
        %3505 = vmatprep.subr.mxu0 0.0
        %3506 = vmatpush1.msra.mxu0 0.0
        %3507 = vmatprep.subr.mxu0 0.0
        %3508 = vmatpush1.msra.mxu0 0.0
        %3509 = vmatprep.subr.mxu0 0.0
        %3510 = vmatpush1.msra.mxu0 0.0
        %3511 = vmatprep.subr.mxu0 0.0
        %3512 = vmatpush1.msra.mxu0 0.0
        %3513 = vmatprep.subr.mxu0 0.0
        %3514 = vmatpush1.msra.mxu0 0.0
        %3515 = vmatprep.subr.mxu0 0.0
        %3516 = vmatpush1.msra.mxu0 0.0
        %3517 = vmatprep.subr.mxu0 0.0
        %3518 = vmatpush1.msra.mxu0 0.0
        %3519 = vmatprep.subr.mxu0 0.0
        %3520 = vmatpush1.msra.mxu0 0.0
        %3521 = vmatprep.subr.mxu0 0.0
        %3522 = vmatpush1.msra.mxu0 0.0
        %3523 = vmatprep.subr.mxu0 0.0
        %3524 = vmatpush1.msra.mxu0 0.0
        %3525 = vmatprep.subr.mxu0 0.0
        %3526 = vmatpush1.msra.mxu0 0.0
        %3527 = vmatprep.subr.mxu0 0.0
        %3528 = vmatpush1.msra.mxu0 0.0
        %3529 = vmatprep.subr.mxu0 0.0
        %3530 = vmatpush1.msra.mxu0 0.0
        %3531 = vmatprep.subr.mxu0 0.0
        %3532 = vmatpush1.msra.mxu0 %v1322
        %3533 = vmatprep.subr.mxu0 0.0
        %3534 = vmatpush2.msra.mxu0 0.0
        %3535 = vmatprep.subr.mxu0 0.0
        %3536 = vmatpush2.msra.mxu0 0.0
        %3537 = vmatprep.subr.mxu0 0.0
        %3538 = vmatpush2.msra.mxu0 0.0
        %3539 = vmatprep.subr.mxu0 0.0
        %3540 = vmatpush2.msra.mxu0 0.0
        %3541 = vmatprep.subr.mxu0 0.0
        %3542 = vmatpush2.msra.mxu0 0.0
        %3543 = vmatprep.subr.mxu0 0.0
        %3544 = vmatpush2.msra.mxu0 0.0
        %3545 = vmatprep.subr.mxu0 0.0
        %3546 = vmatpush2.msra.mxu0 0.0
        %3547 = vmatprep.subr.mxu0 0.0
        %3548 = vmatpush2.msra.mxu0 0.0
        %3549 = vmatprep.subr.mxu0 0.0
        %3550 = vmatpush2.msra.mxu0 0.0
        %3551 = vmatprep.subr.mxu0 0.0
        %3552 = vmatpush2.msra.mxu0 0.0
        %3553 = vmatprep.subr.mxu0 0.0
        %3554 = vmatpush2.msra.mxu0 0.0
        %3555 = vmatprep.subr.mxu0 0.0
        %3556 = vmatpush2.msra.mxu0 0.0
        %3557 = vmatprep.subr.mxu0 0.0
        %3558 = vmatpush2.msra.mxu0 0.0
        %3559 = vmatprep.subr.mxu0 0.0
        %3560 = vmatpush2.msra.mxu0 0.0
        %3561 = vmatprep.subr.mxu0 0.0
        %3562 = vmatpush2.msra.mxu0 0.0
        %3563 = vmatprep.subr.mxu0 0.0
        %3564 = vmatpush2.msra.mxu0 0.0
        %3565 = vmatprep.mubr.f32.mxu0 0.0
        %3566 = vmatmul.mubr.f32.gmra.mxu0 %v3499
        %v3567 = vpop.f32.mrf.mxu0
        %v3568 = vadd.f32 0.0, %v3567
        %v3569 = vpop.f32.mrf.mxu0
        %3570 = vdwg.mxu0
        %v3571 = vadd.f32 %v3496, %v3568
        %s3572 = scalar_lea.vmem [#allocation2], 32
        %3573 = vst.msk [vmem:[%s3572] sm:$0xff] %vm2080, %v3571
        %3574 = vrot.lane.b32.xlu0 %v1497, 88
        %v3575 = vpop.permute.xlu0 %3574
        %v3576 = vsel %vm883, %v3575, 0
        %3578 = vmatprep.subr.mxu0 0.0
        %3579 = vmatpush1.msra.mxu0 0.0
        %3580 = vmatprep.subr.mxu0 0.0
        %3581 = vmatpush1.msra.mxu0 0.0
        %3582 = vmatprep.subr.mxu0 0.0
        %3583 = vmatpush1.msra.mxu0 0.0
        %3584 = vmatprep.subr.mxu0 0.0
        %3585 = vmatpush1.msra.mxu0 0.0
        %3586 = vmatprep.subr.mxu0 0.0
        %3587 = vmatpush1.msra.mxu0 0.0
        %3588 = vmatprep.subr.mxu0 0.0
        %3589 = vmatpush1.msra.mxu0 0.0
        %3590 = vmatprep.subr.mxu0 0.0
        %3591 = vmatpush1.msra.mxu0 0.0
        %3592 = vmatprep.subr.mxu0 0.0
        %3593 = vmatpush1.msra.mxu0 0.0
        %3594 = vmatprep.subr.mxu0 0.0
        %3595 = vmatpush1.msra.mxu0 0.0
        %3596 = vmatprep.subr.mxu0 0.0
        %3597 = vmatpush1.msra.mxu0 0.0
        %3598 = vmatprep.subr.mxu0 0.0
        %3599 = vmatpush1.msra.mxu0 0.0
        %3600 = vmatprep.subr.mxu0 0.0
        %3601 = vmatpush1.msra.mxu0 0.0
        %3602 = vmatprep.subr.mxu0 0.0
        %3603 = vmatpush1.msra.mxu0 0.0
        %3604 = vmatprep.subr.mxu0 0.0
        %3605 = vmatpush1.msra.mxu0 0.0
        %3606 = vmatprep.subr.mxu0 0.0
        %3607 = vmatpush1.msra.mxu0 0.0
        %3608 = vmatprep.subr.mxu0 0.0
        %3609 = vmatpush1.msra.mxu0 %v1319
        %3610 = vmatprep.subr.mxu0 0.0
        %3611 = vmatpush2.msra.mxu0 0.0
        %3612 = vmatprep.subr.mxu0 0.0
        %3613 = vmatpush2.msra.mxu0 0.0
        %3614 = vmatprep.subr.mxu0 0.0
        %3615 = vmatpush2.msra.mxu0 0.0
        %3616 = vmatprep.subr.mxu0 0.0
        %3617 = vmatpush2.msra.mxu0 0.0
        %3618 = vmatprep.subr.mxu0 0.0
        %3619 = vmatpush2.msra.mxu0 0.0
        %3620 = vmatprep.subr.mxu0 0.0
        %3621 = vmatpush2.msra.mxu0 0.0
        %3622 = vmatprep.subr.mxu0 0.0
        %3623 = vmatpush2.msra.mxu0 0.0
        %3624 = vmatprep.subr.mxu0 0.0
        %3625 = vmatpush2.msra.mxu0 0.0
        %3626 = vmatprep.subr.mxu0 0.0
        %3627 = vmatpush2.msra.mxu0 0.0
        %3628 = vmatprep.subr.mxu0 0.0
        %3629 = vmatpush2.msra.mxu0 0.0
        %3630 = vmatprep.subr.mxu0 0.0
        %3631 = vmatpush2.msra.mxu0 0.0
        %3632 = vmatprep.subr.mxu0 0.0
        %3633 = vmatpush2.msra.mxu0 0.0
        %3634 = vmatprep.subr.mxu0 0.0
        %3635 = vmatpush2.msra.mxu0 0.0
        %3636 = vmatprep.subr.mxu0 0.0
        %3637 = vmatpush2.msra.mxu0 0.0
        %3638 = vmatprep.subr.mxu0 0.0
        %3639 = vmatpush2.msra.mxu0 0.0
        %3640 = vmatprep.subr.mxu0 0.0
        %3641 = vmatpush2.msra.mxu0 0.0
        %3642 = vmatprep.mubr.f32.mxu0 0.0
        %3643 = vmatmul.mubr.f32.gmra.mxu0 %v3576
        %v3644 = vpop.f32.mrf.mxu0
        %v3645 = vadd.f32 0.0, %v3644
        %v3646 = vpop.f32.mrf.mxu0
        %3647 = vdwg.mxu0
        %v3648 = vsel %vm883, %v871, 0
        %3650 = vmatprep.subr.mxu0 0.0
        %3651 = vmatpush1.msra.mxu0 0.0
        %3652 = vmatprep.subr.mxu0 0.0
        %3653 = vmatpush1.msra.mxu0 0.0
        %3654 = vmatprep.subr.mxu0 0.0
        %3655 = vmatpush1.msra.mxu0 0.0
        %3656 = vmatprep.subr.mxu0 0.0
        %3657 = vmatpush1.msra.mxu0 0.0
        %3658 = vmatprep.subr.mxu0 0.0
        %3659 = vmatpush1.msra.mxu0 0.0
        %3660 = vmatprep.subr.mxu0 0.0
        %3661 = vmatpush1.msra.mxu0 0.0
        %3662 = vmatprep.subr.mxu0 0.0
        %3663 = vmatpush1.msra.mxu0 0.0
        %3664 = vmatprep.subr.mxu0 0.0
        %3665 = vmatpush1.msra.mxu0 0.0
        %3666 = vmatprep.subr.mxu0 0.0
        %3667 = vmatpush1.msra.mxu0 0.0
        %3668 = vmatprep.subr.mxu0 0.0
        %3669 = vmatpush1.msra.mxu0 0.0
        %3670 = vmatprep.subr.mxu0 0.0
        %3671 = vmatpush1.msra.mxu0 0.0
        %3672 = vmatprep.subr.mxu0 0.0
        %3673 = vmatpush1.msra.mxu0 0.0
        %3674 = vmatprep.subr.mxu0 0.0
        %3675 = vmatpush1.msra.mxu0 0.0
        %3676 = vmatprep.subr.mxu0 0.0
        %3677 = vmatpush1.msra.mxu0 0.0
        %3678 = vmatprep.subr.mxu0 0.0
        %3679 = vmatpush1.msra.mxu0 0.0
        %3680 = vmatprep.subr.mxu0 0.0
        %3681 = vmatpush1.msra.mxu0 %v1318
        %3682 = vmatprep.subr.mxu0 0.0
        %3683 = vmatpush2.msra.mxu0 0.0
        %3684 = vmatprep.subr.mxu0 0.0
        %3685 = vmatpush2.msra.mxu0 0.0
        %3686 = vmatprep.subr.mxu0 0.0
        %3687 = vmatpush2.msra.mxu0 0.0
        %3688 = vmatprep.subr.mxu0 0.0
        %3689 = vmatpush2.msra.mxu0 0.0
        %3690 = vmatprep.subr.mxu0 0.0
        %3691 = vmatpush2.msra.mxu0 0.0
        %3692 = vmatprep.subr.mxu0 0.0
        %3693 = vmatpush2.msra.mxu0 0.0
        %3694 = vmatprep.subr.mxu0 0.0
        %3695 = vmatpush2.msra.mxu0 0.0
        %3696 = vmatprep.subr.mxu0 0.0
        %3697 = vmatpush2.msra.mxu0 0.0
        %3698 = vmatprep.subr.mxu0 0.0
        %3699 = vmatpush2.msra.mxu0 0.0
        %3700 = vmatprep.subr.mxu0 0.0
        %3701 = vmatpush2.msra.mxu0 0.0
        %3702 = vmatprep.subr.mxu0 0.0
        %3703 = vmatpush2.msra.mxu0 0.0
        %3704 = vmatprep.subr.mxu0 0.0
        %3705 = vmatpush2.msra.mxu0 0.0
        %3706 = vmatprep.subr.mxu0 0.0
        %3707 = vmatpush2.msra.mxu0 0.0
        %3708 = vmatprep.subr.mxu0 0.0
        %3709 = vmatpush2.msra.mxu0 0.0
        %3710 = vmatprep.subr.mxu0 0.0
        %3711 = vmatpush2.msra.mxu0 0.0
        %3712 = vmatprep.subr.mxu0 0.0
        %3713 = vmatpush2.msra.mxu0 0.0
        %3714 = vmatprep.mubr.f32.mxu0 0.0
        %3715 = vmatmul.mubr.f32.gmra.mxu0 %v3648
        %v3716 = vpop.f32.mrf.mxu0
        %v3717 = vadd.f32 %v3645, %v3716
        %v3718 = vpop.f32.mrf.mxu0
        %3719 = vdwg.mxu0
        %3720 = vrot.lane.b32.xlu0 %v1567, 88
        %v3721 = vpop.permute.xlu0 %3720
        %v3722 = vsel %vm883, %v3721, 0
        %3724 = vmatprep.subr.mxu0 0.0
        %3725 = vmatpush1.msra.mxu0 0.0
        %3726 = vmatprep.subr.mxu0 0.0
        %3727 = vmatpush1.msra.mxu0 0.0
        %3728 = vmatprep.subr.mxu0 0.0
        %3729 = vmatpush1.msra.mxu0 0.0
        %3730 = vmatprep.subr.mxu0 0.0
        %3731 = vmatpush1.msra.mxu0 0.0
        %3732 = vmatprep.subr.mxu0 0.0
        %3733 = vmatpush1.msra.mxu0 0.0
        %3734 = vmatprep.subr.mxu0 0.0
        %3735 = vmatpush1.msra.mxu0 0.0
        %3736 = vmatprep.subr.mxu0 0.0
        %3737 = vmatpush1.msra.mxu0 0.0
        %3738 = vmatprep.subr.mxu0 0.0
        %3739 = vmatpush1.msra.mxu0 0.0
        %3740 = vmatprep.subr.mxu0 0.0
        %3741 = vmatpush1.msra.mxu0 0.0
        %3742 = vmatprep.subr.mxu0 0.0
        %3743 = vmatpush1.msra.mxu0 0.0
        %3744 = vmatprep.subr.mxu0 0.0
        %3745 = vmatpush1.msra.mxu0 0.0
        %3746 = vmatprep.subr.mxu0 0.0
        %3747 = vmatpush1.msra.mxu0 0.0
        %3748 = vmatprep.subr.mxu0 0.0
        %3749 = vmatpush1.msra.mxu0 0.0
        %3750 = vmatprep.subr.mxu0 0.0
        %3751 = vmatpush1.msra.mxu0 0.0
        %3752 = vmatprep.subr.mxu0 0.0
        %3753 = vmatpush1.msra.mxu0 0.0
        %3754 = vmatprep.subr.mxu0 0.0
        %3755 = vmatpush1.msra.mxu0 %v1320
        %3756 = vmatprep.subr.mxu0 0.0
        %3757 = vmatpush2.msra.mxu0 0.0
        %3758 = vmatprep.subr.mxu0 0.0
        %3759 = vmatpush2.msra.mxu0 0.0
        %3760 = vmatprep.subr.mxu0 0.0
        %3761 = vmatpush2.msra.mxu0 0.0
        %3762 = vmatprep.subr.mxu0 0.0
        %3763 = vmatpush2.msra.mxu0 0.0
        %3764 = vmatprep.subr.mxu0 0.0
        %3765 = vmatpush2.msra.mxu0 0.0
        %3766 = vmatprep.subr.mxu0 0.0
        %3767 = vmatpush2.msra.mxu0 0.0
        %3768 = vmatprep.subr.mxu0 0.0
        %3769 = vmatpush2.msra.mxu0 0.0
        %3770 = vmatprep.subr.mxu0 0.0
        %3771 = vmatpush2.msra.mxu0 0.0
        %3772 = vmatprep.subr.mxu0 0.0
        %3773 = vmatpush2.msra.mxu0 0.0
        %3774 = vmatprep.subr.mxu0 0.0
        %3775 = vmatpush2.msra.mxu0 0.0
        %3776 = vmatprep.subr.mxu0 0.0
        %3777 = vmatpush2.msra.mxu0 0.0
        %3778 = vmatprep.subr.mxu0 0.0
        %3779 = vmatpush2.msra.mxu0 0.0
        %3780 = vmatprep.subr.mxu0 0.0
        %3781 = vmatpush2.msra.mxu0 0.0
        %3782 = vmatprep.subr.mxu0 0.0
        %3783 = vmatpush2.msra.mxu0 0.0
        %3784 = vmatprep.subr.mxu0 0.0
        %3785 = vmatpush2.msra.mxu0 0.0
        %3786 = vmatprep.subr.mxu0 0.0
        %3787 = vmatpush2.msra.mxu0 0.0
        %3788 = vmatprep.mubr.f32.mxu0 0.0
        %3789 = vmatmul.mubr.f32.gmra.mxu0 %v3722
        %v3790 = vpop.f32.mrf.mxu0
        %v3791 = vadd.f32 0.0, %v3790
        %v3792 = vpop.f32.mrf.mxu0
        %3793 = vdwg.mxu0
        %v3794 = vadd.f32 %v3717, %v3791
        %3795 = vrot.lane.b32.xlu0 %v1640, 88
        %v3796 = vpop.permute.xlu0 %3795
        %v3797 = vsel %vm883, %v3796, 0
        %3799 = vmatprep.subr.mxu0 0.0
        %3800 = vmatpush1.msra.mxu0 0.0
        %3801 = vmatprep.subr.mxu0 0.0
        %3802 = vmatpush1.msra.mxu0 0.0
        %3803 = vmatprep.subr.mxu0 0.0
        %3804 = vmatpush1.msra.mxu0 0.0
        %3805 = vmatprep.subr.mxu0 0.0
        %3806 = vmatpush1.msra.mxu0 0.0
        %3807 = vmatprep.subr.mxu0 0.0
        %3808 = vmatpush1.msra.mxu0 0.0
        %3809 = vmatprep.subr.mxu0 0.0
        %3810 = vmatpush1.msra.mxu0 0.0
        %3811 = vmatprep.subr.mxu0 0.0
        %3812 = vmatpush1.msra.mxu0 0.0
        %3813 = vmatprep.subr.mxu0 0.0
        %3814 = vmatpush1.msra.mxu0 0.0
        %3815 = vmatprep.subr.mxu0 0.0
        %3816 = vmatpush1.msra.mxu0 0.0
        %3817 = vmatprep.subr.mxu0 0.0
        %3818 = vmatpush1.msra.mxu0 0.0
        %3819 = vmatprep.subr.mxu0 0.0
        %3820 = vmatpush1.msra.mxu0 0.0
        %3821 = vmatprep.subr.mxu0 0.0
        %3822 = vmatpush1.msra.mxu0 0.0
        %3823 = vmatprep.subr.mxu0 0.0
        %3824 = vmatpush1.msra.mxu0 0.0
        %3825 = vmatprep.subr.mxu0 0.0
        %3826 = vmatpush1.msra.mxu0 0.0
        %3827 = vmatprep.subr.mxu0 0.0
        %3828 = vmatpush1.msra.mxu0 0.0
        %3829 = vmatprep.subr.mxu0 0.0
        %3830 = vmatpush1.msra.mxu0 %v1321
        %3831 = vmatprep.subr.mxu0 0.0
        %3832 = vmatpush2.msra.mxu0 0.0
        %3833 = vmatprep.subr.mxu0 0.0
        %3834 = vmatpush2.msra.mxu0 0.0
        %3835 = vmatprep.subr.mxu0 0.0
        %3836 = vmatpush2.msra.mxu0 0.0
        %3837 = vmatprep.subr.mxu0 0.0
        %3838 = vmatpush2.msra.mxu0 0.0
        %3839 = vmatprep.subr.mxu0 0.0
        %3840 = vmatpush2.msra.mxu0 0.0
        %3841 = vmatprep.subr.mxu0 0.0
        %3842 = vmatpush2.msra.mxu0 0.0
        %3843 = vmatprep.subr.mxu0 0.0
        %3844 = vmatpush2.msra.mxu0 0.0
        %3845 = vmatprep.subr.mxu0 0.0
        %3846 = vmatpush2.msra.mxu0 0.0
        %3847 = vmatprep.subr.mxu0 0.0
        %3848 = vmatpush2.msra.mxu0 0.0
        %3849 = vmatprep.subr.mxu0 0.0
        %3850 = vmatpush2.msra.mxu0 0.0
        %3851 = vmatprep.subr.mxu0 0.0
        %3852 = vmatpush2.msra.mxu0 0.0
        %3853 = vmatprep.subr.mxu0 0.0
        %3854 = vmatpush2.msra.mxu0 0.0
        %3855 = vmatprep.subr.mxu0 0.0
        %3856 = vmatpush2.msra.mxu0 0.0
        %3857 = vmatprep.subr.mxu0 0.0
        %3858 = vmatpush2.msra.mxu0 0.0
        %3859 = vmatprep.subr.mxu0 0.0
        %3860 = vmatpush2.msra.mxu0 0.0
        %3861 = vmatprep.subr.mxu0 0.0
        %3862 = vmatpush2.msra.mxu0 0.0
        %3863 = vmatprep.mubr.f32.mxu0 0.0
        %3864 = vmatmul.mubr.f32.gmra.mxu0 %v3797
        %v3865 = vpop.f32.mrf.mxu0
        %v3866 = vadd.f32 0.0, %v3865
        %v3867 = vpop.f32.mrf.mxu0
        %3868 = vdwg.mxu0
        %v3869 = vadd.f32 %v3794, %v3866
        %3870 = vrot.lane.b32.xlu0 %v1710, 88
        %v3871 = vpop.permute.xlu0 %3870
        %v3872 = vsel %vm883, %v3871, 0
        %3874 = vmatprep.subr.mxu0 0.0
        %3875 = vmatpush1.msra.mxu0 0.0
        %3876 = vmatprep.subr.mxu0 0.0
        %3877 = vmatpush1.msra.mxu0 0.0
        %3878 = vmatprep.subr.mxu0 0.0
        %3879 = vmatpush1.msra.mxu0 0.0
        %3880 = vmatprep.subr.mxu0 0.0
        %3881 = vmatpush1.msra.mxu0 0.0
        %3882 = vmatprep.subr.mxu0 0.0
        %3883 = vmatpush1.msra.mxu0 0.0
        %3884 = vmatprep.subr.mxu0 0.0
        %3885 = vmatpush1.msra.mxu0 0.0
        %3886 = vmatprep.subr.mxu0 0.0
        %3887 = vmatpush1.msra.mxu0 0.0
        %3888 = vmatprep.subr.mxu0 0.0
        %3889 = vmatpush1.msra.mxu0 0.0
        %3890 = vmatprep.subr.mxu0 0.0
        %3891 = vmatpush1.msra.mxu0 0.0
        %3892 = vmatprep.subr.mxu0 0.0
        %3893 = vmatpush1.msra.mxu0 0.0
        %3894 = vmatprep.subr.mxu0 0.0
        %3895 = vmatpush1.msra.mxu0 0.0
        %3896 = vmatprep.subr.mxu0 0.0
        %3897 = vmatpush1.msra.mxu0 0.0
        %3898 = vmatprep.subr.mxu0 0.0
        %3899 = vmatpush1.msra.mxu0 0.0
        %3900 = vmatprep.subr.mxu0 0.0
        %3901 = vmatpush1.msra.mxu0 0.0
        %3902 = vmatprep.subr.mxu0 0.0
        %3903 = vmatpush1.msra.mxu0 0.0
        %3904 = vmatprep.subr.mxu0 0.0
        %3905 = vmatpush1.msra.mxu0 %v1322
        %3906 = vmatprep.subr.mxu0 0.0
        %3907 = vmatpush2.msra.mxu0 0.0
        %3908 = vmatprep.subr.mxu0 0.0
        %3909 = vmatpush2.msra.mxu0 0.0
        %3910 = vmatprep.subr.mxu0 0.0
        %3911 = vmatpush2.msra.mxu0 0.0
        %3912 = vmatprep.subr.mxu0 0.0
        %3913 = vmatpush2.msra.mxu0 0.0
        %3914 = vmatprep.subr.mxu0 0.0
        %3915 = vmatpush2.msra.mxu0 0.0
        %3916 = vmatprep.subr.mxu0 0.0
        %3917 = vmatpush2.msra.mxu0 0.0
        %3918 = vmatprep.subr.mxu0 0.0
        %3919 = vmatpush2.msra.mxu0 0.0
        %3920 = vmatprep.subr.mxu0 0.0
        %3921 = vmatpush2.msra.mxu0 0.0
        %3922 = vmatprep.subr.mxu0 0.0
        %3923 = vmatpush2.msra.mxu0 0.0
        %3924 = vmatprep.subr.mxu0 0.0
        %3925 = vmatpush2.msra.mxu0 0.0
        %3926 = vmatprep.subr.mxu0 0.0
        %3927 = vmatpush2.msra.mxu0 0.0
        %3928 = vmatprep.subr.mxu0 0.0
        %3929 = vmatpush2.msra.mxu0 0.0
        %3930 = vmatprep.subr.mxu0 0.0
        %3931 = vmatpush2.msra.mxu0 0.0
        %3932 = vmatprep.subr.mxu0 0.0
        %3933 = vmatpush2.msra.mxu0 0.0
        %3934 = vmatprep.subr.mxu0 0.0
        %3935 = vmatpush2.msra.mxu0 0.0
        %3936 = vmatprep.subr.mxu0 0.0
        %3937 = vmatpush2.msra.mxu0 0.0
        %3938 = vmatprep.mubr.f32.mxu0 0.0
        %3939 = vmatmul.mubr.f32.gmra.mxu0 %v3872
        %v3940 = vpop.f32.mrf.mxu0
        %v3941 = vadd.f32 0.0, %v3940
        %v3942 = vpop.f32.mrf.mxu0
        %3943 = vdwg.mxu0
        %v3944 = vadd.f32 %v3869, %v3941
        %s3945 = scalar_lea.vmem [#allocation2], 40
        %3946 = vst.msk [vmem:[%s3945] sm:$0xff] %vm2080, %v3944
        %s3947 = sld [smem:[#allocation4 + %s54]]
        %s3948 = sadd.s32 %s3947, 1
        // While loop
        $region113: #{dcrnn_forward.3} parent=111 // loop_pre_header
          _
        $region114: #{dcrnn_forward.3} parent=111 // loop_header
          %s3950 = sphi 0, %s3952
          %p3951 = scmp.ge.s32.totalorder %s3950, %s3948
          %v3955 = vphi 0.0, %v5296
          %v3956 = vphi 0.0, %v7284
        $region115: #{dcrnn_forward.3} parent=111 // loop_header_branch
          %3954 = sbr.rel (%p3951) target = $region119
        $region116: #{dcrnn_forward.3} parent=111 // loop_body
          %s3957 = smul.u32 %s3950, 8
          %s3958 = scalar_lea.vmem [#allocation2], %s3957
          %v3959 = vld [vmem:[%s3958] sm:$0xff]
          %3961 = vrot.lane.b32.xlu0 %v3955, 96
          %v3962 = vpop.permute.xlu0 %3961
          %3964 = vmatprep.subr.mxu0 0.0
          %3965 = vmatpush1.msra.mxu0 0.0
          %3966 = vmatprep.subr.mxu0 0.0
          %3967 = vmatpush1.msra.mxu0 0.0
          %3968 = vmatprep.subr.mxu0 0.0
          %3969 = vmatpush1.msra.mxu0 0.0
          %3970 = vmatprep.subr.mxu0 0.0
          %3971 = vmatpush1.msra.mxu0 0.0
          %3972 = vmatprep.subr.mxu0 0.0
          %3973 = vmatpush1.msra.mxu0 0.0
          %3974 = vmatprep.subr.mxu0 0.0
          %3975 = vmatpush1.msra.mxu0 0.0
          %3976 = vmatprep.subr.mxu0 0.0
          %3977 = vmatpush1.msra.mxu0 0.0
          %3978 = vmatprep.subr.mxu0 0.0
          %3979 = vmatpush1.msra.mxu0 0.0
          %3980 = vmatprep.subr.mxu0 0.0
          %3981 = vmatpush1.msra.mxu0 0.0
          %3982 = vmatprep.subr.mxu0 0.0
          %3983 = vmatpush1.msra.mxu0 0.0
          %3984 = vmatprep.subr.mxu0 0.0
          %3985 = vmatpush1.msra.mxu0 0.0
          %3986 = vmatprep.subr.mxu0 0.0
          %3987 = vmatpush1.msra.mxu0 0.0
          %3988 = vmatprep.subr.mxu0 0.0
          %3989 = vmatpush1.msra.mxu0 0.0
          %3990 = vmatprep.subr.mxu0 0.0
          %3991 = vmatpush1.msra.mxu0 0.0
          %3992 = vmatprep.subr.mxu0 0.0
          %3993 = vmatpush1.msra.mxu0 0.0
          %3994 = vmatprep.subr.mxu0 0.0
          %3995 = vmatpush1.msra.mxu0 %v3962
          %3996 = vmatprep.subr.mxu0 0.0
          %3997 = vmatpush2.msra.mxu0 0.0
          %3998 = vmatprep.subr.mxu0 0.0
          %3999 = vmatpush2.msra.mxu0 0.0
          %4000 = vmatprep.subr.mxu0 0.0
          %4001 = vmatpush2.msra.mxu0 0.0
          %4002 = vmatprep.subr.mxu0 0.0
          %4003 = vmatpush2.msra.mxu0 0.0
          %4004 = vmatprep.subr.mxu0 0.0
          %4005 = vmatpush2.msra.mxu0 0.0
          %4006 = vmatprep.subr.mxu0 0.0
          %4007 = vmatpush2.msra.mxu0 0.0
          %4008 = vmatprep.subr.mxu0 0.0
          %4009 = vmatpush2.msra.mxu0 0.0
          %4010 = vmatprep.subr.mxu0 0.0
          %4011 = vmatpush2.msra.mxu0 0.0
          %4012 = vmatprep.subr.mxu0 0.0
          %4013 = vmatpush2.msra.mxu0 0.0
          %4014 = vmatprep.subr.mxu0 0.0
          %4015 = vmatpush2.msra.mxu0 0.0
          %4016 = vmatprep.subr.mxu0 0.0
          %4017 = vmatpush2.msra.mxu0 0.0
          %4018 = vmatprep.subr.mxu0 0.0
          %4019 = vmatpush2.msra.mxu0 0.0
          %4020 = vmatprep.subr.mxu0 0.0
          %4021 = vmatpush2.msra.mxu0 0.0
          %4022 = vmatprep.subr.mxu0 0.0
          %4023 = vmatpush2.msra.mxu0 0.0
          %4024 = vmatprep.subr.mxu0 0.0
          %4025 = vmatpush2.msra.mxu0 0.0
          %4026 = vmatprep.subr.mxu0 0.0
          %4027 = vmatpush2.msra.mxu0 0.0
          %4028 = vmatprep.mubr.f32.mxu0 0.0
          %4029 = vmatmul.mubr.f32.gmra.mxu0 %v1428
          %v4030 = vpop.f32.mrf.mxu0
          %v4031 = vadd.f32 0.0, %v4030
          %v4032 = vpop.f32.mrf.mxu0
          %4033 = vdwg.mxu0
          %v4035 = vsel %vm1058, %v4031, 0
          %4037 = vmatprep.subr.mxu0 0.0
          %4038 = vmatpush1.msra.mxu0 0.0
          %4039 = vmatprep.subr.mxu0 0.0
          %4040 = vmatpush1.msra.mxu0 0.0
          %4041 = vmatprep.subr.mxu0 0.0
          %4042 = vmatpush1.msra.mxu0 0.0
          %4043 = vmatprep.subr.mxu0 0.0
          %4044 = vmatpush1.msra.mxu0 0.0
          %4045 = vmatprep.subr.mxu0 0.0
          %4046 = vmatpush1.msra.mxu0 0.0
          %4047 = vmatprep.subr.mxu0 0.0
          %4048 = vmatpush1.msra.mxu0 0.0
          %4049 = vmatprep.subr.mxu0 0.0
          %4050 = vmatpush1.msra.mxu0 0.0
          %4051 = vmatprep.subr.mxu0 0.0
          %4052 = vmatpush1.msra.mxu0 0.0
          %4053 = vmatprep.subr.mxu0 0.0
          %4054 = vmatpush1.msra.mxu0 0.0
          %4055 = vmatprep.subr.mxu0 0.0
          %4056 = vmatpush1.msra.mxu0 0.0
          %4057 = vmatprep.subr.mxu0 0.0
          %4058 = vmatpush1.msra.mxu0 0.0
          %4059 = vmatprep.subr.mxu0 0.0
          %4060 = vmatpush1.msra.mxu0 0.0
          %4061 = vmatprep.subr.mxu0 0.0
          %4062 = vmatpush1.msra.mxu0 %v1330
          %4063 = vmatprep.subr.mxu0 0.0
          %4064 = vmatpush1.msra.mxu0 %v1329
          %4065 = vmatprep.subr.mxu0 0.0
          %4066 = vmatpush1.msra.mxu0 %v1328
          %4067 = vmatprep.subr.mxu0 0.0
          %4068 = vmatpush1.msra.mxu0 %v1327
          %4069 = vmatprep.subr.mxu0 0.0
          %4070 = vmatpush2.msra.mxu0 0.0
          %4071 = vmatprep.subr.mxu0 0.0
          %4072 = vmatpush2.msra.mxu0 0.0
          %4073 = vmatprep.subr.mxu0 0.0
          %4074 = vmatpush2.msra.mxu0 0.0
          %4075 = vmatprep.subr.mxu0 0.0
          %4076 = vmatpush2.msra.mxu0 0.0
          %4077 = vmatprep.subr.mxu0 0.0
          %4078 = vmatpush2.msra.mxu0 0.0
          %4079 = vmatprep.subr.mxu0 0.0
          %4080 = vmatpush2.msra.mxu0 0.0
          %4081 = vmatprep.subr.mxu0 0.0
          %4082 = vmatpush2.msra.mxu0 0.0
          %4083 = vmatprep.subr.mxu0 0.0
          %4084 = vmatpush2.msra.mxu0 0.0
          %4085 = vmatprep.subr.mxu0 0.0
          %4086 = vmatpush2.msra.mxu0 0.0
          %4087 = vmatprep.subr.mxu0 0.0
          %4088 = vmatpush2.msra.mxu0 0.0
          %4089 = vmatprep.subr.mxu0 0.0
          %4090 = vmatpush2.msra.mxu0 0.0
          %4091 = vmatprep.subr.mxu0 0.0
          %4092 = vmatpush2.msra.mxu0 0.0
          %4093 = vmatprep.subr.mxu0 0.0
          %4094 = vmatpush2.msra.mxu0 0.0
          %4095 = vmatprep.subr.mxu0 0.0
          %4096 = vmatpush2.msra.mxu0 0.0
          %4097 = vmatprep.subr.mxu0 0.0
          %4098 = vmatpush2.msra.mxu0 0.0
          %4099 = vmatprep.subr.mxu0 0.0
          %4100 = vmatpush2.msra.mxu0 0.0
          %4101 = vmatprep.mubr.f32.mxu0 0.0
          %4102 = vmatmul.mubr.f32.gmra.mxu0 %v4035
          %v4103 = vpop.f32.mrf.mxu0
          %v4104 = vadd.f32 0.0, %v4103
          %v4105 = vpop.f32.mrf.mxu0
          %4106 = vdwg.mxu0
          %v4107 = vsel %vm1058, %v3962, 0
          %4109 = vmatprep.subr.mxu0 0.0
          %4110 = vmatpush1.msra.mxu0 0.0
          %4111 = vmatprep.subr.mxu0 0.0
          %4112 = vmatpush1.msra.mxu0 0.0
          %4113 = vmatprep.subr.mxu0 0.0
          %4114 = vmatpush1.msra.mxu0 0.0
          %4115 = vmatprep.subr.mxu0 0.0
          %4116 = vmatpush1.msra.mxu0 0.0
          %4117 = vmatprep.subr.mxu0 0.0
          %4118 = vmatpush1.msra.mxu0 0.0
          %4119 = vmatprep.subr.mxu0 0.0
          %4120 = vmatpush1.msra.mxu0 0.0
          %4121 = vmatprep.subr.mxu0 0.0
          %4122 = vmatpush1.msra.mxu0 0.0
          %4123 = vmatprep.subr.mxu0 0.0
          %4124 = vmatpush1.msra.mxu0 0.0
          %4125 = vmatprep.subr.mxu0 0.0
          %4126 = vmatpush1.msra.mxu0 0.0
          %4127 = vmatprep.subr.mxu0 0.0
          %4128 = vmatpush1.msra.mxu0 0.0
          %4129 = vmatprep.subr.mxu0 0.0
          %4130 = vmatpush1.msra.mxu0 0.0
          %4131 = vmatprep.subr.mxu0 0.0
          %4132 = vmatpush1.msra.mxu0 0.0
          %4133 = vmatprep.subr.mxu0 0.0
          %4134 = vmatpush1.msra.mxu0 %v1326
          %4135 = vmatprep.subr.mxu0 0.0
          %4136 = vmatpush1.msra.mxu0 %v1325
          %4137 = vmatprep.subr.mxu0 0.0
          %4138 = vmatpush1.msra.mxu0 %v1324
          %4139 = vmatprep.subr.mxu0 0.0
          %4140 = vmatpush1.msra.mxu0 %v1323
          %4141 = vmatprep.subr.mxu0 0.0
          %4142 = vmatpush2.msra.mxu0 0.0
          %4143 = vmatprep.subr.mxu0 0.0
          %4144 = vmatpush2.msra.mxu0 0.0
          %4145 = vmatprep.subr.mxu0 0.0
          %4146 = vmatpush2.msra.mxu0 0.0
          %4147 = vmatprep.subr.mxu0 0.0
          %4148 = vmatpush2.msra.mxu0 0.0
          %4149 = vmatprep.subr.mxu0 0.0
          %4150 = vmatpush2.msra.mxu0 0.0
          %4151 = vmatprep.subr.mxu0 0.0
          %4152 = vmatpush2.msra.mxu0 0.0
          %4153 = vmatprep.subr.mxu0 0.0
          %4154 = vmatpush2.msra.mxu0 0.0
          %4155 = vmatprep.subr.mxu0 0.0
          %4156 = vmatpush2.msra.mxu0 0.0
          %4157 = vmatprep.subr.mxu0 0.0
          %4158 = vmatpush2.msra.mxu0 0.0
          %4159 = vmatprep.subr.mxu0 0.0
          %4160 = vmatpush2.msra.mxu0 0.0
          %4161 = vmatprep.subr.mxu0 0.0
          %4162 = vmatpush2.msra.mxu0 0.0
          %4163 = vmatprep.subr.mxu0 0.0
          %4164 = vmatpush2.msra.mxu0 0.0
          %4165 = vmatprep.subr.mxu0 0.0
          %4166 = vmatpush2.msra.mxu0 0.0
          %4167 = vmatprep.subr.mxu0 0.0
          %4168 = vmatpush2.msra.mxu0 0.0
          %4169 = vmatprep.subr.mxu0 0.0
          %4170 = vmatpush2.msra.mxu0 0.0
          %4171 = vmatprep.subr.mxu0 0.0
          %4172 = vmatpush2.msra.mxu0 0.0
          %4173 = vmatprep.mubr.f32.mxu0 0.0
          %4174 = vmatmul.mubr.f32.gmra.mxu0 %v4107
          %v4175 = vpop.f32.mrf.mxu0
          %v4176 = vadd.f32 %v4104, %v4175
          %v4177 = vpop.f32.mrf.mxu0
          %4178 = vdwg.mxu0
          %4179 = vmatprep.subr.mxu0 0.0
          %4180 = vmatpush1.msra.mxu0 0.0
          %4181 = vmatprep.subr.mxu0 0.0
          %4182 = vmatpush1.msra.mxu0 0.0
          %4183 = vmatprep.subr.mxu0 0.0
          %4184 = vmatpush1.msra.mxu0 0.0
          %4185 = vmatprep.subr.mxu0 0.0
          %4186 = vmatpush1.msra.mxu0 0.0
          %4187 = vmatprep.subr.mxu0 0.0
          %4188 = vmatpush1.msra.mxu0 0.0
          %4189 = vmatprep.subr.mxu0 0.0
          %4190 = vmatpush1.msra.mxu0 0.0
          %4191 = vmatprep.subr.mxu0 0.0
          %4192 = vmatpush1.msra.mxu0 0.0
          %4193 = vmatprep.subr.mxu0 0.0
          %4194 = vmatpush1.msra.mxu0 0.0
          %4195 = vmatprep.subr.mxu0 0.0
          %4196 = vmatpush1.msra.mxu0 0.0
          %4197 = vmatprep.subr.mxu0 0.0
          %4198 = vmatpush1.msra.mxu0 0.0
          %4199 = vmatprep.subr.mxu0 0.0
          %4200 = vmatpush1.msra.mxu0 0.0
          %4201 = vmatprep.subr.mxu0 0.0
          %4202 = vmatpush1.msra.mxu0 0.0
          %4203 = vmatprep.subr.mxu0 0.0
          %4204 = vmatpush1.msra.mxu0 0.0
          %4205 = vmatprep.subr.mxu0 0.0
          %4206 = vmatpush1.msra.mxu0 0.0
          %4207 = vmatprep.subr.mxu0 0.0
          %4208 = vmatpush1.msra.mxu0 0.0
          %4209 = vmatprep.subr.mxu0 0.0
          %4210 = vmatpush1.msra.mxu0 %v4031
          %4211 = vmatprep.subr.mxu0 0.0
          %4212 = vmatpush2.msra.mxu0 0.0
          %4213 = vmatprep.subr.mxu0 0.0
          %4214 = vmatpush2.msra.mxu0 0.0
          %4215 = vmatprep.subr.mxu0 0.0
          %4216 = vmatpush2.msra.mxu0 0.0
          %4217 = vmatprep.subr.mxu0 0.0
          %4218 = vmatpush2.msra.mxu0 0.0
          %4219 = vmatprep.subr.mxu0 0.0
          %4220 = vmatpush2.msra.mxu0 0.0
          %4221 = vmatprep.subr.mxu0 0.0
          %4222 = vmatpush2.msra.mxu0 0.0
          %4223 = vmatprep.subr.mxu0 0.0
          %4224 = vmatpush2.msra.mxu0 0.0
          %4225 = vmatprep.subr.mxu0 0.0
          %4226 = vmatpush2.msra.mxu0 0.0
          %4227 = vmatprep.subr.mxu0 0.0
          %4228 = vmatpush2.msra.mxu0 0.0
          %4229 = vmatprep.subr.mxu0 0.0
          %4230 = vmatpush2.msra.mxu0 0.0
          %4231 = vmatprep.subr.mxu0 0.0
          %4232 = vmatpush2.msra.mxu0 0.0
          %4233 = vmatprep.subr.mxu0 0.0
          %4234 = vmatpush2.msra.mxu0 0.0
          %4235 = vmatprep.subr.mxu0 0.0
          %4236 = vmatpush2.msra.mxu0 0.0
          %4237 = vmatprep.subr.mxu0 0.0
          %4238 = vmatpush2.msra.mxu0 0.0
          %4239 = vmatprep.subr.mxu0 0.0
          %4240 = vmatpush2.msra.mxu0 0.0
          %4241 = vmatprep.subr.mxu0 0.0
          %4242 = vmatpush2.msra.mxu0 0.0
          %4243 = vmatprep.mubr.f32.mxu0 0.0
          %4244 = vmatmul.mubr.f32.gmra.mxu0 %v1428
          %v4245 = vpop.f32.mrf.mxu0
          %v4246 = vadd.f32 0.0, %v4245
          %v4247 = vpop.f32.mrf.mxu0
          %4248 = vdwg.mxu0
          %v4250 = vsel %vm1058, %v4246, 0
          %4252 = vmatprep.subr.mxu0 0.0
          %4253 = vmatpush1.msra.mxu0 0.0
          %4254 = vmatprep.subr.mxu0 0.0
          %4255 = vmatpush1.msra.mxu0 0.0
          %4256 = vmatprep.subr.mxu0 0.0
          %4257 = vmatpush1.msra.mxu0 0.0
          %4258 = vmatprep.subr.mxu0 0.0
          %4259 = vmatpush1.msra.mxu0 0.0
          %4260 = vmatprep.subr.mxu0 0.0
          %4261 = vmatpush1.msra.mxu0 0.0
          %4262 = vmatprep.subr.mxu0 0.0
          %4263 = vmatpush1.msra.mxu0 0.0
          %4264 = vmatprep.subr.mxu0 0.0
          %4265 = vmatpush1.msra.mxu0 0.0
          %4266 = vmatprep.subr.mxu0 0.0
          %4267 = vmatpush1.msra.mxu0 0.0
          %4268 = vmatprep.subr.mxu0 0.0
          %4269 = vmatpush1.msra.mxu0 0.0
          %4270 = vmatprep.subr.mxu0 0.0
          %4271 = vmatpush1.msra.mxu0 0.0
          %4272 = vmatprep.subr.mxu0 0.0
          %4273 = vmatpush1.msra.mxu0 0.0
          %4274 = vmatprep.subr.mxu0 0.0
          %4275 = vmatpush1.msra.mxu0 0.0
          %4276 = vmatprep.subr.mxu0 0.0
          %4277 = vmatpush1.msra.mxu0 %v1334
          %4278 = vmatprep.subr.mxu0 0.0
          %4279 = vmatpush1.msra.mxu0 %v1333
          %4280 = vmatprep.subr.mxu0 0.0
          %4281 = vmatpush1.msra.mxu0 %v1332
          %4282 = vmatprep.subr.mxu0 0.0
          %4283 = vmatpush1.msra.mxu0 %v1331
          %4284 = vmatprep.subr.mxu0 0.0
          %4285 = vmatpush2.msra.mxu0 0.0
          %4286 = vmatprep.subr.mxu0 0.0
          %4287 = vmatpush2.msra.mxu0 0.0
          %4288 = vmatprep.subr.mxu0 0.0
          %4289 = vmatpush2.msra.mxu0 0.0
          %4290 = vmatprep.subr.mxu0 0.0
          %4291 = vmatpush2.msra.mxu0 0.0
          %4292 = vmatprep.subr.mxu0 0.0
          %4293 = vmatpush2.msra.mxu0 0.0
          %4294 = vmatprep.subr.mxu0 0.0
          %4295 = vmatpush2.msra.mxu0 0.0
          %4296 = vmatprep.subr.mxu0 0.0
          %4297 = vmatpush2.msra.mxu0 0.0
          %4298 = vmatprep.subr.mxu0 0.0
          %4299 = vmatpush2.msra.mxu0 0.0
          %4300 = vmatprep.subr.mxu0 0.0
          %4301 = vmatpush2.msra.mxu0 0.0
          %4302 = vmatprep.subr.mxu0 0.0
          %4303 = vmatpush2.msra.mxu0 0.0
          %4304 = vmatprep.subr.mxu0 0.0
          %4305 = vmatpush2.msra.mxu0 0.0
          %4306 = vmatprep.subr.mxu0 0.0
          %4307 = vmatpush2.msra.mxu0 0.0
          %4308 = vmatprep.subr.mxu0 0.0
          %4309 = vmatpush2.msra.mxu0 0.0
          %4310 = vmatprep.subr.mxu0 0.0
          %4311 = vmatpush2.msra.mxu0 0.0
          %4312 = vmatprep.subr.mxu0 0.0
          %4313 = vmatpush2.msra.mxu0 0.0
          %4314 = vmatprep.subr.mxu0 0.0
          %4315 = vmatpush2.msra.mxu0 0.0
          %4316 = vmatprep.mubr.f32.mxu0 0.0
          %4317 = vmatmul.mubr.f32.gmra.mxu0 %v4250
          %v4318 = vpop.f32.mrf.mxu0
          %v4319 = vadd.f32 0.0, %v4318
          %v4320 = vpop.f32.mrf.mxu0
          %4321 = vdwg.mxu0
          %v4322 = vadd.f32 %v4176, %v4319
          %4323 = vmatprep.subr.mxu0 0.0
          %4324 = vmatpush1.msra.mxu0 0.0
          %4325 = vmatprep.subr.mxu0 0.0
          %4326 = vmatpush1.msra.mxu0 0.0
          %4327 = vmatprep.subr.mxu0 0.0
          %4328 = vmatpush1.msra.mxu0 0.0
          %4329 = vmatprep.subr.mxu0 0.0
          %4330 = vmatpush1.msra.mxu0 0.0
          %4331 = vmatprep.subr.mxu0 0.0
          %4332 = vmatpush1.msra.mxu0 0.0
          %4333 = vmatprep.subr.mxu0 0.0
          %4334 = vmatpush1.msra.mxu0 0.0
          %4335 = vmatprep.subr.mxu0 0.0
          %4336 = vmatpush1.msra.mxu0 0.0
          %4337 = vmatprep.subr.mxu0 0.0
          %4338 = vmatpush1.msra.mxu0 0.0
          %4339 = vmatprep.subr.mxu0 0.0
          %4340 = vmatpush1.msra.mxu0 0.0
          %4341 = vmatprep.subr.mxu0 0.0
          %4342 = vmatpush1.msra.mxu0 0.0
          %4343 = vmatprep.subr.mxu0 0.0
          %4344 = vmatpush1.msra.mxu0 0.0
          %4345 = vmatprep.subr.mxu0 0.0
          %4346 = vmatpush1.msra.mxu0 0.0
          %4347 = vmatprep.subr.mxu0 0.0
          %4348 = vmatpush1.msra.mxu0 0.0
          %4349 = vmatprep.subr.mxu0 0.0
          %4350 = vmatpush1.msra.mxu0 0.0
          %4351 = vmatprep.subr.mxu0 0.0
          %4352 = vmatpush1.msra.mxu0 0.0
          %4353 = vmatprep.subr.mxu0 0.0
          %4354 = vmatpush1.msra.mxu0 %v3962
          %4355 = vmatprep.subr.mxu0 0.0
          %4356 = vmatpush2.msra.mxu0 0.0
          %4357 = vmatprep.subr.mxu0 0.0
          %4358 = vmatpush2.msra.mxu0 0.0
          %4359 = vmatprep.subr.mxu0 0.0
          %4360 = vmatpush2.msra.mxu0 0.0
          %4361 = vmatprep.subr.mxu0 0.0
          %4362 = vmatpush2.msra.mxu0 0.0
          %4363 = vmatprep.subr.mxu0 0.0
          %4364 = vmatpush2.msra.mxu0 0.0
          %4365 = vmatprep.subr.mxu0 0.0
          %4366 = vmatpush2.msra.mxu0 0.0
          %4367 = vmatprep.subr.mxu0 0.0
          %4368 = vmatpush2.msra.mxu0 0.0
          %4369 = vmatprep.subr.mxu0 0.0
          %4370 = vmatpush2.msra.mxu0 0.0
          %4371 = vmatprep.subr.mxu0 0.0
          %4372 = vmatpush2.msra.mxu0 0.0
          %4373 = vmatprep.subr.mxu0 0.0
          %4374 = vmatpush2.msra.mxu0 0.0
          %4375 = vmatprep.subr.mxu0 0.0
          %4376 = vmatpush2.msra.mxu0 0.0
          %4377 = vmatprep.subr.mxu0 0.0
          %4378 = vmatpush2.msra.mxu0 0.0
          %4379 = vmatprep.subr.mxu0 0.0
          %4380 = vmatpush2.msra.mxu0 0.0
          %4381 = vmatprep.subr.mxu0 0.0
          %4382 = vmatpush2.msra.mxu0 0.0
          %4383 = vmatprep.subr.mxu0 0.0
          %4384 = vmatpush2.msra.mxu0 0.0
          %4385 = vmatprep.subr.mxu0 0.0
          %4386 = vmatpush2.msra.mxu0 0.0
          %4387 = vmatprep.mubr.f32.mxu0 0.0
          %4388 = vmatmul.mubr.f32.gmra.mxu0 %v1571
          %v4389 = vpop.f32.mrf.mxu0
          %v4390 = vadd.f32 0.0, %v4389
          %v4391 = vpop.f32.mrf.mxu0
          %4392 = vdwg.mxu0
          %v4394 = vsel %vm1058, %v4390, 0
          %4396 = vmatprep.subr.mxu0 0.0
          %4397 = vmatpush1.msra.mxu0 0.0
          %4398 = vmatprep.subr.mxu0 0.0
          %4399 = vmatpush1.msra.mxu0 0.0
          %4400 = vmatprep.subr.mxu0 0.0
          %4401 = vmatpush1.msra.mxu0 0.0
          %4402 = vmatprep.subr.mxu0 0.0
          %4403 = vmatpush1.msra.mxu0 0.0
          %4404 = vmatprep.subr.mxu0 0.0
          %4405 = vmatpush1.msra.mxu0 0.0
          %4406 = vmatprep.subr.mxu0 0.0
          %4407 = vmatpush1.msra.mxu0 0.0
          %4408 = vmatprep.subr.mxu0 0.0
          %4409 = vmatpush1.msra.mxu0 0.0
          %4410 = vmatprep.subr.mxu0 0.0
          %4411 = vmatpush1.msra.mxu0 0.0
          %4412 = vmatprep.subr.mxu0 0.0
          %4413 = vmatpush1.msra.mxu0 0.0
          %4414 = vmatprep.subr.mxu0 0.0
          %4415 = vmatpush1.msra.mxu0 0.0
          %4416 = vmatprep.subr.mxu0 0.0
          %4417 = vmatpush1.msra.mxu0 0.0
          %4418 = vmatprep.subr.mxu0 0.0
          %4419 = vmatpush1.msra.mxu0 0.0
          %4420 = vmatprep.subr.mxu0 0.0
          %4421 = vmatpush1.msra.mxu0 %v1338
          %4422 = vmatprep.subr.mxu0 0.0
          %4423 = vmatpush1.msra.mxu0 %v1337
          %4424 = vmatprep.subr.mxu0 0.0
          %4425 = vmatpush1.msra.mxu0 %v1336
          %4426 = vmatprep.subr.mxu0 0.0
          %4427 = vmatpush1.msra.mxu0 %v1335
          %4428 = vmatprep.subr.mxu0 0.0
          %4429 = vmatpush2.msra.mxu0 0.0
          %4430 = vmatprep.subr.mxu0 0.0
          %4431 = vmatpush2.msra.mxu0 0.0
          %4432 = vmatprep.subr.mxu0 0.0
          %4433 = vmatpush2.msra.mxu0 0.0
          %4434 = vmatprep.subr.mxu0 0.0
          %4435 = vmatpush2.msra.mxu0 0.0
          %4436 = vmatprep.subr.mxu0 0.0
          %4437 = vmatpush2.msra.mxu0 0.0
          %4438 = vmatprep.subr.mxu0 0.0
          %4439 = vmatpush2.msra.mxu0 0.0
          %4440 = vmatprep.subr.mxu0 0.0
          %4441 = vmatpush2.msra.mxu0 0.0
          %4442 = vmatprep.subr.mxu0 0.0
          %4443 = vmatpush2.msra.mxu0 0.0
          %4444 = vmatprep.subr.mxu0 0.0
          %4445 = vmatpush2.msra.mxu0 0.0
          %4446 = vmatprep.subr.mxu0 0.0
          %4447 = vmatpush2.msra.mxu0 0.0
          %4448 = vmatprep.subr.mxu0 0.0
          %4449 = vmatpush2.msra.mxu0 0.0
          %4450 = vmatprep.subr.mxu0 0.0
          %4451 = vmatpush2.msra.mxu0 0.0
          %4452 = vmatprep.subr.mxu0 0.0
          %4453 = vmatpush2.msra.mxu0 0.0
          %4454 = vmatprep.subr.mxu0 0.0
          %4455 = vmatpush2.msra.mxu0 0.0
          %4456 = vmatprep.subr.mxu0 0.0
          %4457 = vmatpush2.msra.mxu0 0.0
          %4458 = vmatprep.subr.mxu0 0.0
          %4459 = vmatpush2.msra.mxu0 0.0
          %4460 = vmatprep.mubr.f32.mxu0 0.0
          %4461 = vmatmul.mubr.f32.gmra.mxu0 %v4394
          %v4462 = vpop.f32.mrf.mxu0
          %v4463 = vadd.f32 0.0, %v4462
          %v4464 = vpop.f32.mrf.mxu0
          %4465 = vdwg.mxu0
          %v4466 = vadd.f32 %v4322, %v4463
          %4467 = vmatprep.subr.mxu0 0.0
          %4468 = vmatpush1.msra.mxu0 0.0
          %4469 = vmatprep.subr.mxu0 0.0
          %4470 = vmatpush1.msra.mxu0 0.0
          %4471 = vmatprep.subr.mxu0 0.0
          %4472 = vmatpush1.msra.mxu0 0.0
          %4473 = vmatprep.subr.mxu0 0.0
          %4474 = vmatpush1.msra.mxu0 0.0
          %4475 = vmatprep.subr.mxu0 0.0
          %4476 = vmatpush1.msra.mxu0 0.0
          %4477 = vmatprep.subr.mxu0 0.0
          %4478 = vmatpush1.msra.mxu0 0.0
          %4479 = vmatprep.subr.mxu0 0.0
          %4480 = vmatpush1.msra.mxu0 0.0
          %4481 = vmatprep.subr.mxu0 0.0
          %4482 = vmatpush1.msra.mxu0 0.0
          %4483 = vmatprep.subr.mxu0 0.0
          %4484 = vmatpush1.msra.mxu0 0.0
          %4485 = vmatprep.subr.mxu0 0.0
          %4486 = vmatpush1.msra.mxu0 0.0
          %4487 = vmatprep.subr.mxu0 0.0
          %4488 = vmatpush1.msra.mxu0 0.0
          %4489 = vmatprep.subr.mxu0 0.0
          %4490 = vmatpush1.msra.mxu0 0.0
          %4491 = vmatprep.subr.mxu0 0.0
          %4492 = vmatpush1.msra.mxu0 0.0
          %4493 = vmatprep.subr.mxu0 0.0
          %4494 = vmatpush1.msra.mxu0 0.0
          %4495 = vmatprep.subr.mxu0 0.0
          %4496 = vmatpush1.msra.mxu0 0.0
          %4497 = vmatprep.subr.mxu0 0.0
          %4498 = vmatpush1.msra.mxu0 %v4390
          %4499 = vmatprep.subr.mxu0 0.0
          %4500 = vmatpush2.msra.mxu0 0.0
          %4501 = vmatprep.subr.mxu0 0.0
          %4502 = vmatpush2.msra.mxu0 0.0
          %4503 = vmatprep.subr.mxu0 0.0
          %4504 = vmatpush2.msra.mxu0 0.0
          %4505 = vmatprep.subr.mxu0 0.0
          %4506 = vmatpush2.msra.mxu0 0.0
          %4507 = vmatprep.subr.mxu0 0.0
          %4508 = vmatpush2.msra.mxu0 0.0
          %4509 = vmatprep.subr.mxu0 0.0
          %4510 = vmatpush2.msra.mxu0 0.0
          %4511 = vmatprep.subr.mxu0 0.0
          %4512 = vmatpush2.msra.mxu0 0.0
          %4513 = vmatprep.subr.mxu0 0.0
          %4514 = vmatpush2.msra.mxu0 0.0
          %4515 = vmatprep.subr.mxu0 0.0
          %4516 = vmatpush2.msra.mxu0 0.0
          %4517 = vmatprep.subr.mxu0 0.0
          %4518 = vmatpush2.msra.mxu0 0.0
          %4519 = vmatprep.subr.mxu0 0.0
          %4520 = vmatpush2.msra.mxu0 0.0
          %4521 = vmatprep.subr.mxu0 0.0
          %4522 = vmatpush2.msra.mxu0 0.0
          %4523 = vmatprep.subr.mxu0 0.0
          %4524 = vmatpush2.msra.mxu0 0.0
          %4525 = vmatprep.subr.mxu0 0.0
          %4526 = vmatpush2.msra.mxu0 0.0
          %4527 = vmatprep.subr.mxu0 0.0
          %4528 = vmatpush2.msra.mxu0 0.0
          %4529 = vmatprep.subr.mxu0 0.0
          %4530 = vmatpush2.msra.mxu0 0.0
          %4531 = vmatprep.mubr.f32.mxu0 0.0
          %4532 = vmatmul.mubr.f32.gmra.mxu0 %v1571
          %v4533 = vpop.f32.mrf.mxu0
          %v4534 = vadd.f32 0.0, %v4533
          %v4535 = vpop.f32.mrf.mxu0
          %4536 = vdwg.mxu0
          %v4538 = vsel %vm1058, %v4534, 0
          %4540 = vmatprep.subr.mxu0 0.0
          %4541 = vmatpush1.msra.mxu0 0.0
          %4542 = vmatprep.subr.mxu0 0.0
          %4543 = vmatpush1.msra.mxu0 0.0
          %4544 = vmatprep.subr.mxu0 0.0
          %4545 = vmatpush1.msra.mxu0 0.0
          %4546 = vmatprep.subr.mxu0 0.0
          %4547 = vmatpush1.msra.mxu0 0.0
          %4548 = vmatprep.subr.mxu0 0.0
          %4549 = vmatpush1.msra.mxu0 0.0
          %4550 = vmatprep.subr.mxu0 0.0
          %4551 = vmatpush1.msra.mxu0 0.0
          %4552 = vmatprep.subr.mxu0 0.0
          %4553 = vmatpush1.msra.mxu0 0.0
          %4554 = vmatprep.subr.mxu0 0.0
          %4555 = vmatpush1.msra.mxu0 0.0
          %4556 = vmatprep.subr.mxu0 0.0
          %4557 = vmatpush1.msra.mxu0 0.0
          %4558 = vmatprep.subr.mxu0 0.0
          %4559 = vmatpush1.msra.mxu0 0.0
          %4560 = vmatprep.subr.mxu0 0.0
          %4561 = vmatpush1.msra.mxu0 0.0
          %4562 = vmatprep.subr.mxu0 0.0
          %4563 = vmatpush1.msra.mxu0 0.0
          %4564 = vmatprep.subr.mxu0 0.0
          %4565 = vmatpush1.msra.mxu0 %v1342
          %4566 = vmatprep.subr.mxu0 0.0
          %4567 = vmatpush1.msra.mxu0 %v1341
          %4568 = vmatprep.subr.mxu0 0.0
          %4569 = vmatpush1.msra.mxu0 %v1340
          %4570 = vmatprep.subr.mxu0 0.0
          %4571 = vmatpush1.msra.mxu0 %v1339
          %4572 = vmatprep.subr.mxu0 0.0
          %4573 = vmatpush2.msra.mxu0 0.0
          %4574 = vmatprep.subr.mxu0 0.0
          %4575 = vmatpush2.msra.mxu0 0.0
          %4576 = vmatprep.subr.mxu0 0.0
          %4577 = vmatpush2.msra.mxu0 0.0
          %4578 = vmatprep.subr.mxu0 0.0
          %4579 = vmatpush2.msra.mxu0 0.0
          %4580 = vmatprep.subr.mxu0 0.0
          %4581 = vmatpush2.msra.mxu0 0.0
          %4582 = vmatprep.subr.mxu0 0.0
          %4583 = vmatpush2.msra.mxu0 0.0
          %4584 = vmatprep.subr.mxu0 0.0
          %4585 = vmatpush2.msra.mxu0 0.0
          %4586 = vmatprep.subr.mxu0 0.0
          %4587 = vmatpush2.msra.mxu0 0.0
          %4588 = vmatprep.subr.mxu0 0.0
          %4589 = vmatpush2.msra.mxu0 0.0
          %4590 = vmatprep.subr.mxu0 0.0
          %4591 = vmatpush2.msra.mxu0 0.0
          %4592 = vmatprep.subr.mxu0 0.0
          %4593 = vmatpush2.msra.mxu0 0.0
          %4594 = vmatprep.subr.mxu0 0.0
          %4595 = vmatpush2.msra.mxu0 0.0
          %4596 = vmatprep.subr.mxu0 0.0
          %4597 = vmatpush2.msra.mxu0 0.0
          %4598 = vmatprep.subr.mxu0 0.0
          %4599 = vmatpush2.msra.mxu0 0.0
          %4600 = vmatprep.subr.mxu0 0.0
          %4601 = vmatpush2.msra.mxu0 0.0
          %4602 = vmatprep.subr.mxu0 0.0
          %4603 = vmatpush2.msra.mxu0 0.0
          %4604 = vmatprep.mubr.f32.mxu0 0.0
          %4605 = vmatmul.mubr.f32.gmra.mxu0 %v4538
          %v4606 = vpop.f32.mrf.mxu0
          %v4607 = vadd.f32 0.0, %v4606
          %v4608 = vpop.f32.mrf.mxu0
          %4609 = vdwg.mxu0
          %v4610 = vadd.f32 %v4466, %v4607
          %v4611 = vadd.f32 %v3959, %v4610
          %v4613 = vlaneseq
          %v4614 = vshrl.u32 %v4613, 7
          %v4615 = vsub.s32 0, %v4614
          %v4616 = vrot.slane %v1363, %v4615
          %v4618 = vadd.f32 %v4611, %v4616
          %v4619 = vxor.u32 %v4618, 2147483648
          %v4620 = vmul.f32 %v4619, 1.442695
          %v4621 = vpow.pop %v4620
          %v4622 = vadd.f32 %v4621, 1.0
          %v4623 = vrcp.pop %v4622
          %v4624 = vmul.f32 1.0, %v4623
          %v4625 = vmul.f32 %v4624, %v3962
          %4626 = vmatprep.subr.mxu0 0.0
          %4627 = vmatpush1.msra.mxu0 0.0
          %4628 = vmatprep.subr.mxu0 0.0
          %4629 = vmatpush1.msra.mxu0 0.0
          %4630 = vmatprep.subr.mxu0 0.0
          %4631 = vmatpush1.msra.mxu0 0.0
          %4632 = vmatprep.subr.mxu0 0.0
          %4633 = vmatpush1.msra.mxu0 0.0
          %4634 = vmatprep.subr.mxu0 0.0
          %4635 = vmatpush1.msra.mxu0 0.0
          %4636 = vmatprep.subr.mxu0 0.0
          %4637 = vmatpush1.msra.mxu0 0.0
          %4638 = vmatprep.subr.mxu0 0.0
          %4639 = vmatpush1.msra.mxu0 0.0
          %4640 = vmatprep.subr.mxu0 0.0
          %4641 = vmatpush1.msra.mxu0 0.0
          %4642 = vmatprep.subr.mxu0 0.0
          %4643 = vmatpush1.msra.mxu0 0.0
          %4644 = vmatprep.subr.mxu0 0.0
          %4645 = vmatpush1.msra.mxu0 0.0
          %4646 = vmatprep.subr.mxu0 0.0
          %4647 = vmatpush1.msra.mxu0 0.0
          %4648 = vmatprep.subr.mxu0 0.0
          %4649 = vmatpush1.msra.mxu0 0.0
          %4650 = vmatprep.subr.mxu0 0.0
          %4651 = vmatpush1.msra.mxu0 0.0
          %4652 = vmatprep.subr.mxu0 0.0
          %4653 = vmatpush1.msra.mxu0 0.0
          %4654 = vmatprep.subr.mxu0 0.0
          %4655 = vmatpush1.msra.mxu0 0.0
          %4656 = vmatprep.subr.mxu0 0.0
          %4657 = vmatpush1.msra.mxu0 %v4625
          %4658 = vmatprep.subr.mxu0 0.0
          %4659 = vmatpush2.msra.mxu0 0.0
          %4660 = vmatprep.subr.mxu0 0.0
          %4661 = vmatpush2.msra.mxu0 0.0
          %4662 = vmatprep.subr.mxu0 0.0
          %4663 = vmatpush2.msra.mxu0 0.0
          %4664 = vmatprep.subr.mxu0 0.0
          %4665 = vmatpush2.msra.mxu0 0.0
          %4666 = vmatprep.subr.mxu0 0.0
          %4667 = vmatpush2.msra.mxu0 0.0
          %4668 = vmatprep.subr.mxu0 0.0
          %4669 = vmatpush2.msra.mxu0 0.0
          %4670 = vmatprep.subr.mxu0 0.0
          %4671 = vmatpush2.msra.mxu0 0.0
          %4672 = vmatprep.subr.mxu0 0.0
          %4673 = vmatpush2.msra.mxu0 0.0
          %4674 = vmatprep.subr.mxu0 0.0
          %4675 = vmatpush2.msra.mxu0 0.0
          %4676 = vmatprep.subr.mxu0 0.0
          %4677 = vmatpush2.msra.mxu0 0.0
          %4678 = vmatprep.subr.mxu0 0.0
          %4679 = vmatpush2.msra.mxu0 0.0
          %4680 = vmatprep.subr.mxu0 0.0
          %4681 = vmatpush2.msra.mxu0 0.0
          %4682 = vmatprep.subr.mxu0 0.0
          %4683 = vmatpush2.msra.mxu0 0.0
          %4684 = vmatprep.subr.mxu0 0.0
          %4685 = vmatpush2.msra.mxu0 0.0
          %4686 = vmatprep.subr.mxu0 0.0
          %4687 = vmatpush2.msra.mxu0 0.0
          %4688 = vmatprep.subr.mxu0 0.0
          %4689 = vmatpush2.msra.mxu0 0.0
          %4690 = vmatprep.mubr.f32.mxu0 0.0
          %4691 = vmatmul.mubr.f32.gmra.mxu0 %v1428
          %v4692 = vpop.f32.mrf.mxu0
          %v4693 = vadd.f32 0.0, %v4692
          %v4694 = vpop.f32.mrf.mxu0
          %4695 = vdwg.mxu0
          %v4697 = vsel %vm1058, %v4693, 0
          %4699 = vmatprep.subr.mxu0 0.0
          %4700 = vmatpush1.msra.mxu0 0.0
          %4701 = vmatprep.subr.mxu0 0.0
          %4702 = vmatpush1.msra.mxu0 0.0
          %4703 = vmatprep.subr.mxu0 0.0
          %4704 = vmatpush1.msra.mxu0 0.0
          %4705 = vmatprep.subr.mxu0 0.0
          %4706 = vmatpush1.msra.mxu0 0.0
          %4707 = vmatprep.subr.mxu0 0.0
          %4708 = vmatpush1.msra.mxu0 0.0
          %4709 = vmatprep.subr.mxu0 0.0
          %4710 = vmatpush1.msra.mxu0 0.0
          %4711 = vmatprep.subr.mxu0 0.0
          %4712 = vmatpush1.msra.mxu0 0.0
          %4713 = vmatprep.subr.mxu0 0.0
          %4714 = vmatpush1.msra.mxu0 0.0
          %4715 = vmatprep.subr.mxu0 0.0
          %4716 = vmatpush1.msra.mxu0 0.0
          %4717 = vmatprep.subr.mxu0 0.0
          %4718 = vmatpush1.msra.mxu0 0.0
          %4719 = vmatprep.subr.mxu0 0.0
          %4720 = vmatpush1.msra.mxu0 0.0
          %4721 = vmatprep.subr.mxu0 0.0
          %4722 = vmatpush1.msra.mxu0 0.0
          %4723 = vmatprep.subr.mxu0 0.0
          %4724 = vmatpush1.msra.mxu0 %v1350
          %4725 = vmatprep.subr.mxu0 0.0
          %4726 = vmatpush1.msra.mxu0 %v1349
          %4727 = vmatprep.subr.mxu0 0.0
          %4728 = vmatpush1.msra.mxu0 %v1348
          %4729 = vmatprep.subr.mxu0 0.0
          %4730 = vmatpush1.msra.mxu0 %v1347
          %4731 = vmatprep.subr.mxu0 0.0
          %4732 = vmatpush2.msra.mxu0 0.0
          %4733 = vmatprep.subr.mxu0 0.0
          %4734 = vmatpush2.msra.mxu0 0.0
          %4735 = vmatprep.subr.mxu0 0.0
          %4736 = vmatpush2.msra.mxu0 0.0
          %4737 = vmatprep.subr.mxu0 0.0
          %4738 = vmatpush2.msra.mxu0 0.0
          %4739 = vmatprep.subr.mxu0 0.0
          %4740 = vmatpush2.msra.mxu0 0.0
          %4741 = vmatprep.subr.mxu0 0.0
          %4742 = vmatpush2.msra.mxu0 0.0
          %4743 = vmatprep.subr.mxu0 0.0
          %4744 = vmatpush2.msra.mxu0 0.0
          %4745 = vmatprep.subr.mxu0 0.0
          %4746 = vmatpush2.msra.mxu0 0.0
          %4747 = vmatprep.subr.mxu0 0.0
          %4748 = vmatpush2.msra.mxu0 0.0
          %4749 = vmatprep.subr.mxu0 0.0
          %4750 = vmatpush2.msra.mxu0 0.0
          %4751 = vmatprep.subr.mxu0 0.0
          %4752 = vmatpush2.msra.mxu0 0.0
          %4753 = vmatprep.subr.mxu0 0.0
          %4754 = vmatpush2.msra.mxu0 0.0
          %4755 = vmatprep.subr.mxu0 0.0
          %4756 = vmatpush2.msra.mxu0 0.0
          %4757 = vmatprep.subr.mxu0 0.0
          %4758 = vmatpush2.msra.mxu0 0.0
          %4759 = vmatprep.subr.mxu0 0.0
          %4760 = vmatpush2.msra.mxu0 0.0
          %4761 = vmatprep.subr.mxu0 0.0
          %4762 = vmatpush2.msra.mxu0 0.0
          %4763 = vmatprep.mubr.f32.mxu0 0.0
          %4764 = vmatmul.mubr.f32.gmra.mxu0 %v4697
          %v4765 = vpop.f32.mrf.mxu0
          %v4766 = vadd.f32 0.0, %v4765
          %v4767 = vpop.f32.mrf.mxu0
          %4768 = vdwg.mxu0
          %v4770 = vsel %vm1058, %v4625, 0
          %4772 = vmatprep.subr.mxu0 0.0
          %4773 = vmatpush1.msra.mxu0 0.0
          %4774 = vmatprep.subr.mxu0 0.0
          %4775 = vmatpush1.msra.mxu0 0.0
          %4776 = vmatprep.subr.mxu0 0.0
          %4777 = vmatpush1.msra.mxu0 0.0
          %4778 = vmatprep.subr.mxu0 0.0
          %4779 = vmatpush1.msra.mxu0 0.0
          %4780 = vmatprep.subr.mxu0 0.0
          %4781 = vmatpush1.msra.mxu0 0.0
          %4782 = vmatprep.subr.mxu0 0.0
          %4783 = vmatpush1.msra.mxu0 0.0
          %4784 = vmatprep.subr.mxu0 0.0
          %4785 = vmatpush1.msra.mxu0 0.0
          %4786 = vmatprep.subr.mxu0 0.0
          %4787 = vmatpush1.msra.mxu0 0.0
          %4788 = vmatprep.subr.mxu0 0.0
          %4789 = vmatpush1.msra.mxu0 0.0
          %4790 = vmatprep.subr.mxu0 0.0
          %4791 = vmatpush1.msra.mxu0 0.0
          %4792 = vmatprep.subr.mxu0 0.0
          %4793 = vmatpush1.msra.mxu0 0.0
          %4794 = vmatprep.subr.mxu0 0.0
          %4795 = vmatpush1.msra.mxu0 0.0
          %4796 = vmatprep.subr.mxu0 0.0
          %4797 = vmatpush1.msra.mxu0 %v1346
          %4798 = vmatprep.subr.mxu0 0.0
          %4799 = vmatpush1.msra.mxu0 %v1345
          %4800 = vmatprep.subr.mxu0 0.0
          %4801 = vmatpush1.msra.mxu0 %v1344
          %4802 = vmatprep.subr.mxu0 0.0
          %4803 = vmatpush1.msra.mxu0 %v1343
          %4804 = vmatprep.subr.mxu0 0.0
          %4805 = vmatpush2.msra.mxu0 0.0
          %4806 = vmatprep.subr.mxu0 0.0
          %4807 = vmatpush2.msra.mxu0 0.0
          %4808 = vmatprep.subr.mxu0 0.0
          %4809 = vmatpush2.msra.mxu0 0.0
          %4810 = vmatprep.subr.mxu0 0.0
          %4811 = vmatpush2.msra.mxu0 0.0
          %4812 = vmatprep.subr.mxu0 0.0
          %4813 = vmatpush2.msra.mxu0 0.0
          %4814 = vmatprep.subr.mxu0 0.0
          %4815 = vmatpush2.msra.mxu0 0.0
          %4816 = vmatprep.subr.mxu0 0.0
          %4817 = vmatpush2.msra.mxu0 0.0
          %4818 = vmatprep.subr.mxu0 0.0
          %4819 = vmatpush2.msra.mxu0 0.0
          %4820 = vmatprep.subr.mxu0 0.0
          %4821 = vmatpush2.msra.mxu0 0.0
          %4822 = vmatprep.subr.mxu0 0.0
          %4823 = vmatpush2.msra.mxu0 0.0
          %4824 = vmatprep.subr.mxu0 0.0
          %4825 = vmatpush2.msra.mxu0 0.0
          %4826 = vmatprep.subr.mxu0 0.0
          %4827 = vmatpush2.msra.mxu0 0.0
          %4828 = vmatprep.subr.mxu0 0.0
          %4829 = vmatpush2.msra.mxu0 0.0
          %4830 = vmatprep.subr.mxu0 0.0
          %4831 = vmatpush2.msra.mxu0 0.0
          %4832 = vmatprep.subr.mxu0 0.0
          %4833 = vmatpush2.msra.mxu0 0.0
          %4834 = vmatprep.subr.mxu0 0.0
          %4835 = vmatpush2.msra.mxu0 0.0
          %4836 = vmatprep.mubr.f32.mxu0 0.0
          %4837 = vmatmul.mubr.f32.gmra.mxu0 %v4770
          %v4838 = vpop.f32.mrf.mxu0
          %v4839 = vadd.f32 %v4766, %v4838
          %v4840 = vpop.f32.mrf.mxu0
          %4841 = vdwg.mxu0
          %4842 = vmatprep.subr.mxu0 0.0
          %4843 = vmatpush1.msra.mxu0 0.0
          %4844 = vmatprep.subr.mxu0 0.0
          %4845 = vmatpush1.msra.mxu0 0.0
          %4846 = vmatprep.subr.mxu0 0.0
          %4847 = vmatpush1.msra.mxu0 0.0
          %4848 = vmatprep.subr.mxu0 0.0
          %4849 = vmatpush1.msra.mxu0 0.0
          %4850 = vmatprep.subr.mxu0 0.0
          %4851 = vmatpush1.msra.mxu0 0.0
          %4852 = vmatprep.subr.mxu0 0.0
          %4853 = vmatpush1.msra.mxu0 0.0
          %4854 = vmatprep.subr.mxu0 0.0
          %4855 = vmatpush1.msra.mxu0 0.0
          %4856 = vmatprep.subr.mxu0 0.0
          %4857 = vmatpush1.msra.mxu0 0.0
          %4858 = vmatprep.subr.mxu0 0.0
          %4859 = vmatpush1.msra.mxu0 0.0
          %4860 = vmatprep.subr.mxu0 0.0
          %4861 = vmatpush1.msra.mxu0 0.0
          %4862 = vmatprep.subr.mxu0 0.0
          %4863 = vmatpush1.msra.mxu0 0.0
          %4864 = vmatprep.subr.mxu0 0.0
          %4865 = vmatpush1.msra.mxu0 0.0
          %4866 = vmatprep.subr.mxu0 0.0
          %4867 = vmatpush1.msra.mxu0 0.0
          %4868 = vmatprep.subr.mxu0 0.0
          %4869 = vmatpush1.msra.mxu0 0.0
          %4870 = vmatprep.subr.mxu0 0.0
          %4871 = vmatpush1.msra.mxu0 0.0
          %4872 = vmatprep.subr.mxu0 0.0
          %4873 = vmatpush1.msra.mxu0 %v4693
          %4874 = vmatprep.subr.mxu0 0.0
          %4875 = vmatpush2.msra.mxu0 0.0
          %4876 = vmatprep.subr.mxu0 0.0
          %4877 = vmatpush2.msra.mxu0 0.0
          %4878 = vmatprep.subr.mxu0 0.0
          %4879 = vmatpush2.msra.mxu0 0.0
          %4880 = vmatprep.subr.mxu0 0.0
          %4881 = vmatpush2.msra.mxu0 0.0
          %4882 = vmatprep.subr.mxu0 0.0
          %4883 = vmatpush2.msra.mxu0 0.0
          %4884 = vmatprep.subr.mxu0 0.0
          %4885 = vmatpush2.msra.mxu0 0.0
          %4886 = vmatprep.subr.mxu0 0.0
          %4887 = vmatpush2.msra.mxu0 0.0
          %4888 = vmatprep.subr.mxu0 0.0
          %4889 = vmatpush2.msra.mxu0 0.0
          %4890 = vmatprep.subr.mxu0 0.0
          %4891 = vmatpush2.msra.mxu0 0.0
          %4892 = vmatprep.subr.mxu0 0.0
          %4893 = vmatpush2.msra.mxu0 0.0
          %4894 = vmatprep.subr.mxu0 0.0
          %4895 = vmatpush2.msra.mxu0 0.0
          %4896 = vmatprep.subr.mxu0 0.0
          %4897 = vmatpush2.msra.mxu0 0.0
          %4898 = vmatprep.subr.mxu0 0.0
          %4899 = vmatpush2.msra.mxu0 0.0
          %4900 = vmatprep.subr.mxu0 0.0
          %4901 = vmatpush2.msra.mxu0 0.0
          %4902 = vmatprep.subr.mxu0 0.0
          %4903 = vmatpush2.msra.mxu0 0.0
          %4904 = vmatprep.subr.mxu0 0.0
          %4905 = vmatpush2.msra.mxu0 0.0
          %4906 = vmatprep.mubr.f32.mxu0 0.0
          %4907 = vmatmul.mubr.f32.gmra.mxu0 %v1428
          %v4908 = vpop.f32.mrf.mxu0
          %v4909 = vadd.f32 0.0, %v4908
          %v4910 = vpop.f32.mrf.mxu0
          %4911 = vdwg.mxu0
          %v4913 = vsel %vm1058, %v4909, 0
          %4915 = vmatprep.subr.mxu0 0.0
          %4916 = vmatpush1.msra.mxu0 0.0
          %4917 = vmatprep.subr.mxu0 0.0
          %4918 = vmatpush1.msra.mxu0 0.0
          %4919 = vmatprep.subr.mxu0 0.0
          %4920 = vmatpush1.msra.mxu0 0.0
          %4921 = vmatprep.subr.mxu0 0.0
          %4922 = vmatpush1.msra.mxu0 0.0
          %4923 = vmatprep.subr.mxu0 0.0
          %4924 = vmatpush1.msra.mxu0 0.0
          %4925 = vmatprep.subr.mxu0 0.0
          %4926 = vmatpush1.msra.mxu0 0.0
          %4927 = vmatprep.subr.mxu0 0.0
          %4928 = vmatpush1.msra.mxu0 0.0
          %4929 = vmatprep.subr.mxu0 0.0
          %4930 = vmatpush1.msra.mxu0 0.0
          %4931 = vmatprep.subr.mxu0 0.0
          %4932 = vmatpush1.msra.mxu0 0.0
          %4933 = vmatprep.subr.mxu0 0.0
          %4934 = vmatpush1.msra.mxu0 0.0
          %4935 = vmatprep.subr.mxu0 0.0
          %4936 = vmatpush1.msra.mxu0 0.0
          %4937 = vmatprep.subr.mxu0 0.0
          %4938 = vmatpush1.msra.mxu0 0.0
          %4939 = vmatprep.subr.mxu0 0.0
          %4940 = vmatpush1.msra.mxu0 %v1354
          %4941 = vmatprep.subr.mxu0 0.0
          %4942 = vmatpush1.msra.mxu0 %v1353
          %4943 = vmatprep.subr.mxu0 0.0
          %4944 = vmatpush1.msra.mxu0 %v1352
          %4945 = vmatprep.subr.mxu0 0.0
          %4946 = vmatpush1.msra.mxu0 %v1351
          %4947 = vmatprep.subr.mxu0 0.0
          %4948 = vmatpush2.msra.mxu0 0.0
          %4949 = vmatprep.subr.mxu0 0.0
          %4950 = vmatpush2.msra.mxu0 0.0
          %4951 = vmatprep.subr.mxu0 0.0
          %4952 = vmatpush2.msra.mxu0 0.0
          %4953 = vmatprep.subr.mxu0 0.0
          %4954 = vmatpush2.msra.mxu0 0.0
          %4955 = vmatprep.subr.mxu0 0.0
          %4956 = vmatpush2.msra.mxu0 0.0
          %4957 = vmatprep.subr.mxu0 0.0
          %4958 = vmatpush2.msra.mxu0 0.0
          %4959 = vmatprep.subr.mxu0 0.0
          %4960 = vmatpush2.msra.mxu0 0.0
          %4961 = vmatprep.subr.mxu0 0.0
          %4962 = vmatpush2.msra.mxu0 0.0
          %4963 = vmatprep.subr.mxu0 0.0
          %4964 = vmatpush2.msra.mxu0 0.0
          %4965 = vmatprep.subr.mxu0 0.0
          %4966 = vmatpush2.msra.mxu0 0.0
          %4967 = vmatprep.subr.mxu0 0.0
          %4968 = vmatpush2.msra.mxu0 0.0
          %4969 = vmatprep.subr.mxu0 0.0
          %4970 = vmatpush2.msra.mxu0 0.0
          %4971 = vmatprep.subr.mxu0 0.0
          %4972 = vmatpush2.msra.mxu0 0.0
          %4973 = vmatprep.subr.mxu0 0.0
          %4974 = vmatpush2.msra.mxu0 0.0
          %4975 = vmatprep.subr.mxu0 0.0
          %4976 = vmatpush2.msra.mxu0 0.0
          %4977 = vmatprep.subr.mxu0 0.0
          %4978 = vmatpush2.msra.mxu0 0.0
          %4979 = vmatprep.mubr.f32.mxu0 0.0
          %4980 = vmatmul.mubr.f32.gmra.mxu0 %v4913
          %v4981 = vpop.f32.mrf.mxu0
          %v4982 = vadd.f32 0.0, %v4981
          %v4983 = vpop.f32.mrf.mxu0
          %4984 = vdwg.mxu0
          %v4985 = vadd.f32 %v4839, %v4982
          %4986 = vmatprep.subr.mxu0 0.0
          %4987 = vmatpush1.msra.mxu0 0.0
          %4988 = vmatprep.subr.mxu0 0.0
          %4989 = vmatpush1.msra.mxu0 0.0
          %4990 = vmatprep.subr.mxu0 0.0
          %4991 = vmatpush1.msra.mxu0 0.0
          %4992 = vmatprep.subr.mxu0 0.0
          %4993 = vmatpush1.msra.mxu0 0.0
          %4994 = vmatprep.subr.mxu0 0.0
          %4995 = vmatpush1.msra.mxu0 0.0
          %4996 = vmatprep.subr.mxu0 0.0
          %4997 = vmatpush1.msra.mxu0 0.0
          %4998 = vmatprep.subr.mxu0 0.0
          %4999 = vmatpush1.msra.mxu0 0.0
          %5000 = vmatprep.subr.mxu0 0.0
          %5001 = vmatpush1.msra.mxu0 0.0
          %5002 = vmatprep.subr.mxu0 0.0
          %5003 = vmatpush1.msra.mxu0 0.0
          %5004 = vmatprep.subr.mxu0 0.0
          %5005 = vmatpush1.msra.mxu0 0.0
          %5006 = vmatprep.subr.mxu0 0.0
          %5007 = vmatpush1.msra.mxu0 0.0
          %5008 = vmatprep.subr.mxu0 0.0
          %5009 = vmatpush1.msra.mxu0 0.0
          %5010 = vmatprep.subr.mxu0 0.0
          %5011 = vmatpush1.msra.mxu0 0.0
          %5012 = vmatprep.subr.mxu0 0.0
          %5013 = vmatpush1.msra.mxu0 0.0
          %5014 = vmatprep.subr.mxu0 0.0
          %5015 = vmatpush1.msra.mxu0 0.0
          %5016 = vmatprep.subr.mxu0 0.0
          %5017 = vmatpush1.msra.mxu0 %v4625
          %5018 = vmatprep.subr.mxu0 0.0
          %5019 = vmatpush2.msra.mxu0 0.0
          %5020 = vmatprep.subr.mxu0 0.0
          %5021 = vmatpush2.msra.mxu0 0.0
          %5022 = vmatprep.subr.mxu0 0.0
          %5023 = vmatpush2.msra.mxu0 0.0
          %5024 = vmatprep.subr.mxu0 0.0
          %5025 = vmatpush2.msra.mxu0 0.0
          %5026 = vmatprep.subr.mxu0 0.0
          %5027 = vmatpush2.msra.mxu0 0.0
          %5028 = vmatprep.subr.mxu0 0.0
          %5029 = vmatpush2.msra.mxu0 0.0
          %5030 = vmatprep.subr.mxu0 0.0
          %5031 = vmatpush2.msra.mxu0 0.0
          %5032 = vmatprep.subr.mxu0 0.0
          %5033 = vmatpush2.msra.mxu0 0.0
          %5034 = vmatprep.subr.mxu0 0.0
          %5035 = vmatpush2.msra.mxu0 0.0
          %5036 = vmatprep.subr.mxu0 0.0
          %5037 = vmatpush2.msra.mxu0 0.0
          %5038 = vmatprep.subr.mxu0 0.0
          %5039 = vmatpush2.msra.mxu0 0.0
          %5040 = vmatprep.subr.mxu0 0.0
          %5041 = vmatpush2.msra.mxu0 0.0
          %5042 = vmatprep.subr.mxu0 0.0
          %5043 = vmatpush2.msra.mxu0 0.0
          %5044 = vmatprep.subr.mxu0 0.0
          %5045 = vmatpush2.msra.mxu0 0.0
          %5046 = vmatprep.subr.mxu0 0.0
          %5047 = vmatpush2.msra.mxu0 0.0
          %5048 = vmatprep.subr.mxu0 0.0
          %5049 = vmatpush2.msra.mxu0 0.0
          %5050 = vmatprep.mubr.f32.mxu0 0.0
          %5051 = vmatmul.mubr.f32.gmra.mxu0 %v1571
          %v5052 = vpop.f32.mrf.mxu0
          %v5053 = vadd.f32 0.0, %v5052
          %v5054 = vpop.f32.mrf.mxu0
          %5055 = vdwg.mxu0
          %v5057 = vsel %vm1058, %v5053, 0
          %5059 = vmatprep.subr.mxu0 0.0
          %5060 = vmatpush1.msra.mxu0 0.0
          %5061 = vmatprep.subr.mxu0 0.0
          %5062 = vmatpush1.msra.mxu0 0.0
          %5063 = vmatprep.subr.mxu0 0.0
          %5064 = vmatpush1.msra.mxu0 0.0
          %5065 = vmatprep.subr.mxu0 0.0
          %5066 = vmatpush1.msra.mxu0 0.0
          %5067 = vmatprep.subr.mxu0 0.0
          %5068 = vmatpush1.msra.mxu0 0.0
          %5069 = vmatprep.subr.mxu0 0.0
          %5070 = vmatpush1.msra.mxu0 0.0
          %5071 = vmatprep.subr.mxu0 0.0
          %5072 = vmatpush1.msra.mxu0 0.0
          %5073 = vmatprep.subr.mxu0 0.0
          %5074 = vmatpush1.msra.mxu0 0.0
          %5075 = vmatprep.subr.mxu0 0.0
          %5076 = vmatpush1.msra.mxu0 0.0
          %5077 = vmatprep.subr.mxu0 0.0
          %5078 = vmatpush1.msra.mxu0 0.0
          %5079 = vmatprep.subr.mxu0 0.0
          %5080 = vmatpush1.msra.mxu0 0.0
          %5081 = vmatprep.subr.mxu0 0.0
          %5082 = vmatpush1.msra.mxu0 0.0
          %5083 = vmatprep.subr.mxu0 0.0
          %5084 = vmatpush1.msra.mxu0 %v1358
          %5085 = vmatprep.subr.mxu0 0.0
          %5086 = vmatpush1.msra.mxu0 %v1357
          %5087 = vmatprep.subr.mxu0 0.0
          %5088 = vmatpush1.msra.mxu0 %v1356
          %5089 = vmatprep.subr.mxu0 0.0
          %5090 = vmatpush1.msra.mxu0 %v1355
          %5091 = vmatprep.subr.mxu0 0.0
          %5092 = vmatpush2.msra.mxu0 0.0
          %5093 = vmatprep.subr.mxu0 0.0
          %5094 = vmatpush2.msra.mxu0 0.0
          %5095 = vmatprep.subr.mxu0 0.0
          %5096 = vmatpush2.msra.mxu0 0.0
          %5097 = vmatprep.subr.mxu0 0.0
          %5098 = vmatpush2.msra.mxu0 0.0
          %5099 = vmatprep.subr.mxu0 0.0
          %5100 = vmatpush2.msra.mxu0 0.0
          %5101 = vmatprep.subr.mxu0 0.0
          %5102 = vmatpush2.msra.mxu0 0.0
          %5103 = vmatprep.subr.mxu0 0.0
          %5104 = vmatpush2.msra.mxu0 0.0
          %5105 = vmatprep.subr.mxu0 0.0
          %5106 = vmatpush2.msra.mxu0 0.0
          %5107 = vmatprep.subr.mxu0 0.0
          %5108 = vmatpush2.msra.mxu0 0.0
          %5109 = vmatprep.subr.mxu0 0.0
          %5110 = vmatpush2.msra.mxu0 0.0
          %5111 = vmatprep.subr.mxu0 0.0
          %5112 = vmatpush2.msra.mxu0 0.0
          %5113 = vmatprep.subr.mxu0 0.0
          %5114 = vmatpush2.msra.mxu0 0.0
          %5115 = vmatprep.subr.mxu0 0.0
          %5116 = vmatpush2.msra.mxu0 0.0
          %5117 = vmatprep.subr.mxu0 0.0
          %5118 = vmatpush2.msra.mxu0 0.0
          %5119 = vmatprep.subr.mxu0 0.0
          %5120 = vmatpush2.msra.mxu0 0.0
          %5121 = vmatprep.subr.mxu0 0.0
          %5122 = vmatpush2.msra.mxu0 0.0
          %5123 = vmatprep.mubr.f32.mxu0 0.0
          %5124 = vmatmul.mubr.f32.gmra.mxu0 %v5057
          %v5125 = vpop.f32.mrf.mxu0
          %v5126 = vadd.f32 0.0, %v5125
          %v5127 = vpop.f32.mrf.mxu0
          %5128 = vdwg.mxu0
          %v5129 = vadd.f32 %v4985, %v5126
          %5130 = vmatprep.subr.mxu0 0.0
          %5131 = vmatpush1.msra.mxu0 0.0
          %5132 = vmatprep.subr.mxu0 0.0
          %5133 = vmatpush1.msra.mxu0 0.0
          %5134 = vmatprep.subr.mxu0 0.0
          %5135 = vmatpush1.msra.mxu0 0.0
          %5136 = vmatprep.subr.mxu0 0.0
          %5137 = vmatpush1.msra.mxu0 0.0
          %5138 = vmatprep.subr.mxu0 0.0
          %5139 = vmatpush1.msra.mxu0 0.0
          %5140 = vmatprep.subr.mxu0 0.0
          %5141 = vmatpush1.msra.mxu0 0.0
          %5142 = vmatprep.subr.mxu0 0.0
          %5143 = vmatpush1.msra.mxu0 0.0
          %5144 = vmatprep.subr.mxu0 0.0
          %5145 = vmatpush1.msra.mxu0 0.0
          %5146 = vmatprep.subr.mxu0 0.0
          %5147 = vmatpush1.msra.mxu0 0.0
          %5148 = vmatprep.subr.mxu0 0.0
          %5149 = vmatpush1.msra.mxu0 0.0
          %5150 = vmatprep.subr.mxu0 0.0
          %5151 = vmatpush1.msra.mxu0 0.0
          %5152 = vmatprep.subr.mxu0 0.0
          %5153 = vmatpush1.msra.mxu0 0.0
          %5154 = vmatprep.subr.mxu0 0.0
          %5155 = vmatpush1.msra.mxu0 0.0
          %5156 = vmatprep.subr.mxu0 0.0
          %5157 = vmatpush1.msra.mxu0 0.0
          %5158 = vmatprep.subr.mxu0 0.0
          %5159 = vmatpush1.msra.mxu0 0.0
          %5160 = vmatprep.subr.mxu0 0.0
          %5161 = vmatpush1.msra.mxu0 %v5053
          %5162 = vmatprep.subr.mxu0 0.0
          %5163 = vmatpush2.msra.mxu0 0.0
          %5164 = vmatprep.subr.mxu0 0.0
          %5165 = vmatpush2.msra.mxu0 0.0
          %5166 = vmatprep.subr.mxu0 0.0
          %5167 = vmatpush2.msra.mxu0 0.0
          %5168 = vmatprep.subr.mxu0 0.0
          %5169 = vmatpush2.msra.mxu0 0.0
          %5170 = vmatprep.subr.mxu0 0.0
          %5171 = vmatpush2.msra.mxu0 0.0
          %5172 = vmatprep.subr.mxu0 0.0
          %5173 = vmatpush2.msra.mxu0 0.0
          %5174 = vmatprep.subr.mxu0 0.0
          %5175 = vmatpush2.msra.mxu0 0.0
          %5176 = vmatprep.subr.mxu0 0.0
          %5177 = vmatpush2.msra.mxu0 0.0
          %5178 = vmatprep.subr.mxu0 0.0
          %5179 = vmatpush2.msra.mxu0 0.0
          %5180 = vmatprep.subr.mxu0 0.0
          %5181 = vmatpush2.msra.mxu0 0.0
          %5182 = vmatprep.subr.mxu0 0.0
          %5183 = vmatpush2.msra.mxu0 0.0
          %5184 = vmatprep.subr.mxu0 0.0
          %5185 = vmatpush2.msra.mxu0 0.0
          %5186 = vmatprep.subr.mxu0 0.0
          %5187 = vmatpush2.msra.mxu0 0.0
          %5188 = vmatprep.subr.mxu0 0.0
          %5189 = vmatpush2.msra.mxu0 0.0
          %5190 = vmatprep.subr.mxu0 0.0
          %5191 = vmatpush2.msra.mxu0 0.0
          %5192 = vmatprep.subr.mxu0 0.0
          %5193 = vmatpush2.msra.mxu0 0.0
          %5194 = vmatprep.mubr.f32.mxu0 0.0
          %5195 = vmatmul.mubr.f32.gmra.mxu0 %v1571
          %v5196 = vpop.f32.mrf.mxu0
          %v5197 = vadd.f32 0.0, %v5196
          %v5198 = vpop.f32.mrf.mxu0
          %5199 = vdwg.mxu0
          %v5201 = vsel %vm1058, %v5197, 0
          %5203 = vmatprep.subr.mxu0 0.0
          %5204 = vmatpush1.msra.mxu0 0.0
          %5205 = vmatprep.subr.mxu0 0.0
          %5206 = vmatpush1.msra.mxu0 0.0
          %5207 = vmatprep.subr.mxu0 0.0
          %5208 = vmatpush1.msra.mxu0 0.0
          %5209 = vmatprep.subr.mxu0 0.0
          %5210 = vmatpush1.msra.mxu0 0.0
          %5211 = vmatprep.subr.mxu0 0.0
          %5212 = vmatpush1.msra.mxu0 0.0
          %5213 = vmatprep.subr.mxu0 0.0
          %5214 = vmatpush1.msra.mxu0 0.0
          %5215 = vmatprep.subr.mxu0 0.0
          %5216 = vmatpush1.msra.mxu0 0.0
          %5217 = vmatprep.subr.mxu0 0.0
          %5218 = vmatpush1.msra.mxu0 0.0
          %5219 = vmatprep.subr.mxu0 0.0
          %5220 = vmatpush1.msra.mxu0 0.0
          %5221 = vmatprep.subr.mxu0 0.0
          %5222 = vmatpush1.msra.mxu0 0.0
          %5223 = vmatprep.subr.mxu0 0.0
          %5224 = vmatpush1.msra.mxu0 0.0
          %5225 = vmatprep.subr.mxu0 0.0
          %5226 = vmatpush1.msra.mxu0 0.0
          %5227 = vmatprep.subr.mxu0 0.0
          %5228 = vmatpush1.msra.mxu0 %v1362
          %5229 = vmatprep.subr.mxu0 0.0
          %5230 = vmatpush1.msra.mxu0 %v1361
          %5231 = vmatprep.subr.mxu0 0.0
          %5232 = vmatpush1.msra.mxu0 %v1360
          %5233 = vmatprep.subr.mxu0 0.0
          %5234 = vmatpush1.msra.mxu0 %v1359
          %5235 = vmatprep.subr.mxu0 0.0
          %5236 = vmatpush2.msra.mxu0 0.0
          %5237 = vmatprep.subr.mxu0 0.0
          %5238 = vmatpush2.msra.mxu0 0.0
          %5239 = vmatprep.subr.mxu0 0.0
          %5240 = vmatpush2.msra.mxu0 0.0
          %5241 = vmatprep.subr.mxu0 0.0
          %5242 = vmatpush2.msra.mxu0 0.0
          %5243 = vmatprep.subr.mxu0 0.0
          %5244 = vmatpush2.msra.mxu0 0.0
          %5245 = vmatprep.subr.mxu0 0.0
          %5246 = vmatpush2.msra.mxu0 0.0
          %5247 = vmatprep.subr.mxu0 0.0
          %5248 = vmatpush2.msra.mxu0 0.0
          %5249 = vmatprep.subr.mxu0 0.0
          %5250 = vmatpush2.msra.mxu0 0.0
          %5251 = vmatprep.subr.mxu0 0.0
          %5252 = vmatpush2.msra.mxu0 0.0
          %5253 = vmatprep.subr.mxu0 0.0
          %5254 = vmatpush2.msra.mxu0 0.0
          %5255 = vmatprep.subr.mxu0 0.0
          %5256 = vmatpush2.msra.mxu0 0.0
          %5257 = vmatprep.subr.mxu0 0.0
          %5258 = vmatpush2.msra.mxu0 0.0
          %5259 = vmatprep.subr.mxu0 0.0
          %5260 = vmatpush2.msra.mxu0 0.0
          %5261 = vmatprep.subr.mxu0 0.0
          %5262 = vmatpush2.msra.mxu0 0.0
          %5263 = vmatprep.subr.mxu0 0.0
          %5264 = vmatpush2.msra.mxu0 0.0
          %5265 = vmatprep.subr.mxu0 0.0
          %5266 = vmatpush2.msra.mxu0 0.0
          %5267 = vmatprep.mubr.f32.mxu0 0.0
          %5268 = vmatmul.mubr.f32.gmra.mxu0 %v5201
          %v5269 = vpop.f32.mrf.mxu0
          %v5270 = vadd.f32 0.0, %v5269
          %v5271 = vpop.f32.mrf.mxu0
          %5272 = vdwg.mxu0
          %v5273 = vadd.f32 %v5129, %v5270
          %5275 = vrot.lane.b32.xlu0 %v5273, 64
          %v5276 = vpop.permute.xlu0 %5275
          %v5278 = vadd.f32 %v3959, %v5276
          %v5280 = vlaneseq
          %v5281 = vshrl.u32 %v5280, 7
          %v5282 = vsub.s32 0, %v5281
          %v5283 = vrot.slane %v1364, %v5282
          %5284 = vrot.lane.b32.xlu0 %v5283, 64
          %v5285 = vpop.permute.xlu0 %5284
          %v5287 = vadd.f32 %v5278, %v5285
          %v5288 = vtanh.pop %v5287
          %v5289 = vmul.f32 %v4624, %v3955
          %v5290 = vsub.f32 1.0, %v4624
          %5292 = vrot.lane.b32.xlu0 %v5288, 96
          %v5293 = vpop.permute.xlu0 %5292
          %v5295 = vmul.f32 %v5290, %v5293
          %v5296 = vadd.f32 %v5289, %v5295
          %5298 = vrot.lane.b32.xlu0 %v5296, 96
          %v5299 = vpop.permute.xlu0 %5298
          %5301 = vmatprep.subr.mxu0 0.0
          %5302 = vmatpush1.msra.mxu0 0.0
          %5303 = vmatprep.subr.mxu0 0.0
          %5304 = vmatpush1.msra.mxu0 0.0
          %5305 = vmatprep.subr.mxu0 0.0
          %5306 = vmatpush1.msra.mxu0 0.0
          %5307 = vmatprep.subr.mxu0 0.0
          %5308 = vmatpush1.msra.mxu0 0.0
          %5309 = vmatprep.subr.mxu0 0.0
          %5310 = vmatpush1.msra.mxu0 0.0
          %5311 = vmatprep.subr.mxu0 0.0
          %5312 = vmatpush1.msra.mxu0 0.0
          %5313 = vmatprep.subr.mxu0 0.0
          %5314 = vmatpush1.msra.mxu0 0.0
          %5315 = vmatprep.subr.mxu0 0.0
          %5316 = vmatpush1.msra.mxu0 0.0
          %5317 = vmatprep.subr.mxu0 0.0
          %5318 = vmatpush1.msra.mxu0 0.0
          %5319 = vmatprep.subr.mxu0 0.0
          %5320 = vmatpush1.msra.mxu0 0.0
          %5321 = vmatprep.subr.mxu0 0.0
          %5322 = vmatpush1.msra.mxu0 0.0
          %5323 = vmatprep.subr.mxu0 0.0
          %5324 = vmatpush1.msra.mxu0 0.0
          %5325 = vmatprep.subr.mxu0 0.0
          %5326 = vmatpush1.msra.mxu0 0.0
          %5327 = vmatprep.subr.mxu0 0.0
          %5328 = vmatpush1.msra.mxu0 0.0
          %5329 = vmatprep.subr.mxu0 0.0
          %5330 = vmatpush1.msra.mxu0 0.0
          %5331 = vmatprep.subr.mxu0 0.0
          %5332 = vmatpush1.msra.mxu0 %v5299
          %5333 = vmatprep.subr.mxu0 0.0
          %5334 = vmatpush2.msra.mxu0 0.0
          %5335 = vmatprep.subr.mxu0 0.0
          %5336 = vmatpush2.msra.mxu0 0.0
          %5337 = vmatprep.subr.mxu0 0.0
          %5338 = vmatpush2.msra.mxu0 0.0
          %5339 = vmatprep.subr.mxu0 0.0
          %5340 = vmatpush2.msra.mxu0 0.0
          %5341 = vmatprep.subr.mxu0 0.0
          %5342 = vmatpush2.msra.mxu0 0.0
          %5343 = vmatprep.subr.mxu0 0.0
          %5344 = vmatpush2.msra.mxu0 0.0
          %5345 = vmatprep.subr.mxu0 0.0
          %5346 = vmatpush2.msra.mxu0 0.0
          %5347 = vmatprep.subr.mxu0 0.0
          %5348 = vmatpush2.msra.mxu0 0.0
          %5349 = vmatprep.subr.mxu0 0.0
          %5350 = vmatpush2.msra.mxu0 0.0
          %5351 = vmatprep.subr.mxu0 0.0
          %5352 = vmatpush2.msra.mxu0 0.0
          %5353 = vmatprep.subr.mxu0 0.0
          %5354 = vmatpush2.msra.mxu0 0.0
          %5355 = vmatprep.subr.mxu0 0.0
          %5356 = vmatpush2.msra.mxu0 0.0
          %5357 = vmatprep.subr.mxu0 0.0
          %5358 = vmatpush2.msra.mxu0 0.0
          %5359 = vmatprep.subr.mxu0 0.0
          %5360 = vmatpush2.msra.mxu0 0.0
          %5361 = vmatprep.subr.mxu0 0.0
          %5362 = vmatpush2.msra.mxu0 0.0
          %5363 = vmatprep.subr.mxu0 0.0
          %5364 = vmatpush2.msra.mxu0 0.0
          %5365 = vmatprep.mubr.f32.mxu0 0.0
          %5366 = vmatmul.mubr.f32.gmra.mxu0 %v1428
          %v5367 = vpop.f32.mrf.mxu0
          %v5368 = vadd.f32 0.0, %v5367
          %v5369 = vpop.f32.mrf.mxu0
          %5370 = vdwg.mxu0
          %v5372 = vsel %vm1058, %v5368, 0
          %5374 = vmatprep.subr.mxu0 0.0
          %5375 = vmatpush1.msra.mxu0 0.0
          %5376 = vmatprep.subr.mxu0 0.0
          %5377 = vmatpush1.msra.mxu0 0.0
          %5378 = vmatprep.subr.mxu0 0.0
          %5379 = vmatpush1.msra.mxu0 0.0
          %5380 = vmatprep.subr.mxu0 0.0
          %5381 = vmatpush1.msra.mxu0 0.0
          %5382 = vmatprep.subr.mxu0 0.0
          %5383 = vmatpush1.msra.mxu0 0.0
          %5384 = vmatprep.subr.mxu0 0.0
          %5385 = vmatpush1.msra.mxu0 0.0
          %5386 = vmatprep.subr.mxu0 0.0
          %5387 = vmatpush1.msra.mxu0 0.0
          %5388 = vmatprep.subr.mxu0 0.0
          %5389 = vmatpush1.msra.mxu0 0.0
          %5390 = vmatprep.subr.mxu0 0.0
          %5391 = vmatpush1.msra.mxu0 0.0
          %5392 = vmatprep.subr.mxu0 0.0
          %5393 = vmatpush1.msra.mxu0 0.0
          %5394 = vmatprep.subr.mxu0 0.0
          %5395 = vmatpush1.msra.mxu0 0.0
          %5396 = vmatprep.subr.mxu0 0.0
          %5397 = vmatpush1.msra.mxu0 0.0
          %5398 = vmatprep.subr.mxu0 0.0
          %5399 = vmatpush1.msra.mxu0 %v1372
          %5400 = vmatprep.subr.mxu0 0.0
          %5401 = vmatpush1.msra.mxu0 %v1371
          %5402 = vmatprep.subr.mxu0 0.0
          %5403 = vmatpush1.msra.mxu0 %v1370
          %5404 = vmatprep.subr.mxu0 0.0
          %5405 = vmatpush1.msra.mxu0 %v1369
          %5406 = vmatprep.subr.mxu0 0.0
          %5407 = vmatpush2.msra.mxu0 0.0
          %5408 = vmatprep.subr.mxu0 0.0
          %5409 = vmatpush2.msra.mxu0 0.0
          %5410 = vmatprep.subr.mxu0 0.0
          %5411 = vmatpush2.msra.mxu0 0.0
          %5412 = vmatprep.subr.mxu0 0.0
          %5413 = vmatpush2.msra.mxu0 0.0
          %5414 = vmatprep.subr.mxu0 0.0
          %5415 = vmatpush2.msra.mxu0 0.0
          %5416 = vmatprep.subr.mxu0 0.0
          %5417 = vmatpush2.msra.mxu0 0.0
          %5418 = vmatprep.subr.mxu0 0.0
          %5419 = vmatpush2.msra.mxu0 0.0
          %5420 = vmatprep.subr.mxu0 0.0
          %5421 = vmatpush2.msra.mxu0 0.0
          %5422 = vmatprep.subr.mxu0 0.0
          %5423 = vmatpush2.msra.mxu0 0.0
          %5424 = vmatprep.subr.mxu0 0.0
          %5425 = vmatpush2.msra.mxu0 0.0
          %5426 = vmatprep.subr.mxu0 0.0
          %5427 = vmatpush2.msra.mxu0 0.0
          %5428 = vmatprep.subr.mxu0 0.0
          %5429 = vmatpush2.msra.mxu0 0.0
          %5430 = vmatprep.subr.mxu0 0.0
          %5431 = vmatpush2.msra.mxu0 0.0
          %5432 = vmatprep.subr.mxu0 0.0
          %5433 = vmatpush2.msra.mxu0 0.0
          %5434 = vmatprep.subr.mxu0 0.0
          %5435 = vmatpush2.msra.mxu0 0.0
          %5436 = vmatprep.subr.mxu0 0.0
          %5437 = vmatpush2.msra.mxu0 0.0
          %5438 = vmatprep.mubr.f32.mxu0 0.0
          %5439 = vmatmul.mubr.f32.gmra.mxu0 %v5372
          %v5440 = vpop.f32.mrf.mxu0
          %v5441 = vadd.f32 0.0, %v5440
          %v5442 = vpop.f32.mrf.mxu0
          %5443 = vdwg.mxu0
          %v5444 = vsel %vm1058, %v5299, 0
          %5446 = vmatprep.subr.mxu0 0.0
          %5447 = vmatpush1.msra.mxu0 0.0
          %5448 = vmatprep.subr.mxu0 0.0
          %5449 = vmatpush1.msra.mxu0 0.0
          %5450 = vmatprep.subr.mxu0 0.0
          %5451 = vmatpush1.msra.mxu0 0.0
          %5452 = vmatprep.subr.mxu0 0.0
          %5453 = vmatpush1.msra.mxu0 0.0
          %5454 = vmatprep.subr.mxu0 0.0
          %5455 = vmatpush1.msra.mxu0 0.0
          %5456 = vmatprep.subr.mxu0 0.0
          %5457 = vmatpush1.msra.mxu0 0.0
          %5458 = vmatprep.subr.mxu0 0.0
          %5459 = vmatpush1.msra.mxu0 0.0
          %5460 = vmatprep.subr.mxu0 0.0
          %5461 = vmatpush1.msra.mxu0 0.0
          %5462 = vmatprep.subr.mxu0 0.0
          %5463 = vmatpush1.msra.mxu0 0.0
          %5464 = vmatprep.subr.mxu0 0.0
          %5465 = vmatpush1.msra.mxu0 0.0
          %5466 = vmatprep.subr.mxu0 0.0
          %5467 = vmatpush1.msra.mxu0 0.0
          %5468 = vmatprep.subr.mxu0 0.0
          %5469 = vmatpush1.msra.mxu0 0.0
          %5470 = vmatprep.subr.mxu0 0.0
          %5471 = vmatpush1.msra.mxu0 %v1368
          %5472 = vmatprep.subr.mxu0 0.0
          %5473 = vmatpush1.msra.mxu0 %v1367
          %5474 = vmatprep.subr.mxu0 0.0
          %5475 = vmatpush1.msra.mxu0 %v1366
          %5476 = vmatprep.subr.mxu0 0.0
          %5477 = vmatpush1.msra.mxu0 %v1365
          %5478 = vmatprep.subr.mxu0 0.0
          %5479 = vmatpush2.msra.mxu0 0.0
          %5480 = vmatprep.subr.mxu0 0.0
          %5481 = vmatpush2.msra.mxu0 0.0
          %5482 = vmatprep.subr.mxu0 0.0
          %5483 = vmatpush2.msra.mxu0 0.0
          %5484 = vmatprep.subr.mxu0 0.0
          %5485 = vmatpush2.msra.mxu0 0.0
          %5486 = vmatprep.subr.mxu0 0.0
          %5487 = vmatpush2.msra.mxu0 0.0
          %5488 = vmatprep.subr.mxu0 0.0
          %5489 = vmatpush2.msra.mxu0 0.0
          %5490 = vmatprep.subr.mxu0 0.0
          %5491 = vmatpush2.msra.mxu0 0.0
          %5492 = vmatprep.subr.mxu0 0.0
          %5493 = vmatpush2.msra.mxu0 0.0
          %5494 = vmatprep.subr.mxu0 0.0
          %5495 = vmatpush2.msra.mxu0 0.0
          %5496 = vmatprep.subr.mxu0 0.0
          %5497 = vmatpush2.msra.mxu0 0.0
          %5498 = vmatprep.subr.mxu0 0.0
          %5499 = vmatpush2.msra.mxu0 0.0
          %5500 = vmatprep.subr.mxu0 0.0
          %5501 = vmatpush2.msra.mxu0 0.0
          %5502 = vmatprep.subr.mxu0 0.0
          %5503 = vmatpush2.msra.mxu0 0.0
          %5504 = vmatprep.subr.mxu0 0.0
          %5505 = vmatpush2.msra.mxu0 0.0
          %5506 = vmatprep.subr.mxu0 0.0
          %5507 = vmatpush2.msra.mxu0 0.0
          %5508 = vmatprep.subr.mxu0 0.0
          %5509 = vmatpush2.msra.mxu0 0.0
          %5510 = vmatprep.mubr.f32.mxu0 0.0
          %5511 = vmatmul.mubr.f32.gmra.mxu0 %v5444
          %v5512 = vpop.f32.mrf.mxu0
          %v5513 = vadd.f32 %v5441, %v5512
          %v5514 = vpop.f32.mrf.mxu0
          %5515 = vdwg.mxu0
          %5516 = vmatprep.subr.mxu0 0.0
          %5517 = vmatpush1.msra.mxu0 0.0
          %5518 = vmatprep.subr.mxu0 0.0
          %5519 = vmatpush1.msra.mxu0 0.0
          %5520 = vmatprep.subr.mxu0 0.0
          %5521 = vmatpush1.msra.mxu0 0.0
          %5522 = vmatprep.subr.mxu0 0.0
          %5523 = vmatpush1.msra.mxu0 0.0
          %5524 = vmatprep.subr.mxu0 0.0
          %5525 = vmatpush1.msra.mxu0 0.0
          %5526 = vmatprep.subr.mxu0 0.0
          %5527 = vmatpush1.msra.mxu0 0.0
          %5528 = vmatprep.subr.mxu0 0.0
          %5529 = vmatpush1.msra.mxu0 0.0
          %5530 = vmatprep.subr.mxu0 0.0
          %5531 = vmatpush1.msra.mxu0 0.0
          %5532 = vmatprep.subr.mxu0 0.0
          %5533 = vmatpush1.msra.mxu0 0.0
          %5534 = vmatprep.subr.mxu0 0.0
          %5535 = vmatpush1.msra.mxu0 0.0
          %5536 = vmatprep.subr.mxu0 0.0
          %5537 = vmatpush1.msra.mxu0 0.0
          %5538 = vmatprep.subr.mxu0 0.0
          %5539 = vmatpush1.msra.mxu0 0.0
          %5540 = vmatprep.subr.mxu0 0.0
          %5541 = vmatpush1.msra.mxu0 0.0
          %5542 = vmatprep.subr.mxu0 0.0
          %5543 = vmatpush1.msra.mxu0 0.0
          %5544 = vmatprep.subr.mxu0 0.0
          %5545 = vmatpush1.msra.mxu0 0.0
          %5546 = vmatprep.subr.mxu0 0.0
          %5547 = vmatpush1.msra.mxu0 %v5368
          %5548 = vmatprep.subr.mxu0 0.0
          %5549 = vmatpush2.msra.mxu0 0.0
          %5550 = vmatprep.subr.mxu0 0.0
          %5551 = vmatpush2.msra.mxu0 0.0
          %5552 = vmatprep.subr.mxu0 0.0
          %5553 = vmatpush2.msra.mxu0 0.0
          %5554 = vmatprep.subr.mxu0 0.0
          %5555 = vmatpush2.msra.mxu0 0.0
          %5556 = vmatprep.subr.mxu0 0.0
          %5557 = vmatpush2.msra.mxu0 0.0
          %5558 = vmatprep.subr.mxu0 0.0
          %5559 = vmatpush2.msra.mxu0 0.0
          %5560 = vmatprep.subr.mxu0 0.0
          %5561 = vmatpush2.msra.mxu0 0.0
          %5562 = vmatprep.subr.mxu0 0.0
          %5563 = vmatpush2.msra.mxu0 0.0
          %5564 = vmatprep.subr.mxu0 0.0
          %5565 = vmatpush2.msra.mxu0 0.0
          %5566 = vmatprep.subr.mxu0 0.0
          %5567 = vmatpush2.msra.mxu0 0.0
          %5568 = vmatprep.subr.mxu0 0.0
          %5569 = vmatpush2.msra.mxu0 0.0
          %5570 = vmatprep.subr.mxu0 0.0
          %5571 = vmatpush2.msra.mxu0 0.0
          %5572 = vmatprep.subr.mxu0 0.0
          %5573 = vmatpush2.msra.mxu0 0.0
          %5574 = vmatprep.subr.mxu0 0.0
          %5575 = vmatpush2.msra.mxu0 0.0
          %5576 = vmatprep.subr.mxu0 0.0
          %5577 = vmatpush2.msra.mxu0 0.0
          %5578 = vmatprep.subr.mxu0 0.0
          %5579 = vmatpush2.msra.mxu0 0.0
          %5580 = vmatprep.mubr.f32.mxu0 0.0
          %5581 = vmatmul.mubr.f32.gmra.mxu0 %v1428
          %v5582 = vpop.f32.mrf.mxu0
          %v5583 = vadd.f32 0.0, %v5582
          %v5584 = vpop.f32.mrf.mxu0
          %5585 = vdwg.mxu0
          %v5587 = vsel %vm1058, %v5583, 0
          %5589 = vmatprep.subr.mxu0 0.0
          %5590 = vmatpush1.msra.mxu0 0.0
          %5591 = vmatprep.subr.mxu0 0.0
          %5592 = vmatpush1.msra.mxu0 0.0
          %5593 = vmatprep.subr.mxu0 0.0
          %5594 = vmatpush1.msra.mxu0 0.0
          %5595 = vmatprep.subr.mxu0 0.0
          %5596 = vmatpush1.msra.mxu0 0.0
          %5597 = vmatprep.subr.mxu0 0.0
          %5598 = vmatpush1.msra.mxu0 0.0
          %5599 = vmatprep.subr.mxu0 0.0
          %5600 = vmatpush1.msra.mxu0 0.0
          %5601 = vmatprep.subr.mxu0 0.0
          %5602 = vmatpush1.msra.mxu0 0.0
          %5603 = vmatprep.subr.mxu0 0.0
          %5604 = vmatpush1.msra.mxu0 0.0
          %5605 = vmatprep.subr.mxu0 0.0
          %5606 = vmatpush1.msra.mxu0 0.0
          %5607 = vmatprep.subr.mxu0 0.0
          %5608 = vmatpush1.msra.mxu0 0.0
          %5609 = vmatprep.subr.mxu0 0.0
          %5610 = vmatpush1.msra.mxu0 0.0
          %5611 = vmatprep.subr.mxu0 0.0
          %5612 = vmatpush1.msra.mxu0 0.0
          %5613 = vmatprep.subr.mxu0 0.0
          %5614 = vmatpush1.msra.mxu0 %v1376
          %5615 = vmatprep.subr.mxu0 0.0
          %5616 = vmatpush1.msra.mxu0 %v1375
          %5617 = vmatprep.subr.mxu0 0.0
          %5618 = vmatpush1.msra.mxu0 %v1374
          %5619 = vmatprep.subr.mxu0 0.0
          %5620 = vmatpush1.msra.mxu0 %v1373
          %5621 = vmatprep.subr.mxu0 0.0
          %5622 = vmatpush2.msra.mxu0 0.0
          %5623 = vmatprep.subr.mxu0 0.0
          %5624 = vmatpush2.msra.mxu0 0.0
          %5625 = vmatprep.subr.mxu0 0.0
          %5626 = vmatpush2.msra.mxu0 0.0
          %5627 = vmatprep.subr.mxu0 0.0
          %5628 = vmatpush2.msra.mxu0 0.0
          %5629 = vmatprep.subr.mxu0 0.0
          %5630 = vmatpush2.msra.mxu0 0.0
          %5631 = vmatprep.subr.mxu0 0.0
          %5632 = vmatpush2.msra.mxu0 0.0
          %5633 = vmatprep.subr.mxu0 0.0
          %5634 = vmatpush2.msra.mxu0 0.0
          %5635 = vmatprep.subr.mxu0 0.0
          %5636 = vmatpush2.msra.mxu0 0.0
          %5637 = vmatprep.subr.mxu0 0.0
          %5638 = vmatpush2.msra.mxu0 0.0
          %5639 = vmatprep.subr.mxu0 0.0
          %5640 = vmatpush2.msra.mxu0 0.0
          %5641 = vmatprep.subr.mxu0 0.0
          %5642 = vmatpush2.msra.mxu0 0.0
          %5643 = vmatprep.subr.mxu0 0.0
          %5644 = vmatpush2.msra.mxu0 0.0
          %5645 = vmatprep.subr.mxu0 0.0
          %5646 = vmatpush2.msra.mxu0 0.0
          %5647 = vmatprep.subr.mxu0 0.0
          %5648 = vmatpush2.msra.mxu0 0.0
          %5649 = vmatprep.subr.mxu0 0.0
          %5650 = vmatpush2.msra.mxu0 0.0
          %5651 = vmatprep.subr.mxu0 0.0
          %5652 = vmatpush2.msra.mxu0 0.0
          %5653 = vmatprep.mubr.f32.mxu0 0.0
          %5654 = vmatmul.mubr.f32.gmra.mxu0 %v5587
          %v5655 = vpop.f32.mrf.mxu0
          %v5656 = vadd.f32 0.0, %v5655
          %v5657 = vpop.f32.mrf.mxu0
          %5658 = vdwg.mxu0
          %v5659 = vadd.f32 %v5513, %v5656
          %5660 = vmatprep.subr.mxu0 0.0
          %5661 = vmatpush1.msra.mxu0 0.0
          %5662 = vmatprep.subr.mxu0 0.0
          %5663 = vmatpush1.msra.mxu0 0.0
          %5664 = vmatprep.subr.mxu0 0.0
          %5665 = vmatpush1.msra.mxu0 0.0
          %5666 = vmatprep.subr.mxu0 0.0
          %5667 = vmatpush1.msra.mxu0 0.0
          %5668 = vmatprep.subr.mxu0 0.0
          %5669 = vmatpush1.msra.mxu0 0.0
          %5670 = vmatprep.subr.mxu0 0.0
          %5671 = vmatpush1.msra.mxu0 0.0
          %5672 = vmatprep.subr.mxu0 0.0
          %5673 = vmatpush1.msra.mxu0 0.0
          %5674 = vmatprep.subr.mxu0 0.0
          %5675 = vmatpush1.msra.mxu0 0.0
          %5676 = vmatprep.subr.mxu0 0.0
          %5677 = vmatpush1.msra.mxu0 0.0
          %5678 = vmatprep.subr.mxu0 0.0
          %5679 = vmatpush1.msra.mxu0 0.0
          %5680 = vmatprep.subr.mxu0 0.0
          %5681 = vmatpush1.msra.mxu0 0.0
          %5682 = vmatprep.subr.mxu0 0.0
          %5683 = vmatpush1.msra.mxu0 0.0
          %5684 = vmatprep.subr.mxu0 0.0
          %5685 = vmatpush1.msra.mxu0 0.0
          %5686 = vmatprep.subr.mxu0 0.0
          %5687 = vmatpush1.msra.mxu0 0.0
          %5688 = vmatprep.subr.mxu0 0.0
          %5689 = vmatpush1.msra.mxu0 0.0
          %5690 = vmatprep.subr.mxu0 0.0
          %5691 = vmatpush1.msra.mxu0 %v5299
          %5692 = vmatprep.subr.mxu0 0.0
          %5693 = vmatpush2.msra.mxu0 0.0
          %5694 = vmatprep.subr.mxu0 0.0
          %5695 = vmatpush2.msra.mxu0 0.0
          %5696 = vmatprep.subr.mxu0 0.0
          %5697 = vmatpush2.msra.mxu0 0.0
          %5698 = vmatprep.subr.mxu0 0.0
          %5699 = vmatpush2.msra.mxu0 0.0
          %5700 = vmatprep.subr.mxu0 0.0
          %5701 = vmatpush2.msra.mxu0 0.0
          %5702 = vmatprep.subr.mxu0 0.0
          %5703 = vmatpush2.msra.mxu0 0.0
          %5704 = vmatprep.subr.mxu0 0.0
          %5705 = vmatpush2.msra.mxu0 0.0
          %5706 = vmatprep.subr.mxu0 0.0
          %5707 = vmatpush2.msra.mxu0 0.0
          %5708 = vmatprep.subr.mxu0 0.0
          %5709 = vmatpush2.msra.mxu0 0.0
          %5710 = vmatprep.subr.mxu0 0.0
          %5711 = vmatpush2.msra.mxu0 0.0
          %5712 = vmatprep.subr.mxu0 0.0
          %5713 = vmatpush2.msra.mxu0 0.0
          %5714 = vmatprep.subr.mxu0 0.0
          %5715 = vmatpush2.msra.mxu0 0.0
          %5716 = vmatprep.subr.mxu0 0.0
          %5717 = vmatpush2.msra.mxu0 0.0
          %5718 = vmatprep.subr.mxu0 0.0
          %5719 = vmatpush2.msra.mxu0 0.0
          %5720 = vmatprep.subr.mxu0 0.0
          %5721 = vmatpush2.msra.mxu0 0.0
          %5722 = vmatprep.subr.mxu0 0.0
          %5723 = vmatpush2.msra.mxu0 0.0
          %5724 = vmatprep.mubr.f32.mxu0 0.0
          %5725 = vmatmul.mubr.f32.gmra.mxu0 %v1571
          %v5726 = vpop.f32.mrf.mxu0
          %v5727 = vadd.f32 0.0, %v5726
          %v5728 = vpop.f32.mrf.mxu0
          %5729 = vdwg.mxu0
          %v5731 = vsel %vm1058, %v5727, 0
          %5733 = vmatprep.subr.mxu0 0.0
          %5734 = vmatpush1.msra.mxu0 0.0
          %5735 = vmatprep.subr.mxu0 0.0
          %5736 = vmatpush1.msra.mxu0 0.0
          %5737 = vmatprep.subr.mxu0 0.0
          %5738 = vmatpush1.msra.mxu0 0.0
          %5739 = vmatprep.subr.mxu0 0.0
          %5740 = vmatpush1.msra.mxu0 0.0
          %5741 = vmatprep.subr.mxu0 0.0
          %5742 = vmatpush1.msra.mxu0 0.0
          %5743 = vmatprep.subr.mxu0 0.0
          %5744 = vmatpush1.msra.mxu0 0.0
          %5745 = vmatprep.subr.mxu0 0.0
          %5746 = vmatpush1.msra.mxu0 0.0
          %5747 = vmatprep.subr.mxu0 0.0
          %5748 = vmatpush1.msra.mxu0 0.0
          %5749 = vmatprep.subr.mxu0 0.0
          %5750 = vmatpush1.msra.mxu0 0.0
          %5751 = vmatprep.subr.mxu0 0.0
          %5752 = vmatpush1.msra.mxu0 0.0
          %5753 = vmatprep.subr.mxu0 0.0
          %5754 = vmatpush1.msra.mxu0 0.0
          %5755 = vmatprep.subr.mxu0 0.0
          %5756 = vmatpush1.msra.mxu0 0.0
          %5757 = vmatprep.subr.mxu0 0.0
          %5758 = vmatpush1.msra.mxu0 %v1380
          %5759 = vmatprep.subr.mxu0 0.0
          %5760 = vmatpush1.msra.mxu0 %v1379
          %5761 = vmatprep.subr.mxu0 0.0
          %5762 = vmatpush1.msra.mxu0 %v1378
          %5763 = vmatprep.subr.mxu0 0.0
          %5764 = vmatpush1.msra.mxu0 %v1377
          %5765 = vmatprep.subr.mxu0 0.0
          %5766 = vmatpush2.msra.mxu0 0.0
          %5767 = vmatprep.subr.mxu0 0.0
          %5768 = vmatpush2.msra.mxu0 0.0
          %5769 = vmatprep.subr.mxu0 0.0
          %5770 = vmatpush2.msra.mxu0 0.0
          %5771 = vmatprep.subr.mxu0 0.0
          %5772 = vmatpush2.msra.mxu0 0.0
          %5773 = vmatprep.subr.mxu0 0.0
          %5774 = vmatpush2.msra.mxu0 0.0
          %5775 = vmatprep.subr.mxu0 0.0
          %5776 = vmatpush2.msra.mxu0 0.0
          %5777 = vmatprep.subr.mxu0 0.0
          %5778 = vmatpush2.msra.mxu0 0.0
          %5779 = vmatprep.subr.mxu0 0.0
          %5780 = vmatpush2.msra.mxu0 0.0
          %5781 = vmatprep.subr.mxu0 0.0
          %5782 = vmatpush2.msra.mxu0 0.0
          %5783 = vmatprep.subr.mxu0 0.0
          %5784 = vmatpush2.msra.mxu0 0.0
          %5785 = vmatprep.subr.mxu0 0.0
          %5786 = vmatpush2.msra.mxu0 0.0
          %5787 = vmatprep.subr.mxu0 0.0
          %5788 = vmatpush2.msra.mxu0 0.0
          %5789 = vmatprep.subr.mxu0 0.0
          %5790 = vmatpush2.msra.mxu0 0.0
          %5791 = vmatprep.subr.mxu0 0.0
          %5792 = vmatpush2.msra.mxu0 0.0
          %5793 = vmatprep.subr.mxu0 0.0
          %5794 = vmatpush2.msra.mxu0 0.0
          %5795 = vmatprep.subr.mxu0 0.0
          %5796 = vmatpush2.msra.mxu0 0.0
          %5797 = vmatprep.mubr.f32.mxu0 0.0
          %5798 = vmatmul.mubr.f32.gmra.mxu0 %v5731
          %v5799 = vpop.f32.mrf.mxu0
          %v5800 = vadd.f32 0.0, %v5799
          %v5801 = vpop.f32.mrf.mxu0
          %5802 = vdwg.mxu0
          %v5803 = vadd.f32 %v5659, %v5800
          %5804 = vmatprep.subr.mxu0 0.0
          %5805 = vmatpush1.msra.mxu0 0.0
          %5806 = vmatprep.subr.mxu0 0.0
          %5807 = vmatpush1.msra.mxu0 0.0
          %5808 = vmatprep.subr.mxu0 0.0
          %5809 = vmatpush1.msra.mxu0 0.0
          %5810 = vmatprep.subr.mxu0 0.0
          %5811 = vmatpush1.msra.mxu0 0.0
          %5812 = vmatprep.subr.mxu0 0.0
          %5813 = vmatpush1.msra.mxu0 0.0
          %5814 = vmatprep.subr.mxu0 0.0
          %5815 = vmatpush1.msra.mxu0 0.0
          %5816 = vmatprep.subr.mxu0 0.0
          %5817 = vmatpush1.msra.mxu0 0.0
          %5818 = vmatprep.subr.mxu0 0.0
          %5819 = vmatpush1.msra.mxu0 0.0
          %5820 = vmatprep.subr.mxu0 0.0
          %5821 = vmatpush1.msra.mxu0 0.0
          %5822 = vmatprep.subr.mxu0 0.0
          %5823 = vmatpush1.msra.mxu0 0.0
          %5824 = vmatprep.subr.mxu0 0.0
          %5825 = vmatpush1.msra.mxu0 0.0
          %5826 = vmatprep.subr.mxu0 0.0
          %5827 = vmatpush1.msra.mxu0 0.0
          %5828 = vmatprep.subr.mxu0 0.0
          %5829 = vmatpush1.msra.mxu0 0.0
          %5830 = vmatprep.subr.mxu0 0.0
          %5831 = vmatpush1.msra.mxu0 0.0
          %5832 = vmatprep.subr.mxu0 0.0
          %5833 = vmatpush1.msra.mxu0 0.0
          %5834 = vmatprep.subr.mxu0 0.0
          %5835 = vmatpush1.msra.mxu0 %v5727
          %5836 = vmatprep.subr.mxu0 0.0
          %5837 = vmatpush2.msra.mxu0 0.0
          %5838 = vmatprep.subr.mxu0 0.0
          %5839 = vmatpush2.msra.mxu0 0.0
          %5840 = vmatprep.subr.mxu0 0.0
          %5841 = vmatpush2.msra.mxu0 0.0
          %5842 = vmatprep.subr.mxu0 0.0
          %5843 = vmatpush2.msra.mxu0 0.0
          %5844 = vmatprep.subr.mxu0 0.0
          %5845 = vmatpush2.msra.mxu0 0.0
          %5846 = vmatprep.subr.mxu0 0.0
          %5847 = vmatpush2.msra.mxu0 0.0
          %5848 = vmatprep.subr.mxu0 0.0
          %5849 = vmatpush2.msra.mxu0 0.0
          %5850 = vmatprep.subr.mxu0 0.0
          %5851 = vmatpush2.msra.mxu0 0.0
          %5852 = vmatprep.subr.mxu0 0.0
          %5853 = vmatpush2.msra.mxu0 0.0
          %5854 = vmatprep.subr.mxu0 0.0
          %5855 = vmatpush2.msra.mxu0 0.0
          %5856 = vmatprep.subr.mxu0 0.0
          %5857 = vmatpush2.msra.mxu0 0.0
          %5858 = vmatprep.subr.mxu0 0.0
          %5859 = vmatpush2.msra.mxu0 0.0
          %5860 = vmatprep.subr.mxu0 0.0
          %5861 = vmatpush2.msra.mxu0 0.0
          %5862 = vmatprep.subr.mxu0 0.0
          %5863 = vmatpush2.msra.mxu0 0.0
          %5864 = vmatprep.subr.mxu0 0.0
          %5865 = vmatpush2.msra.mxu0 0.0
          %5866 = vmatprep.subr.mxu0 0.0
          %5867 = vmatpush2.msra.mxu0 0.0
          %5868 = vmatprep.mubr.f32.mxu0 0.0
          %5869 = vmatmul.mubr.f32.gmra.mxu0 %v1571
          %v5870 = vpop.f32.mrf.mxu0
          %v5871 = vadd.f32 0.0, %v5870
          %v5872 = vpop.f32.mrf.mxu0
          %5873 = vdwg.mxu0
          %v5875 = vsel %vm1058, %v5871, 0
          %5877 = vmatprep.subr.mxu0 0.0
          %5878 = vmatpush1.msra.mxu0 0.0
          %5879 = vmatprep.subr.mxu0 0.0
          %5880 = vmatpush1.msra.mxu0 0.0
          %5881 = vmatprep.subr.mxu0 0.0
          %5882 = vmatpush1.msra.mxu0 0.0
          %5883 = vmatprep.subr.mxu0 0.0
          %5884 = vmatpush1.msra.mxu0 0.0
          %5885 = vmatprep.subr.mxu0 0.0
          %5886 = vmatpush1.msra.mxu0 0.0
          %5887 = vmatprep.subr.mxu0 0.0
          %5888 = vmatpush1.msra.mxu0 0.0
          %5889 = vmatprep.subr.mxu0 0.0
          %5890 = vmatpush1.msra.mxu0 0.0
          %5891 = vmatprep.subr.mxu0 0.0
          %5892 = vmatpush1.msra.mxu0 0.0
          %5893 = vmatprep.subr.mxu0 0.0
          %5894 = vmatpush1.msra.mxu0 0.0
          %5895 = vmatprep.subr.mxu0 0.0
          %5896 = vmatpush1.msra.mxu0 0.0
          %5897 = vmatprep.subr.mxu0 0.0
          %5898 = vmatpush1.msra.mxu0 0.0
          %5899 = vmatprep.subr.mxu0 0.0
          %5900 = vmatpush1.msra.mxu0 0.0
          %5901 = vmatprep.subr.mxu0 0.0
          %5902 = vmatpush1.msra.mxu0 %v1384
          %5903 = vmatprep.subr.mxu0 0.0
          %5904 = vmatpush1.msra.mxu0 %v1383
          %5905 = vmatprep.subr.mxu0 0.0
          %5906 = vmatpush1.msra.mxu0 %v1382
          %5907 = vmatprep.subr.mxu0 0.0
          %5908 = vmatpush1.msra.mxu0 %v1381
          %5909 = vmatprep.subr.mxu0 0.0
          %5910 = vmatpush2.msra.mxu0 0.0
          %5911 = vmatprep.subr.mxu0 0.0
          %5912 = vmatpush2.msra.mxu0 0.0
          %5913 = vmatprep.subr.mxu0 0.0
          %5914 = vmatpush2.msra.mxu0 0.0
          %5915 = vmatprep.subr.mxu0 0.0
          %5916 = vmatpush2.msra.mxu0 0.0
          %5917 = vmatprep.subr.mxu0 0.0
          %5918 = vmatpush2.msra.mxu0 0.0
          %5919 = vmatprep.subr.mxu0 0.0
          %5920 = vmatpush2.msra.mxu0 0.0
          %5921 = vmatprep.subr.mxu0 0.0
          %5922 = vmatpush2.msra.mxu0 0.0
          %5923 = vmatprep.subr.mxu0 0.0
          %5924 = vmatpush2.msra.mxu0 0.0
          %5925 = vmatprep.subr.mxu0 0.0
          %5926 = vmatpush2.msra.mxu0 0.0
          %5927 = vmatprep.subr.mxu0 0.0
          %5928 = vmatpush2.msra.mxu0 0.0
          %5929 = vmatprep.subr.mxu0 0.0
          %5930 = vmatpush2.msra.mxu0 0.0
          %5931 = vmatprep.subr.mxu0 0.0
          %5932 = vmatpush2.msra.mxu0 0.0
          %5933 = vmatprep.subr.mxu0 0.0
          %5934 = vmatpush2.msra.mxu0 0.0
          %5935 = vmatprep.subr.mxu0 0.0
          %5936 = vmatpush2.msra.mxu0 0.0
          %5937 = vmatprep.subr.mxu0 0.0
          %5938 = vmatpush2.msra.mxu0 0.0
          %5939 = vmatprep.subr.mxu0 0.0
          %5940 = vmatpush2.msra.mxu0 0.0
          %5941 = vmatprep.mubr.f32.mxu0 0.0
          %5942 = vmatmul.mubr.f32.gmra.mxu0 %v5875
          %v5943 = vpop.f32.mrf.mxu0
          %v5944 = vadd.f32 0.0, %v5943
          %v5945 = vpop.f32.mrf.mxu0
          %5946 = vdwg.mxu0
          %v5947 = vadd.f32 %v5803, %v5944
          %5949 = vrot.lane.b32.xlu0 %v3956, 96
          %v5950 = vpop.permute.xlu0 %5949
          %5952 = vmatprep.subr.mxu0 0.0
          %5953 = vmatpush1.msra.mxu0 0.0
          %5954 = vmatprep.subr.mxu0 0.0
          %5955 = vmatpush1.msra.mxu0 0.0
          %5956 = vmatprep.subr.mxu0 0.0
          %5957 = vmatpush1.msra.mxu0 0.0
          %5958 = vmatprep.subr.mxu0 0.0
          %5959 = vmatpush1.msra.mxu0 0.0
          %5960 = vmatprep.subr.mxu0 0.0
          %5961 = vmatpush1.msra.mxu0 0.0
          %5962 = vmatprep.subr.mxu0 0.0
          %5963 = vmatpush1.msra.mxu0 0.0
          %5964 = vmatprep.subr.mxu0 0.0
          %5965 = vmatpush1.msra.mxu0 0.0
          %5966 = vmatprep.subr.mxu0 0.0
          %5967 = vmatpush1.msra.mxu0 0.0
          %5968 = vmatprep.subr.mxu0 0.0
          %5969 = vmatpush1.msra.mxu0 0.0
          %5970 = vmatprep.subr.mxu0 0.0
          %5971 = vmatpush1.msra.mxu0 0.0
          %5972 = vmatprep.subr.mxu0 0.0
          %5973 = vmatpush1.msra.mxu0 0.0
          %5974 = vmatprep.subr.mxu0 0.0
          %5975 = vmatpush1.msra.mxu0 0.0
          %5976 = vmatprep.subr.mxu0 0.0
          %5977 = vmatpush1.msra.mxu0 0.0
          %5978 = vmatprep.subr.mxu0 0.0
          %5979 = vmatpush1.msra.mxu0 0.0
          %5980 = vmatprep.subr.mxu0 0.0
          %5981 = vmatpush1.msra.mxu0 0.0
          %5982 = vmatprep.subr.mxu0 0.0
          %5983 = vmatpush1.msra.mxu0 %v5950
          %5984 = vmatprep.subr.mxu0 0.0
          %5985 = vmatpush2.msra.mxu0 0.0
          %5986 = vmatprep.subr.mxu0 0.0
          %5987 = vmatpush2.msra.mxu0 0.0
          %5988 = vmatprep.subr.mxu0 0.0
          %5989 = vmatpush2.msra.mxu0 0.0
          %5990 = vmatprep.subr.mxu0 0.0
          %5991 = vmatpush2.msra.mxu0 0.0
          %5992 = vmatprep.subr.mxu0 0.0
          %5993 = vmatpush2.msra.mxu0 0.0
          %5994 = vmatprep.subr.mxu0 0.0
          %5995 = vmatpush2.msra.mxu0 0.0
          %5996 = vmatprep.subr.mxu0 0.0
          %5997 = vmatpush2.msra.mxu0 0.0
          %5998 = vmatprep.subr.mxu0 0.0
          %5999 = vmatpush2.msra.mxu0 0.0
          %6000 = vmatprep.subr.mxu0 0.0
          %6001 = vmatpush2.msra.mxu0 0.0
          %6002 = vmatprep.subr.mxu0 0.0
          %6003 = vmatpush2.msra.mxu0 0.0
          %6004 = vmatprep.subr.mxu0 0.0
          %6005 = vmatpush2.msra.mxu0 0.0
          %6006 = vmatprep.subr.mxu0 0.0
          %6007 = vmatpush2.msra.mxu0 0.0
          %6008 = vmatprep.subr.mxu0 0.0
          %6009 = vmatpush2.msra.mxu0 0.0
          %6010 = vmatprep.subr.mxu0 0.0
          %6011 = vmatpush2.msra.mxu0 0.0
          %6012 = vmatprep.subr.mxu0 0.0
          %6013 = vmatpush2.msra.mxu0 0.0
          %6014 = vmatprep.subr.mxu0 0.0
          %6015 = vmatpush2.msra.mxu0 0.0
          %6016 = vmatprep.mubr.f32.mxu0 0.0
          %6017 = vmatmul.mubr.f32.gmra.mxu0 %v1428
          %v6018 = vpop.f32.mrf.mxu0
          %v6019 = vadd.f32 0.0, %v6018
          %v6020 = vpop.f32.mrf.mxu0
          %6021 = vdwg.mxu0
          %v6023 = vsel %vm1058, %v6019, 0
          %6025 = vmatprep.subr.mxu0 0.0
          %6026 = vmatpush1.msra.mxu0 0.0
          %6027 = vmatprep.subr.mxu0 0.0
          %6028 = vmatpush1.msra.mxu0 0.0
          %6029 = vmatprep.subr.mxu0 0.0
          %6030 = vmatpush1.msra.mxu0 0.0
          %6031 = vmatprep.subr.mxu0 0.0
          %6032 = vmatpush1.msra.mxu0 0.0
          %6033 = vmatprep.subr.mxu0 0.0
          %6034 = vmatpush1.msra.mxu0 0.0
          %6035 = vmatprep.subr.mxu0 0.0
          %6036 = vmatpush1.msra.mxu0 0.0
          %6037 = vmatprep.subr.mxu0 0.0
          %6038 = vmatpush1.msra.mxu0 0.0
          %6039 = vmatprep.subr.mxu0 0.0
          %6040 = vmatpush1.msra.mxu0 0.0
          %6041 = vmatprep.subr.mxu0 0.0
          %6042 = vmatpush1.msra.mxu0 0.0
          %6043 = vmatprep.subr.mxu0 0.0
          %6044 = vmatpush1.msra.mxu0 0.0
          %6045 = vmatprep.subr.mxu0 0.0
          %6046 = vmatpush1.msra.mxu0 0.0
          %6047 = vmatprep.subr.mxu0 0.0
          %6048 = vmatpush1.msra.mxu0 0.0
          %6049 = vmatprep.subr.mxu0 0.0
          %6050 = vmatpush1.msra.mxu0 %v1392
          %6051 = vmatprep.subr.mxu0 0.0
          %6052 = vmatpush1.msra.mxu0 %v1391
          %6053 = vmatprep.subr.mxu0 0.0
          %6054 = vmatpush1.msra.mxu0 %v1390
          %6055 = vmatprep.subr.mxu0 0.0
          %6056 = vmatpush1.msra.mxu0 %v1389
          %6057 = vmatprep.subr.mxu0 0.0
          %6058 = vmatpush2.msra.mxu0 0.0
          %6059 = vmatprep.subr.mxu0 0.0
          %6060 = vmatpush2.msra.mxu0 0.0
          %6061 = vmatprep.subr.mxu0 0.0
          %6062 = vmatpush2.msra.mxu0 0.0
          %6063 = vmatprep.subr.mxu0 0.0
          %6064 = vmatpush2.msra.mxu0 0.0
          %6065 = vmatprep.subr.mxu0 0.0
          %6066 = vmatpush2.msra.mxu0 0.0
          %6067 = vmatprep.subr.mxu0 0.0
          %6068 = vmatpush2.msra.mxu0 0.0
          %6069 = vmatprep.subr.mxu0 0.0
          %6070 = vmatpush2.msra.mxu0 0.0
          %6071 = vmatprep.subr.mxu0 0.0
          %6072 = vmatpush2.msra.mxu0 0.0
          %6073 = vmatprep.subr.mxu0 0.0
          %6074 = vmatpush2.msra.mxu0 0.0
          %6075 = vmatprep.subr.mxu0 0.0
          %6076 = vmatpush2.msra.mxu0 0.0
          %6077 = vmatprep.subr.mxu0 0.0
          %6078 = vmatpush2.msra.mxu0 0.0
          %6079 = vmatprep.subr.mxu0 0.0
          %6080 = vmatpush2.msra.mxu0 0.0
          %6081 = vmatprep.subr.mxu0 0.0
          %6082 = vmatpush2.msra.mxu0 0.0
          %6083 = vmatprep.subr.mxu0 0.0
          %6084 = vmatpush2.msra.mxu0 0.0
          %6085 = vmatprep.subr.mxu0 0.0
          %6086 = vmatpush2.msra.mxu0 0.0
          %6087 = vmatprep.subr.mxu0 0.0
          %6088 = vmatpush2.msra.mxu0 0.0
          %6089 = vmatprep.mubr.f32.mxu0 0.0
          %6090 = vmatmul.mubr.f32.gmra.mxu0 %v6023
          %v6091 = vpop.f32.mrf.mxu0
          %v6092 = vadd.f32 0.0, %v6091
          %v6093 = vpop.f32.mrf.mxu0
          %6094 = vdwg.mxu0
          %v6095 = vsel %vm1058, %v5950, 0
          %6097 = vmatprep.subr.mxu0 0.0
          %6098 = vmatpush1.msra.mxu0 0.0
          %6099 = vmatprep.subr.mxu0 0.0
          %6100 = vmatpush1.msra.mxu0 0.0
          %6101 = vmatprep.subr.mxu0 0.0
          %6102 = vmatpush1.msra.mxu0 0.0
          %6103 = vmatprep.subr.mxu0 0.0
          %6104 = vmatpush1.msra.mxu0 0.0
          %6105 = vmatprep.subr.mxu0 0.0
          %6106 = vmatpush1.msra.mxu0 0.0
          %6107 = vmatprep.subr.mxu0 0.0
          %6108 = vmatpush1.msra.mxu0 0.0
          %6109 = vmatprep.subr.mxu0 0.0
          %6110 = vmatpush1.msra.mxu0 0.0
          %6111 = vmatprep.subr.mxu0 0.0
          %6112 = vmatpush1.msra.mxu0 0.0
          %6113 = vmatprep.subr.mxu0 0.0
          %6114 = vmatpush1.msra.mxu0 0.0
          %6115 = vmatprep.subr.mxu0 0.0
          %6116 = vmatpush1.msra.mxu0 0.0
          %6117 = vmatprep.subr.mxu0 0.0
          %6118 = vmatpush1.msra.mxu0 0.0
          %6119 = vmatprep.subr.mxu0 0.0
          %6120 = vmatpush1.msra.mxu0 0.0
          %6121 = vmatprep.subr.mxu0 0.0
          %6122 = vmatpush1.msra.mxu0 %v1388
          %6123 = vmatprep.subr.mxu0 0.0
          %6124 = vmatpush1.msra.mxu0 %v1387
          %6125 = vmatprep.subr.mxu0 0.0
          %6126 = vmatpush1.msra.mxu0 %v1386
          %6127 = vmatprep.subr.mxu0 0.0
          %6128 = vmatpush1.msra.mxu0 %v1385
          %6129 = vmatprep.subr.mxu0 0.0
          %6130 = vmatpush2.msra.mxu0 0.0
          %6131 = vmatprep.subr.mxu0 0.0
          %6132 = vmatpush2.msra.mxu0 0.0
          %6133 = vmatprep.subr.mxu0 0.0
          %6134 = vmatpush2.msra.mxu0 0.0
          %6135 = vmatprep.subr.mxu0 0.0
          %6136 = vmatpush2.msra.mxu0 0.0
          %6137 = vmatprep.subr.mxu0 0.0
          %6138 = vmatpush2.msra.mxu0 0.0
          %6139 = vmatprep.subr.mxu0 0.0
          %6140 = vmatpush2.msra.mxu0 0.0
          %6141 = vmatprep.subr.mxu0 0.0
          %6142 = vmatpush2.msra.mxu0 0.0
          %6143 = vmatprep.subr.mxu0 0.0
          %6144 = vmatpush2.msra.mxu0 0.0
          %6145 = vmatprep.subr.mxu0 0.0
          %6146 = vmatpush2.msra.mxu0 0.0
          %6147 = vmatprep.subr.mxu0 0.0
          %6148 = vmatpush2.msra.mxu0 0.0
          %6149 = vmatprep.subr.mxu0 0.0
          %6150 = vmatpush2.msra.mxu0 0.0
          %6151 = vmatprep.subr.mxu0 0.0
          %6152 = vmatpush2.msra.mxu0 0.0
          %6153 = vmatprep.subr.mxu0 0.0
          %6154 = vmatpush2.msra.mxu0 0.0
          %6155 = vmatprep.subr.mxu0 0.0
          %6156 = vmatpush2.msra.mxu0 0.0
          %6157 = vmatprep.subr.mxu0 0.0
          %6158 = vmatpush2.msra.mxu0 0.0
          %6159 = vmatprep.subr.mxu0 0.0
          %6160 = vmatpush2.msra.mxu0 0.0
          %6161 = vmatprep.mubr.f32.mxu0 0.0
          %6162 = vmatmul.mubr.f32.gmra.mxu0 %v6095
          %v6163 = vpop.f32.mrf.mxu0
          %v6164 = vadd.f32 %v6092, %v6163
          %v6165 = vpop.f32.mrf.mxu0
          %6166 = vdwg.mxu0
          %6167 = vmatprep.subr.mxu0 0.0
          %6168 = vmatpush1.msra.mxu0 0.0
          %6169 = vmatprep.subr.mxu0 0.0
          %6170 = vmatpush1.msra.mxu0 0.0
          %6171 = vmatprep.subr.mxu0 0.0
          %6172 = vmatpush1.msra.mxu0 0.0
          %6173 = vmatprep.subr.mxu0 0.0
          %6174 = vmatpush1.msra.mxu0 0.0
          %6175 = vmatprep.subr.mxu0 0.0
          %6176 = vmatpush1.msra.mxu0 0.0
          %6177 = vmatprep.subr.mxu0 0.0
          %6178 = vmatpush1.msra.mxu0 0.0
          %6179 = vmatprep.subr.mxu0 0.0
          %6180 = vmatpush1.msra.mxu0 0.0
          %6181 = vmatprep.subr.mxu0 0.0
          %6182 = vmatpush1.msra.mxu0 0.0
          %6183 = vmatprep.subr.mxu0 0.0
          %6184 = vmatpush1.msra.mxu0 0.0
          %6185 = vmatprep.subr.mxu0 0.0
          %6186 = vmatpush1.msra.mxu0 0.0
          %6187 = vmatprep.subr.mxu0 0.0
          %6188 = vmatpush1.msra.mxu0 0.0
          %6189 = vmatprep.subr.mxu0 0.0
          %6190 = vmatpush1.msra.mxu0 0.0
          %6191 = vmatprep.subr.mxu0 0.0
          %6192 = vmatpush1.msra.mxu0 0.0
          %6193 = vmatprep.subr.mxu0 0.0
          %6194 = vmatpush1.msra.mxu0 0.0
          %6195 = vmatprep.subr.mxu0 0.0
          %6196 = vmatpush1.msra.mxu0 0.0
          %6197 = vmatprep.subr.mxu0 0.0
          %6198 = vmatpush1.msra.mxu0 %v6019
          %6199 = vmatprep.subr.mxu0 0.0
          %6200 = vmatpush2.msra.mxu0 0.0
          %6201 = vmatprep.subr.mxu0 0.0
          %6202 = vmatpush2.msra.mxu0 0.0
          %6203 = vmatprep.subr.mxu0 0.0
          %6204 = vmatpush2.msra.mxu0 0.0
          %6205 = vmatprep.subr.mxu0 0.0
          %6206 = vmatpush2.msra.mxu0 0.0
          %6207 = vmatprep.subr.mxu0 0.0
          %6208 = vmatpush2.msra.mxu0 0.0
          %6209 = vmatprep.subr.mxu0 0.0
          %6210 = vmatpush2.msra.mxu0 0.0
          %6211 = vmatprep.subr.mxu0 0.0
          %6212 = vmatpush2.msra.mxu0 0.0
          %6213 = vmatprep.subr.mxu0 0.0
          %6214 = vmatpush2.msra.mxu0 0.0
          %6215 = vmatprep.subr.mxu0 0.0
          %6216 = vmatpush2.msra.mxu0 0.0
          %6217 = vmatprep.subr.mxu0 0.0
          %6218 = vmatpush2.msra.mxu0 0.0
          %6219 = vmatprep.subr.mxu0 0.0
          %6220 = vmatpush2.msra.mxu0 0.0
          %6221 = vmatprep.subr.mxu0 0.0
          %6222 = vmatpush2.msra.mxu0 0.0
          %6223 = vmatprep.subr.mxu0 0.0
          %6224 = vmatpush2.msra.mxu0 0.0
          %6225 = vmatprep.subr.mxu0 0.0
          %6226 = vmatpush2.msra.mxu0 0.0
          %6227 = vmatprep.subr.mxu0 0.0
          %6228 = vmatpush2.msra.mxu0 0.0
          %6229 = vmatprep.subr.mxu0 0.0
          %6230 = vmatpush2.msra.mxu0 0.0
          %6231 = vmatprep.mubr.f32.mxu0 0.0
          %6232 = vmatmul.mubr.f32.gmra.mxu0 %v1428
          %v6233 = vpop.f32.mrf.mxu0
          %v6234 = vadd.f32 0.0, %v6233
          %v6235 = vpop.f32.mrf.mxu0
          %6236 = vdwg.mxu0
          %v6238 = vsel %vm1058, %v6234, 0
          %6240 = vmatprep.subr.mxu0 0.0
          %6241 = vmatpush1.msra.mxu0 0.0
          %6242 = vmatprep.subr.mxu0 0.0
          %6243 = vmatpush1.msra.mxu0 0.0
          %6244 = vmatprep.subr.mxu0 0.0
          %6245 = vmatpush1.msra.mxu0 0.0
          %6246 = vmatprep.subr.mxu0 0.0
          %6247 = vmatpush1.msra.mxu0 0.0
          %6248 = vmatprep.subr.mxu0 0.0
          %6249 = vmatpush1.msra.mxu0 0.0
          %6250 = vmatprep.subr.mxu0 0.0
          %6251 = vmatpush1.msra.mxu0 0.0
          %6252 = vmatprep.subr.mxu0 0.0
          %6253 = vmatpush1.msra.mxu0 0.0
          %6254 = vmatprep.subr.mxu0 0.0
          %6255 = vmatpush1.msra.mxu0 0.0
          %6256 = vmatprep.subr.mxu0 0.0
          %6257 = vmatpush1.msra.mxu0 0.0
          %6258 = vmatprep.subr.mxu0 0.0
          %6259 = vmatpush1.msra.mxu0 0.0
          %6260 = vmatprep.subr.mxu0 0.0
          %6261 = vmatpush1.msra.mxu0 0.0
          %6262 = vmatprep.subr.mxu0 0.0
          %6263 = vmatpush1.msra.mxu0 0.0
          %6264 = vmatprep.subr.mxu0 0.0
          %6265 = vmatpush1.msra.mxu0 %v1396
          %6266 = vmatprep.subr.mxu0 0.0
          %6267 = vmatpush1.msra.mxu0 %v1395
          %6268 = vmatprep.subr.mxu0 0.0
          %6269 = vmatpush1.msra.mxu0 %v1394
          %6270 = vmatprep.subr.mxu0 0.0
          %6271 = vmatpush1.msra.mxu0 %v1393
          %6272 = vmatprep.subr.mxu0 0.0
          %6273 = vmatpush2.msra.mxu0 0.0
          %6274 = vmatprep.subr.mxu0 0.0
          %6275 = vmatpush2.msra.mxu0 0.0
          %6276 = vmatprep.subr.mxu0 0.0
          %6277 = vmatpush2.msra.mxu0 0.0
          %6278 = vmatprep.subr.mxu0 0.0
          %6279 = vmatpush2.msra.mxu0 0.0
          %6280 = vmatprep.subr.mxu0 0.0
          %6281 = vmatpush2.msra.mxu0 0.0
          %6282 = vmatprep.subr.mxu0 0.0
          %6283 = vmatpush2.msra.mxu0 0.0
          %6284 = vmatprep.subr.mxu0 0.0
          %6285 = vmatpush2.msra.mxu0 0.0
          %6286 = vmatprep.subr.mxu0 0.0
          %6287 = vmatpush2.msra.mxu0 0.0
          %6288 = vmatprep.subr.mxu0 0.0
          %6289 = vmatpush2.msra.mxu0 0.0
          %6290 = vmatprep.subr.mxu0 0.0
          %6291 = vmatpush2.msra.mxu0 0.0
          %6292 = vmatprep.subr.mxu0 0.0
          %6293 = vmatpush2.msra.mxu0 0.0
          %6294 = vmatprep.subr.mxu0 0.0
          %6295 = vmatpush2.msra.mxu0 0.0
          %6296 = vmatprep.subr.mxu0 0.0
          %6297 = vmatpush2.msra.mxu0 0.0
          %6298 = vmatprep.subr.mxu0 0.0
          %6299 = vmatpush2.msra.mxu0 0.0
          %6300 = vmatprep.subr.mxu0 0.0
          %6301 = vmatpush2.msra.mxu0 0.0
          %6302 = vmatprep.subr.mxu0 0.0
          %6303 = vmatpush2.msra.mxu0 0.0
          %6304 = vmatprep.mubr.f32.mxu0 0.0
          %6305 = vmatmul.mubr.f32.gmra.mxu0 %v6238
          %v6306 = vpop.f32.mrf.mxu0
          %v6307 = vadd.f32 0.0, %v6306
          %v6308 = vpop.f32.mrf.mxu0
          %6309 = vdwg.mxu0
          %v6310 = vadd.f32 %v6164, %v6307
          %6311 = vmatprep.subr.mxu0 0.0
          %6312 = vmatpush1.msra.mxu0 0.0
          %6313 = vmatprep.subr.mxu0 0.0
          %6314 = vmatpush1.msra.mxu0 0.0
          %6315 = vmatprep.subr.mxu0 0.0
          %6316 = vmatpush1.msra.mxu0 0.0
          %6317 = vmatprep.subr.mxu0 0.0
          %6318 = vmatpush1.msra.mxu0 0.0
          %6319 = vmatprep.subr.mxu0 0.0
          %6320 = vmatpush1.msra.mxu0 0.0
          %6321 = vmatprep.subr.mxu0 0.0
          %6322 = vmatpush1.msra.mxu0 0.0
          %6323 = vmatprep.subr.mxu0 0.0
          %6324 = vmatpush1.msra.mxu0 0.0
          %6325 = vmatprep.subr.mxu0 0.0
          %6326 = vmatpush1.msra.mxu0 0.0
          %6327 = vmatprep.subr.mxu0 0.0
          %6328 = vmatpush1.msra.mxu0 0.0
          %6329 = vmatprep.subr.mxu0 0.0
          %6330 = vmatpush1.msra.mxu0 0.0
          %6331 = vmatprep.subr.mxu0 0.0
          %6332 = vmatpush1.msra.mxu0 0.0
          %6333 = vmatprep.subr.mxu0 0.0
          %6334 = vmatpush1.msra.mxu0 0.0
          %6335 = vmatprep.subr.mxu0 0.0
          %6336 = vmatpush1.msra.mxu0 0.0
          %6337 = vmatprep.subr.mxu0 0.0
          %6338 = vmatpush1.msra.mxu0 0.0
          %6339 = vmatprep.subr.mxu0 0.0
          %6340 = vmatpush1.msra.mxu0 0.0
          %6341 = vmatprep.subr.mxu0 0.0
          %6342 = vmatpush1.msra.mxu0 %v5950
          %6343 = vmatprep.subr.mxu0 0.0
          %6344 = vmatpush2.msra.mxu0 0.0
          %6345 = vmatprep.subr.mxu0 0.0
          %6346 = vmatpush2.msra.mxu0 0.0
          %6347 = vmatprep.subr.mxu0 0.0
          %6348 = vmatpush2.msra.mxu0 0.0
          %6349 = vmatprep.subr.mxu0 0.0
          %6350 = vmatpush2.msra.mxu0 0.0
          %6351 = vmatprep.subr.mxu0 0.0
          %6352 = vmatpush2.msra.mxu0 0.0
          %6353 = vmatprep.subr.mxu0 0.0
          %6354 = vmatpush2.msra.mxu0 0.0
          %6355 = vmatprep.subr.mxu0 0.0
          %6356 = vmatpush2.msra.mxu0 0.0
          %6357 = vmatprep.subr.mxu0 0.0
          %6358 = vmatpush2.msra.mxu0 0.0
          %6359 = vmatprep.subr.mxu0 0.0
          %6360 = vmatpush2.msra.mxu0 0.0
          %6361 = vmatprep.subr.mxu0 0.0
          %6362 = vmatpush2.msra.mxu0 0.0
          %6363 = vmatprep.subr.mxu0 0.0
          %6364 = vmatpush2.msra.mxu0 0.0
          %6365 = vmatprep.subr.mxu0 0.0
          %6366 = vmatpush2.msra.mxu0 0.0
          %6367 = vmatprep.subr.mxu0 0.0
          %6368 = vmatpush2.msra.mxu0 0.0
          %6369 = vmatprep.subr.mxu0 0.0
          %6370 = vmatpush2.msra.mxu0 0.0
          %6371 = vmatprep.subr.mxu0 0.0
          %6372 = vmatpush2.msra.mxu0 0.0
          %6373 = vmatprep.subr.mxu0 0.0
          %6374 = vmatpush2.msra.mxu0 0.0
          %6375 = vmatprep.mubr.f32.mxu0 0.0
          %6376 = vmatmul.mubr.f32.gmra.mxu0 %v1571
          %v6377 = vpop.f32.mrf.mxu0
          %v6378 = vadd.f32 0.0, %v6377
          %v6379 = vpop.f32.mrf.mxu0
          %6380 = vdwg.mxu0
          %v6382 = vsel %vm1058, %v6378, 0
          %6384 = vmatprep.subr.mxu0 0.0
          %6385 = vmatpush1.msra.mxu0 0.0
          %6386 = vmatprep.subr.mxu0 0.0
          %6387 = vmatpush1.msra.mxu0 0.0
          %6388 = vmatprep.subr.mxu0 0.0
          %6389 = vmatpush1.msra.mxu0 0.0
          %6390 = vmatprep.subr.mxu0 0.0
          %6391 = vmatpush1.msra.mxu0 0.0
          %6392 = vmatprep.subr.mxu0 0.0
          %6393 = vmatpush1.msra.mxu0 0.0
          %6394 = vmatprep.subr.mxu0 0.0
          %6395 = vmatpush1.msra.mxu0 0.0
          %6396 = vmatprep.subr.mxu0 0.0
          %6397 = vmatpush1.msra.mxu0 0.0
          %6398 = vmatprep.subr.mxu0 0.0
          %6399 = vmatpush1.msra.mxu0 0.0
          %6400 = vmatprep.subr.mxu0 0.0
          %6401 = vmatpush1.msra.mxu0 0.0
          %6402 = vmatprep.subr.mxu0 0.0
          %6403 = vmatpush1.msra.mxu0 0.0
          %6404 = vmatprep.subr.mxu0 0.0
          %6405 = vmatpush1.msra.mxu0 0.0
          %6406 = vmatprep.subr.mxu0 0.0
          %6407 = vmatpush1.msra.mxu0 0.0
          %6408 = vmatprep.subr.mxu0 0.0
          %6409 = vmatpush1.msra.mxu0 %v1400
          %6410 = vmatprep.subr.mxu0 0.0
          %6411 = vmatpush1.msra.mxu0 %v1399
          %6412 = vmatprep.subr.mxu0 0.0
          %6413 = vmatpush1.msra.mxu0 %v1398
          %6414 = vmatprep.subr.mxu0 0.0
          %6415 = vmatpush1.msra.mxu0 %v1397
          %6416 = vmatprep.subr.mxu0 0.0
          %6417 = vmatpush2.msra.mxu0 0.0
          %6418 = vmatprep.subr.mxu0 0.0
          %6419 = vmatpush2.msra.mxu0 0.0
          %6420 = vmatprep.subr.mxu0 0.0
          %6421 = vmatpush2.msra.mxu0 0.0
          %6422 = vmatprep.subr.mxu0 0.0
          %6423 = vmatpush2.msra.mxu0 0.0
          %6424 = vmatprep.subr.mxu0 0.0
          %6425 = vmatpush2.msra.mxu0 0.0
          %6426 = vmatprep.subr.mxu0 0.0
          %6427 = vmatpush2.msra.mxu0 0.0
          %6428 = vmatprep.subr.mxu0 0.0
          %6429 = vmatpush2.msra.mxu0 0.0
          %6430 = vmatprep.subr.mxu0 0.0
          %6431 = vmatpush2.msra.mxu0 0.0
          %6432 = vmatprep.subr.mxu0 0.0
          %6433 = vmatpush2.msra.mxu0 0.0
          %6434 = vmatprep.subr.mxu0 0.0
          %6435 = vmatpush2.msra.mxu0 0.0
          %6436 = vmatprep.subr.mxu0 0.0
          %6437 = vmatpush2.msra.mxu0 0.0
          %6438 = vmatprep.subr.mxu0 0.0
          %6439 = vmatpush2.msra.mxu0 0.0
          %6440 = vmatprep.subr.mxu0 0.0
          %6441 = vmatpush2.msra.mxu0 0.0
          %6442 = vmatprep.subr.mxu0 0.0
          %6443 = vmatpush2.msra.mxu0 0.0
          %6444 = vmatprep.subr.mxu0 0.0
          %6445 = vmatpush2.msra.mxu0 0.0
          %6446 = vmatprep.subr.mxu0 0.0
          %6447 = vmatpush2.msra.mxu0 0.0
          %6448 = vmatprep.mubr.f32.mxu0 0.0
          %6449 = vmatmul.mubr.f32.gmra.mxu0 %v6382
          %v6450 = vpop.f32.mrf.mxu0
          %v6451 = vadd.f32 0.0, %v6450
          %v6452 = vpop.f32.mrf.mxu0
          %6453 = vdwg.mxu0
          %v6454 = vadd.f32 %v6310, %v6451
          %6455 = vmatprep.subr.mxu0 0.0
          %6456 = vmatpush1.msra.mxu0 0.0
          %6457 = vmatprep.subr.mxu0 0.0
          %6458 = vmatpush1.msra.mxu0 0.0
          %6459 = vmatprep.subr.mxu0 0.0
          %6460 = vmatpush1.msra.mxu0 0.0
          %6461 = vmatprep.subr.mxu0 0.0
          %6462 = vmatpush1.msra.mxu0 0.0
          %6463 = vmatprep.subr.mxu0 0.0
          %6464 = vmatpush1.msra.mxu0 0.0
          %6465 = vmatprep.subr.mxu0 0.0
          %6466 = vmatpush1.msra.mxu0 0.0
          %6467 = vmatprep.subr.mxu0 0.0
          %6468 = vmatpush1.msra.mxu0 0.0
          %6469 = vmatprep.subr.mxu0 0.0
          %6470 = vmatpush1.msra.mxu0 0.0
          %6471 = vmatprep.subr.mxu0 0.0
          %6472 = vmatpush1.msra.mxu0 0.0
          %6473 = vmatprep.subr.mxu0 0.0
          %6474 = vmatpush1.msra.mxu0 0.0
          %6475 = vmatprep.subr.mxu0 0.0
          %6476 = vmatpush1.msra.mxu0 0.0
          %6477 = vmatprep.subr.mxu0 0.0
          %6478 = vmatpush1.msra.mxu0 0.0
          %6479 = vmatprep.subr.mxu0 0.0
          %6480 = vmatpush1.msra.mxu0 0.0
          %6481 = vmatprep.subr.mxu0 0.0
          %6482 = vmatpush1.msra.mxu0 0.0
          %6483 = vmatprep.subr.mxu0 0.0
          %6484 = vmatpush1.msra.mxu0 0.0
          %6485 = vmatprep.subr.mxu0 0.0
          %6486 = vmatpush1.msra.mxu0 %v6378
          %6487 = vmatprep.subr.mxu0 0.0
          %6488 = vmatpush2.msra.mxu0 0.0
          %6489 = vmatprep.subr.mxu0 0.0
          %6490 = vmatpush2.msra.mxu0 0.0
          %6491 = vmatprep.subr.mxu0 0.0
          %6492 = vmatpush2.msra.mxu0 0.0
          %6493 = vmatprep.subr.mxu0 0.0
          %6494 = vmatpush2.msra.mxu0 0.0
          %6495 = vmatprep.subr.mxu0 0.0
          %6496 = vmatpush2.msra.mxu0 0.0
          %6497 = vmatprep.subr.mxu0 0.0
          %6498 = vmatpush2.msra.mxu0 0.0
          %6499 = vmatprep.subr.mxu0 0.0
          %6500 = vmatpush2.msra.mxu0 0.0
          %6501 = vmatprep.subr.mxu0 0.0
          %6502 = vmatpush2.msra.mxu0 0.0
          %6503 = vmatprep.subr.mxu0 0.0
          %6504 = vmatpush2.msra.mxu0 0.0
          %6505 = vmatprep.subr.mxu0 0.0
          %6506 = vmatpush2.msra.mxu0 0.0
          %6507 = vmatprep.subr.mxu0 0.0
          %6508 = vmatpush2.msra.mxu0 0.0
          %6509 = vmatprep.subr.mxu0 0.0
          %6510 = vmatpush2.msra.mxu0 0.0
          %6511 = vmatprep.subr.mxu0 0.0
          %6512 = vmatpush2.msra.mxu0 0.0
          %6513 = vmatprep.subr.mxu0 0.0
          %6514 = vmatpush2.msra.mxu0 0.0
          %6515 = vmatprep.subr.mxu0 0.0
          %6516 = vmatpush2.msra.mxu0 0.0
          %6517 = vmatprep.subr.mxu0 0.0
          %6518 = vmatpush2.msra.mxu0 0.0
          %6519 = vmatprep.mubr.f32.mxu0 0.0
          %6520 = vmatmul.mubr.f32.gmra.mxu0 %v1571
          %v6521 = vpop.f32.mrf.mxu0
          %v6522 = vadd.f32 0.0, %v6521
          %v6523 = vpop.f32.mrf.mxu0
          %6524 = vdwg.mxu0
          %v6526 = vsel %vm1058, %v6522, 0
          %6528 = vmatprep.subr.mxu0 0.0
          %6529 = vmatpush1.msra.mxu0 0.0
          %6530 = vmatprep.subr.mxu0 0.0
          %6531 = vmatpush1.msra.mxu0 0.0
          %6532 = vmatprep.subr.mxu0 0.0
          %6533 = vmatpush1.msra.mxu0 0.0
          %6534 = vmatprep.subr.mxu0 0.0
          %6535 = vmatpush1.msra.mxu0 0.0
          %6536 = vmatprep.subr.mxu0 0.0
          %6537 = vmatpush1.msra.mxu0 0.0
          %6538 = vmatprep.subr.mxu0 0.0
          %6539 = vmatpush1.msra.mxu0 0.0
          %6540 = vmatprep.subr.mxu0 0.0
          %6541 = vmatpush1.msra.mxu0 0.0
          %6542 = vmatprep.subr.mxu0 0.0
          %6543 = vmatpush1.msra.mxu0 0.0
          %6544 = vmatprep.subr.mxu0 0.0
          %6545 = vmatpush1.msra.mxu0 0.0
          %6546 = vmatprep.subr.mxu0 0.0
          %6547 = vmatpush1.msra.mxu0 0.0
          %6548 = vmatprep.subr.mxu0 0.0
          %6549 = vmatpush1.msra.mxu0 0.0
          %6550 = vmatprep.subr.mxu0 0.0
          %6551 = vmatpush1.msra.mxu0 0.0
          %6552 = vmatprep.subr.mxu0 0.0
          %6553 = vmatpush1.msra.mxu0 %v1404
          %6554 = vmatprep.subr.mxu0 0.0
          %6555 = vmatpush1.msra.mxu0 %v1403
          %6556 = vmatprep.subr.mxu0 0.0
          %6557 = vmatpush1.msra.mxu0 %v1402
          %6558 = vmatprep.subr.mxu0 0.0
          %6559 = vmatpush1.msra.mxu0 %v1401
          %6560 = vmatprep.subr.mxu0 0.0
          %6561 = vmatpush2.msra.mxu0 0.0
          %6562 = vmatprep.subr.mxu0 0.0
          %6563 = vmatpush2.msra.mxu0 0.0
          %6564 = vmatprep.subr.mxu0 0.0
          %6565 = vmatpush2.msra.mxu0 0.0
          %6566 = vmatprep.subr.mxu0 0.0
          %6567 = vmatpush2.msra.mxu0 0.0
          %6568 = vmatprep.subr.mxu0 0.0
          %6569 = vmatpush2.msra.mxu0 0.0
          %6570 = vmatprep.subr.mxu0 0.0
          %6571 = vmatpush2.msra.mxu0 0.0
          %6572 = vmatprep.subr.mxu0 0.0
          %6573 = vmatpush2.msra.mxu0 0.0
          %6574 = vmatprep.subr.mxu0 0.0
          %6575 = vmatpush2.msra.mxu0 0.0
          %6576 = vmatprep.subr.mxu0 0.0
          %6577 = vmatpush2.msra.mxu0 0.0
          %6578 = vmatprep.subr.mxu0 0.0
          %6579 = vmatpush2.msra.mxu0 0.0
          %6580 = vmatprep.subr.mxu0 0.0
          %6581 = vmatpush2.msra.mxu0 0.0
          %6582 = vmatprep.subr.mxu0 0.0
          %6583 = vmatpush2.msra.mxu0 0.0
          %6584 = vmatprep.subr.mxu0 0.0
          %6585 = vmatpush2.msra.mxu0 0.0
          %6586 = vmatprep.subr.mxu0 0.0
          %6587 = vmatpush2.msra.mxu0 0.0
          %6588 = vmatprep.subr.mxu0 0.0
          %6589 = vmatpush2.msra.mxu0 0.0
          %6590 = vmatprep.subr.mxu0 0.0
          %6591 = vmatpush2.msra.mxu0 0.0
          %6592 = vmatprep.mubr.f32.mxu0 0.0
          %6593 = vmatmul.mubr.f32.gmra.mxu0 %v6526
          %v6594 = vpop.f32.mrf.mxu0
          %v6595 = vadd.f32 0.0, %v6594
          %v6596 = vpop.f32.mrf.mxu0
          %6597 = vdwg.mxu0
          %v6598 = vadd.f32 %v6454, %v6595
          %v6599 = vadd.f32 %v5947, %v6598
          %v6601 = vlaneseq
          %v6602 = vshrl.u32 %v6601, 7
          %v6603 = vsub.s32 0, %v6602
          %v6604 = vrot.slane %v1425, %v6603
          %v6606 = vadd.f32 %v6599, %v6604
          %v6607 = vxor.u32 %v6606, 2147483648
          %v6608 = vmul.f32 %v6607, 1.442695
          %v6609 = vpow.pop %v6608
          %v6610 = vadd.f32 %v6609, 1.0
          %v6611 = vrcp.pop %v6610
          %v6612 = vmul.f32 1.0, %v6611
          %v6613 = vmul.f32 %v6612, %v5950
          %6614 = vmatprep.subr.mxu0 0.0
          %6615 = vmatpush1.msra.mxu0 0.0
          %6616 = vmatprep.subr.mxu0 0.0
          %6617 = vmatpush1.msra.mxu0 0.0
          %6618 = vmatprep.subr.mxu0 0.0
          %6619 = vmatpush1.msra.mxu0 0.0
          %6620 = vmatprep.subr.mxu0 0.0
          %6621 = vmatpush1.msra.mxu0 0.0
          %6622 = vmatprep.subr.mxu0 0.0
          %6623 = vmatpush1.msra.mxu0 0.0
          %6624 = vmatprep.subr.mxu0 0.0
          %6625 = vmatpush1.msra.mxu0 0.0
          %6626 = vmatprep.subr.mxu0 0.0
          %6627 = vmatpush1.msra.mxu0 0.0
          %6628 = vmatprep.subr.mxu0 0.0
          %6629 = vmatpush1.msra.mxu0 0.0
          %6630 = vmatprep.subr.mxu0 0.0
          %6631 = vmatpush1.msra.mxu0 0.0
          %6632 = vmatprep.subr.mxu0 0.0
          %6633 = vmatpush1.msra.mxu0 0.0
          %6634 = vmatprep.subr.mxu0 0.0
          %6635 = vmatpush1.msra.mxu0 0.0
          %6636 = vmatprep.subr.mxu0 0.0
          %6637 = vmatpush1.msra.mxu0 0.0
          %6638 = vmatprep.subr.mxu0 0.0
          %6639 = vmatpush1.msra.mxu0 0.0
          %6640 = vmatprep.subr.mxu0 0.0
          %6641 = vmatpush1.msra.mxu0 0.0
          %6642 = vmatprep.subr.mxu0 0.0
          %6643 = vmatpush1.msra.mxu0 0.0
          %6644 = vmatprep.subr.mxu0 0.0
          %6645 = vmatpush1.msra.mxu0 %v6613
          %6646 = vmatprep.subr.mxu0 0.0
          %6647 = vmatpush2.msra.mxu0 0.0
          %6648 = vmatprep.subr.mxu0 0.0
          %6649 = vmatpush2.msra.mxu0 0.0
          %6650 = vmatprep.subr.mxu0 0.0
          %6651 = vmatpush2.msra.mxu0 0.0
          %6652 = vmatprep.subr.mxu0 0.0
          %6653 = vmatpush2.msra.mxu0 0.0
          %6654 = vmatprep.subr.mxu0 0.0
          %6655 = vmatpush2.msra.mxu0 0.0
          %6656 = vmatprep.subr.mxu0 0.0
          %6657 = vmatpush2.msra.mxu0 0.0
          %6658 = vmatprep.subr.mxu0 0.0
          %6659 = vmatpush2.msra.mxu0 0.0
          %6660 = vmatprep.subr.mxu0 0.0
          %6661 = vmatpush2.msra.mxu0 0.0
          %6662 = vmatprep.subr.mxu0 0.0
          %6663 = vmatpush2.msra.mxu0 0.0
          %6664 = vmatprep.subr.mxu0 0.0
          %6665 = vmatpush2.msra.mxu0 0.0
          %6666 = vmatprep.subr.mxu0 0.0
          %6667 = vmatpush2.msra.mxu0 0.0
          %6668 = vmatprep.subr.mxu0 0.0
          %6669 = vmatpush2.msra.mxu0 0.0
          %6670 = vmatprep.subr.mxu0 0.0
          %6671 = vmatpush2.msra.mxu0 0.0
          %6672 = vmatprep.subr.mxu0 0.0
          %6673 = vmatpush2.msra.mxu0 0.0
          %6674 = vmatprep.subr.mxu0 0.0
          %6675 = vmatpush2.msra.mxu0 0.0
          %6676 = vmatprep.subr.mxu0 0.0
          %6677 = vmatpush2.msra.mxu0 0.0
          %6678 = vmatprep.mubr.f32.mxu0 0.0
          %6679 = vmatmul.mubr.f32.gmra.mxu0 %v1428
          %v6680 = vpop.f32.mrf.mxu0
          %v6681 = vadd.f32 0.0, %v6680
          %v6682 = vpop.f32.mrf.mxu0
          %6683 = vdwg.mxu0
          %v6685 = vsel %vm1058, %v6681, 0
          %6687 = vmatprep.subr.mxu0 0.0
          %6688 = vmatpush1.msra.mxu0 0.0
          %6689 = vmatprep.subr.mxu0 0.0
          %6690 = vmatpush1.msra.mxu0 0.0
          %6691 = vmatprep.subr.mxu0 0.0
          %6692 = vmatpush1.msra.mxu0 0.0
          %6693 = vmatprep.subr.mxu0 0.0
          %6694 = vmatpush1.msra.mxu0 0.0
          %6695 = vmatprep.subr.mxu0 0.0
          %6696 = vmatpush1.msra.mxu0 0.0
          %6697 = vmatprep.subr.mxu0 0.0
          %6698 = vmatpush1.msra.mxu0 0.0
          %6699 = vmatprep.subr.mxu0 0.0
          %6700 = vmatpush1.msra.mxu0 0.0
          %6701 = vmatprep.subr.mxu0 0.0
          %6702 = vmatpush1.msra.mxu0 0.0
          %6703 = vmatprep.subr.mxu0 0.0
          %6704 = vmatpush1.msra.mxu0 0.0
          %6705 = vmatprep.subr.mxu0 0.0
          %6706 = vmatpush1.msra.mxu0 0.0
          %6707 = vmatprep.subr.mxu0 0.0
          %6708 = vmatpush1.msra.mxu0 0.0
          %6709 = vmatprep.subr.mxu0 0.0
          %6710 = vmatpush1.msra.mxu0 0.0
          %6711 = vmatprep.subr.mxu0 0.0
          %6712 = vmatpush1.msra.mxu0 %v1412
          %6713 = vmatprep.subr.mxu0 0.0
          %6714 = vmatpush1.msra.mxu0 %v1411
          %6715 = vmatprep.subr.mxu0 0.0
          %6716 = vmatpush1.msra.mxu0 %v1410
          %6717 = vmatprep.subr.mxu0 0.0
          %6718 = vmatpush1.msra.mxu0 %v1409
          %6719 = vmatprep.subr.mxu0 0.0
          %6720 = vmatpush2.msra.mxu0 0.0
          %6721 = vmatprep.subr.mxu0 0.0
          %6722 = vmatpush2.msra.mxu0 0.0
          %6723 = vmatprep.subr.mxu0 0.0
          %6724 = vmatpush2.msra.mxu0 0.0
          %6725 = vmatprep.subr.mxu0 0.0
          %6726 = vmatpush2.msra.mxu0 0.0
          %6727 = vmatprep.subr.mxu0 0.0
          %6728 = vmatpush2.msra.mxu0 0.0
          %6729 = vmatprep.subr.mxu0 0.0
          %6730 = vmatpush2.msra.mxu0 0.0
          %6731 = vmatprep.subr.mxu0 0.0
          %6732 = vmatpush2.msra.mxu0 0.0
          %6733 = vmatprep.subr.mxu0 0.0
          %6734 = vmatpush2.msra.mxu0 0.0
          %6735 = vmatprep.subr.mxu0 0.0
          %6736 = vmatpush2.msra.mxu0 0.0
          %6737 = vmatprep.subr.mxu0 0.0
          %6738 = vmatpush2.msra.mxu0 0.0
          %6739 = vmatprep.subr.mxu0 0.0
          %6740 = vmatpush2.msra.mxu0 0.0
          %6741 = vmatprep.subr.mxu0 0.0
          %6742 = vmatpush2.msra.mxu0 0.0
          %6743 = vmatprep.subr.mxu0 0.0
          %6744 = vmatpush2.msra.mxu0 0.0
          %6745 = vmatprep.subr.mxu0 0.0
          %6746 = vmatpush2.msra.mxu0 0.0
          %6747 = vmatprep.subr.mxu0 0.0
          %6748 = vmatpush2.msra.mxu0 0.0
          %6749 = vmatprep.subr.mxu0 0.0
          %6750 = vmatpush2.msra.mxu0 0.0
          %6751 = vmatprep.mubr.f32.mxu0 0.0
          %6752 = vmatmul.mubr.f32.gmra.mxu0 %v6685
          %v6753 = vpop.f32.mrf.mxu0
          %v6754 = vadd.f32 0.0, %v6753
          %v6755 = vpop.f32.mrf.mxu0
          %6756 = vdwg.mxu0
          %v6758 = vsel %vm1058, %v6613, 0
          %6760 = vmatprep.subr.mxu0 0.0
          %6761 = vmatpush1.msra.mxu0 0.0
          %6762 = vmatprep.subr.mxu0 0.0
          %6763 = vmatpush1.msra.mxu0 0.0
          %6764 = vmatprep.subr.mxu0 0.0
          %6765 = vmatpush1.msra.mxu0 0.0
          %6766 = vmatprep.subr.mxu0 0.0
          %6767 = vmatpush1.msra.mxu0 0.0
          %6768 = vmatprep.subr.mxu0 0.0
          %6769 = vmatpush1.msra.mxu0 0.0
          %6770 = vmatprep.subr.mxu0 0.0
          %6771 = vmatpush1.msra.mxu0 0.0
          %6772 = vmatprep.subr.mxu0 0.0
          %6773 = vmatpush1.msra.mxu0 0.0
          %6774 = vmatprep.subr.mxu0 0.0
          %6775 = vmatpush1.msra.mxu0 0.0
          %6776 = vmatprep.subr.mxu0 0.0
          %6777 = vmatpush1.msra.mxu0 0.0
          %6778 = vmatprep.subr.mxu0 0.0
          %6779 = vmatpush1.msra.mxu0 0.0
          %6780 = vmatprep.subr.mxu0 0.0
          %6781 = vmatpush1.msra.mxu0 0.0
          %6782 = vmatprep.subr.mxu0 0.0
          %6783 = vmatpush1.msra.mxu0 0.0
          %6784 = vmatprep.subr.mxu0 0.0
          %6785 = vmatpush1.msra.mxu0 %v1408
          %6786 = vmatprep.subr.mxu0 0.0
          %6787 = vmatpush1.msra.mxu0 %v1407
          %6788 = vmatprep.subr.mxu0 0.0
          %6789 = vmatpush1.msra.mxu0 %v1406
          %6790 = vmatprep.subr.mxu0 0.0
          %6791 = vmatpush1.msra.mxu0 %v1405
          %6792 = vmatprep.subr.mxu0 0.0
          %6793 = vmatpush2.msra.mxu0 0.0
          %6794 = vmatprep.subr.mxu0 0.0
          %6795 = vmatpush2.msra.mxu0 0.0
          %6796 = vmatprep.subr.mxu0 0.0
          %6797 = vmatpush2.msra.mxu0 0.0
          %6798 = vmatprep.subr.mxu0 0.0
          %6799 = vmatpush2.msra.mxu0 0.0
          %6800 = vmatprep.subr.mxu0 0.0
          %6801 = vmatpush2.msra.mxu0 0.0
          %6802 = vmatprep.subr.mxu0 0.0
          %6803 = vmatpush2.msra.mxu0 0.0
          %6804 = vmatprep.subr.mxu0 0.0
          %6805 = vmatpush2.msra.mxu0 0.0
          %6806 = vmatprep.subr.mxu0 0.0
          %6807 = vmatpush2.msra.mxu0 0.0
          %6808 = vmatprep.subr.mxu0 0.0
          %6809 = vmatpush2.msra.mxu0 0.0
          %6810 = vmatprep.subr.mxu0 0.0
          %6811 = vmatpush2.msra.mxu0 0.0
          %6812 = vmatprep.subr.mxu0 0.0
          %6813 = vmatpush2.msra.mxu0 0.0
          %6814 = vmatprep.subr.mxu0 0.0
          %6815 = vmatpush2.msra.mxu0 0.0
          %6816 = vmatprep.subr.mxu0 0.0
          %6817 = vmatpush2.msra.mxu0 0.0
          %6818 = vmatprep.subr.mxu0 0.0
          %6819 = vmatpush2.msra.mxu0 0.0
          %6820 = vmatprep.subr.mxu0 0.0
          %6821 = vmatpush2.msra.mxu0 0.0
          %6822 = vmatprep.subr.mxu0 0.0
          %6823 = vmatpush2.msra.mxu0 0.0
          %6824 = vmatprep.mubr.f32.mxu0 0.0
          %6825 = vmatmul.mubr.f32.gmra.mxu0 %v6758
          %v6826 = vpop.f32.mrf.mxu0
          %v6827 = vadd.f32 %v6754, %v6826
          %v6828 = vpop.f32.mrf.mxu0
          %6829 = vdwg.mxu0
          %6830 = vmatprep.subr.mxu0 0.0
          %6831 = vmatpush1.msra.mxu0 0.0
          %6832 = vmatprep.subr.mxu0 0.0
          %6833 = vmatpush1.msra.mxu0 0.0
          %6834 = vmatprep.subr.mxu0 0.0
          %6835 = vmatpush1.msra.mxu0 0.0
          %6836 = vmatprep.subr.mxu0 0.0
          %6837 = vmatpush1.msra.mxu0 0.0
          %6838 = vmatprep.subr.mxu0 0.0
          %6839 = vmatpush1.msra.mxu0 0.0
          %6840 = vmatprep.subr.mxu0 0.0
          %6841 = vmatpush1.msra.mxu0 0.0
          %6842 = vmatprep.subr.mxu0 0.0
          %6843 = vmatpush1.msra.mxu0 0.0
          %6844 = vmatprep.subr.mxu0 0.0
          %6845 = vmatpush1.msra.mxu0 0.0
          %6846 = vmatprep.subr.mxu0 0.0
          %6847 = vmatpush1.msra.mxu0 0.0
          %6848 = vmatprep.subr.mxu0 0.0
          %6849 = vmatpush1.msra.mxu0 0.0
          %6850 = vmatprep.subr.mxu0 0.0
          %6851 = vmatpush1.msra.mxu0 0.0
          %6852 = vmatprep.subr.mxu0 0.0
          %6853 = vmatpush1.msra.mxu0 0.0
          %6854 = vmatprep.subr.mxu0 0.0
          %6855 = vmatpush1.msra.mxu0 0.0
          %6856 = vmatprep.subr.mxu0 0.0
          %6857 = vmatpush1.msra.mxu0 0.0
          %6858 = vmatprep.subr.mxu0 0.0
          %6859 = vmatpush1.msra.mxu0 0.0
          %6860 = vmatprep.subr.mxu0 0.0
          %6861 = vmatpush1.msra.mxu0 %v6681
          %6862 = vmatprep.subr.mxu0 0.0
          %6863 = vmatpush2.msra.mxu0 0.0
          %6864 = vmatprep.subr.mxu0 0.0
          %6865 = vmatpush2.msra.mxu0 0.0
          %6866 = vmatprep.subr.mxu0 0.0
          %6867 = vmatpush2.msra.mxu0 0.0
          %6868 = vmatprep.subr.mxu0 0.0
          %6869 = vmatpush2.msra.mxu0 0.0
          %6870 = vmatprep.subr.mxu0 0.0
          %6871 = vmatpush2.msra.mxu0 0.0
          %6872 = vmatprep.subr.mxu0 0.0
          %6873 = vmatpush2.msra.mxu0 0.0
          %6874 = vmatprep.subr.mxu0 0.0
          %6875 = vmatpush2.msra.mxu0 0.0
          %6876 = vmatprep.subr.mxu0 0.0
          %6877 = vmatpush2.msra.mxu0 0.0
          %6878 = vmatprep.subr.mxu0 0.0
          %6879 = vmatpush2.msra.mxu0 0.0
          %6880 = vmatprep.subr.mxu0 0.0
          %6881 = vmatpush2.msra.mxu0 0.0
          %6882 = vmatprep.subr.mxu0 0.0
          %6883 = vmatpush2.msra.mxu0 0.0
          %6884 = vmatprep.subr.mxu0 0.0
          %6885 = vmatpush2.msra.mxu0 0.0
          %6886 = vmatprep.subr.mxu0 0.0
          %6887 = vmatpush2.msra.mxu0 0.0
          %6888 = vmatprep.subr.mxu0 0.0
          %6889 = vmatpush2.msra.mxu0 0.0
          %6890 = vmatprep.subr.mxu0 0.0
          %6891 = vmatpush2.msra.mxu0 0.0
          %6892 = vmatprep.subr.mxu0 0.0
          %6893 = vmatpush2.msra.mxu0 0.0
          %6894 = vmatprep.mubr.f32.mxu0 0.0
          %6895 = vmatmul.mubr.f32.gmra.mxu0 %v1428
          %v6896 = vpop.f32.mrf.mxu0
          %v6897 = vadd.f32 0.0, %v6896
          %v6898 = vpop.f32.mrf.mxu0
          %6899 = vdwg.mxu0
          %v6901 = vsel %vm1058, %v6897, 0
          %6903 = vmatprep.subr.mxu0 0.0
          %6904 = vmatpush1.msra.mxu0 0.0
          %6905 = vmatprep.subr.mxu0 0.0
          %6906 = vmatpush1.msra.mxu0 0.0
          %6907 = vmatprep.subr.mxu0 0.0
          %6908 = vmatpush1.msra.mxu0 0.0
          %6909 = vmatprep.subr.mxu0 0.0
          %6910 = vmatpush1.msra.mxu0 0.0
          %6911 = vmatprep.subr.mxu0 0.0
          %6912 = vmatpush1.msra.mxu0 0.0
          %6913 = vmatprep.subr.mxu0 0.0
          %6914 = vmatpush1.msra.mxu0 0.0
          %6915 = vmatprep.subr.mxu0 0.0
          %6916 = vmatpush1.msra.mxu0 0.0
          %6917 = vmatprep.subr.mxu0 0.0
          %6918 = vmatpush1.msra.mxu0 0.0
          %6919 = vmatprep.subr.mxu0 0.0
          %6920 = vmatpush1.msra.mxu0 0.0
          %6921 = vmatprep.subr.mxu0 0.0
          %6922 = vmatpush1.msra.mxu0 0.0
          %6923 = vmatprep.subr.mxu0 0.0
          %6924 = vmatpush1.msra.mxu0 0.0
          %6925 = vmatprep.subr.mxu0 0.0
          %6926 = vmatpush1.msra.mxu0 0.0
          %6927 = vmatprep.subr.mxu0 0.0
          %6928 = vmatpush1.msra.mxu0 %v1416
          %6929 = vmatprep.subr.mxu0 0.0
          %6930 = vmatpush1.msra.mxu0 %v1415
          %6931 = vmatprep.subr.mxu0 0.0
          %6932 = vmatpush1.msra.mxu0 %v1414
          %6933 = vmatprep.subr.mxu0 0.0
          %6934 = vmatpush1.msra.mxu0 %v1413
          %6935 = vmatprep.subr.mxu0 0.0
          %6936 = vmatpush2.msra.mxu0 0.0
          %6937 = vmatprep.subr.mxu0 0.0
          %6938 = vmatpush2.msra.mxu0 0.0
          %6939 = vmatprep.subr.mxu0 0.0
          %6940 = vmatpush2.msra.mxu0 0.0
          %6941 = vmatprep.subr.mxu0 0.0
          %6942 = vmatpush2.msra.mxu0 0.0
          %6943 = vmatprep.subr.mxu0 0.0
          %6944 = vmatpush2.msra.mxu0 0.0
          %6945 = vmatprep.subr.mxu0 0.0
          %6946 = vmatpush2.msra.mxu0 0.0
          %6947 = vmatprep.subr.mxu0 0.0
          %6948 = vmatpush2.msra.mxu0 0.0
          %6949 = vmatprep.subr.mxu0 0.0
          %6950 = vmatpush2.msra.mxu0 0.0
          %6951 = vmatprep.subr.mxu0 0.0
          %6952 = vmatpush2.msra.mxu0 0.0
          %6953 = vmatprep.subr.mxu0 0.0
          %6954 = vmatpush2.msra.mxu0 0.0
          %6955 = vmatprep.subr.mxu0 0.0
          %6956 = vmatpush2.msra.mxu0 0.0
          %6957 = vmatprep.subr.mxu0 0.0
          %6958 = vmatpush2.msra.mxu0 0.0
          %6959 = vmatprep.subr.mxu0 0.0
          %6960 = vmatpush2.msra.mxu0 0.0
          %6961 = vmatprep.subr.mxu0 0.0
          %6962 = vmatpush2.msra.mxu0 0.0
          %6963 = vmatprep.subr.mxu0 0.0
          %6964 = vmatpush2.msra.mxu0 0.0
          %6965 = vmatprep.subr.mxu0 0.0
          %6966 = vmatpush2.msra.mxu0 0.0
          %6967 = vmatprep.mubr.f32.mxu0 0.0
          %6968 = vmatmul.mubr.f32.gmra.mxu0 %v6901
          %v6969 = vpop.f32.mrf.mxu0
          %v6970 = vadd.f32 0.0, %v6969
          %v6971 = vpop.f32.mrf.mxu0
          %6972 = vdwg.mxu0
          %v6973 = vadd.f32 %v6827, %v6970
          %6974 = vmatprep.subr.mxu0 0.0
          %6975 = vmatpush1.msra.mxu0 0.0
          %6976 = vmatprep.subr.mxu0 0.0
          %6977 = vmatpush1.msra.mxu0 0.0
          %6978 = vmatprep.subr.mxu0 0.0
          %6979 = vmatpush1.msra.mxu0 0.0
          %6980 = vmatprep.subr.mxu0 0.0
          %6981 = vmatpush1.msra.mxu0 0.0
          %6982 = vmatprep.subr.mxu0 0.0
          %6983 = vmatpush1.msra.mxu0 0.0
          %6984 = vmatprep.subr.mxu0 0.0
          %6985 = vmatpush1.msra.mxu0 0.0
          %6986 = vmatprep.subr.mxu0 0.0
          %6987 = vmatpush1.msra.mxu0 0.0
          %6988 = vmatprep.subr.mxu0 0.0
          %6989 = vmatpush1.msra.mxu0 0.0
          %6990 = vmatprep.subr.mxu0 0.0
          %6991 = vmatpush1.msra.mxu0 0.0
          %6992 = vmatprep.subr.mxu0 0.0
          %6993 = vmatpush1.msra.mxu0 0.0
          %6994 = vmatprep.subr.mxu0 0.0
          %6995 = vmatpush1.msra.mxu0 0.0
          %6996 = vmatprep.subr.mxu0 0.0
          %6997 = vmatpush1.msra.mxu0 0.0
          %6998 = vmatprep.subr.mxu0 0.0
          %6999 = vmatpush1.msra.mxu0 0.0
          %7000 = vmatprep.subr.mxu0 0.0
          %7001 = vmatpush1.msra.mxu0 0.0
          %7002 = vmatprep.subr.mxu0 0.0
          %7003 = vmatpush1.msra.mxu0 0.0
          %7004 = vmatprep.subr.mxu0 0.0
          %7005 = vmatpush1.msra.mxu0 %v6613
          %7006 = vmatprep.subr.mxu0 0.0
          %7007 = vmatpush2.msra.mxu0 0.0
          %7008 = vmatprep.subr.mxu0 0.0
          %7009 = vmatpush2.msra.mxu0 0.0
          %7010 = vmatprep.subr.mxu0 0.0
          %7011 = vmatpush2.msra.mxu0 0.0
          %7012 = vmatprep.subr.mxu0 0.0
          %7013 = vmatpush2.msra.mxu0 0.0
          %7014 = vmatprep.subr.mxu0 0.0
          %7015 = vmatpush2.msra.mxu0 0.0
          %7016 = vmatprep.subr.mxu0 0.0
          %7017 = vmatpush2.msra.mxu0 0.0
          %7018 = vmatprep.subr.mxu0 0.0
          %7019 = vmatpush2.msra.mxu0 0.0
          %7020 = vmatprep.subr.mxu0 0.0
          %7021 = vmatpush2.msra.mxu0 0.0
          %7022 = vmatprep.subr.mxu0 0.0
          %7023 = vmatpush2.msra.mxu0 0.0
          %7024 = vmatprep.subr.mxu0 0.0
          %7025 = vmatpush2.msra.mxu0 0.0
          %7026 = vmatprep.subr.mxu0 0.0
          %7027 = vmatpush2.msra.mxu0 0.0
          %7028 = vmatprep.subr.mxu0 0.0
          %7029 = vmatpush2.msra.mxu0 0.0
          %7030 = vmatprep.subr.mxu0 0.0
          %7031 = vmatpush2.msra.mxu0 0.0
          %7032 = vmatprep.subr.mxu0 0.0
          %7033 = vmatpush2.msra.mxu0 0.0
          %7034 = vmatprep.subr.mxu0 0.0
          %7035 = vmatpush2.msra.mxu0 0.0
          %7036 = vmatprep.subr.mxu0 0.0
          %7037 = vmatpush2.msra.mxu0 0.0
          %7038 = vmatprep.mubr.f32.mxu0 0.0
          %7039 = vmatmul.mubr.f32.gmra.mxu0 %v1571
          %v7040 = vpop.f32.mrf.mxu0
          %v7041 = vadd.f32 0.0, %v7040
          %v7042 = vpop.f32.mrf.mxu0
          %7043 = vdwg.mxu0
          %v7045 = vsel %vm1058, %v7041, 0
          %7047 = vmatprep.subr.mxu0 0.0
          %7048 = vmatpush1.msra.mxu0 0.0
          %7049 = vmatprep.subr.mxu0 0.0
          %7050 = vmatpush1.msra.mxu0 0.0
          %7051 = vmatprep.subr.mxu0 0.0
          %7052 = vmatpush1.msra.mxu0 0.0
          %7053 = vmatprep.subr.mxu0 0.0
          %7054 = vmatpush1.msra.mxu0 0.0
          %7055 = vmatprep.subr.mxu0 0.0
          %7056 = vmatpush1.msra.mxu0 0.0
          %7057 = vmatprep.subr.mxu0 0.0
          %7058 = vmatpush1.msra.mxu0 0.0
          %7059 = vmatprep.subr.mxu0 0.0
          %7060 = vmatpush1.msra.mxu0 0.0
          %7061 = vmatprep.subr.mxu0 0.0
          %7062 = vmatpush1.msra.mxu0 0.0
          %7063 = vmatprep.subr.mxu0 0.0
          %7064 = vmatpush1.msra.mxu0 0.0
          %7065 = vmatprep.subr.mxu0 0.0
          %7066 = vmatpush1.msra.mxu0 0.0
          %7067 = vmatprep.subr.mxu0 0.0
          %7068 = vmatpush1.msra.mxu0 0.0
          %7069 = vmatprep.subr.mxu0 0.0
          %7070 = vmatpush1.msra.mxu0 0.0
          %7071 = vmatprep.subr.mxu0 0.0
          %7072 = vmatpush1.msra.mxu0 %v1420
          %7073 = vmatprep.subr.mxu0 0.0
          %7074 = vmatpush1.msra.mxu0 %v1419
          %7075 = vmatprep.subr.mxu0 0.0
          %7076 = vmatpush1.msra.mxu0 %v1418
          %7077 = vmatprep.subr.mxu0 0.0
          %7078 = vmatpush1.msra.mxu0 %v1417
          %7079 = vmatprep.subr.mxu0 0.0
          %7080 = vmatpush2.msra.mxu0 0.0
          %7081 = vmatprep.subr.mxu0 0.0
          %7082 = vmatpush2.msra.mxu0 0.0
          %7083 = vmatprep.subr.mxu0 0.0
          %7084 = vmatpush2.msra.mxu0 0.0
          %7085 = vmatprep.subr.mxu0 0.0
          %7086 = vmatpush2.msra.mxu0 0.0
          %7087 = vmatprep.subr.mxu0 0.0
          %7088 = vmatpush2.msra.mxu0 0.0
          %7089 = vmatprep.subr.mxu0 0.0
          %7090 = vmatpush2.msra.mxu0 0.0
          %7091 = vmatprep.subr.mxu0 0.0
          %7092 = vmatpush2.msra.mxu0 0.0
          %7093 = vmatprep.subr.mxu0 0.0
          %7094 = vmatpush2.msra.mxu0 0.0
          %7095 = vmatprep.subr.mxu0 0.0
          %7096 = vmatpush2.msra.mxu0 0.0
          %7097 = vmatprep.subr.mxu0 0.0
          %7098 = vmatpush2.msra.mxu0 0.0
          %7099 = vmatprep.subr.mxu0 0.0
          %7100 = vmatpush2.msra.mxu0 0.0
          %7101 = vmatprep.subr.mxu0 0.0
          %7102 = vmatpush2.msra.mxu0 0.0
          %7103 = vmatprep.subr.mxu0 0.0
          %7104 = vmatpush2.msra.mxu0 0.0
          %7105 = vmatprep.subr.mxu0 0.0
          %7106 = vmatpush2.msra.mxu0 0.0
          %7107 = vmatprep.subr.mxu0 0.0
          %7108 = vmatpush2.msra.mxu0 0.0
          %7109 = vmatprep.subr.mxu0 0.0
          %7110 = vmatpush2.msra.mxu0 0.0
          %7111 = vmatprep.mubr.f32.mxu0 0.0
          %7112 = vmatmul.mubr.f32.gmra.mxu0 %v7045
          %v7113 = vpop.f32.mrf.mxu0
          %v7114 = vadd.f32 0.0, %v7113
          %v7115 = vpop.f32.mrf.mxu0
          %7116 = vdwg.mxu0
          %v7117 = vadd.f32 %v6973, %v7114
          %7118 = vmatprep.subr.mxu0 0.0
          %7119 = vmatpush1.msra.mxu0 0.0
          %7120 = vmatprep.subr.mxu0 0.0
          %7121 = vmatpush1.msra.mxu0 0.0
          %7122 = vmatprep.subr.mxu0 0.0
          %7123 = vmatpush1.msra.mxu0 0.0
          %7124 = vmatprep.subr.mxu0 0.0
          %7125 = vmatpush1.msra.mxu0 0.0
          %7126 = vmatprep.subr.mxu0 0.0
          %7127 = vmatpush1.msra.mxu0 0.0
          %7128 = vmatprep.subr.mxu0 0.0
          %7129 = vmatpush1.msra.mxu0 0.0
          %7130 = vmatprep.subr.mxu0 0.0
          %7131 = vmatpush1.msra.mxu0 0.0
          %7132 = vmatprep.subr.mxu0 0.0
          %7133 = vmatpush1.msra.mxu0 0.0
          %7134 = vmatprep.subr.mxu0 0.0
          %7135 = vmatpush1.msra.mxu0 0.0
          %7136 = vmatprep.subr.mxu0 0.0
          %7137 = vmatpush1.msra.mxu0 0.0
          %7138 = vmatprep.subr.mxu0 0.0
          %7139 = vmatpush1.msra.mxu0 0.0
          %7140 = vmatprep.subr.mxu0 0.0
          %7141 = vmatpush1.msra.mxu0 0.0
          %7142 = vmatprep.subr.mxu0 0.0
          %7143 = vmatpush1.msra.mxu0 0.0
          %7144 = vmatprep.subr.mxu0 0.0
          %7145 = vmatpush1.msra.mxu0 0.0
          %7146 = vmatprep.subr.mxu0 0.0
          %7147 = vmatpush1.msra.mxu0 0.0
          %7148 = vmatprep.subr.mxu0 0.0
          %7149 = vmatpush1.msra.mxu0 %v7041
          %7150 = vmatprep.subr.mxu0 0.0
          %7151 = vmatpush2.msra.mxu0 0.0
          %7152 = vmatprep.subr.mxu0 0.0
          %7153 = vmatpush2.msra.mxu0 0.0
          %7154 = vmatprep.subr.mxu0 0.0
          %7155 = vmatpush2.msra.mxu0 0.0
          %7156 = vmatprep.subr.mxu0 0.0
          %7157 = vmatpush2.msra.mxu0 0.0
          %7158 = vmatprep.subr.mxu0 0.0
          %7159 = vmatpush2.msra.mxu0 0.0
          %7160 = vmatprep.subr.mxu0 0.0
          %7161 = vmatpush2.msra.mxu0 0.0
          %7162 = vmatprep.subr.mxu0 0.0
          %7163 = vmatpush2.msra.mxu0 0.0
          %7164 = vmatprep.subr.mxu0 0.0
          %7165 = vmatpush2.msra.mxu0 0.0
          %7166 = vmatprep.subr.mxu0 0.0
          %7167 = vmatpush2.msra.mxu0 0.0
          %7168 = vmatprep.subr.mxu0 0.0
          %7169 = vmatpush2.msra.mxu0 0.0
          %7170 = vmatprep.subr.mxu0 0.0
          %7171 = vmatpush2.msra.mxu0 0.0
          %7172 = vmatprep.subr.mxu0 0.0
          %7173 = vmatpush2.msra.mxu0 0.0
          %7174 = vmatprep.subr.mxu0 0.0
          %7175 = vmatpush2.msra.mxu0 0.0
          %7176 = vmatprep.subr.mxu0 0.0
          %7177 = vmatpush2.msra.mxu0 0.0
          %7178 = vmatprep.subr.mxu0 0.0
          %7179 = vmatpush2.msra.mxu0 0.0
          %7180 = vmatprep.subr.mxu0 0.0
          %7181 = vmatpush2.msra.mxu0 0.0
          %7182 = vmatprep.mubr.f32.mxu0 0.0
          %7183 = vmatmul.mubr.f32.gmra.mxu0 %v1571
          %v7184 = vpop.f32.mrf.mxu0
          %v7185 = vadd.f32 0.0, %v7184
          %v7186 = vpop.f32.mrf.mxu0
          %7187 = vdwg.mxu0
          %v7189 = vsel %vm1058, %v7185, 0
          %7191 = vmatprep.subr.mxu0 0.0
          %7192 = vmatpush1.msra.mxu0 0.0
          %7193 = vmatprep.subr.mxu0 0.0
          %7194 = vmatpush1.msra.mxu0 0.0
          %7195 = vmatprep.subr.mxu0 0.0
          %7196 = vmatpush1.msra.mxu0 0.0
          %7197 = vmatprep.subr.mxu0 0.0
          %7198 = vmatpush1.msra.mxu0 0.0
          %7199 = vmatprep.subr.mxu0 0.0
          %7200 = vmatpush1.msra.mxu0 0.0
          %7201 = vmatprep.subr.mxu0 0.0
          %7202 = vmatpush1.msra.mxu0 0.0
          %7203 = vmatprep.subr.mxu0 0.0
          %7204 = vmatpush1.msra.mxu0 0.0
          %7205 = vmatprep.subr.mxu0 0.0
          %7206 = vmatpush1.msra.mxu0 0.0
          %7207 = vmatprep.subr.mxu0 0.0
          %7208 = vmatpush1.msra.mxu0 0.0
          %7209 = vmatprep.subr.mxu0 0.0
          %7210 = vmatpush1.msra.mxu0 0.0
          %7211 = vmatprep.subr.mxu0 0.0
          %7212 = vmatpush1.msra.mxu0 0.0
          %7213 = vmatprep.subr.mxu0 0.0
          %7214 = vmatpush1.msra.mxu0 0.0
          %7215 = vmatprep.subr.mxu0 0.0
          %7216 = vmatpush1.msra.mxu0 %v1424
          %7217 = vmatprep.subr.mxu0 0.0
          %7218 = vmatpush1.msra.mxu0 %v1423
          %7219 = vmatprep.subr.mxu0 0.0
          %7220 = vmatpush1.msra.mxu0 %v1422
          %7221 = vmatprep.subr.mxu0 0.0
          %7222 = vmatpush1.msra.mxu0 %v1421
          %7223 = vmatprep.subr.mxu0 0.0
          %7224 = vmatpush2.msra.mxu0 0.0
          %7225 = vmatprep.subr.mxu0 0.0
          %7226 = vmatpush2.msra.mxu0 0.0
          %7227 = vmatprep.subr.mxu0 0.0
          %7228 = vmatpush2.msra.mxu0 0.0
          %7229 = vmatprep.subr.mxu0 0.0
          %7230 = vmatpush2.msra.mxu0 0.0
          %7231 = vmatprep.subr.mxu0 0.0
          %7232 = vmatpush2.msra.mxu0 0.0
          %7233 = vmatprep.subr.mxu0 0.0
          %7234 = vmatpush2.msra.mxu0 0.0
          %7235 = vmatprep.subr.mxu0 0.0
          %7236 = vmatpush2.msra.mxu0 0.0
          %7237 = vmatprep.subr.mxu0 0.0
          %7238 = vmatpush2.msra.mxu0 0.0
          %7239 = vmatprep.subr.mxu0 0.0
          %7240 = vmatpush2.msra.mxu0 0.0
          %7241 = vmatprep.subr.mxu0 0.0
          %7242 = vmatpush2.msra.mxu0 0.0
          %7243 = vmatprep.subr.mxu0 0.0
          %7244 = vmatpush2.msra.mxu0 0.0
          %7245 = vmatprep.subr.mxu0 0.0
          %7246 = vmatpush2.msra.mxu0 0.0
          %7247 = vmatprep.subr.mxu0 0.0
          %7248 = vmatpush2.msra.mxu0 0.0
          %7249 = vmatprep.subr.mxu0 0.0
          %7250 = vmatpush2.msra.mxu0 0.0
          %7251 = vmatprep.subr.mxu0 0.0
          %7252 = vmatpush2.msra.mxu0 0.0
          %7253 = vmatprep.subr.mxu0 0.0
          %7254 = vmatpush2.msra.mxu0 0.0
          %7255 = vmatprep.mubr.f32.mxu0 0.0
          %7256 = vmatmul.mubr.f32.gmra.mxu0 %v7189
          %v7257 = vpop.f32.mrf.mxu0
          %v7258 = vadd.f32 0.0, %v7257
          %v7259 = vpop.f32.mrf.mxu0
          %7260 = vdwg.mxu0
          %v7261 = vadd.f32 %v7117, %v7258
          %7263 = vrot.lane.b32.xlu0 %v7261, 64
          %v7264 = vpop.permute.xlu0 %7263
          %v7266 = vadd.f32 %v5947, %v7264
          %v7268 = vlaneseq
          %v7269 = vshrl.u32 %v7268, 7
          %v7270 = vsub.s32 0, %v7269
          %v7271 = vrot.slane %v1426, %v7270
          %7272 = vrot.lane.b32.xlu0 %v7271, 64
          %v7273 = vpop.permute.xlu0 %7272
          %v7275 = vadd.f32 %v7266, %v7273
          %v7276 = vtanh.pop %v7275
          %v7277 = vmul.f32 %v6612, %v3956
          %v7278 = vsub.f32 1.0, %v6612
          %7280 = vrot.lane.b32.xlu0 %v7276, 96
          %v7281 = vpop.permute.xlu0 %7280
          %v7283 = vmul.f32 %v7278, %v7281
          %v7284 = vadd.f32 %v7277, %v7283
        $region117: #{dcrnn_forward.3} parent=111 // loop_footer
          %s3952 = sadd.s32 %s3950, 1
        $region118: #{dcrnn_forward.3} parent=111 // loop_footer_branch
          %3949 = sbr.rel target = $region114
        $region119: #{dcrnn_forward.3} parent=111 // loop_exit
          _
        %vm7285 = vcmask 523520
        %v7286 = vsel %vm7285, %v3956, -inf
        %v7287 = vrot.slane %v7286, 4
        %v7288 = vmax.f32 %v7286, %v7287
        %v7289 = vrot.slane %v7288, 2
        %v7290 = vmax.f32 %v7288, %v7289
        %v7291 = vrot.slane %v7290, 1
        %v7292 = vmax.f32 %v7290, %v7291
        %v7293 = vld [vmem:[%s18] sm:$0xff]
        %v7294 = vld [vmem:[%s18 + $0x8] sm:$0xff]
        %v7295 = vld [vmem:[%s18 + $0x10] sm:$0xff]
        %v7296 = vld [vmem:[%s18 + $0x18] sm:$0xff]
        %v7297 = vld [vmem:[%s19] sm:$0x1]
        %7299 = vrot.lane.b32.xlu0 %v7292, 96
        %v7300 = vpop.permute.xlu0 %7299
        %v7301 = vsel %vm1058, %v7300, 0
        %7303 = vmatprep.subr.mxu0 0.0
        %7304 = vmatpush1.msra.mxu0 0.0
        %7305 = vmatprep.subr.mxu0 0.0
        %7306 = vmatpush1.msra.mxu0 0.0
        %7307 = vmatprep.subr.mxu0 0.0
        %7308 = vmatpush1.msra.mxu0 0.0
        %7309 = vmatprep.subr.mxu0 0.0
        %7310 = vmatpush1.msra.mxu0 0.0
        %7311 = vmatprep.subr.mxu0 0.0
        %7312 = vmatpush1.msra.mxu0 0.0
        %7313 = vmatprep.subr.mxu0 0.0
        %7314 = vmatpush1.msra.mxu0 0.0
        %7315 = vmatprep.subr.mxu0 0.0
        %7316 = vmatpush1.msra.mxu0 0.0
        %7317 = vmatprep.subr.mxu0 0.0
        %7318 = vmatpush1.msra.mxu0 0.0
        %7319 = vmatprep.subr.mxu0 0.0
        %7320 = vmatpush1.msra.mxu0 0.0
        %7321 = vmatprep.subr.mxu0 0.0
        %7322 = vmatpush1.msra.mxu0 0.0
        %7323 = vmatprep.subr.mxu0 0.0
        %7324 = vmatpush1.msra.mxu0 0.0
        %7325 = vmatprep.subr.mxu0 0.0
        %7326 = vmatpush1.msra.mxu0 0.0
        %7327 = vmatprep.subr.mxu0 0.0
        %7328 = vmatpush1.msra.mxu0 %v7296
        %7329 = vmatprep.subr.mxu0 0.0
        %7330 = vmatpush1.msra.mxu0 %v7295
        %7331 = vmatprep.subr.mxu0 0.0
        %7332 = vmatpush1.msra.mxu0 %v7294
        %7333 = vmatprep.subr.mxu0 0.0
        %7334 = vmatpush1.msra.mxu0 %v7293
        %7335 = vmatprep.subr.mxu0 0.0
        %7336 = vmatpush2.msra.mxu0 0.0
        %7337 = vmatprep.subr.mxu0 0.0
        %7338 = vmatpush2.msra.mxu0 0.0
        %7339 = vmatprep.subr.mxu0 0.0
        %7340 = vmatpush2.msra.mxu0 0.0
        %7341 = vmatprep.subr.mxu0 0.0
        %7342 = vmatpush2.msra.mxu0 0.0
        %7343 = vmatprep.subr.mxu0 0.0
        %7344 = vmatpush2.msra.mxu0 0.0
        %7345 = vmatprep.subr.mxu0 0.0
        %7346 = vmatpush2.msra.mxu0 0.0
        %7347 = vmatprep.subr.mxu0 0.0
        %7348 = vmatpush2.msra.mxu0 0.0
        %7349 = vmatprep.subr.mxu0 0.0
        %7350 = vmatpush2.msra.mxu0 0.0
        %7351 = vmatprep.subr.mxu0 0.0
        %7352 = vmatpush2.msra.mxu0 0.0
        %7353 = vmatprep.subr.mxu0 0.0
        %7354 = vmatpush2.msra.mxu0 0.0
        %7355 = vmatprep.subr.mxu0 0.0
        %7356 = vmatpush2.msra.mxu0 0.0
        %7357 = vmatprep.subr.mxu0 0.0
        %7358 = vmatpush2.msra.mxu0 0.0
        %7359 = vmatprep.subr.mxu0 0.0
        %7360 = vmatpush2.msra.mxu0 0.0
        %7361 = vmatprep.subr.mxu0 0.0
        %7362 = vmatpush2.msra.mxu0 0.0
        %7363 = vmatprep.subr.mxu0 0.0
        %7364 = vmatpush2.msra.mxu0 0.0
        %7365 = vmatprep.subr.mxu0 0.0
        %7366 = vmatpush2.msra.mxu0 0.0
        %7367 = vmatprep.mubr.f32.mxu0 0.0
        %7368 = vmatmul.mubr.f32.gmra.mxu0 %v7301
        %v7369 = vpop.f32.mrf.mxu0
        %v7370 = vadd.f32 %v7297, %v7369
        %v7371 = vpop.f32.mrf.mxu0
        %7372 = vdwg.mxu0
        %v7373 = vld [vmem:[%s20] sm:$0xff]
        %v7374 = vld [vmem:[%s20 + $0x8] sm:$0xff]
        %v7375 = vld [vmem:[%s20 + $0x10] sm:$0xff]
        %v7376 = vld [vmem:[%s20 + $0x18] sm:$0xff]
        %v7377 = vld [vmem:[%s21] sm:$0x1]
        %7378 = vmatprep.subr.mxu0 0.0
        %7379 = vmatpush1.msra.mxu0 0.0
        %7380 = vmatprep.subr.mxu0 0.0
        %7381 = vmatpush1.msra.mxu0 0.0
        %7382 = vmatprep.subr.mxu0 0.0
        %7383 = vmatpush1.msra.mxu0 0.0
        %7384 = vmatprep.subr.mxu0 0.0
        %7385 = vmatpush1.msra.mxu0 0.0
        %7386 = vmatprep.subr.mxu0 0.0
        %7387 = vmatpush1.msra.mxu0 0.0
        %7388 = vmatprep.subr.mxu0 0.0
        %7389 = vmatpush1.msra.mxu0 0.0
        %7390 = vmatprep.subr.mxu0 0.0
        %7391 = vmatpush1.msra.mxu0 0.0
        %7392 = vmatprep.subr.mxu0 0.0
        %7393 = vmatpush1.msra.mxu0 0.0
        %7394 = vmatprep.subr.mxu0 0.0
        %7395 = vmatpush1.msra.mxu0 0.0
        %7396 = vmatprep.subr.mxu0 0.0
        %7397 = vmatpush1.msra.mxu0 0.0
        %7398 = vmatprep.subr.mxu0 0.0
        %7399 = vmatpush1.msra.mxu0 0.0
        %7400 = vmatprep.subr.mxu0 0.0
        %7401 = vmatpush1.msra.mxu0 0.0
        %7402 = vmatprep.subr.mxu0 0.0
        %7403 = vmatpush1.msra.mxu0 %v7376
        %7404 = vmatprep.subr.mxu0 0.0
        %7405 = vmatpush1.msra.mxu0 %v7375
        %7406 = vmatprep.subr.mxu0 0.0
        %7407 = vmatpush1.msra.mxu0 %v7374
        %7408 = vmatprep.subr.mxu0 0.0
        %7409 = vmatpush1.msra.mxu0 %v7373
        %7410 = vmatprep.subr.mxu0 0.0
        %7411 = vmatpush2.msra.mxu0 0.0
        %7412 = vmatprep.subr.mxu0 0.0
        %7413 = vmatpush2.msra.mxu0 0.0
        %7414 = vmatprep.subr.mxu0 0.0
        %7415 = vmatpush2.msra.mxu0 0.0
        %7416 = vmatprep.subr.mxu0 0.0
        %7417 = vmatpush2.msra.mxu0 0.0
        %7418 = vmatprep.subr.mxu0 0.0
        %7419 = vmatpush2.msra.mxu0 0.0
        %7420 = vmatprep.subr.mxu0 0.0
        %7421 = vmatpush2.msra.mxu0 0.0
        %7422 = vmatprep.subr.mxu0 0.0
        %7423 = vmatpush2.msra.mxu0 0.0
        %7424 = vmatprep.subr.mxu0 0.0
        %7425 = vmatpush2.msra.mxu0 0.0
        %7426 = vmatprep.subr.mxu0 0.0
        %7427 = vmatpush2.msra.mxu0 0.0
        %7428 = vmatprep.subr.mxu0 0.0
        %7429 = vmatpush2.msra.mxu0 0.0
        %7430 = vmatprep.subr.mxu0 0.0
        %7431 = vmatpush2.msra.mxu0 0.0
        %7432 = vmatprep.subr.mxu0 0.0
        %7433 = vmatpush2.msra.mxu0 0.0
        %7434 = vmatprep.subr.mxu0 0.0
        %7435 = vmatpush2.msra.mxu0 0.0
        %7436 = vmatprep.subr.mxu0 0.0
        %7437 = vmatpush2.msra.mxu0 0.0
        %7438 = vmatprep.subr.mxu0 0.0
        %7439 = vmatpush2.msra.mxu0 0.0
        %7440 = vmatprep.subr.mxu0 0.0
        %7441 = vmatpush2.msra.mxu0 0.0
        %7442 = vmatprep.mubr.f32.mxu0 0.0
        %7443 = vmatmul.mubr.f32.gmra.mxu0 %v7301
        %v7444 = vpop.f32.mrf.mxu0
        %v7445 = vadd.f32 %v7377, %v7444
        %v7446 = vpop.f32.mrf.mxu0
        %7447 = vdwg.mxu0
        %v7448 = vmax.f32 %v7445, 0.0
        %v7449 = vand.u32 2147483647, %v7445
        %v7450 = vsub.f32 0.0, %v7449
        %v7451 = vmul.f32 %v7450, 1.442695
        %v7452 = vpow.pop %v7451
        %v7453 = vadd.f32 %v7452, 1.0
        %v7454 = vlog2.pop %v7453
        %v7455 = vmul.f32 %v7454, 0.6931472
        %v7456 = vadd.f32 %v7448, %v7455
        %v7457 = vld [vmem:[%s851] sm:$0x1]
        %v7458 = vmul.f32 %v7456, %v7457
        %v7459 = vadd.f32 %v7370, %v7458
        %v7460 = vmax.f32 %v7459, 0.0
        %v7461 = vld [vmem:[%s22] sm:$0xff]
        %v7462 = vld [vmem:[%s22 + $0x8] sm:$0xff]
        %v7463 = vld [vmem:[%s23] sm:$0x1]
        %vm7464 = vcmask 130048
        %v7466 = vsel %vm7464, %v7460, 0
        %7468 = vmatprep.subr.mxu0 0.0
        %7469 = vmatpush1.msra.mxu0 0.0
        %7470 = vmatprep.subr.mxu0 0.0
        %7471 = vmatpush1.msra.mxu0 0.0
        %7472 = vmatprep.subr.mxu0 0.0
        %7473 = vmatpush1.msra.mxu0 0.0
        %7474 = vmatprep.subr.mxu0 0.0
        %7475 = vmatpush1.msra.mxu0 0.0
        %7476 = vmatprep.subr.mxu0 0.0
        %7477 = vmatpush1.msra.mxu0 0.0
        %7478 = vmatprep.subr.mxu0 0.0
        %7479 = vmatpush1.msra.mxu0 0.0
        %7480 = vmatprep.subr.mxu0 0.0
        %7481 = vmatpush1.msra.mxu0 0.0
        %7482 = vmatprep.subr.mxu0 0.0
        %7483 = vmatpush1.msra.mxu0 0.0
        %7484 = vmatprep.subr.mxu0 0.0
        %7485 = vmatpush1.msra.mxu0 0.0
        %7486 = vmatprep.subr.mxu0 0.0
        %7487 = vmatpush1.msra.mxu0 0.0
        %7488 = vmatprep.subr.mxu0 0.0
        %7489 = vmatpush1.msra.mxu0 0.0
        %7490 = vmatprep.subr.mxu0 0.0
        %7491 = vmatpush1.msra.mxu0 0.0
        %7492 = vmatprep.subr.mxu0 0.0
        %7493 = vmatpush1.msra.mxu0 0.0
        %7494 = vmatprep.subr.mxu0 0.0
        %7495 = vmatpush1.msra.mxu0 0.0
        %7496 = vmatprep.subr.mxu0 0.0
        %7497 = vmatpush1.msra.mxu0 %v7462
        %7498 = vmatprep.subr.mxu0 0.0
        %7499 = vmatpush1.msra.mxu0 %v7461
        %7500 = vmatprep.subr.mxu0 0.0
        %7501 = vmatpush2.msra.mxu0 0.0
        %7502 = vmatprep.subr.mxu0 0.0
        %7503 = vmatpush2.msra.mxu0 0.0
        %7504 = vmatprep.subr.mxu0 0.0
        %7505 = vmatpush2.msra.mxu0 0.0
        %7506 = vmatprep.subr.mxu0 0.0
        %7507 = vmatpush2.msra.mxu0 0.0
        %7508 = vmatprep.subr.mxu0 0.0
        %7509 = vmatpush2.msra.mxu0 0.0
        %7510 = vmatprep.subr.mxu0 0.0
        %7511 = vmatpush2.msra.mxu0 0.0
        %7512 = vmatprep.subr.mxu0 0.0
        %7513 = vmatpush2.msra.mxu0 0.0
        %7514 = vmatprep.subr.mxu0 0.0
        %7515 = vmatpush2.msra.mxu0 0.0
        %7516 = vmatprep.subr.mxu0 0.0
        %7517 = vmatpush2.msra.mxu0 0.0
        %7518 = vmatprep.subr.mxu0 0.0
        %7519 = vmatpush2.msra.mxu0 0.0
        %7520 = vmatprep.subr.mxu0 0.0
        %7521 = vmatpush2.msra.mxu0 0.0
        %7522 = vmatprep.subr.mxu0 0.0
        %7523 = vmatpush2.msra.mxu0 0.0
        %7524 = vmatprep.subr.mxu0 0.0
        %7525 = vmatpush2.msra.mxu0 0.0
        %7526 = vmatprep.subr.mxu0 0.0
        %7527 = vmatpush2.msra.mxu0 0.0
        %7528 = vmatprep.subr.mxu0 0.0
        %7529 = vmatpush2.msra.mxu0 0.0
        %7530 = vmatprep.subr.mxu0 0.0
        %7531 = vmatpush2.msra.mxu0 0.0
        %7532 = vmatprep.mubr.f32.mxu0 0.0
        %7533 = vmatmul.mubr.f32.gmra.mxu0 %v7466
        %v7534 = vpop.f32.mrf.mxu0
        %v7535 = vadd.f32 %v7463, %v7534
        %v7536 = vpop.f32.mrf.mxu0
        %7537 = vdwg.mxu0
        %vm7538 = vcmask 32768
        %7539 = vst.msk [vmem:[%s821] sm:$0x1] %vm7538, %v7535
        %vm7540 = vcmask 122880
        %7541 = vst.msk [vmem:[%s827] sm:$0x1] %vm7540, %v7459
        %7542 = vst.msk [vmem:[%s833] sm:$0x1] %vm7540, %v7370
        %7543 = vst.msk [vmem:[%s839] sm:$0x1] %vm7540, %v7456
        %s7544 = sand.u32 %s560, 1
        %s7545 = scalar_lea.sflag [#allocation6], %s7544
        %s7546 = sand.u32 %s560, 1
        %s7547 = scalar_lea.vmem [#allocation5], %s7546
        %s7548 = sand.u32 %s54, 1
        %s7549 = scalar_lea.sflag [#allocation8], %s7548
        %s7550 = sand.u32 %s586, 1
        %s7551 = scalar_lea.vmem [#allocation7], %s7550
        %s7552 = sand.u32 %s54, 1
        %s7553 = scalar_lea.sflag [#allocation8], %s7552
        %s7554 = sand.u32 %s612, 1
        %s7555 = scalar_lea.vmem [#allocation9], %s7554
        %s7556 = sand.u32 %s638, 1
        %s7557 = scalar_lea.sflag [#allocation11], %s7556
        %s7558 = sand.u32 %s638, 1
        %s7559 = scalar_lea.vmem [#allocation10], %s7558
        // Predicated region
        $region120: #{dcrnn_forward.3} parent=111 // pred_check
          %p7560 = pneg %p570
        $region121: #{dcrnn_forward.3} parent=111 // pred_check_branch
          %7562 = sbr.rel (%p7560) target = $region123
        $region122: #{dcrnn_forward.3} parent=111 // pred_region
          %s7564 = ssub.s32 16, 16
          %7565 = vsyncadd %s7545, %s7564
          %s7566 = smul.addr %s54, 16
          %s7567 = scalar_lea.hbm %s24, %s7566
          %s7569 = sshll.u32 %s7547, 4
          %s7570 = int_to_ptr.vmem [resolvable:$true] %s7569
          %7572 = dma.vmem_to_hbm [thread:$0]  %s7570, 16, %s7567, %s7545
        $region123: #{dcrnn_forward.3} parent=111 // pred_fallthru
          _
        // Predicated region
        $region124: #{dcrnn_forward.3} parent=111 // pred_check
          %p7573 = pneg %p596
        $region125: #{dcrnn_forward.3} parent=111 // pred_check_branch
          %7575 = sbr.rel (%p7573) target = $region127
        $region126: #{dcrnn_forward.3} parent=111 // pred_region
          %s7577 = ssub.s32 16, 16
          %7578 = vsyncadd %s7549, %s7577
          %s7579 = smul.addr %s54, 16
          %s7580 = scalar_lea.hbm %s25, %s7579
          %s7582 = sshll.u32 %s7551, 4
          %s7583 = int_to_ptr.vmem [resolvable:$true] %s7582
          %7585 = dma.vmem_to_hbm [thread:$0]  %s7583, 16, %s7580, %s7549
        $region127: #{dcrnn_forward.3} parent=111 // pred_fallthru
          _
        // Predicated region
        $region128: #{dcrnn_forward.3} parent=111 // pred_check
          %p7586 = pneg %p622
        $region129: #{dcrnn_forward.3} parent=111 // pred_check_branch
          %7588 = sbr.rel (%p7586) target = $region131
        $region130: #{dcrnn_forward.3} parent=111 // pred_region
          %s7590 = ssub.s32 16, 16
          %7591 = vsyncadd %s7553, %s7590
          %s7592 = smul.addr %s54, 16
          %s7593 = scalar_lea.hbm %s26, %s7592
          %s7595 = sshll.u32 %s7555, 4
          %s7596 = int_to_ptr.vmem [resolvable:$true] %s7595
          %7598 = dma.vmem_to_hbm [thread:$0]  %s7596, 16, %s7593, %s7553
        $region131: #{dcrnn_forward.3} parent=111 // pred_fallthru
          _
        // Predicated region
        $region132: #{dcrnn_forward.3} parent=111 // pred_check
          %p7599 = pneg %p648
        $region133: #{dcrnn_forward.3} parent=111 // pred_check_branch
          %7601 = sbr.rel (%p7599) target = $region135
        $region134: #{dcrnn_forward.3} parent=111 // pred_region
          %s7603 = ssub.s32 16, 16
          %7604 = vsyncadd %s7557, %s7603
          %s7605 = smul.addr %s54, 16
          %s7606 = scalar_lea.hbm %s27, %s7605
          %s7608 = sshll.u32 %s7559, 4
          %s7609 = int_to_ptr.vmem [resolvable:$true] %s7608
          %7611 = dma.vmem_to_hbm [thread:$0]  %s7609, 16, %s7606, %s7557
        $region135: #{dcrnn_forward.3} parent=111 // pred_fallthru
          _
      $region112: #{dcrnn_forward.3} parent=5 // pred_fallthru
        _
      %p7612 = scmp.le.s32.totalorder 2, %s49
      // Predicated region
      $region136: #{dcrnn_forward.3} parent=5 // pred_check
        %p7613 = pneg %p7612
      $region137: #{dcrnn_forward.3} parent=5 // pred_check_branch
        %7615 = sbr.rel (%p7613) target = $region139
      $region138: #{dcrnn_forward.3} parent=5 // pred_region
        %s7616 = ssub.s32 %s49, 2
        // Predicated region
        $region140: #{dcrnn_forward.3} parent=138 // pred_check
          %p7617 = pneg %p576
        $region141: #{dcrnn_forward.3} parent=138 // pred_check_branch
          %7619 = sbr.rel (%p7617) target = $region143
        $region142: #{dcrnn_forward.3} parent=138 // pred_region
          %s7620 = sand.u32 %s561, 1
          %s7621 = scalar_lea.sflag [#allocation6], %s7620
          %s7622 = sand.u32 %s561, 1
          %s7623 = scalar_lea.vmem [#allocation5], %s7622
          %7624 = dma.done %s7621, 16
        $region143: #{dcrnn_forward.3} parent=138 // pred_fallthru
          _
        // Predicated region
        $region144: #{dcrnn_forward.3} parent=138 // pred_check
          %p7625 = pneg %p602
        $region145: #{dcrnn_forward.3} parent=138 // pred_check_branch
          %7627 = sbr.rel (%p7625) target = $region147
        $region146: #{dcrnn_forward.3} parent=138 // pred_region
          %s7628 = sand.u32 %s55, 1
          %s7629 = scalar_lea.sflag [#allocation8], %s7628
          %s7630 = sand.u32 %s587, 1
          %s7631 = scalar_lea.vmem [#allocation7], %s7630
          %7632 = dma.done %s7629, 16
        $region147: #{dcrnn_forward.3} parent=138 // pred_fallthru
          _
        // Predicated region
        $region148: #{dcrnn_forward.3} parent=138 // pred_check
          %p7633 = pneg %p628
        $region149: #{dcrnn_forward.3} parent=138 // pred_check_branch
          %7635 = sbr.rel (%p7633) target = $region151
        $region150: #{dcrnn_forward.3} parent=138 // pred_region
          %s7636 = sand.u32 %s55, 1
          %s7637 = scalar_lea.sflag [#allocation8], %s7636
          %s7638 = sand.u32 %s613, 1
          %s7639 = scalar_lea.vmem [#allocation9], %s7638
          %7640 = dma.done %s7637, 16
        $region151: #{dcrnn_forward.3} parent=138 // pred_fallthru
          _
        // Predicated region
        $region152: #{dcrnn_forward.3} parent=138 // pred_check
          %p7641 = pneg %p654
        $region153: #{dcrnn_forward.3} parent=138 // pred_check_branch
          %7643 = sbr.rel (%p7641) target = $region155
        $region154: #{dcrnn_forward.3} parent=138 // pred_region
          %s7644 = sand.u32 %s639, 1
          %s7645 = scalar_lea.sflag [#allocation11], %s7644
          %s7646 = sand.u32 %s639, 1
          %s7647 = scalar_lea.vmem [#allocation10], %s7646
          %7648 = dma.done %s7645, 16
        $region155: #{dcrnn_forward.3} parent=138 // pred_fallthru
          _
      $region139: #{dcrnn_forward.3} parent=5 // pred_fallthru
        _
    $region6: #{dcrnn_forward.3} parent=1 // loop_footer
      %s53 = sadd.s32 1, %s49
    $region7: #{dcrnn_forward.3} parent=1 // loop_footer_branch
      %48 = sbr.rel target = $region3
    $region8: #{dcrnn_forward.3} parent=1 // loop_exit
      _
    %7649 = vsyncpa [#allocation6], 1
    %s7650 = scalar_lea.sflag [#allocation6], 1
    %7651 = vsyncpa %s7650, 1
    %7652 = vsyncpa [#allocation8], 1
    %s7653 = scalar_lea.sflag [#allocation8], 1
    %7654 = vsyncpa %s7653, 1
    %7655 = vsyncpa [#allocation11], 1
    %s7656 = scalar_lea.sflag [#allocation11], 1
    %7657 = vsyncpa %s7656, 1

</llo_original>
